<compile_context>
chip_gen: v5e
topology: v5e:2x2
jax: 0.10.0
libtpu: 0.0.40
codegen_flags: <defaults>
</compile_context>

<pallas_src>
import functools
import numpy as np
import jax
import jax.numpy as jnp
from jax.experimental import pallas as pl
from jax.experimental.pallas import tpu as pltpu

VOCAB = 16384
EMB = 64
HID = 112
TPI = 1.0       # value used by `torch.zeros(...).fill_(self.tpi)` in the decoder
FFF_CHUNK = 4096  # lane width of each output-logit chunk written inside the kernel


# ----------------------------------------------------------------------------
# Fused kernel: encoder conv stack -> decoder conv/attention stack -> fff
# Everything is per-batch; activations are (seq, channel) so channels sit on
# the lane axis.
# ----------------------------------------------------------------------------
def _seq2seq_kernel(src_ref, trg_ref,
                    ew0_ref, eb0_ref, ewm_ref, ebm_ref, ew5_ref, eb5_ref,
                    wcl0_ref, bcl0_ref, wc3_ref, bc3_ref,
                    wcib_ref, bcib_ref, wpa_ref, wpb_ref, bp1_ref,
                    wp2_ref, bp2_ref, wcma_ref, bcma_ref, wccf_ref, bccf_ref,
                    wfff_ref, bfff_ref, o_ref, *, tpi, n_chunk):
    f32 = jnp.float32
    bf16 = jnp.bfloat16

    def bdot(x, w):  # bf16 x bf16 matmul, f32 accumulate
        return jnp.dot(x.astype(bf16), w, preferred_element_type=f32)

    # ------------------------------ encoder ------------------------------
    xs = src_ref[...]                                   # (L, 64) f32
    L = xs.shape[0]
    row_l = jax.lax.broadcasted_iota(jnp.int32, (L, HID), 0)

    r = bdot(xs, ew0_ref[...]) + eb0_ref[...]           # cc0 -> (L, 112)
    for i in range(4):                                  # cc1..cc4: conv3 pad=1, relu, residual
        # down[l] = r[l-1] (zero at l=0); up[l] = r[l+1] (zero at l=L-1)
        down = jnp.where(row_l < 1, 0.0, pltpu.roll(r, 1, 0))
        up = jnp.where(row_l >= L - 1, 0.0, pltpu.roll(r, L - 1, 0))
        acc = (bdot(down, ewm_ref[3 * i + 0])
               + bdot(r, ewm_ref[3 * i + 1])
               + bdot(up, ewm_ref[3 * i + 2])
               + ebm_ref[i])
        r = jnp.maximum(acc, 0.0) + r
    enc = bdot(r, ew5_ref[...]) + eb5_ref[...] + xs     # cc5 + resg(input) -> ees (L, 64)
    sl = L

    # ------------------------------ decoder ------------------------------
    xt = trg_ref[...]                                   # (T, 64) f32
    T = xt.shape[0]
    row_t = jax.lax.broadcasted_iota(jnp.int32, (T, HID), 0)

    t = bdot(xt, wcl0_ref[...]) + bcl0_ref[...]         # cl0 -> (T, 112)
    # cpr1 split: relu(Wa@tt + Wb@ees + b).  Wb@ees is shared by all 4 blocks.
    b_enc = bdot(enc, wpb_ref[...])                     # (sl, 64)

    for blk in range(4):                                # cl1, claa, clfa, ccac
        # tcat = [TPI, TPI, t] along seq; tap k multiplies tcat[l+k]:
        #   x0[l] = t[l-2] (TPI for l<2), x1[l] = t[l-1] (TPI for l<1), x2 = t
        x0 = jnp.where(row_t < 2, tpi, pltpu.roll(t, 2, 0))
        x1 = jnp.where(row_t < 1, tpi, pltpu.roll(t, 1, 0))
        acc = (bdot(x0, wc3_ref[3 * blk + 0])
               + bdot(x1, wc3_ref[3 * blk + 1])
               + bdot(t, wc3_ref[3 * blk + 2])
               + bc3_ref[blk])
        xconv = jnp.maximum(acc, 0.0)                   # (T, 112)

        tt = bdot(xconv, wcib_ref[...]) + bcib_ref[...]     # cib -> (T, 64)
        a = bdot(tt, wpa_ref[...]) + bp1_ref[...]           # cpr1 (tt half) -> (T, 64)

        # Batched cpr over all encoder positions: rows ordered (s, l).
        p1 = jnp.concatenate(
            [jnp.maximum(a + b_enc[s:s + 1, :], 0.0) for s in range(sl)],
            axis=0)                                          # (sl*T, 64)
        p2 = jnp.maximum(bdot(p1, wp2_ref[...]) + bp2_ref[...], 0.0)  # (sl*T, 64)
        m = p2[0:T, :]
        for s in range(1, sl):                               # max over encoder positions
            m = jnp.maximum(m, p2[s * T:(s + 1) * T, :])

        t = bdot(m, wcma_ref[...]) + bcma_ref[...] + xconv   # cma + residual -> (T, 112)

    # TODO(synk): output_width_30b=True on ccf is an AI85 quantization flag; it has
    # no effect on float math and is ignored here.
    ccf = bdot(t, wccf_ref[...]) + bccf_ref[...]             # ccf -> (T, 64)

    # ---------- fused fff: Linear(64 -> VOCAB), weight tied to embedding ----------
    ccf_b = ccf.astype(bf16)
    v = o_ref.shape[-1]
    for j in range(v // n_chunk):                            # lane-dense 4096-wide stores
        lo = j * n_chunk
        logits = jnp.dot(ccf_b, wfff_ref[:, lo:lo + n_chunk],
                         preferred_element_type=f32)
        o_ref[:, lo:lo + n_chunk] = logits + bfff_ref[:, lo:lo + n_chunk]


def seq2seq_pallas(q, pre_src, pre_trg):
    B, L, _ = pre_src.shape
    T = pre_trg.shape[1]
    assert VOCAB % FFF_CHUNK == 0
    kern = functools.partial(_seq2seq_kernel, tpi=TPI, n_chunk=FFF_CHUNK)
    const = lambda b: (0, 0)
    const3 = lambda b: (0, 0, 0)
    return pl.pallas_call(
        kern,
        out_shape=jax.ShapeDtypeStruct((B, T, VOCAB), jnp.float32),
        grid=(B,),
        in_specs=[
            pl.BlockSpec((None, L, EMB), lambda b: (b, 0, 0)),   # pre_src
            pl.BlockSpec((None, T, EMB), lambda b: (b, 0, 0)),   # pre_trg
            pl.BlockSpec((EMB, HID), const),                     # cc0^T
            pl.BlockSpec((1, HID), const),
            pl.BlockSpec((12, HID, HID), const3),                # cc1..cc4 taps^T
            pl.BlockSpec((4, 1, HID), const3),
            pl.BlockSpec((HID, EMB), const),                     # cc5^T
            pl.BlockSpec((1, EMB), const),
            pl.BlockSpec((EMB, HID), const),                     # cl0^T
            pl.BlockSpec((1, HID), const),
            pl.BlockSpec((12, HID, HID), const3),                # cl1/claa/clfa/ccac taps^T
            pl.BlockSpec((4, 1, HID), const3),
            pl.BlockSpec((HID, EMB), const),                     # cib^T
            pl.BlockSpec((1, EMB), const),
            pl.BlockSpec((EMB, EMB), const),                     # cpr1[:, :64]^T (tt half)
            pl.BlockSpec((EMB, EMB), const),                     # cpr1[:, 64:]^T (ees half)
            pl.BlockSpec((1, EMB), const),
            pl.BlockSpec((EMB, EMB), const),                     # cpr2^T
            pl.BlockSpec((1, EMB), const),
            pl.BlockSpec((EMB, HID), const),                     # cma^T
            pl.BlockSpec((1, HID), const),
            pl.BlockSpec((HID, EMB), const),                     # ccf^T
            pl.BlockSpec((1, EMB), const),
            pl.BlockSpec((EMB, VOCAB), const),                   # fff weight (= emb^T) bf16
            pl.BlockSpec((1, VOCAB), const),                     # fff bias
        ],
        out_specs=pl.BlockSpec((None, T, VOCAB), lambda b: (b, 0, 0)),
        compiler_params=pltpu.CompilerParams(
            dimension_semantics=("parallel",)),
    )(pre_src, pre_trg,
      q['enc_w0'], q['enc_b0'], q['enc_wmid'], q['enc_bmid'], q['enc_w5'], q['enc_b5'],
      q['dec_wcl0'], q['dec_bcl0'], q['dec_wc3'], q['dec_bc3'],
      q['dec_wcib'], q['dec_bcib'], q['dec_wpa'], q['dec_wpb'], q['dec_bp1'],
      q['dec_wp2'], q['dec_bp2'], q['dec_wcma'], q['dec_bcma'],
      q['dec_wccf'], q['dec_bccf'], q['emb_t'], q['fff_b'])


# ----------------------------------------------------------------------------
# lpre (embedding + positional encoding) - plain JAX glue
# ----------------------------------------------------------------------------
def _sinusoidal_pe(pos_start, length, dim):
    pos = np.arange(pos_start, pos_start + length)[:, None].astype(np.float32)
    i = np.arange(dim)[None, :]
    angle = pos / np.power(10000.0, (2 * (i // 2)) / dim)
    pe = np.where(i % 2 == 0, np.sin(angle), np.cos(angle))
    return jnp.asarray(pe, jnp.float32)


# TODO(synk): layers.lpre source not provided; assumed = token embedding (ee1,
# weight shared with fff) + sinusoidal positional encoding, emitted as (B, T, 64).
def lpre(emb, tokens, pss):
    _, T = tokens.shape
    e = jnp.take(emb, tokens, axis=0)                       # (B, T, 64)
    return (e + _sinusoidal_pe(pss, T, EMB)[None]).astype(jnp.float32)


# ----------------------------------------------------------------------------
# Forward
# ----------------------------------------------------------------------------
def seq2seq_forward(q, src, trg):
    pre_src = lpre(q['emb'], src, 0)                        # (B, L, 64)
    pre_trg = lpre(q['emb'], trg, 0)                        # (B, T, 64)
    return seq2seq_pallas(q, pre_src, pre_trg)              # (B, T, VOCAB)


# ----------------------------------------------------------------------------
# Parameters
# ----------------------------------------------------------------------------
def init_params(key):
    keys = iter(jax.random.split(key, 48))

    def w(shape, scale=0.05):
        return jax.random.normal(next(keys), shape, jnp.float32) * scale

    p = {}
    p['emb'] = w((VOCAB, EMB), 0.02)        # shared: lpre.ee1.weight == fff.weight
    p['fff_b'] = w((VOCAB,), 0.02)
    # encoder
    p['cc0'] = (w((HID, EMB, 1)), w((HID,)))
    for i in range(1, 5):
        p[f'cc{i}'] = (w((HID, HID, 3)), w((HID,)))
    p['cc5'] = (w((EMB, HID, 1)), w((EMB,)))
    # decoder
    p['cl0'] = (w((HID, EMB, 1)), w((HID,)))
    p['ccf'] = (w((EMB, HID, 1)), w((EMB,)))
    p['cib'] = (w((EMB, HID, 1)), w((EMB,)))
    p['cma'] = (w((HID, EMB, 1)), w((HID,)))
    p['cpr1'] = (w((EMB, 2 * EMB, 1)), w((EMB,)))
    p['cpr2'] = (w((EMB, EMB, 1)), w((EMB,)))
    for name in ('cl1', 'claa', 'clfa', 'ccac'):
        p[name] = (w((HID, HID, 3)), w((HID,)))
    return p


def prepare_params(p):
    """One-time (outside jit) transpose / stack / bf16-cast into kernel layout."""
    bf16 = jnp.bfloat16
    f32 = jnp.float32

    def w1x1_t(wk):   # (Cout, Cin, 1) -> (Cin, Cout) bf16
        return jnp.asarray(wk[:, :, 0].T, bf16)

    def bias_row(b):  # (C,) -> (1, C) f32
        return jnp.asarray(b.reshape(1, -1), f32)

    def taps_t(wk):   # (Cout, Cin, 3) -> (3, Cin, Cout) bf16; [k] = W[:,:,k].T
        return jnp.asarray(jnp.transpose(wk, (2, 1, 0)), bf16)

    q = {}
    q['emb'] = p['emb']                                        # f32, for token lookup
    q['emb_t'] = jnp.asarray(p['emb'].T, bf16)                 # (64, V), fff.weight == ee1.weight
    q['fff_b'] = jnp.asarray(p['fff_b'].reshape(1, VOCAB), f32)
    # encoder
    q['enc_w0'] = w1x1_t(p['cc0'][0]); q['enc_b0'] = bias_row(p['cc0'][1])
    q['enc_wmid'] = jnp.concatenate(
        [taps_t(p[f'cc{i}'][0]) for i in range(1, 5)], axis=0)        # (12, 112, 112)
    q['enc_bmid'] = jnp.stack(
        [bias_row(p[f'cc{i}'][1]) for i in range(1, 5)], axis=0)      # (4, 1, 112)
    q['enc_w5'] = w1x1_t(p['cc5'][0]); q['enc_b5'] = bias_row(p['cc5'][1])
    # decoder
    q['dec_wcl0'] = w1x1_t(p['cl0'][0]); q['dec_bcl0'] = bias_row(p['cl0'][1])
    q['dec_wc3'] = jnp.concatenate(
        [taps_t(p[n][0]) for n in ('cl1', 'claa', 'clfa', 'ccac')], axis=0)   # (12, 112, 112)
    q['dec_bc3'] = jnp.stack(
        [bias_row(p[n][1]) for n in ('cl1', 'claa', 'clfa', 'ccac')], axis=0)  # (4, 1, 112)
    q['dec_wcib'] = w1x1_t(p['cib'][0]); q['dec_bcib'] = bias_row(p['cib'][1])
    wpr1 = p['cpr1'][0][:, :, 0]                               # (64, 128)
    q['dec_wpa'] = jnp.asarray(wpr1[:, :EMB].T, bf16)          # acts on repeated tt
    q['dec_wpb'] = jnp.asarray(wpr1[:, EMB:].T, bf16)          # acts on repeated ees
    q['dec_bp1'] = bias_row(p['cpr1'][1])
    q['dec_wp2'] = w1x1_t(p['cpr2'][0]); q['dec_bp2'] = bias_row(p['cpr2'][1])
    q['dec_wcma'] = w1x1_t(p['cma'][0]); q['dec_bcma'] = bias_row(p['cma'][1])
    q['dec_wccf'] = w1x1_t(p['ccf'][0]); q['dec_bccf'] = bias_row(p['ccf'][1])
    return q


if __name__ == "__main__":
    key = jax.random.PRNGKey(0)
    pkey, skey, tkey = jax.random.split(key, 3)
    params = init_params(pkey)
    prepped = prepare_params(params)   # outside jit: no transposes/casts in the hot path

    B, SRC_LEN, TRG_LEN = 2, 8, 8
    src = jax.random.randint(skey, (B, SRC_LEN), 0, VOCAB, dtype=jnp.int32)
    trg = jax.random.randint(tkey, (B, TRG_LEN), 0, VOCAB, dtype=jnp.int32)

    fwd = jax.jit(seq2seq_forward)
    out = fwd(prepped, src, trg)
    jax.block_until_ready(out)
    assert out.shape == (B, TRG_LEN, VOCAB) and out.dtype == jnp.float32
    print("KERNEL_OK")
</pallas_src>

<mosaic_0001>
module attributes {stable_mosaic.version = 11 : i64} {
  func.func @_seq2seq_kernel(%arg0: i32, %arg1: memref<1x8x64xf32, #tpu.memory_space<vmem>>, %arg2: memref<1x8x64xf32, #tpu.memory_space<vmem>>, %arg3: memref<64x112xbf16, #tpu.memory_space<vmem>>, %arg4: memref<1x112xf32, #tpu.memory_space<vmem>>, %arg5: memref<12x112x112xbf16, #tpu.memory_space<vmem>>, %arg6: memref<4x1x112xf32, #tpu.memory_space<vmem>>, %arg7: memref<112x64xbf16, #tpu.memory_space<vmem>>, %arg8: memref<1x64xf32, #tpu.memory_space<vmem>>, %arg9: memref<64x112xbf16, #tpu.memory_space<vmem>>, %arg10: memref<1x112xf32, #tpu.memory_space<vmem>>, %arg11: memref<12x112x112xbf16, #tpu.memory_space<vmem>>, %arg12: memref<4x1x112xf32, #tpu.memory_space<vmem>>, %arg13: memref<112x64xbf16, #tpu.memory_space<vmem>>, %arg14: memref<1x64xf32, #tpu.memory_space<vmem>>, %arg15: memref<64x64xbf16, #tpu.memory_space<vmem>>, %arg16: memref<64x64xbf16, #tpu.memory_space<vmem>>, %arg17: memref<1x64xf32, #tpu.memory_space<vmem>>, %arg18: memref<64x64xbf16, #tpu.memory_space<vmem>>, %arg19: memref<1x64xf32, #tpu.memory_space<vmem>>, %arg20: memref<64x112xbf16, #tpu.memory_space<vmem>>, %arg21: memref<1x112xf32, #tpu.memory_space<vmem>>, %arg22: memref<112x64xbf16, #tpu.memory_space<vmem>>, %arg23: memref<1x64xf32, #tpu.memory_space<vmem>>, %arg24: memref<64x16384xbf16, #tpu.memory_space<vmem>>, %arg25: memref<1x16384xf32, #tpu.memory_space<vmem>>, %arg26: memref<1x8x16384xf32, #tpu.memory_space<vmem>>) attributes {dimension_semantics = [#tpu.dimension_semantics<parallel>], iteration_bounds = array<i64: 2>, scalar_prefetch = 0 : i64, scratch_operands = 0 : i64, tpu.core_type = #tpu.core_type<tc>, window_params = [{transform_indices = @transform_0, window_bounds = array<i64: 1, 8, 64>}, {transform_indices = @transform_1, window_bounds = array<i64: 1, 8, 64>}, {pipeline_mode = #tpu.pipeline_mode<synchronous>, transform_indices = @transform_2, window_bounds = array<i64: 64, 112>}, {pipeline_mode = #tpu.pipeline_mode<synchronous>, transform_indices = @transform_3, window_bounds = array<i64: 1, 112>}, {pipeline_mode = #tpu.pipeline_mode<synchronous>, transform_indices = @transform_4, window_bounds = array<i64: 12, 112, 112>}, {pipeline_mode = #tpu.pipeline_mode<synchronous>, transform_indices = @transform_5, window_bounds = array<i64: 4, 1, 112>}, {pipeline_mode = #tpu.pipeline_mode<synchronous>, transform_indices = @transform_6, window_bounds = array<i64: 112, 64>}, {pipeline_mode = #tpu.pipeline_mode<synchronous>, transform_indices = @transform_7, window_bounds = array<i64: 1, 64>}, {pipeline_mode = #tpu.pipeline_mode<synchronous>, transform_indices = @transform_8, window_bounds = array<i64: 64, 112>}, {pipeline_mode = #tpu.pipeline_mode<synchronous>, transform_indices = @transform_9, window_bounds = array<i64: 1, 112>}, {pipeline_mode = #tpu.pipeline_mode<synchronous>, transform_indices = @transform_10, window_bounds = array<i64: 12, 112, 112>}, {pipeline_mode = #tpu.pipeline_mode<synchronous>, transform_indices = @transform_11, window_bounds = array<i64: 4, 1, 112>}, {pipeline_mode = #tpu.pipeline_mode<synchronous>, transform_indices = @transform_12, window_bounds = array<i64: 112, 64>}, {pipeline_mode = #tpu.pipeline_mode<synchronous>, transform_indices = @transform_13, window_bounds = array<i64: 1, 64>}, {pipeline_mode = #tpu.pipeline_mode<synchronous>, transform_indices = @transform_14, window_bounds = array<i64: 64, 64>}, {pipeline_mode = #tpu.pipeline_mode<synchronous>, transform_indices = @transform_15, window_bounds = array<i64: 64, 64>}, {pipeline_mode = #tpu.pipeline_mode<synchronous>, transform_indices = @transform_16, window_bounds = array<i64: 1, 64>}, {pipeline_mode = #tpu.pipeline_mode<synchronous>, transform_indices = @transform_17, window_bounds = array<i64: 64, 64>}, {pipeline_mode = #tpu.pipeline_mode<synchronous>, transform_indices = @transform_18, window_bounds = array<i64: 1, 64>}, {pipeline_mode = #tpu.pipeline_mode<synchronous>, transform_indices = @transform_19, window_bounds = array<i64: 64, 112>}, {pipeline_mode = #tpu.pipeline_mode<synchronous>, transform_indices = @transform_20, window_bounds = array<i64: 1, 112>}, {pipeline_mode = #tpu.pipeline_mode<synchronous>, transform_indices = @transform_21, window_bounds = array<i64: 112, 64>}, {pipeline_mode = #tpu.pipeline_mode<synchronous>, transform_indices = @transform_22, window_bounds = array<i64: 1, 64>}, {pipeline_mode = #tpu.pipeline_mode<synchronous>, transform_indices = @transform_23, window_bounds = array<i64: 64, 16384>}, {pipeline_mode = #tpu.pipeline_mode<synchronous>, transform_indices = @transform_24, window_bounds = array<i64: 1, 16384>}, {transform_indices = @transform_25, window_bounds = array<i64: 1, 8, 16384>}]} {
    %c0 = arith.constant 0 : index
    %c0_0 = arith.constant 0 : index
    %c0_1 = arith.constant 0 : index
    %0 = vector.load %arg1[%c0, %c0_0, %c0_1] : memref<1x8x64xf32, #tpu.memory_space<vmem>>, vector<1x8x64xf32>
    %1 = vector.shape_cast %0 : vector<1x8x64xf32> to vector<8x64xf32>
    %2 = tpu.iota {dimensions = array<i32: 0>} : vector<8x112xi32>
    %c0_2 = arith.constant 0 : index
    %c0_3 = arith.constant 0 : index
    %3 = vector.load %arg3[%c0_2, %c0_3] : memref<64x112xbf16, #tpu.memory_space<vmem>>, vector<64x112xbf16>
    %4 = arith.truncf %1 : vector<8x64xf32> to vector<8x64xbf16>
    %cst = arith.constant dense<0.000000e+00> : vector<8x112xf32>
    %5 = tpu.matmul %4, %3, %cst {dimension_numbers = #tpu.dot_dimension_numbers<[1], [0], [0], [1], [0, 0, 1, 1], [], []>} : vector<8x64xbf16>, vector<64x112xbf16>, vector<8x112xf32> -> vector<8x112xf32>
    %c0_4 = arith.constant 0 : index
    %c0_5 = arith.constant 0 : index
    %6 = vector.load %arg4[%c0_4, %c0_5] : memref<1x112xf32, #tpu.memory_space<vmem>>, vector<1x112xf32>
    %7 = vector.broadcast %6 : vector<1x112xf32> to vector<8x112xf32>
    %8 = arith.addf %5, %7 : vector<8x112xf32>
    %c1_i32 = arith.constant 1 : i32
    %9 = vector.broadcast %c1_i32 : i32 to vector<8x112xi32>
    %10 = arith.cmpi slt, %2, %9 : vector<8x112xi32>
    %c1_i32_6 = arith.constant 1 : i32
    %11 = tpu.dynamic_rotate %8 by %c1_i32_6 dim 0 : vector<8x112xf32>, i32 -> vector<8x112xf32>
    %cst_7 = arith.constant 0.000000e+00 : f32
    %12 = vector.broadcast %cst_7 : f32 to vector<8x112xf32>
    %13 = arith.select %10, %12, %11 : vector<8x112xi1>, vector<8x112xf32>
    %c7_i32 = arith.constant 7 : i32
    %14 = vector.broadcast %c7_i32 : i32 to vector<8x112xi32>
    %15 = arith.cmpi sge, %2, %14 : vector<8x112xi32>
    %c7_i32_8 = arith.constant 7 : i32
    %16 = tpu.dynamic_rotate %8 by %c7_i32_8 dim 0 : vector<8x112xf32>, i32 -> vector<8x112xf32>
    %cst_9 = arith.constant 0.000000e+00 : f32
    %17 = vector.broadcast %cst_9 : f32 to vector<8x112xf32>
    %18 = arith.select %15, %17, %16 : vector<8x112xi1>, vector<8x112xf32>
    %c0_10 = arith.constant 0 : index
    %c0_11 = arith.constant 0 : index
    %c0_12 = arith.constant 0 : index
    %19 = vector.load %arg5[%c0_10, %c0_11, %c0_12] : memref<12x112x112xbf16, #tpu.memory_space<vmem>>, vector<1x112x112xbf16>
    %20 = vector.shape_cast %19 : vector<1x112x112xbf16> to vector<112x112xbf16>
    %21 = arith.truncf %13 : vector<8x112xf32> to vector<8x112xbf16>
    %cst_13 = arith.constant dense<0.000000e+00> : vector<8x112xf32>
    %22 = tpu.matmul %21, %20, %cst_13 {dimension_numbers = #tpu.dot_dimension_numbers<[1], [0], [0], [1], [0, 0, 1, 1], [], []>} : vector<8x112xbf16>, vector<112x112xbf16>, vector<8x112xf32> -> vector<8x112xf32>
    %c1 = arith.constant 1 : index
    %c0_14 = arith.constant 0 : index
    %c0_15 = arith.constant 0 : index
    %23 = vector.load %arg5[%c1, %c0_14, %c0_15] : memref<12x112x112xbf16, #tpu.memory_space<vmem>>, vector<1x112x112xbf16>
    %24 = vector.shape_cast %23 : vector<1x112x112xbf16> to vector<112x112xbf16>
    %25 = arith.truncf %8 : vector<8x112xf32> to vector<8x112xbf16>
    %cst_16 = arith.constant dense<0.000000e+00> : vector<8x112xf32>
    %26 = tpu.matmul %25, %24, %cst_16 {dimension_numbers = #tpu.dot_dimension_numbers<[1], [0], [0], [1], [0, 0, 1, 1], [], []>} : vector<8x112xbf16>, vector<112x112xbf16>, vector<8x112xf32> -> vector<8x112xf32>
    %27 = arith.addf %22, %26 : vector<8x112xf32>
    %c2 = arith.constant 2 : index
    %c0_17 = arith.constant 0 : index
    %c0_18 = arith.constant 0 : index
    %28 = vector.load %arg5[%c2, %c0_17, %c0_18] : memref<12x112x112xbf16, #tpu.memory_space<vmem>>, vector<1x112x112xbf16>
    %29 = vector.shape_cast %28 : vector<1x112x112xbf16> to vector<112x112xbf16>
    %30 = arith.truncf %18 : vector<8x112xf32> to vector<8x112xbf16>
    %cst_19 = arith.constant dense<0.000000e+00> : vector<8x112xf32>
    %31 = tpu.matmul %30, %29, %cst_19 {dimension_numbers = #tpu.dot_dimension_numbers<[1], [0], [0], [1], [0, 0, 1, 1], [], []>} : vector<8x112xbf16>, vector<112x112xbf16>, vector<8x112xf32> -> vector<8x112xf32>
    %32 = arith.addf %27, %31 : vector<8x112xf32>
    %c0_20 = arith.constant 0 : index
    %c0_21 = arith.constant 0 : index
    %c0_22 = arith.constant 0 : index
    %33 = vector.load %arg6[%c0_20, %c0_21, %c0_22] : memref<4x1x112xf32, #tpu.memory_space<vmem>>, vector<1x1x112xf32>
    %34 = vector.shape_cast %33 : vector<1x1x112xf32> to vector<1x112xf32>
    %35 = vector.broadcast %34 : vector<1x112xf32> to vector<8x112xf32>
    %36 = arith.addf %32, %35 : vector<8x112xf32>
    %cst_23 = arith.constant 0.000000e+00 : f32
    %37 = vector.broadcast %cst_23 : f32 to vector<8x112xf32>
    %38 = arith.maximumf %36, %37 : vector<8x112xf32>
    %39 = arith.addf %38, %8 : vector<8x112xf32>
    %c1_i32_24 = arith.constant 1 : i32
    %40 = vector.broadcast %c1_i32_24 : i32 to vector<8x112xi32>
    %41 = arith.cmpi slt, %2, %40 : vector<8x112xi32>
    %c1_i32_25 = arith.constant 1 : i32
    %42 = tpu.dynamic_rotate %39 by %c1_i32_25 dim 0 : vector<8x112xf32>, i32 -> vector<8x112xf32>
    %cst_26 = arith.constant 0.000000e+00 : f32
    %43 = vector.broadcast %cst_26 : f32 to vector<8x112xf32>
    %44 = arith.select %41, %43, %42 : vector<8x112xi1>, vector<8x112xf32>
    %c7_i32_27 = arith.constant 7 : i32
    %45 = vector.broadcast %c7_i32_27 : i32 to vector<8x112xi32>
    %46 = arith.cmpi sge, %2, %45 : vector<8x112xi32>
    %c7_i32_28 = arith.constant 7 : i32
    %47 = tpu.dynamic_rotate %39 by %c7_i32_28 dim 0 : vector<8x112xf32>, i32 -> vector<8x112xf32>
    %cst_29 = arith.constant 0.000000e+00 : f32
    %48 = vector.broadcast %cst_29 : f32 to vector<8x112xf32>
    %49 = arith.select %46, %48, %47 : vector<8x112xi1>, vector<8x112xf32>
    %c3 = arith.constant 3 : index
    %c0_30 = arith.constant 0 : index
    %c0_31 = arith.constant 0 : index
    %50 = vector.load %arg5[%c3, %c0_30, %c0_31] : memref<12x112x112xbf16, #tpu.memory_space<vmem>>, vector<1x112x112xbf16>
    %51 = vector.shape_cast %50 : vector<1x112x112xbf16> to vector<112x112xbf16>
    %52 = arith.truncf %44 : vector<8x112xf32> to vector<8x112xbf16>
    %cst_32 = arith.constant dense<0.000000e+00> : vector<8x112xf32>
    %53 = tpu.matmul %52, %51, %cst_32 {dimension_numbers = #tpu.dot_dimension_numbers<[1], [0], [0], [1], [0, 0, 1, 1], [], []>} : vector<8x112xbf16>, vector<112x112xbf16>, vector<8x112xf32> -> vector<8x112xf32>
    %c4 = arith.constant 4 : index
    %c0_33 = arith.constant 0 : index
    %c0_34 = arith.constant 0 : index
    %54 = vector.load %arg5[%c4, %c0_33, %c0_34] : memref<12x112x112xbf16, #tpu.memory_space<vmem>>, vector<1x112x112xbf16>
    %55 = vector.shape_cast %54 : vector<1x112x112xbf16> to vector<112x112xbf16>
    %56 = arith.truncf %39 : vector<8x112xf32> to vector<8x112xbf16>
    %cst_35 = arith.constant dense<0.000000e+00> : vector<8x112xf32>
    %57 = tpu.matmul %56, %55, %cst_35 {dimension_numbers = #tpu.dot_dimension_numbers<[1], [0], [0], [1], [0, 0, 1, 1], [], []>} : vector<8x112xbf16>, vector<112x112xbf16>, vector<8x112xf32> -> vector<8x112xf32>
    %58 = arith.addf %53, %57 : vector<8x112xf32>
    %c5 = arith.constant 5 : index
    %c0_36 = arith.constant 0 : index
    %c0_37 = arith.constant 0 : index
    %59 = vector.load %arg5[%c5, %c0_36, %c0_37] : memref<12x112x112xbf16, #tpu.memory_space<vmem>>, vector<1x112x112xbf16>
    %60 = vector.shape_cast %59 : vector<1x112x112xbf16> to vector<112x112xbf16>
    %61 = arith.truncf %49 : vector<8x112xf32> to vector<8x112xbf16>
    %cst_38 = arith.constant dense<0.000000e+00> : vector<8x112xf32>
    %62 = tpu.matmul %61, %60, %cst_38 {dimension_numbers = #tpu.dot_dimension_numbers<[1], [0], [0], [1], [0, 0, 1, 1], [], []>} : vector<8x112xbf16>, vector<112x112xbf16>, vector<8x112xf32> -> vector<8x112xf32>
    %63 = arith.addf %58, %62 : vector<8x112xf32>
    %c1_39 = arith.constant 1 : index
    %c0_40 = arith.constant 0 : index
    %c0_41 = arith.constant 0 : index
    %64 = vector.load %arg6[%c1_39, %c0_40, %c0_41] : memref<4x1x112xf32, #tpu.memory_space<vmem>>, vector<1x1x112xf32>
    %65 = vector.shape_cast %64 : vector<1x1x112xf32> to vector<1x112xf32>
    %66 = vector.broadcast %65 : vector<1x112xf32> to vector<8x112xf32>
    %67 = arith.addf %63, %66 : vector<8x112xf32>
    %cst_42 = arith.constant 0.000000e+00 : f32
    %68 = vector.broadcast %cst_42 : f32 to vector<8x112xf32>
    %69 = arith.maximumf %67, %68 : vector<8x112xf32>
    %70 = arith.addf %69, %39 : vector<8x112xf32>
    %c1_i32_43 = arith.constant 1 : i32
    %71 = vector.broadcast %c1_i32_43 : i32 to vector<8x112xi32>
    %72 = arith.cmpi slt, %2, %71 : vector<8x112xi32>
    %c1_i32_44 = arith.constant 1 : i32
    %73 = tpu.dynamic_rotate %70 by %c1_i32_44 dim 0 : vector<8x112xf32>, i32 -> vector<8x112xf32>
    %cst_45 = arith.constant 0.000000e+00 : f32
    %74 = vector.broadcast %cst_45 : f32 to vector<8x112xf32>
    %75 = arith.select %72, %74, %73 : vector<8x112xi1>, vector<8x112xf32>
    %c7_i32_46 = arith.constant 7 : i32
    %76 = vector.broadcast %c7_i32_46 : i32 to vector<8x112xi32>
    %77 = arith.cmpi sge, %2, %76 : vector<8x112xi32>
    %c7_i32_47 = arith.constant 7 : i32
    %78 = tpu.dynamic_rotate %70 by %c7_i32_47 dim 0 : vector<8x112xf32>, i32 -> vector<8x112xf32>
    %cst_48 = arith.constant 0.000000e+00 : f32
    %79 = vector.broadcast %cst_48 : f32 to vector<8x112xf32>
    %80 = arith.select %77, %79, %78 : vector<8x112xi1>, vector<8x112xf32>
    %c6 = arith.constant 6 : index
    %c0_49 = arith.constant 0 : index
    %c0_50 = arith.constant 0 : index
    %81 = vector.load %arg5[%c6, %c0_49, %c0_50] : memref<12x112x112xbf16, #tpu.memory_space<vmem>>, vector<1x112x112xbf16>
    %82 = vector.shape_cast %81 : vector<1x112x112xbf16> to vector<112x112xbf16>
    %83 = arith.truncf %75 : vector<8x112xf32> to vector<8x112xbf16>
    %cst_51 = arith.constant dense<0.000000e+00> : vector<8x112xf32>
    %84 = tpu.matmul %83, %82, %cst_51 {dimension_numbers = #tpu.dot_dimension_numbers<[1], [0], [0], [1], [0, 0, 1, 1], [], []>} : vector<8x112xbf16>, vector<112x112xbf16>, vector<8x112xf32> -> vector<8x112xf32>
    %c7 = arith.constant 7 : index
    %c0_52 = arith.constant 0 : index
    %c0_53 = arith.constant 0 : index
    %85 = vector.load %arg5[%c7, %c0_52, %c0_53] : memref<12x112x112xbf16, #tpu.memory_space<vmem>>, vector<1x112x112xbf16>
    %86 = vector.shape_cast %85 : vector<1x112x112xbf16> to vector<112x112xbf16>
    %87 = arith.truncf %70 : vector<8x112xf32> to vector<8x112xbf16>
    %cst_54 = arith.constant dense<0.000000e+00> : vector<8x112xf32>
    %88 = tpu.matmul %87, %86, %cst_54 {dimension_numbers = #tpu.dot_dimension_numbers<[1], [0], [0], [1], [0, 0, 1, 1], [], []>} : vector<8x112xbf16>, vector<112x112xbf16>, vector<8x112xf32> -> vector<8x112xf32>
    %89 = arith.addf %84, %88 : vector<8x112xf32>
    %c8 = arith.constant 8 : index
    %c0_55 = arith.constant 0 : index
    %c0_56 = arith.constant 0 : index
    %90 = vector.load %arg5[%c8, %c0_55, %c0_56] : memref<12x112x112xbf16, #tpu.memory_space<vmem>>, vector<1x112x112xbf16>
    %91 = vector.shape_cast %90 : vector<1x112x112xbf16> to vector<112x112xbf16>
    %92 = arith.truncf %80 : vector<8x112xf32> to vector<8x112xbf16>
    %cst_57 = arith.constant dense<0.000000e+00> : vector<8x112xf32>
    %93 = tpu.matmul %92, %91, %cst_57 {dimension_numbers = #tpu.dot_dimension_numbers<[1], [0], [0], [1], [0, 0, 1, 1], [], []>} : vector<8x112xbf16>, vector<112x112xbf16>, vector<8x112xf32> -> vector<8x112xf32>
    %94 = arith.addf %89, %93 : vector<8x112xf32>
    %c2_58 = arith.constant 2 : index
    %c0_59 = arith.constant 0 : index
    %c0_60 = arith.constant 0 : index
    %95 = vector.load %arg6[%c2_58, %c0_59, %c0_60] : memref<4x1x112xf32, #tpu.memory_space<vmem>>, vector<1x1x112xf32>
    %96 = vector.shape_cast %95 : vector<1x1x112xf32> to vector<1x112xf32>
    %97 = vector.broadcast %96 : vector<1x112xf32> to vector<8x112xf32>
    %98 = arith.addf %94, %97 : vector<8x112xf32>
    %cst_61 = arith.constant 0.000000e+00 : f32
    %99 = vector.broadcast %cst_61 : f32 to vector<8x112xf32>
    %100 = arith.maximumf %98, %99 : vector<8x112xf32>
    %101 = arith.addf %100, %70 : vector<8x112xf32>
    %c1_i32_62 = arith.constant 1 : i32
    %102 = vector.broadcast %c1_i32_62 : i32 to vector<8x112xi32>
    %103 = arith.cmpi slt, %2, %102 : vector<8x112xi32>
    %c1_i32_63 = arith.constant 1 : i32
    %104 = tpu.dynamic_rotate %101 by %c1_i32_63 dim 0 : vector<8x112xf32>, i32 -> vector<8x112xf32>
    %cst_64 = arith.constant 0.000000e+00 : f32
    %105 = vector.broadcast %cst_64 : f32 to vector<8x112xf32>
    %106 = arith.select %103, %105, %104 : vector<8x112xi1>, vector<8x112xf32>
    %c7_i32_65 = arith.constant 7 : i32
    %107 = vector.broadcast %c7_i32_65 : i32 to vector<8x112xi32>
    %108 = arith.cmpi sge, %2, %107 : vector<8x112xi32>
    %c7_i32_66 = arith.constant 7 : i32
    %109 = tpu.dynamic_rotate %101 by %c7_i32_66 dim 0 : vector<8x112xf32>, i32 -> vector<8x112xf32>
    %cst_67 = arith.constant 0.000000e+00 : f32
    %110 = vector.broadcast %cst_67 : f32 to vector<8x112xf32>
    %111 = arith.select %108, %110, %109 : vector<8x112xi1>, vector<8x112xf32>
    %c9 = arith.constant 9 : index
    %c0_68 = arith.constant 0 : index
    %c0_69 = arith.constant 0 : index
    %112 = vector.load %arg5[%c9, %c0_68, %c0_69] : memref<12x112x112xbf16, #tpu.memory_space<vmem>>, vector<1x112x112xbf16>
    %113 = vector.shape_cast %112 : vector<1x112x112xbf16> to vector<112x112xbf16>
    %114 = arith.truncf %106 : vector<8x112xf32> to vector<8x112xbf16>
    %cst_70 = arith.constant dense<0.000000e+00> : vector<8x112xf32>
    %115 = tpu.matmul %114, %113, %cst_70 {dimension_numbers = #tpu.dot_dimension_numbers<[1], [0], [0], [1], [0, 0, 1, 1], [], []>} : vector<8x112xbf16>, vector<112x112xbf16>, vector<8x112xf32> -> vector<8x112xf32>
    %c10 = arith.constant 10 : index
    %c0_71 = arith.constant 0 : index
    %c0_72 = arith.constant 0 : index
    %116 = vector.load %arg5[%c10, %c0_71, %c0_72] : memref<12x112x112xbf16, #tpu.memory_space<vmem>>, vector<1x112x112xbf16>
    %117 = vector.shape_cast %116 : vector<1x112x112xbf16> to vector<112x112xbf16>
    %118 = arith.truncf %101 : vector<8x112xf32> to vector<8x112xbf16>
    %cst_73 = arith.constant dense<0.000000e+00> : vector<8x112xf32>
    %119 = tpu.matmul %118, %117, %cst_73 {dimension_numbers = #tpu.dot_dimension_numbers<[1], [0], [0], [1], [0, 0, 1, 1], [], []>} : vector<8x112xbf16>, vector<112x112xbf16>, vector<8x112xf32> -> vector<8x112xf32>
    %120 = arith.addf %115, %119 : vector<8x112xf32>
    %c11 = arith.constant 11 : index
    %c0_74 = arith.constant 0 : index
    %c0_75 = arith.constant 0 : index
    %121 = vector.load %arg5[%c11, %c0_74, %c0_75] : memref<12x112x112xbf16, #tpu.memory_space<vmem>>, vector<1x112x112xbf16>
    %122 = vector.shape_cast %121 : vector<1x112x112xbf16> to vector<112x112xbf16>
    %123 = arith.truncf %111 : vector<8x112xf32> to vector<8x112xbf16>
    %cst_76 = arith.constant dense<0.000000e+00> : vector<8x112xf32>
    %124 = tpu.matmul %123, %122, %cst_76 {dimension_numbers = #tpu.dot_dimension_numbers<[1], [0], [0], [1], [0, 0, 1, 1], [], []>} : vector<8x112xbf16>, vector<112x112xbf16>, vector<8x112xf32> -> vector<8x112xf32>
    %125 = arith.addf %120, %124 : vector<8x112xf32>
    %c3_77 = arith.constant 3 : index
    %c0_78 = arith.constant 0 : index
    %c0_79 = arith.constant 0 : index
    %126 = vector.load %arg6[%c3_77, %c0_78, %c0_79] : memref<4x1x112xf32, #tpu.memory_space<vmem>>, vector<1x1x112xf32>
    %127 = vector.shape_cast %126 : vector<1x1x112xf32> to vector<1x112xf32>
    %128 = vector.broadcast %127 : vector<1x112xf32> to vector<8x112xf32>
    %129 = arith.addf %125, %128 : vector<8x112xf32>
    %cst_80 = arith.constant 0.000000e+00 : f32
    %130 = vector.broadcast %cst_80 : f32 to vector<8x112xf32>
    %131 = arith.maximumf %129, %130 : vector<8x112xf32>
    %132 = arith.addf %131, %101 : vector<8x112xf32>
    %c0_81 = arith.constant 0 : index
    %c0_82 = arith.constant 0 : index
    %133 = vector.load %arg7[%c0_81, %c0_82] : memref<112x64xbf16, #tpu.memory_space<vmem>>, vector<112x64xbf16>
    %134 = arith.truncf %132 : vector<8x112xf32> to vector<8x112xbf16>
    %cst_83 = arith.constant dense<0.000000e+00> : vector<8x64xf32>
    %135 = tpu.matmul %134, %133, %cst_83 {dimension_numbers = #tpu.dot_dimension_numbers<[1], [0], [0], [1], [0, 0, 1, 1], [], []>} : vector<8x112xbf16>, vector<112x64xbf16>, vector<8x64xf32> -> vector<8x64xf32>
    %c0_84 = arith.constant 0 : index
    %c0_85 = arith.constant 0 : index
    %136 = vector.load %arg8[%c0_84, %c0_85] : memref<1x64xf32, #tpu.memory_space<vmem>>, vector<1x64xf32>
    %137 = vector.broadcast %136 : vector<1x64xf32> to vector<8x64xf32>
    %138 = arith.addf %135, %137 : vector<8x64xf32>
    %139 = arith.addf %138, %1 : vector<8x64xf32>
    %c0_86 = arith.constant 0 : index
    %c0_87 = arith.constant 0 : index
    %c0_88 = arith.constant 0 : index
    %140 = vector.load %arg2[%c0_86, %c0_87, %c0_88] : memref<1x8x64xf32, #tpu.memory_space<vmem>>, vector<1x8x64xf32>
    %141 = vector.shape_cast %140 : vector<1x8x64xf32> to vector<8x64xf32>
    %142 = tpu.iota {dimensions = array<i32: 0>} : vector<8x112xi32>
    %c0_89 = arith.constant 0 : index
    %c0_90 = arith.constant 0 : index
    %143 = vector.load %arg9[%c0_89, %c0_90] : memref<64x112xbf16, #tpu.memory_space<vmem>>, vector<64x112xbf16>
    %144 = arith.truncf %141 : vector<8x64xf32> to vector<8x64xbf16>
    %cst_91 = arith.constant dense<0.000000e+00> : vector<8x112xf32>
    %145 = tpu.matmul %144, %143, %cst_91 {dimension_numbers = #tpu.dot_dimension_numbers<[1], [0], [0], [1], [0, 0, 1, 1], [], []>} : vector<8x64xbf16>, vector<64x112xbf16>, vector<8x112xf32> -> vector<8x112xf32>
    %c0_92 = arith.constant 0 : index
    %c0_93 = arith.constant 0 : index
    %146 = vector.load %arg10[%c0_92, %c0_93] : memref<1x112xf32, #tpu.memory_space<vmem>>, vector<1x112xf32>
    %147 = vector.broadcast %146 : vector<1x112xf32> to vector<8x112xf32>
    %148 = arith.addf %145, %147 : vector<8x112xf32>
    %c0_94 = arith.constant 0 : index
    %c0_95 = arith.constant 0 : index
    %149 = vector.load %arg16[%c0_94, %c0_95] : memref<64x64xbf16, #tpu.memory_space<vmem>>, vector<64x64xbf16>
    %150 = arith.truncf %139 : vector<8x64xf32> to vector<8x64xbf16>
    %cst_96 = arith.constant dense<0.000000e+00> : vector<8x64xf32>
    %151 = tpu.matmul %150, %149, %cst_96 {dimension_numbers = #tpu.dot_dimension_numbers<[1], [0], [0], [1], [0, 0, 1, 1], [], []>} : vector<8x64xbf16>, vector<64x64xbf16>, vector<8x64xf32> -> vector<8x64xf32>
    %c2_i32 = arith.constant 2 : i32
    %152 = vector.broadcast %c2_i32 : i32 to vector<8x112xi32>
    %153 = arith.cmpi slt, %142, %152 : vector<8x112xi32>
    %c2_i32_97 = arith.constant 2 : i32
    %154 = tpu.dynamic_rotate %148 by %c2_i32_97 dim 0 : vector<8x112xf32>, i32 -> vector<8x112xf32>
    %cst_98 = arith.constant 1.000000e+00 : f32
    %155 = vector.broadcast %cst_98 : f32 to vector<8x112xf32>
    %156 = arith.select %153, %155, %154 : vector<8x112xi1>, vector<8x112xf32>
    %c1_i32_99 = arith.constant 1 : i32
    %157 = vector.broadcast %c1_i32_99 : i32 to vector<8x112xi32>
    %158 = arith.cmpi slt, %142, %157 : vector<8x112xi32>
    %c1_i32_100 = arith.constant 1 : i32
    %159 = tpu.dynamic_rotate %148 by %c1_i32_100 dim 0 : vector<8x112xf32>, i32 -> vector<8x112xf32>
    %cst_101 = arith.constant 1.000000e+00 : f32
    %160 = vector.broadcast %cst_101 : f32 to vector<8x112xf32>
    %161 = arith.select %158, %160, %159 : vector<8x112xi1>, vector<8x112xf32>
    %c0_102 = arith.constant 0 : index
    %c0_103 = arith.constant 0 : index
    %c0_104 = arith.constant 0 : index
    %162 = vector.load %arg11[%c0_102, %c0_103, %c0_104] : memref<12x112x112xbf16, #tpu.memory_space<vmem>>, vector<1x112x112xbf16>
    %163 = vector.shape_cast %162 : vector<1x112x112xbf16> to vector<112x112xbf16>
    %164 = arith.truncf %156 : vector<8x112xf32> to vector<8x112xbf16>
    %cst_105 = arith.constant dense<0.000000e+00> : vector<8x112xf32>
    %165 = tpu.matmul %164, %163, %cst_105 {dimension_numbers = #tpu.dot_dimension_numbers<[1], [0], [0], [1], [0, 0, 1, 1], [], []>} : vector<8x112xbf16>, vector<112x112xbf16>, vector<8x112xf32> -> vector<8x112xf32>
    %c1_106 = arith.constant 1 : index
    %c0_107 = arith.constant 0 : index
    %c0_108 = arith.constant 0 : index
    %166 = vector.load %arg11[%c1_106, %c0_107, %c0_108] : memref<12x112x112xbf16, #tpu.memory_space<vmem>>, vector<1x112x112xbf16>
    %167 = vector.shape_cast %166 : vector<1x112x112xbf16> to vector<112x112xbf16>
    %168 = arith.truncf %161 : vector<8x112xf32> to vector<8x112xbf16>
    %cst_109 = arith.constant dense<0.000000e+00> : vector<8x112xf32>
    %169 = tpu.matmul %168, %167, %cst_109 {dimension_numbers = #tpu.dot_dimension_numbers<[1], [0], [0], [1], [0, 0, 1, 1], [], []>} : vector<8x112xbf16>, vector<112x112xbf16>, vector<8x112xf32> -> vector<8x112xf32>
    %170 = arith.addf %165, %169 : vector<8x112xf32>
    %c2_110 = arith.constant 2 : index
    %c0_111 = arith.constant 0 : index
    %c0_112 = arith.constant 0 : index
    %171 = vector.load %arg11[%c2_110, %c0_111, %c0_112] : memref<12x112x112xbf16, #tpu.memory_space<vmem>>, vector<1x112x112xbf16>
    %172 = vector.shape_cast %171 : vector<1x112x112xbf16> to vector<112x112xbf16>
    %173 = arith.truncf %148 : vector<8x112xf32> to vector<8x112xbf16>
    %cst_113 = arith.constant dense<0.000000e+00> : vector<8x112xf32>
    %174 = tpu.matmul %173, %172, %cst_113 {dimension_numbers = #tpu.dot_dimension_numbers<[1], [0], [0], [1], [0, 0, 1, 1], [], []>} : vector<8x112xbf16>, vector<112x112xbf16>, vector<8x112xf32> -> vector<8x112xf32>
    %175 = arith.addf %170, %174 : vector<8x112xf32>
    %c0_114 = arith.constant 0 : index
    %c0_115 = arith.constant 0 : index
    %c0_116 = arith.constant 0 : index
    %176 = vector.load %arg12[%c0_114, %c0_115, %c0_116] : memref<4x1x112xf32, #tpu.memory_space<vmem>>, vector<1x1x112xf32>
    %177 = vector.shape_cast %176 : vector<1x1x112xf32> to vector<1x112xf32>
    %178 = vector.broadcast %177 : vector<1x112xf32> to vector<8x112xf32>
    %179 = arith.addf %175, %178 : vector<8x112xf32>
    %cst_117 = arith.constant 0.000000e+00 : f32
    %180 = vector.broadcast %cst_117 : f32 to vector<8x112xf32>
    %181 = arith.maximumf %179, %180 : vector<8x112xf32>
    %c0_118 = arith.constant 0 : index
    %c0_119 = arith.constant 0 : index
    %182 = vector.load %arg13[%c0_118, %c0_119] : memref<112x64xbf16, #tpu.memory_space<vmem>>, vector<112x64xbf16>
    %183 = arith.truncf %181 : vector<8x112xf32> to vector<8x112xbf16>
    %cst_120 = arith.constant dense<0.000000e+00> : vector<8x64xf32>
    %184 = tpu.matmul %183, %182, %cst_120 {dimension_numbers = #tpu.dot_dimension_numbers<[1], [0], [0], [1], [0, 0, 1, 1], [], []>} : vector<8x112xbf16>, vector<112x64xbf16>, vector<8x64xf32> -> vector<8x64xf32>
    %c0_121 = arith.constant 0 : index
    %c0_122 = arith.constant 0 : index
    %185 = vector.load %arg14[%c0_121, %c0_122] : memref<1x64xf32, #tpu.memory_space<vmem>>, vector<1x64xf32>
    %186 = vector.broadcast %185 : vector<1x64xf32> to vector<8x64xf32>
    %187 = arith.addf %184, %186 : vector<8x64xf32>
    %c0_123 = arith.constant 0 : index
    %c0_124 = arith.constant 0 : index
    %188 = vector.load %arg15[%c0_123, %c0_124] : memref<64x64xbf16, #tpu.memory_space<vmem>>, vector<64x64xbf16>
    %189 = arith.truncf %187 : vector<8x64xf32> to vector<8x64xbf16>
    %cst_125 = arith.constant dense<0.000000e+00> : vector<8x64xf32>
    %190 = tpu.matmul %189, %188, %cst_125 {dimension_numbers = #tpu.dot_dimension_numbers<[1], [0], [0], [1], [0, 0, 1, 1], [], []>} : vector<8x64xbf16>, vector<64x64xbf16>, vector<8x64xf32> -> vector<8x64xf32>
    %c0_126 = arith.constant 0 : index
    %c0_127 = arith.constant 0 : index
    %191 = vector.load %arg17[%c0_126, %c0_127] : memref<1x64xf32, #tpu.memory_space<vmem>>, vector<1x64xf32>
    %192 = vector.broadcast %191 : vector<1x64xf32> to vector<8x64xf32>
    %193 = arith.addf %190, %192 : vector<8x64xf32>
    %194 = vector.extract_strided_slice %151 {offsets = [0, 0], sizes = [1, 64], strides = [1, 1]} : vector<8x64xf32> to vector<1x64xf32>
    %195 = vector.broadcast %194 : vector<1x64xf32> to vector<8x64xf32>
    %196 = arith.addf %193, %195 : vector<8x64xf32>
    %cst_128 = arith.constant 0.000000e+00 : f32
    %197 = vector.broadcast %cst_128 : f32 to vector<8x64xf32>
    %198 = arith.maximumf %196, %197 : vector<8x64xf32>
    %199 = vector.extract_strided_slice %151 {offsets = [1, 0], sizes = [1, 64], strides = [1, 1]} : vector<8x64xf32> to vector<1x64xf32>
    %200 = vector.broadcast %199 : vector<1x64xf32> to vector<8x64xf32>
    %201 = arith.addf %193, %200 : vector<8x64xf32>
    %cst_129 = arith.constant 0.000000e+00 : f32
    %202 = vector.broadcast %cst_129 : f32 to vector<8x64xf32>
    %203 = arith.maximumf %201, %202 : vector<8x64xf32>
    %204 = vector.extract_strided_slice %151 {offsets = [2, 0], sizes = [1, 64], strides = [1, 1]} : vector<8x64xf32> to vector<1x64xf32>
    %205 = vector.broadcast %204 : vector<1x64xf32> to vector<8x64xf32>
    %206 = arith.addf %193, %205 : vector<8x64xf32>
    %cst_130 = arith.constant 0.000000e+00 : f32
    %207 = vector.broadcast %cst_130 : f32 to vector<8x64xf32>
    %208 = arith.maximumf %206, %207 : vector<8x64xf32>
    %209 = vector.extract_strided_slice %151 {offsets = [3, 0], sizes = [1, 64], strides = [1, 1]} : vector<8x64xf32> to vector<1x64xf32>
    %210 = vector.broadcast %209 : vector<1x64xf32> to vector<8x64xf32>
    %211 = arith.addf %193, %210 : vector<8x64xf32>
    %cst_131 = arith.constant 0.000000e+00 : f32
    %212 = vector.broadcast %cst_131 : f32 to vector<8x64xf32>
    %213 = arith.maximumf %211, %212 : vector<8x64xf32>
    %214 = vector.extract_strided_slice %151 {offsets = [4, 0], sizes = [1, 64], strides = [1, 1]} : vector<8x64xf32> to vector<1x64xf32>
    %215 = vector.broadcast %214 : vector<1x64xf32> to vector<8x64xf32>
    %216 = arith.addf %193, %215 : vector<8x64xf32>
    %cst_132 = arith.constant 0.000000e+00 : f32
    %217 = vector.broadcast %cst_132 : f32 to vector<8x64xf32>
    %218 = arith.maximumf %216, %217 : vector<8x64xf32>
    %219 = vector.extract_strided_slice %151 {offsets = [5, 0], sizes = [1, 64], strides = [1, 1]} : vector<8x64xf32> to vector<1x64xf32>
    %220 = vector.broadcast %219 : vector<1x64xf32> to vector<8x64xf32>
    %221 = arith.addf %193, %220 : vector<8x64xf32>
    %cst_133 = arith.constant 0.000000e+00 : f32
    %222 = vector.broadcast %cst_133 : f32 to vector<8x64xf32>
    %223 = arith.maximumf %221, %222 : vector<8x64xf32>
    %224 = vector.extract_strided_slice %151 {offsets = [6, 0], sizes = [1, 64], strides = [1, 1]} : vector<8x64xf32> to vector<1x64xf32>
    %225 = vector.broadcast %224 : vector<1x64xf32> to vector<8x64xf32>
    %226 = arith.addf %193, %225 : vector<8x64xf32>
    %cst_134 = arith.constant 0.000000e+00 : f32
    %227 = vector.broadcast %cst_134 : f32 to vector<8x64xf32>
    %228 = arith.maximumf %226, %227 : vector<8x64xf32>
    %229 = vector.extract_strided_slice %151 {offsets = [7, 0], sizes = [1, 64], strides = [1, 1]} : vector<8x64xf32> to vector<1x64xf32>
    %230 = vector.broadcast %229 : vector<1x64xf32> to vector<8x64xf32>
    %231 = arith.addf %193, %230 : vector<8x64xf32>
    %cst_135 = arith.constant 0.000000e+00 : f32
    %232 = vector.broadcast %cst_135 : f32 to vector<8x64xf32>
    %233 = arith.maximumf %231, %232 : vector<8x64xf32>
    %234 = tpu.concatenate %198, %203, %208, %213, %218, %223, %228, %233 in 0 : vector<8x64xf32>, vector<8x64xf32>, vector<8x64xf32>, vector<8x64xf32>, vector<8x64xf32>, vector<8x64xf32>, vector<8x64xf32>, vector<8x64xf32> -> vector<64x64xf32>
    %c0_136 = arith.constant 0 : index
    %c0_137 = arith.constant 0 : index
    %235 = vector.load %arg18[%c0_136, %c0_137] : memref<64x64xbf16, #tpu.memory_space<vmem>>, vector<64x64xbf16>
    %236 = arith.truncf %234 : vector<64x64xf32> to vector<64x64xbf16>
    %cst_138 = arith.constant dense<0.000000e+00> : vector<64x64xf32>
    %237 = tpu.matmul %236, %235, %cst_138 {dimension_numbers = #tpu.dot_dimension_numbers<[1], [0], [0], [1], [0, 0, 1, 1], [], []>} : vector<64x64xbf16>, vector<64x64xbf16>, vector<64x64xf32> -> vector<64x64xf32>
    %c0_139 = arith.constant 0 : index
    %c0_140 = arith.constant 0 : index
    %238 = vector.load %arg19[%c0_139, %c0_140] : memref<1x64xf32, #tpu.memory_space<vmem>>, vector<1x64xf32>
    %239 = vector.broadcast %238 : vector<1x64xf32> to vector<64x64xf32>
    %240 = arith.addf %237, %239 : vector<64x64xf32>
    %cst_141 = arith.constant 0.000000e+00 : f32
    %241 = vector.broadcast %cst_141 : f32 to vector<64x64xf32>
    %242 = arith.maximumf %240, %241 : vector<64x64xf32>
    %243 = vector.extract_strided_slice %242 {offsets = [0, 0], sizes = [8, 64], strides = [1, 1]} : vector<64x64xf32> to vector<8x64xf32>
    %244 = vector.extract_strided_slice %242 {offsets = [8, 0], sizes = [8, 64], strides = [1, 1]} : vector<64x64xf32> to vector<8x64xf32>
    %245 = arith.maximumf %243, %244 : vector<8x64xf32>
    %246 = vector.extract_strided_slice %242 {offsets = [16, 0], sizes = [8, 64], strides = [1, 1]} : vector<64x64xf32> to vector<8x64xf32>
    %247 = arith.maximumf %245, %246 : vector<8x64xf32>
    %248 = vector.extract_strided_slice %242 {offsets = [24, 0], sizes = [8, 64], strides = [1, 1]} : vector<64x64xf32> to vector<8x64xf32>
    %249 = arith.maximumf %247, %248 : vector<8x64xf32>
    %250 = vector.extract_strided_slice %242 {offsets = [32, 0], sizes = [8, 64], strides = [1, 1]} : vector<64x64xf32> to vector<8x64xf32>
    %251 = arith.maximumf %249, %250 : vector<8x64xf32>
    %252 = vector.extract_strided_slice %242 {offsets = [40, 0], sizes = [8, 64], strides = [1, 1]} : vector<64x64xf32> to vector<8x64xf32>
    %253 = arith.maximumf %251, %252 : vector<8x64xf32>
    %254 = vector.extract_strided_slice %242 {offsets = [48, 0], sizes = [8, 64], strides = [1, 1]} : vector<64x64xf32> to vector<8x64xf32>
    %255 = arith.maximumf %253, %254 : vector<8x64xf32>
    %256 = vector.extract_strided_slice %242 {offsets = [56, 0], sizes = [8, 64], strides = [1, 1]} : vector<64x64xf32> to vector<8x64xf32>
    %257 = arith.maximumf %255, %256 : vector<8x64xf32>
    %c0_142 = arith.constant 0 : index
    %c0_143 = arith.constant 0 : index
    %258 = vector.load %arg20[%c0_142, %c0_143] : memref<64x112xbf16, #tpu.memory_space<vmem>>, vector<64x112xbf16>
    %259 = arith.truncf %257 : vector<8x64xf32> to vector<8x64xbf16>
    %cst_144 = arith.constant dense<0.000000e+00> : vector<8x112xf32>
    %260 = tpu.matmul %259, %258, %cst_144 {dimension_numbers = #tpu.dot_dimension_numbers<[1], [0], [0], [1], [0, 0, 1, 1], [], []>} : vector<8x64xbf16>, vector<64x112xbf16>, vector<8x112xf32> -> vector<8x112xf32>
    %c0_145 = arith.constant 0 : index
    %c0_146 = arith.constant 0 : index
    %261 = vector.load %arg21[%c0_145, %c0_146] : memref<1x112xf32, #tpu.memory_space<vmem>>, vector<1x112xf32>
    %262 = vector.broadcast %261 : vector<1x112xf32> to vector<8x112xf32>
    %263 = arith.addf %260, %262 : vector<8x112xf32>
    %264 = arith.addf %263, %181 : vector<8x112xf32>
    %c2_i32_147 = arith.constant 2 : i32
    %265 = vector.broadcast %c2_i32_147 : i32 to vector<8x112xi32>
    %266 = arith.cmpi slt, %142, %265 : vector<8x112xi32>
    %c2_i32_148 = arith.constant 2 : i32
    %267 = tpu.dynamic_rotate %264 by %c2_i32_148 dim 0 : vector<8x112xf32>, i32 -> vector<8x112xf32>
    %cst_149 = arith.constant 1.000000e+00 : f32
    %268 = vector.broadcast %cst_149 : f32 to vector<8x112xf32>
    %269 = arith.select %266, %268, %267 : vector<8x112xi1>, vector<8x112xf32>
    %c1_i32_150 = arith.constant 1 : i32
    %270 = vector.broadcast %c1_i32_150 : i32 to vector<8x112xi32>
    %271 = arith.cmpi slt, %142, %270 : vector<8x112xi32>
    %c1_i32_151 = arith.constant 1 : i32
    %272 = tpu.dynamic_rotate %264 by %c1_i32_151 dim 0 : vector<8x112xf32>, i32 -> vector<8x112xf32>
    %cst_152 = arith.constant 1.000000e+00 : f32
    %273 = vector.broadcast %cst_152 : f32 to vector<8x112xf32>
    %274 = arith.select %271, %273, %272 : vector<8x112xi1>, vector<8x112xf32>
    %c3_153 = arith.constant 3 : index
    %c0_154 = arith.constant 0 : index
    %c0_155 = arith.constant 0 : index
    %275 = vector.load %arg11[%c3_153, %c0_154, %c0_155] : memref<12x112x112xbf16, #tpu.memory_space<vmem>>, vector<1x112x112xbf16>
    %276 = vector.shape_cast %275 : vector<1x112x112xbf16> to vector<112x112xbf16>
    %277 = arith.truncf %269 : vector<8x112xf32> to vector<8x112xbf16>
    %cst_156 = arith.constant dense<0.000000e+00> : vector<8x112xf32>
    %278 = tpu.matmul %277, %276, %cst_156 {dimension_numbers = #tpu.dot_dimension_numbers<[1], [0], [0], [1], [0, 0, 1, 1], [], []>} : vector<8x112xbf16>, vector<112x112xbf16>, vector<8x112xf32> -> vector<8x112xf32>
    %c4_157 = arith.constant 4 : index
    %c0_158 = arith.constant 0 : index
    %c0_159 = arith.constant 0 : index
    %279 = vector.load %arg11[%c4_157, %c0_158, %c0_159] : memref<12x112x112xbf16, #tpu.memory_space<vmem>>, vector<1x112x112xbf16>
    %280 = vector.shape_cast %279 : vector<1x112x112xbf16> to vector<112x112xbf16>
    %281 = arith.truncf %274 : vector<8x112xf32> to vector<8x112xbf16>
    %cst_160 = arith.constant dense<0.000000e+00> : vector<8x112xf32>
    %282 = tpu.matmul %281, %280, %cst_160 {dimension_numbers = #tpu.dot_dimension_numbers<[1], [0], [0], [1], [0, 0, 1, 1], [], []>} : vector<8x112xbf16>, vector<112x112xbf16>, vector<8x112xf32> -> vector<8x112xf32>
    %283 = arith.addf %278, %282 : vector<8x112xf32>
    %c5_161 = arith.constant 5 : index
    %c0_162 = arith.constant 0 : index
    %c0_163 = arith.constant 0 : index
    %284 = vector.load %arg11[%c5_161, %c0_162, %c0_163] : memref<12x112x112xbf16, #tpu.memory_space<vmem>>, vector<1x112x112xbf16>
    %285 = vector.shape_cast %284 : vector<1x112x112xbf16> to vector<112x112xbf16>
    %286 = arith.truncf %264 : vector<8x112xf32> to vector<8x112xbf16>
    %cst_164 = arith.constant dense<0.000000e+00> : vector<8x112xf32>
    %287 = tpu.matmul %286, %285, %cst_164 {dimension_numbers = #tpu.dot_dimension_numbers<[1], [0], [0], [1], [0, 0, 1, 1], [], []>} : vector<8x112xbf16>, vector<112x112xbf16>, vector<8x112xf32> -> vector<8x112xf32>
    %288 = arith.addf %283, %287 : vector<8x112xf32>
    %c1_165 = arith.constant 1 : index
    %c0_166 = arith.constant 0 : index
    %c0_167 = arith.constant 0 : index
    %289 = vector.load %arg12[%c1_165, %c0_166, %c0_167] : memref<4x1x112xf32, #tpu.memory_space<vmem>>, vector<1x1x112xf32>
    %290 = vector.shape_cast %289 : vector<1x1x112xf32> to vector<1x112xf32>
    %291 = vector.broadcast %290 : vector<1x112xf32> to vector<8x112xf32>
    %292 = arith.addf %288, %291 : vector<8x112xf32>
    %cst_168 = arith.constant 0.000000e+00 : f32
    %293 = vector.broadcast %cst_168 : f32 to vector<8x112xf32>
    %294 = arith.maximumf %292, %293 : vector<8x112xf32>
    %c0_169 = arith.constant 0 : index
    %c0_170 = arith.constant 0 : index
    %295 = vector.load %arg13[%c0_169, %c0_170] : memref<112x64xbf16, #tpu.memory_space<vmem>>, vector<112x64xbf16>
    %296 = arith.truncf %294 : vector<8x112xf32> to vector<8x112xbf16>
    %cst_171 = arith.constant dense<0.000000e+00> : vector<8x64xf32>
    %297 = tpu.matmul %296, %295, %cst_171 {dimension_numbers = #tpu.dot_dimension_numbers<[1], [0], [0], [1], [0, 0, 1, 1], [], []>} : vector<8x112xbf16>, vector<112x64xbf16>, vector<8x64xf32> -> vector<8x64xf32>
    %c0_172 = arith.constant 0 : index
    %c0_173 = arith.constant 0 : index
    %298 = vector.load %arg14[%c0_172, %c0_173] : memref<1x64xf32, #tpu.memory_space<vmem>>, vector<1x64xf32>
    %299 = vector.broadcast %298 : vector<1x64xf32> to vector<8x64xf32>
    %300 = arith.addf %297, %299 : vector<8x64xf32>
    %c0_174 = arith.constant 0 : index
    %c0_175 = arith.constant 0 : index
    %301 = vector.load %arg15[%c0_174, %c0_175] : memref<64x64xbf16, #tpu.memory_space<vmem>>, vector<64x64xbf16>
    %302 = arith.truncf %300 : vector<8x64xf32> to vector<8x64xbf16>
    %cst_176 = arith.constant dense<0.000000e+00> : vector<8x64xf32>
    %303 = tpu.matmul %302, %301, %cst_176 {dimension_numbers = #tpu.dot_dimension_numbers<[1], [0], [0], [1], [0, 0, 1, 1], [], []>} : vector<8x64xbf16>, vector<64x64xbf16>, vector<8x64xf32> -> vector<8x64xf32>
    %c0_177 = arith.constant 0 : index
    %c0_178 = arith.constant 0 : index
    %304 = vector.load %arg17[%c0_177, %c0_178] : memref<1x64xf32, #tpu.memory_space<vmem>>, vector<1x64xf32>
    %305 = vector.broadcast %304 : vector<1x64xf32> to vector<8x64xf32>
    %306 = arith.addf %303, %305 : vector<8x64xf32>
    %307 = vector.extract_strided_slice %151 {offsets = [0, 0], sizes = [1, 64], strides = [1, 1]} : vector<8x64xf32> to vector<1x64xf32>
    %308 = vector.broadcast %307 : vector<1x64xf32> to vector<8x64xf32>
    %309 = arith.addf %306, %308 : vector<8x64xf32>
    %cst_179 = arith.constant 0.000000e+00 : f32
    %310 = vector.broadcast %cst_179 : f32 to vector<8x64xf32>
    %311 = arith.maximumf %309, %310 : vector<8x64xf32>
    %312 = vector.extract_strided_slice %151 {offsets = [1, 0], sizes = [1, 64], strides = [1, 1]} : vector<8x64xf32> to vector<1x64xf32>
    %313 = vector.broadcast %312 : vector<1x64xf32> to vector<8x64xf32>
    %314 = arith.addf %306, %313 : vector<8x64xf32>
    %cst_180 = arith.constant 0.000000e+00 : f32
    %315 = vector.broadcast %cst_180 : f32 to vector<8x64xf32>
    %316 = arith.maximumf %314, %315 : vector<8x64xf32>
    %317 = vector.extract_strided_slice %151 {offsets = [2, 0], sizes = [1, 64], strides = [1, 1]} : vector<8x64xf32> to vector<1x64xf32>
    %318 = vector.broadcast %317 : vector<1x64xf32> to vector<8x64xf32>
    %319 = arith.addf %306, %318 : vector<8x64xf32>
    %cst_181 = arith.constant 0.000000e+00 : f32
    %320 = vector.broadcast %cst_181 : f32 to vector<8x64xf32>
    %321 = arith.maximumf %319, %320 : vector<8x64xf32>
    %322 = vector.extract_strided_slice %151 {offsets = [3, 0], sizes = [1, 64], strides = [1, 1]} : vector<8x64xf32> to vector<1x64xf32>
    %323 = vector.broadcast %322 : vector<1x64xf32> to vector<8x64xf32>
    %324 = arith.addf %306, %323 : vector<8x64xf32>
    %cst_182 = arith.constant 0.000000e+00 : f32
    %325 = vector.broadcast %cst_182 : f32 to vector<8x64xf32>
    %326 = arith.maximumf %324, %325 : vector<8x64xf32>
    %327 = vector.extract_strided_slice %151 {offsets = [4, 0], sizes = [1, 64], strides = [1, 1]} : vector<8x64xf32> to vector<1x64xf32>
    %328 = vector.broadcast %327 : vector<1x64xf32> to vector<8x64xf32>
    %329 = arith.addf %306, %328 : vector<8x64xf32>
    %cst_183 = arith.constant 0.000000e+00 : f32
    %330 = vector.broadcast %cst_183 : f32 to vector<8x64xf32>
    %331 = arith.maximumf %329, %330 : vector<8x64xf32>
    %332 = vector.extract_strided_slice %151 {offsets = [5, 0], sizes = [1, 64], strides = [1, 1]} : vector<8x64xf32> to vector<1x64xf32>
    %333 = vector.broadcast %332 : vector<1x64xf32> to vector<8x64xf32>
    %334 = arith.addf %306, %333 : vector<8x64xf32>
    %cst_184 = arith.constant 0.000000e+00 : f32
    %335 = vector.broadcast %cst_184 : f32 to vector<8x64xf32>
    %336 = arith.maximumf %334, %335 : vector<8x64xf32>
    %337 = vector.extract_strided_slice %151 {offsets = [6, 0], sizes = [1, 64], strides = [1, 1]} : vector<8x64xf32> to vector<1x64xf32>
    %338 = vector.broadcast %337 : vector<1x64xf32> to vector<8x64xf32>
    %339 = arith.addf %306, %338 : vector<8x64xf32>
    %cst_185 = arith.constant 0.000000e+00 : f32
    %340 = vector.broadcast %cst_185 : f32 to vector<8x64xf32>
    %341 = arith.maximumf %339, %340 : vector<8x64xf32>
    %342 = vector.extract_strided_slice %151 {offsets = [7, 0], sizes = [1, 64], strides = [1, 1]} : vector<8x64xf32> to vector<1x64xf32>
    %343 = vector.broadcast %342 : vector<1x64xf32> to vector<8x64xf32>
    %344 = arith.addf %306, %343 : vector<8x64xf32>
    %cst_186 = arith.constant 0.000000e+00 : f32
    %345 = vector.broadcast %cst_186 : f32 to vector<8x64xf32>
    %346 = arith.maximumf %344, %345 : vector<8x64xf32>
    %347 = tpu.concatenate %311, %316, %321, %326, %331, %336, %341, %346 in 0 : vector<8x64xf32>, vector<8x64xf32>, vector<8x64xf32>, vector<8x64xf32>, vector<8x64xf32>, vector<8x64xf32>, vector<8x64xf32>, vector<8x64xf32> -> vector<64x64xf32>
    %c0_187 = arith.constant 0 : index
    %c0_188 = arith.constant 0 : index
    %348 = vector.load %arg18[%c0_187, %c0_188] : memref<64x64xbf16, #tpu.memory_space<vmem>>, vector<64x64xbf16>
    %349 = arith.truncf %347 : vector<64x64xf32> to vector<64x64xbf16>
    %cst_189 = arith.constant dense<0.000000e+00> : vector<64x64xf32>
    %350 = tpu.matmul %349, %348, %cst_189 {dimension_numbers = #tpu.dot_dimension_numbers<[1], [0], [0], [1], [0, 0, 1, 1], [], []>} : vector<64x64xbf16>, vector<64x64xbf16>, vector<64x64xf32> -> vector<64x64xf32>
    %c0_190 = arith.constant 0 : index
    %c0_191 = arith.constant 0 : index
    %351 = vector.load %arg19[%c0_190, %c0_191] : memref<1x64xf32, #tpu.memory_space<vmem>>, vector<1x64xf32>
    %352 = vector.broadcast %351 : vector<1x64xf32> to vector<64x64xf32>
    %353 = arith.addf %350, %352 : vector<64x64xf32>
    %cst_192 = arith.constant 0.000000e+00 : f32
    %354 = vector.broadcast %cst_192 : f32 to vector<64x64xf32>
    %355 = arith.maximumf %353, %354 : vector<64x64xf32>
    %356 = vector.extract_strided_slice %355 {offsets = [0, 0], sizes = [8, 64], strides = [1, 1]} : vector<64x64xf32> to vector<8x64xf32>
    %357 = vector.extract_strided_slice %355 {offsets = [8, 0], sizes = [8, 64], strides = [1, 1]} : vector<64x64xf32> to vector<8x64xf32>
    %358 = arith.maximumf %356, %357 : vector<8x64xf32>
    %359 = vector.extract_strided_slice %355 {offsets = [16, 0], sizes = [8, 64], strides = [1, 1]} : vector<64x64xf32> to vector<8x64xf32>
    %360 = arith.maximumf %358, %359 : vector<8x64xf32>
    %361 = vector.extract_strided_slice %355 {offsets = [24, 0], sizes = [8, 64], strides = [1, 1]} : vector<64x64xf32> to vector<8x64xf32>
    %362 = arith.maximumf %360, %361 : vector<8x64xf32>
    %363 = vector.extract_strided_slice %355 {offsets = [32, 0], sizes = [8, 64], strides = [1, 1]} : vector<64x64xf32> to vector<8x64xf32>
    %364 = arith.maximumf %362, %363 : vector<8x64xf32>
    %365 = vector.extract_strided_slice %355 {offsets = [40, 0], sizes = [8, 64], strides = [1, 1]} : vector<64x64xf32> to vector<8x64xf32>
    %366 = arith.maximumf %364, %365 : vector<8x64xf32>
    %367 = vector.extract_strided_slice %355 {offsets = [48, 0], sizes = [8, 64], strides = [1, 1]} : vector<64x64xf32> to vector<8x64xf32>
    %368 = arith.maximumf %366, %367 : vector<8x64xf32>
    %369 = vector.extract_strided_slice %355 {offsets = [56, 0], sizes = [8, 64], strides = [1, 1]} : vector<64x64xf32> to vector<8x64xf32>
    %370 = arith.maximumf %368, %369 : vector<8x64xf32>
    %c0_193 = arith.constant 0 : index
    %c0_194 = arith.constant 0 : index
    %371 = vector.load %arg20[%c0_193, %c0_194] : memref<64x112xbf16, #tpu.memory_space<vmem>>, vector<64x112xbf16>
    %372 = arith.truncf %370 : vector<8x64xf32> to vector<8x64xbf16>
    %cst_195 = arith.constant dense<0.000000e+00> : vector<8x112xf32>
    %373 = tpu.matmul %372, %371, %cst_195 {dimension_numbers = #tpu.dot_dimension_numbers<[1], [0], [0], [1], [0, 0, 1, 1], [], []>} : vector<8x64xbf16>, vector<64x112xbf16>, vector<8x112xf32> -> vector<8x112xf32>
    %c0_196 = arith.constant 0 : index
    %c0_197 = arith.constant 0 : index
    %374 = vector.load %arg21[%c0_196, %c0_197] : memref<1x112xf32, #tpu.memory_space<vmem>>, vector<1x112xf32>
    %375 = vector.broadcast %374 : vector<1x112xf32> to vector<8x112xf32>
    %376 = arith.addf %373, %375 : vector<8x112xf32>
    %377 = arith.addf %376, %294 : vector<8x112xf32>
    %c2_i32_198 = arith.constant 2 : i32
    %378 = vector.broadcast %c2_i32_198 : i32 to vector<8x112xi32>
    %379 = arith.cmpi slt, %142, %378 : vector<8x112xi32>
    %c2_i32_199 = arith.constant 2 : i32
    %380 = tpu.dynamic_rotate %377 by %c2_i32_199 dim 0 : vector<8x112xf32>, i32 -> vector<8x112xf32>
    %cst_200 = arith.constant 1.000000e+00 : f32
    %381 = vector.broadcast %cst_200 : f32 to vector<8x112xf32>
    %382 = arith.select %379, %381, %380 : vector<8x112xi1>, vector<8x112xf32>
    %c1_i32_201 = arith.constant 1 : i32
    %383 = vector.broadcast %c1_i32_201 : i32 to vector<8x112xi32>
    %384 = arith.cmpi slt, %142, %383 : vector<8x112xi32>
    %c1_i32_202 = arith.constant 1 : i32
    %385 = tpu.dynamic_rotate %377 by %c1_i32_202 dim 0 : vector<8x112xf32>, i32 -> vector<8x112xf32>
    %cst_203 = arith.constant 1.000000e+00 : f32
    %386 = vector.broadcast %cst_203 : f32 to vector<8x112xf32>
    %387 = arith.select %384, %386, %385 : vector<8x112xi1>, vector<8x112xf32>
    %c6_204 = arith.constant 6 : index
    %c0_205 = arith.constant 0 : index
    %c0_206 = arith.constant 0 : index
    %388 = vector.load %arg11[%c6_204, %c0_205, %c0_206] : memref<12x112x112xbf16, #tpu.memory_space<vmem>>, vector<1x112x112xbf16>
    %389 = vector.shape_cast %388 : vector<1x112x112xbf16> to vector<112x112xbf16>
    %390 = arith.truncf %382 : vector<8x112xf32> to vector<8x112xbf16>
    %cst_207 = arith.constant dense<0.000000e+00> : vector<8x112xf32>
    %391 = tpu.matmul %390, %389, %cst_207 {dimension_numbers = #tpu.dot_dimension_numbers<[1], [0], [0], [1], [0, 0, 1, 1], [], []>} : vector<8x112xbf16>, vector<112x112xbf16>, vector<8x112xf32> -> vector<8x112xf32>
    %c7_208 = arith.constant 7 : index
    %c0_209 = arith.constant 0 : index
    %c0_210 = arith.constant 0 : index
    %392 = vector.load %arg11[%c7_208, %c0_209, %c0_210] : memref<12x112x112xbf16, #tpu.memory_space<vmem>>, vector<1x112x112xbf16>
    %393 = vector.shape_cast %392 : vector<1x112x112xbf16> to vector<112x112xbf16>
    %394 = arith.truncf %387 : vector<8x112xf32> to vector<8x112xbf16>
    %cst_211 = arith.constant dense<0.000000e+00> : vector<8x112xf32>
    %395 = tpu.matmul %394, %393, %cst_211 {dimension_numbers = #tpu.dot_dimension_numbers<[1], [0], [0], [1], [0, 0, 1, 1], [], []>} : vector<8x112xbf16>, vector<112x112xbf16>, vector<8x112xf32> -> vector<8x112xf32>
    %396 = arith.addf %391, %395 : vector<8x112xf32>
    %c8_212 = arith.constant 8 : index
    %c0_213 = arith.constant 0 : index
    %c0_214 = arith.constant 0 : index
    %397 = vector.load %arg11[%c8_212, %c0_213, %c0_214] : memref<12x112x112xbf16, #tpu.memory_space<vmem>>, vector<1x112x112xbf16>
    %398 = vector.shape_cast %397 : vector<1x112x112xbf16> to vector<112x112xbf16>
    %399 = arith.truncf %377 : vector<8x112xf32> to vector<8x112xbf16>
    %cst_215 = arith.constant dense<0.000000e+00> : vector<8x112xf32>
    %400 = tpu.matmul %399, %398, %cst_215 {dimension_numbers = #tpu.dot_dimension_numbers<[1], [0], [0], [1], [0, 0, 1, 1], [], []>} : vector<8x112xbf16>, vector<112x112xbf16>, vector<8x112xf32> -> vector<8x112xf32>
    %401 = arith.addf %396, %400 : vector<8x112xf32>
    %c2_216 = arith.constant 2 : index
    %c0_217 = arith.constant 0 : index
    %c0_218 = arith.constant 0 : index
    %402 = vector.load %arg12[%c2_216, %c0_217, %c0_218] : memref<4x1x112xf32, #tpu.memory_space<vmem>>, vector<1x1x112xf32>
    %403 = vector.shape_cast %402 : vector<1x1x112xf32> to vector<1x112xf32>
    %404 = vector.broadcast %403 : vector<1x112xf32> to vector<8x112xf32>
    %405 = arith.addf %401, %404 : vector<8x112xf32>
    %cst_219 = arith.constant 0.000000e+00 : f32
    %406 = vector.broadcast %cst_219 : f32 to vector<8x112xf32>
    %407 = arith.maximumf %405, %406 : vector<8x112xf32>
    %c0_220 = arith.constant 0 : index
    %c0_221 = arith.constant 0 : index
    %408 = vector.load %arg13[%c0_220, %c0_221] : memref<112x64xbf16, #tpu.memory_space<vmem>>, vector<112x64xbf16>
    %409 = arith.truncf %407 : vector<8x112xf32> to vector<8x112xbf16>
    %cst_222 = arith.constant dense<0.000000e+00> : vector<8x64xf32>
    %410 = tpu.matmul %409, %408, %cst_222 {dimension_numbers = #tpu.dot_dimension_numbers<[1], [0], [0], [1], [0, 0, 1, 1], [], []>} : vector<8x112xbf16>, vector<112x64xbf16>, vector<8x64xf32> -> vector<8x64xf32>
    %c0_223 = arith.constant 0 : index
    %c0_224 = arith.constant 0 : index
    %411 = vector.load %arg14[%c0_223, %c0_224] : memref<1x64xf32, #tpu.memory_space<vmem>>, vector<1x64xf32>
    %412 = vector.broadcast %411 : vector<1x64xf32> to vector<8x64xf32>
    %413 = arith.addf %410, %412 : vector<8x64xf32>
    %c0_225 = arith.constant 0 : index
    %c0_226 = arith.constant 0 : index
    %414 = vector.load %arg15[%c0_225, %c0_226] : memref<64x64xbf16, #tpu.memory_space<vmem>>, vector<64x64xbf16>
    %415 = arith.truncf %413 : vector<8x64xf32> to vector<8x64xbf16>
    %cst_227 = arith.constant dense<0.000000e+00> : vector<8x64xf32>
    %416 = tpu.matmul %415, %414, %cst_227 {dimension_numbers = #tpu.dot_dimension_numbers<[1], [0], [0], [1], [0, 0, 1, 1], [], []>} : vector<8x64xbf16>, vector<64x64xbf16>, vector<8x64xf32> -> vector<8x64xf32>
    %c0_228 = arith.constant 0 : index
    %c0_229 = arith.constant 0 : index
    %417 = vector.load %arg17[%c0_228, %c0_229] : memref<1x64xf32, #tpu.memory_space<vmem>>, vector<1x64xf32>
    %418 = vector.broadcast %417 : vector<1x64xf32> to vector<8x64xf32>
    %419 = arith.addf %416, %418 : vector<8x64xf32>
    %420 = vector.extract_strided_slice %151 {offsets = [0, 0], sizes = [1, 64], strides = [1, 1]} : vector<8x64xf32> to vector<1x64xf32>
    %421 = vector.broadcast %420 : vector<1x64xf32> to vector<8x64xf32>
    %422 = arith.addf %419, %421 : vector<8x64xf32>
    %cst_230 = arith.constant 0.000000e+00 : f32
    %423 = vector.broadcast %cst_230 : f32 to vector<8x64xf32>
    %424 = arith.maximumf %422, %423 : vector<8x64xf32>
    %425 = vector.extract_strided_slice %151 {offsets = [1, 0], sizes = [1, 64], strides = [1, 1]} : vector<8x64xf32> to vector<1x64xf32>
    %426 = vector.broadcast %425 : vector<1x64xf32> to vector<8x64xf32>
    %427 = arith.addf %419, %426 : vector<8x64xf32>
    %cst_231 = arith.constant 0.000000e+00 : f32
    %428 = vector.broadcast %cst_231 : f32 to vector<8x64xf32>
    %429 = arith.maximumf %427, %428 : vector<8x64xf32>
    %430 = vector.extract_strided_slice %151 {offsets = [2, 0], sizes = [1, 64], strides = [1, 1]} : vector<8x64xf32> to vector<1x64xf32>
    %431 = vector.broadcast %430 : vector<1x64xf32> to vector<8x64xf32>
    %432 = arith.addf %419, %431 : vector<8x64xf32>
    %cst_232 = arith.constant 0.000000e+00 : f32
    %433 = vector.broadcast %cst_232 : f32 to vector<8x64xf32>
    %434 = arith.maximumf %432, %433 : vector<8x64xf32>
    %435 = vector.extract_strided_slice %151 {offsets = [3, 0], sizes = [1, 64], strides = [1, 1]} : vector<8x64xf32> to vector<1x64xf32>
    %436 = vector.broadcast %435 : vector<1x64xf32> to vector<8x64xf32>
    %437 = arith.addf %419, %436 : vector<8x64xf32>
    %cst_233 = arith.constant 0.000000e+00 : f32
    %438 = vector.broadcast %cst_233 : f32 to vector<8x64xf32>
    %439 = arith.maximumf %437, %438 : vector<8x64xf32>
    %440 = vector.extract_strided_slice %151 {offsets = [4, 0], sizes = [1, 64], strides = [1, 1]} : vector<8x64xf32> to vector<1x64xf32>
    %441 = vector.broadcast %440 : vector<1x64xf32> to vector<8x64xf32>
    %442 = arith.addf %419, %441 : vector<8x64xf32>
    %cst_234 = arith.constant 0.000000e+00 : f32
    %443 = vector.broadcast %cst_234 : f32 to vector<8x64xf32>
    %444 = arith.maximumf %442, %443 : vector<8x64xf32>
    %445 = vector.extract_strided_slice %151 {offsets = [5, 0], sizes = [1, 64], strides = [1, 1]} : vector<8x64xf32> to vector<1x64xf32>
    %446 = vector.broadcast %445 : vector<1x64xf32> to vector<8x64xf32>
    %447 = arith.addf %419, %446 : vector<8x64xf32>
    %cst_235 = arith.constant 0.000000e+00 : f32
    %448 = vector.broadcast %cst_235 : f32 to vector<8x64xf32>
    %449 = arith.maximumf %447, %448 : vector<8x64xf32>
    %450 = vector.extract_strided_slice %151 {offsets = [6, 0], sizes = [1, 64], strides = [1, 1]} : vector<8x64xf32> to vector<1x64xf32>
    %451 = vector.broadcast %450 : vector<1x64xf32> to vector<8x64xf32>
    %452 = arith.addf %419, %451 : vector<8x64xf32>
    %cst_236 = arith.constant 0.000000e+00 : f32
    %453 = vector.broadcast %cst_236 : f32 to vector<8x64xf32>
    %454 = arith.maximumf %452, %453 : vector<8x64xf32>
    %455 = vector.extract_strided_slice %151 {offsets = [7, 0], sizes = [1, 64], strides = [1, 1]} : vector<8x64xf32> to vector<1x64xf32>
    %456 = vector.broadcast %455 : vector<1x64xf32> to vector<8x64xf32>
    %457 = arith.addf %419, %456 : vector<8x64xf32>
    %cst_237 = arith.constant 0.000000e+00 : f32
    %458 = vector.broadcast %cst_237 : f32 to vector<8x64xf32>
    %459 = arith.maximumf %457, %458 : vector<8x64xf32>
    %460 = tpu.concatenate %424, %429, %434, %439, %444, %449, %454, %459 in 0 : vector<8x64xf32>, vector<8x64xf32>, vector<8x64xf32>, vector<8x64xf32>, vector<8x64xf32>, vector<8x64xf32>, vector<8x64xf32>, vector<8x64xf32> -> vector<64x64xf32>
    %c0_238 = arith.constant 0 : index
    %c0_239 = arith.constant 0 : index
    %461 = vector.load %arg18[%c0_238, %c0_239] : memref<64x64xbf16, #tpu.memory_space<vmem>>, vector<64x64xbf16>
    %462 = arith.truncf %460 : vector<64x64xf32> to vector<64x64xbf16>
    %cst_240 = arith.constant dense<0.000000e+00> : vector<64x64xf32>
    %463 = tpu.matmul %462, %461, %cst_240 {dimension_numbers = #tpu.dot_dimension_numbers<[1], [0], [0], [1], [0, 0, 1, 1], [], []>} : vector<64x64xbf16>, vector<64x64xbf16>, vector<64x64xf32> -> vector<64x64xf32>
    %c0_241 = arith.constant 0 : index
    %c0_242 = arith.constant 0 : index
    %464 = vector.load %arg19[%c0_241, %c0_242] : memref<1x64xf32, #tpu.memory_space<vmem>>, vector<1x64xf32>
    %465 = vector.broadcast %464 : vector<1x64xf32> to vector<64x64xf32>
    %466 = arith.addf %463, %465 : vector<64x64xf32>
    %cst_243 = arith.constant 0.000000e+00 : f32
    %467 = vector.broadcast %cst_243 : f32 to vector<64x64xf32>
    %468 = arith.maximumf %466, %467 : vector<64x64xf32>
    %469 = vector.extract_strided_slice %468 {offsets = [0, 0], sizes = [8, 64], strides = [1, 1]} : vector<64x64xf32> to vector<8x64xf32>
    %470 = vector.extract_strided_slice %468 {offsets = [8, 0], sizes = [8, 64], strides = [1, 1]} : vector<64x64xf32> to vector<8x64xf32>
    %471 = arith.maximumf %469, %470 : vector<8x64xf32>
    %472 = vector.extract_strided_slice %468 {offsets = [16, 0], sizes = [8, 64], strides = [1, 1]} : vector<64x64xf32> to vector<8x64xf32>
    %473 = arith.maximumf %471, %472 : vector<8x64xf32>
    %474 = vector.extract_strided_slice %468 {offsets = [24, 0], sizes = [8, 64], strides = [1, 1]} : vector<64x64xf32> to vector<8x64xf32>
    %475 = arith.maximumf %473, %474 : vector<8x64xf32>
    %476 = vector.extract_strided_slice %468 {offsets = [32, 0], sizes = [8, 64], strides = [1, 1]} : vector<64x64xf32> to vector<8x64xf32>
    %477 = arith.maximumf %475, %476 : vector<8x64xf32>
    %478 = vector.extract_strided_slice %468 {offsets = [40, 0], sizes = [8, 64], strides = [1, 1]} : vector<64x64xf32> to vector<8x64xf32>
    %479 = arith.maximumf %477, %478 : vector<8x64xf32>
    %480 = vector.extract_strided_slice %468 {offsets = [48, 0], sizes = [8, 64], strides = [1, 1]} : vector<64x64xf32> to vector<8x64xf32>
    %481 = arith.maximumf %479, %480 : vector<8x64xf32>
    %482 = vector.extract_strided_slice %468 {offsets = [56, 0], sizes = [8, 64], strides = [1, 1]} : vector<64x64xf32> to vector<8x64xf32>
    %483 = arith.maximumf %481, %482 : vector<8x64xf32>
    %c0_244 = arith.constant 0 : index
    %c0_245 = arith.constant 0 : index
    %484 = vector.load %arg20[%c0_244, %c0_245] : memref<64x112xbf16, #tpu.memory_space<vmem>>, vector<64x112xbf16>
    %485 = arith.truncf %483 : vector<8x64xf32> to vector<8x64xbf16>
    %cst_246 = arith.constant dense<0.000000e+00> : vector<8x112xf32>
    %486 = tpu.matmul %485, %484, %cst_246 {dimension_numbers = #tpu.dot_dimension_numbers<[1], [0], [0], [1], [0, 0, 1, 1], [], []>} : vector<8x64xbf16>, vector<64x112xbf16>, vector<8x112xf32> -> vector<8x112xf32>
    %c0_247 = arith.constant 0 : index
    %c0_248 = arith.constant 0 : index
    %487 = vector.load %arg21[%c0_247, %c0_248] : memref<1x112xf32, #tpu.memory_space<vmem>>, vector<1x112xf32>
    %488 = vector.broadcast %487 : vector<1x112xf32> to vector<8x112xf32>
    %489 = arith.addf %486, %488 : vector<8x112xf32>
    %490 = arith.addf %489, %407 : vector<8x112xf32>
    %c2_i32_249 = arith.constant 2 : i32
    %491 = vector.broadcast %c2_i32_249 : i32 to vector<8x112xi32>
    %492 = arith.cmpi slt, %142, %491 : vector<8x112xi32>
    %c2_i32_250 = arith.constant 2 : i32
    %493 = tpu.dynamic_rotate %490 by %c2_i32_250 dim 0 : vector<8x112xf32>, i32 -> vector<8x112xf32>
    %cst_251 = arith.constant 1.000000e+00 : f32
    %494 = vector.broadcast %cst_251 : f32 to vector<8x112xf32>
    %495 = arith.select %492, %494, %493 : vector<8x112xi1>, vector<8x112xf32>
    %c1_i32_252 = arith.constant 1 : i32
    %496 = vector.broadcast %c1_i32_252 : i32 to vector<8x112xi32>
    %497 = arith.cmpi slt, %142, %496 : vector<8x112xi32>
    %c1_i32_253 = arith.constant 1 : i32
    %498 = tpu.dynamic_rotate %490 by %c1_i32_253 dim 0 : vector<8x112xf32>, i32 -> vector<8x112xf32>
    %cst_254 = arith.constant 1.000000e+00 : f32
    %499 = vector.broadcast %cst_254 : f32 to vector<8x112xf32>
    %500 = arith.select %497, %499, %498 : vector<8x112xi1>, vector<8x112xf32>
    %c9_255 = arith.constant 9 : index
    %c0_256 = arith.constant 0 : index
    %c0_257 = arith.constant 0 : index
    %501 = vector.load %arg11[%c9_255, %c0_256, %c0_257] : memref<12x112x112xbf16, #tpu.memory_space<vmem>>, vector<1x112x112xbf16>
    %502 = vector.shape_cast %501 : vector<1x112x112xbf16> to vector<112x112xbf16>
    %503 = arith.truncf %495 : vector<8x112xf32> to vector<8x112xbf16>
    %cst_258 = arith.constant dense<0.000000e+00> : vector<8x112xf32>
    %504 = tpu.matmul %503, %502, %cst_258 {dimension_numbers = #tpu.dot_dimension_numbers<[1], [0], [0], [1], [0, 0, 1, 1], [], []>} : vector<8x112xbf16>, vector<112x112xbf16>, vector<8x112xf32> -> vector<8x112xf32>
    %c10_259 = arith.constant 10 : index
    %c0_260 = arith.constant 0 : index
    %c0_261 = arith.constant 0 : index
    %505 = vector.load %arg11[%c10_259, %c0_260, %c0_261] : memref<12x112x112xbf16, #tpu.memory_space<vmem>>, vector<1x112x112xbf16>
    %506 = vector.shape_cast %505 : vector<1x112x112xbf16> to vector<112x112xbf16>
    %507 = arith.truncf %500 : vector<8x112xf32> to vector<8x112xbf16>
    %cst_262 = arith.constant dense<0.000000e+00> : vector<8x112xf32>
    %508 = tpu.matmul %507, %506, %cst_262 {dimension_numbers = #tpu.dot_dimension_numbers<[1], [0], [0], [1], [0, 0, 1, 1], [], []>} : vector<8x112xbf16>, vector<112x112xbf16>, vector<8x112xf32> -> vector<8x112xf32>
    %509 = arith.addf %504, %508 : vector<8x112xf32>
    %c11_263 = arith.constant 11 : index
    %c0_264 = arith.constant 0 : index
    %c0_265 = arith.constant 0 : index
    %510 = vector.load %arg11[%c11_263, %c0_264, %c0_265] : memref<12x112x112xbf16, #tpu.memory_space<vmem>>, vector<1x112x112xbf16>
    %511 = vector.shape_cast %510 : vector<1x112x112xbf16> to vector<112x112xbf16>
    %512 = arith.truncf %490 : vector<8x112xf32> to vector<8x112xbf16>
    %cst_266 = arith.constant dense<0.000000e+00> : vector<8x112xf32>
    %513 = tpu.matmul %512, %511, %cst_266 {dimension_numbers = #tpu.dot_dimension_numbers<[1], [0], [0], [1], [0, 0, 1, 1], [], []>} : vector<8x112xbf16>, vector<112x112xbf16>, vector<8x112xf32> -> vector<8x112xf32>
    %514 = arith.addf %509, %513 : vector<8x112xf32>
    %c3_267 = arith.constant 3 : index
    %c0_268 = arith.constant 0 : index
    %c0_269 = arith.constant 0 : index
    %515 = vector.load %arg12[%c3_267, %c0_268, %c0_269] : memref<4x1x112xf32, #tpu.memory_space<vmem>>, vector<1x1x112xf32>
    %516 = vector.shape_cast %515 : vector<1x1x112xf32> to vector<1x112xf32>
    %517 = vector.broadcast %516 : vector<1x112xf32> to vector<8x112xf32>
    %518 = arith.addf %514, %517 : vector<8x112xf32>
    %cst_270 = arith.constant 0.000000e+00 : f32
    %519 = vector.broadcast %cst_270 : f32 to vector<8x112xf32>
    %520 = arith.maximumf %518, %519 : vector<8x112xf32>
    %c0_271 = arith.constant 0 : index
    %c0_272 = arith.constant 0 : index
    %521 = vector.load %arg13[%c0_271, %c0_272] : memref<112x64xbf16, #tpu.memory_space<vmem>>, vector<112x64xbf16>
    %522 = arith.truncf %520 : vector<8x112xf32> to vector<8x112xbf16>
    %cst_273 = arith.constant dense<0.000000e+00> : vector<8x64xf32>
    %523 = tpu.matmul %522, %521, %cst_273 {dimension_numbers = #tpu.dot_dimension_numbers<[1], [0], [0], [1], [0, 0, 1, 1], [], []>} : vector<8x112xbf16>, vector<112x64xbf16>, vector<8x64xf32> -> vector<8x64xf32>
    %c0_274 = arith.constant 0 : index
    %c0_275 = arith.constant 0 : index
    %524 = vector.load %arg14[%c0_274, %c0_275] : memref<1x64xf32, #tpu.memory_space<vmem>>, vector<1x64xf32>
    %525 = vector.broadcast %524 : vector<1x64xf32> to vector<8x64xf32>
    %526 = arith.addf %523, %525 : vector<8x64xf32>
    %c0_276 = arith.constant 0 : index
    %c0_277 = arith.constant 0 : index
    %527 = vector.load %arg15[%c0_276, %c0_277] : memref<64x64xbf16, #tpu.memory_space<vmem>>, vector<64x64xbf16>
    %528 = arith.truncf %526 : vector<8x64xf32> to vector<8x64xbf16>
    %cst_278 = arith.constant dense<0.000000e+00> : vector<8x64xf32>
    %529 = tpu.matmul %528, %527, %cst_278 {dimension_numbers = #tpu.dot_dimension_numbers<[1], [0], [0], [1], [0, 0, 1, 1], [], []>} : vector<8x64xbf16>, vector<64x64xbf16>, vector<8x64xf32> -> vector<8x64xf32>
    %c0_279 = arith.constant 0 : index
    %c0_280 = arith.constant 0 : index
    %530 = vector.load %arg17[%c0_279, %c0_280] : memref<1x64xf32, #tpu.memory_space<vmem>>, vector<1x64xf32>
    %531 = vector.broadcast %530 : vector<1x64xf32> to vector<8x64xf32>
    %532 = arith.addf %529, %531 : vector<8x64xf32>
    %533 = vector.extract_strided_slice %151 {offsets = [0, 0], sizes = [1, 64], strides = [1, 1]} : vector<8x64xf32> to vector<1x64xf32>
    %534 = vector.broadcast %533 : vector<1x64xf32> to vector<8x64xf32>
    %535 = arith.addf %532, %534 : vector<8x64xf32>
    %cst_281 = arith.constant 0.000000e+00 : f32
    %536 = vector.broadcast %cst_281 : f32 to vector<8x64xf32>
    %537 = arith.maximumf %535, %536 : vector<8x64xf32>
    %538 = vector.extract_strided_slice %151 {offsets = [1, 0], sizes = [1, 64], strides = [1, 1]} : vector<8x64xf32> to vector<1x64xf32>
    %539 = vector.broadcast %538 : vector<1x64xf32> to vector<8x64xf32>
    %540 = arith.addf %532, %539 : vector<8x64xf32>
    %cst_282 = arith.constant 0.000000e+00 : f32
    %541 = vector.broadcast %cst_282 : f32 to vector<8x64xf32>
    %542 = arith.maximumf %540, %541 : vector<8x64xf32>
    %543 = vector.extract_strided_slice %151 {offsets = [2, 0], sizes = [1, 64], strides = [1, 1]} : vector<8x64xf32> to vector<1x64xf32>
    %544 = vector.broadcast %543 : vector<1x64xf32> to vector<8x64xf32>
    %545 = arith.addf %532, %544 : vector<8x64xf32>
    %cst_283 = arith.constant 0.000000e+00 : f32
    %546 = vector.broadcast %cst_283 : f32 to vector<8x64xf32>
    %547 = arith.maximumf %545, %546 : vector<8x64xf32>
    %548 = vector.extract_strided_slice %151 {offsets = [3, 0], sizes = [1, 64], strides = [1, 1]} : vector<8x64xf32> to vector<1x64xf32>
    %549 = vector.broadcast %548 : vector<1x64xf32> to vector<8x64xf32>
    %550 = arith.addf %532, %549 : vector<8x64xf32>
    %cst_284 = arith.constant 0.000000e+00 : f32
    %551 = vector.broadcast %cst_284 : f32 to vector<8x64xf32>
    %552 = arith.maximumf %550, %551 : vector<8x64xf32>
    %553 = vector.extract_strided_slice %151 {offsets = [4, 0], sizes = [1, 64], strides = [1, 1]} : vector<8x64xf32> to vector<1x64xf32>
    %554 = vector.broadcast %553 : vector<1x64xf32> to vector<8x64xf32>
    %555 = arith.addf %532, %554 : vector<8x64xf32>
    %cst_285 = arith.constant 0.000000e+00 : f32
    %556 = vector.broadcast %cst_285 : f32 to vector<8x64xf32>
    %557 = arith.maximumf %555, %556 : vector<8x64xf32>
    %558 = vector.extract_strided_slice %151 {offsets = [5, 0], sizes = [1, 64], strides = [1, 1]} : vector<8x64xf32> to vector<1x64xf32>
    %559 = vector.broadcast %558 : vector<1x64xf32> to vector<8x64xf32>
    %560 = arith.addf %532, %559 : vector<8x64xf32>
    %cst_286 = arith.constant 0.000000e+00 : f32
    %561 = vector.broadcast %cst_286 : f32 to vector<8x64xf32>
    %562 = arith.maximumf %560, %561 : vector<8x64xf32>
    %563 = vector.extract_strided_slice %151 {offsets = [6, 0], sizes = [1, 64], strides = [1, 1]} : vector<8x64xf32> to vector<1x64xf32>
    %564 = vector.broadcast %563 : vector<1x64xf32> to vector<8x64xf32>
    %565 = arith.addf %532, %564 : vector<8x64xf32>
    %cst_287 = arith.constant 0.000000e+00 : f32
    %566 = vector.broadcast %cst_287 : f32 to vector<8x64xf32>
    %567 = arith.maximumf %565, %566 : vector<8x64xf32>
    %568 = vector.extract_strided_slice %151 {offsets = [7, 0], sizes = [1, 64], strides = [1, 1]} : vector<8x64xf32> to vector<1x64xf32>
    %569 = vector.broadcast %568 : vector<1x64xf32> to vector<8x64xf32>
    %570 = arith.addf %532, %569 : vector<8x64xf32>
    %cst_288 = arith.constant 0.000000e+00 : f32
    %571 = vector.broadcast %cst_288 : f32 to vector<8x64xf32>
    %572 = arith.maximumf %570, %571 : vector<8x64xf32>
    %573 = tpu.concatenate %537, %542, %547, %552, %557, %562, %567, %572 in 0 : vector<8x64xf32>, vector<8x64xf32>, vector<8x64xf32>, vector<8x64xf32>, vector<8x64xf32>, vector<8x64xf32>, vector<8x64xf32>, vector<8x64xf32> -> vector<64x64xf32>
    %c0_289 = arith.constant 0 : index
    %c0_290 = arith.constant 0 : index
    %574 = vector.load %arg18[%c0_289, %c0_290] : memref<64x64xbf16, #tpu.memory_space<vmem>>, vector<64x64xbf16>
    %575 = arith.truncf %573 : vector<64x64xf32> to vector<64x64xbf16>
    %cst_291 = arith.constant dense<0.000000e+00> : vector<64x64xf32>
    %576 = tpu.matmul %575, %574, %cst_291 {dimension_numbers = #tpu.dot_dimension_numbers<[1], [0], [0], [1], [0, 0, 1, 1], [], []>} : vector<64x64xbf16>, vector<64x64xbf16>, vector<64x64xf32> -> vector<64x64xf32>
    %c0_292 = arith.constant 0 : index
    %c0_293 = arith.constant 0 : index
    %577 = vector.load %arg19[%c0_292, %c0_293] : memref<1x64xf32, #tpu.memory_space<vmem>>, vector<1x64xf32>
    %578 = vector.broadcast %577 : vector<1x64xf32> to vector<64x64xf32>
    %579 = arith.addf %576, %578 : vector<64x64xf32>
    %cst_294 = arith.constant 0.000000e+00 : f32
    %580 = vector.broadcast %cst_294 : f32 to vector<64x64xf32>
    %581 = arith.maximumf %579, %580 : vector<64x64xf32>
    %582 = vector.extract_strided_slice %581 {offsets = [0, 0], sizes = [8, 64], strides = [1, 1]} : vector<64x64xf32> to vector<8x64xf32>
    %583 = vector.extract_strided_slice %581 {offsets = [8, 0], sizes = [8, 64], strides = [1, 1]} : vector<64x64xf32> to vector<8x64xf32>
    %584 = arith.maximumf %582, %583 : vector<8x64xf32>
    %585 = vector.extract_strided_slice %581 {offsets = [16, 0], sizes = [8, 64], strides = [1, 1]} : vector<64x64xf32> to vector<8x64xf32>
    %586 = arith.maximumf %584, %585 : vector<8x64xf32>
    %587 = vector.extract_strided_slice %581 {offsets = [24, 0], sizes = [8, 64], strides = [1, 1]} : vector<64x64xf32> to vector<8x64xf32>
    %588 = arith.maximumf %586, %587 : vector<8x64xf32>
    %589 = vector.extract_strided_slice %581 {offsets = [32, 0], sizes = [8, 64], strides = [1, 1]} : vector<64x64xf32> to vector<8x64xf32>
    %590 = arith.maximumf %588, %589 : vector<8x64xf32>
    %591 = vector.extract_strided_slice %581 {offsets = [40, 0], sizes = [8, 64], strides = [1, 1]} : vector<64x64xf32> to vector<8x64xf32>
    %592 = arith.maximumf %590, %591 : vector<8x64xf32>
    %593 = vector.extract_strided_slice %581 {offsets = [48, 0], sizes = [8, 64], strides = [1, 1]} : vector<64x64xf32> to vector<8x64xf32>
    %594 = arith.maximumf %592, %593 : vector<8x64xf32>
    %595 = vector.extract_strided_slice %581 {offsets = [56, 0], sizes = [8, 64], strides = [1, 1]} : vector<64x64xf32> to vector<8x64xf32>
    %596 = arith.maximumf %594, %595 : vector<8x64xf32>
    %c0_295 = arith.constant 0 : index
    %c0_296 = arith.constant 0 : index
    %597 = vector.load %arg20[%c0_295, %c0_296] : memref<64x112xbf16, #tpu.memory_space<vmem>>, vector<64x112xbf16>
    %598 = arith.truncf %596 : vector<8x64xf32> to vector<8x64xbf16>
    %cst_297 = arith.constant dense<0.000000e+00> : vector<8x112xf32>
    %599 = tpu.matmul %598, %597, %cst_297 {dimension_numbers = #tpu.dot_dimension_numbers<[1], [0], [0], [1], [0, 0, 1, 1], [], []>} : vector<8x64xbf16>, vector<64x112xbf16>, vector<8x112xf32> -> vector<8x112xf32>
    %c0_298 = arith.constant 0 : index
    %c0_299 = arith.constant 0 : index
    %600 = vector.load %arg21[%c0_298, %c0_299] : memref<1x112xf32, #tpu.memory_space<vmem>>, vector<1x112xf32>
    %601 = vector.broadcast %600 : vector<1x112xf32> to vector<8x112xf32>
    %602 = arith.addf %599, %601 : vector<8x112xf32>
    %603 = arith.addf %602, %520 : vector<8x112xf32>
    %c0_300 = arith.constant 0 : index
    %c0_301 = arith.constant 0 : index
    %604 = vector.load %arg22[%c0_300, %c0_301] : memref<112x64xbf16, #tpu.memory_space<vmem>>, vector<112x64xbf16>
    %605 = arith.truncf %603 : vector<8x112xf32> to vector<8x112xbf16>
    %cst_302 = arith.constant dense<0.000000e+00> : vector<8x64xf32>
    %606 = tpu.matmul %605, %604, %cst_302 {dimension_numbers = #tpu.dot_dimension_numbers<[1], [0], [0], [1], [0, 0, 1, 1], [], []>} : vector<8x112xbf16>, vector<112x64xbf16>, vector<8x64xf32> -> vector<8x64xf32>
    %c0_303 = arith.constant 0 : index
    %c0_304 = arith.constant 0 : index
    %607 = vector.load %arg23[%c0_303, %c0_304] : memref<1x64xf32, #tpu.memory_space<vmem>>, vector<1x64xf32>
    %608 = vector.broadcast %607 : vector<1x64xf32> to vector<8x64xf32>
    %609 = arith.addf %606, %608 : vector<8x64xf32>
    %610 = arith.truncf %609 : vector<8x64xf32> to vector<8x64xbf16>
    %c0_305 = arith.constant 0 : index
    %c0_306 = arith.constant 0 : index
    %611 = vector.load %arg24[%c0_305, %c0_306] : memref<64x16384xbf16, #tpu.memory_space<vmem>>, vector<64x4096xbf16>
    %cst_307 = arith.constant dense<0.000000e+00> : vector<8x4096xf32>
    %612 = tpu.matmul %610, %611, %cst_307 {dimension_numbers = #tpu.dot_dimension_numbers<[1], [0], [0], [1], [0, 0, 1, 1], [], []>} : vector<8x64xbf16>, vector<64x4096xbf16>, vector<8x4096xf32> -> vector<8x4096xf32>
    %c0_308 = arith.constant 0 : index
    %c0_309 = arith.constant 0 : index
    %613 = vector.load %arg25[%c0_308, %c0_309] : memref<1x16384xf32, #tpu.memory_space<vmem>>, vector<1x4096xf32>
    %614 = vector.broadcast %613 : vector<1x4096xf32> to vector<8x4096xf32>
    %615 = arith.addf %612, %614 : vector<8x4096xf32>
    %c0_310 = arith.constant 0 : index
    %c0_311 = arith.constant 0 : index
    %c0_312 = arith.constant 0 : index
    %616 = vector.load %arg26[%c0_310, %c0_311, %c0_312] : memref<1x8x16384xf32, #tpu.memory_space<vmem>>, vector<1x8x4096xf32>
    %617 = vector.shape_cast %616 : vector<1x8x4096xf32> to vector<8x4096xf32>
    %618 = vector.shape_cast %615 : vector<8x4096xf32> to vector<1x8x4096xf32>
    tpu.vector_store %arg26[%c0_310, %c0_311, %c0_312], %618 {strides = array<i32>} : memref<1x8x16384xf32, #tpu.memory_space<vmem>>, vector<1x8x4096xf32>,
    %c0_313 = arith.constant 0 : index
    %c4096 = arith.constant 4096 : index
    %619 = vector.load %arg24[%c0_313, %c4096] : memref<64x16384xbf16, #tpu.memory_space<vmem>>, vector<64x4096xbf16>
    %cst_314 = arith.constant dense<0.000000e+00> : vector<8x4096xf32>
    %620 = tpu.matmul %610, %619, %cst_314 {dimension_numbers = #tpu.dot_dimension_numbers<[1], [0], [0], [1], [0, 0, 1, 1], [], []>} : vector<8x64xbf16>, vector<64x4096xbf16>, vector<8x4096xf32> -> vector<8x4096xf32>
    %c0_315 = arith.constant 0 : index
    %c4096_316 = arith.constant 4096 : index
    %621 = vector.load %arg25[%c0_315, %c4096_316] : memref<1x16384xf32, #tpu.memory_space<vmem>>, vector<1x4096xf32>
    %622 = vector.broadcast %621 : vector<1x4096xf32> to vector<8x4096xf32>
    %623 = arith.addf %620, %622 : vector<8x4096xf32>
    %c0_317 = arith.constant 0 : index
    %c0_318 = arith.constant 0 : index
    %c4096_319 = arith.constant 4096 : index
    %624 = vector.load %arg26[%c0_317, %c0_318, %c4096_319] : memref<1x8x16384xf32, #tpu.memory_space<vmem>>, vector<1x8x4096xf32>
    %625 = vector.shape_cast %624 : vector<1x8x4096xf32> to vector<8x4096xf32>
    %626 = vector.shape_cast %623 : vector<8x4096xf32> to vector<1x8x4096xf32>
    tpu.vector_store %arg26[%c0_317, %c0_318, %c4096_319], %626 {strides = array<i32>} : memref<1x8x16384xf32, #tpu.memory_space<vmem>>, vector<1x8x4096xf32>,
    %c0_320 = arith.constant 0 : index
    %c8192 = arith.constant 8192 : index
    %627 = vector.load %arg24[%c0_320, %c8192] : memref<64x16384xbf16, #tpu.memory_space<vmem>>, vector<64x4096xbf16>
    %cst_321 = arith.constant dense<0.000000e+00> : vector<8x4096xf32>
    %628 = tpu.matmul %610, %627, %cst_321 {dimension_numbers = #tpu.dot_dimension_numbers<[1], [0], [0], [1], [0, 0, 1, 1], [], []>} : vector<8x64xbf16>, vector<64x4096xbf16>, vector<8x4096xf32> -> vector<8x4096xf32>
    %c0_322 = arith.constant 0 : index
    %c8192_323 = arith.constant 8192 : index
    %629 = vector.load %arg25[%c0_322, %c8192_323] : memref<1x16384xf32, #tpu.memory_space<vmem>>, vector<1x4096xf32>
    %630 = vector.broadcast %629 : vector<1x4096xf32> to vector<8x4096xf32>
    %631 = arith.addf %628, %630 : vector<8x4096xf32>
    %c0_324 = arith.constant 0 : index
    %c0_325 = arith.constant 0 : index
    %c8192_326 = arith.constant 8192 : index
    %632 = vector.load %arg26[%c0_324, %c0_325, %c8192_326] : memref<1x8x16384xf32, #tpu.memory_space<vmem>>, vector<1x8x4096xf32>
    %633 = vector.shape_cast %632 : vector<1x8x4096xf32> to vector<8x4096xf32>
    %634 = vector.shape_cast %631 : vector<8x4096xf32> to vector<1x8x4096xf32>
    tpu.vector_store %arg26[%c0_324, %c0_325, %c8192_326], %634 {strides = array<i32>} : memref<1x8x16384xf32, #tpu.memory_space<vmem>>, vector<1x8x4096xf32>,
    %c0_327 = arith.constant 0 : index
    %c12288 = arith.constant 12288 : index
    %635 = vector.load %arg24[%c0_327, %c12288] : memref<64x16384xbf16, #tpu.memory_space<vmem>>, vector<64x4096xbf16>
    %cst_328 = arith.constant dense<0.000000e+00> : vector<8x4096xf32>
    %636 = tpu.matmul %610, %635, %cst_328 {dimension_numbers = #tpu.dot_dimension_numbers<[1], [0], [0], [1], [0, 0, 1, 1], [], []>} : vector<8x64xbf16>, vector<64x4096xbf16>, vector<8x4096xf32> -> vector<8x4096xf32>
    %c0_329 = arith.constant 0 : index
    %c12288_330 = arith.constant 12288 : index
    %637 = vector.load %arg25[%c0_329, %c12288_330] : memref<1x16384xf32, #tpu.memory_space<vmem>>, vector<1x4096xf32>
    %638 = vector.broadcast %637 : vector<1x4096xf32> to vector<8x4096xf32>
    %639 = arith.addf %636, %638 : vector<8x4096xf32>
    %c0_331 = arith.constant 0 : index
    %c0_332 = arith.constant 0 : index
    %c12288_333 = arith.constant 12288 : index
    %640 = vector.load %arg26[%c0_331, %c0_332, %c12288_333] : memref<1x8x16384xf32, #tpu.memory_space<vmem>>, vector<1x8x4096xf32>
    %641 = vector.shape_cast %640 : vector<1x8x4096xf32> to vector<8x4096xf32>
    %642 = vector.shape_cast %639 : vector<8x4096xf32> to vector<1x8x4096xf32>
    tpu.vector_store %arg26[%c0_331, %c0_332, %c12288_333], %642 {strides = array<i32>} : memref<1x8x16384xf32, #tpu.memory_space<vmem>>, vector<1x8x4096xf32>,
    return
  }
  func.func @transform_0(%arg0: i32) -> (i32, i32, i32) {
    %c0_i32 = arith.constant 0 : i32
    %c0_i32_0 = arith.constant 0 : i32
    %c0_i32_1 = arith.constant 0 : i32
    return %arg0, %c0_i32, %c0_i32_0 : i32, i32, i32
  }
  func.func @transform_1(%arg0: i32) -> (i32, i32, i32) {
    %c0_i32 = arith.constant 0 : i32
    %c0_i32_0 = arith.constant 0 : i32
    %c0_i32_1 = arith.constant 0 : i32
    return %arg0, %c0_i32, %c0_i32_0 : i32, i32, i32
  }
  func.func @transform_2(%arg0: i32) -> (i32, i32) {
    %c0_i32 = arith.constant 0 : i32
    %c0_i32_0 = arith.constant 0 : i32
    %c0_i32_1 = arith.constant 0 : i32
    return %c0_i32, %c0_i32_0 : i32, i32
  }
  func.func @transform_3(%arg0: i32) -> (i32, i32) {
    %c0_i32 = arith.constant 0 : i32
    %c0_i32_0 = arith.constant 0 : i32
    %c0_i32_1 = arith.constant 0 : i32
    return %c0_i32, %c0_i32_0 : i32, i32
  }
  func.func @transform_4(%arg0: i32) -> (i32, i32, i32) {
    %c0_i32 = arith.constant 0 : i32
    %c0_i32_0 = arith.constant 0 : i32
    %c0_i32_1 = arith.constant 0 : i32
    %c0_i32_2 = arith.constant 0 : i32
    return %c0_i32, %c0_i32_0, %c0_i32_1 : i32, i32, i32
  }
  func.func @transform_5(%arg0: i32) -> (i32, i32, i32) {
    %c0_i32 = arith.constant 0 : i32
    %c0_i32_0 = arith.constant 0 : i32
    %c0_i32_1 = arith.constant 0 : i32
    %c0_i32_2 = arith.constant 0 : i32
    return %c0_i32, %c0_i32_0, %c0_i32_1 : i32, i32, i32
  }
  func.func @transform_6(%arg0: i32) -> (i32, i32) {
    %c0_i32 = arith.constant 0 : i32
    %c0_i32_0 = arith.constant 0 : i32
    %c0_i32_1 = arith.constant 0 : i32
    return %c0_i32, %c0_i32_0 : i32, i32
  }
  func.func @transform_7(%arg0: i32) -> (i32, i32) {
    %c0_i32 = arith.constant 0 : i32
    %c0_i32_0 = arith.constant 0 : i32
    %c0_i32_1 = arith.constant 0 : i32
    return %c0_i32, %c0_i32_0 : i32, i32
  }
  func.func @transform_8(%arg0: i32) -> (i32, i32) {
    %c0_i32 = arith.constant 0 : i32
    %c0_i32_0 = arith.constant 0 : i32
    %c0_i32_1 = arith.constant 0 : i32
    return %c0_i32, %c0_i32_0 : i32, i32
  }
  func.func @transform_9(%arg0: i32) -> (i32, i32) {
    %c0_i32 = arith.constant 0 : i32
    %c0_i32_0 = arith.constant 0 : i32
    %c0_i32_1 = arith.constant 0 : i32
    return %c0_i32, %c0_i32_0 : i32, i32
  }
  func.func @transform_10(%arg0: i32) -> (i32, i32, i32) {
    %c0_i32 = arith.constant 0 : i32
    %c0_i32_0 = arith.constant 0 : i32
    %c0_i32_1 = arith.constant 0 : i32
    %c0_i32_2 = arith.constant 0 : i32
    return %c0_i32, %c0_i32_0, %c0_i32_1 : i32, i32, i32
  }
  func.func @transform_11(%arg0: i32) -> (i32, i32, i32) {
    %c0_i32 = arith.constant 0 : i32
    %c0_i32_0 = arith.constant 0 : i32
    %c0_i32_1 = arith.constant 0 : i32
    %c0_i32_2 = arith.constant 0 : i32
    return %c0_i32, %c0_i32_0, %c0_i32_1 : i32, i32, i32
  }
  func.func @transform_12(%arg0: i32) -> (i32, i32) {
    %c0_i32 = arith.constant 0 : i32
    %c0_i32_0 = arith.constant 0 : i32
    %c0_i32_1 = arith.constant 0 : i32
    return %c0_i32, %c0_i32_0 : i32, i32
  }
  func.func @transform_13(%arg0: i32) -> (i32, i32) {
    %c0_i32 = arith.constant 0 : i32
    %c0_i32_0 = arith.constant 0 : i32
    %c0_i32_1 = arith.constant 0 : i32
    return %c0_i32, %c0_i32_0 : i32, i32
  }
  func.func @transform_14(%arg0: i32) -> (i32, i32) {
    %c0_i32 = arith.constant 0 : i32
    %c0_i32_0 = arith.constant 0 : i32
    %c0_i32_1 = arith.constant 0 : i32
    return %c0_i32, %c0_i32_0 : i32, i32
  }
  func.func @transform_15(%arg0: i32) -> (i32, i32) {
    %c0_i32 = arith.constant 0 : i32
    %c0_i32_0 = arith.constant 0 : i32
    %c0_i32_1 = arith.constant 0 : i32
    return %c0_i32, %c0_i32_0 : i32, i32
  }
  func.func @transform_16(%arg0: i32) -> (i32, i32) {
    %c0_i32 = arith.constant 0 : i32
    %c0_i32_0 = arith.constant 0 : i32
    %c0_i32_1 = arith.constant 0 : i32
    return %c0_i32, %c0_i32_0 : i32, i32
  }
  func.func @transform_17(%arg0: i32) -> (i32, i32) {
    %c0_i32 = arith.constant 0 : i32
    %c0_i32_0 = arith.constant 0 : i32
    %c0_i32_1 = arith.constant 0 : i32
    return %c0_i32, %c0_i32_0 : i32, i32
  }
  func.func @transform_18(%arg0: i32) -> (i32, i32) {
    %c0_i32 = arith.constant 0 : i32
    %c0_i32_0 = arith.constant 0 : i32
    %c0_i32_1 = arith.constant 0 : i32
    return %c0_i32, %c0_i32_0 : i32, i32
  }
  func.func @transform_19(%arg0: i32) -> (i32, i32) {
    %c0_i32 = arith.constant 0 : i32
    %c0_i32_0 = arith.constant 0 : i32
    %c0_i32_1 = arith.constant 0 : i32
    return %c0_i32, %c0_i32_0 : i32, i32
  }
  func.func @transform_20(%arg0: i32) -> (i32, i32) {
    %c0_i32 = arith.constant 0 : i32
    %c0_i32_0 = arith.constant 0 : i32
    %c0_i32_1 = arith.constant 0 : i32
    return %c0_i32, %c0_i32_0 : i32, i32
  }
  func.func @transform_21(%arg0: i32) -> (i32, i32) {
    %c0_i32 = arith.constant 0 : i32
    %c0_i32_0 = arith.constant 0 : i32
    %c0_i32_1 = arith.constant 0 : i32
    return %c0_i32, %c0_i32_0 : i32, i32
  }
  func.func @transform_22(%arg0: i32) -> (i32, i32) {
    %c0_i32 = arith.constant 0 : i32
    %c0_i32_0 = arith.constant 0 : i32
    %c0_i32_1 = arith.constant 0 : i32
    return %c0_i32, %c0_i32_0 : i32, i32
  }
  func.func @transform_23(%arg0: i32) -> (i32, i32) {
    %c0_i32 = arith.constant 0 : i32
    %c0_i32_0 = arith.constant 0 : i32
    %c0_i32_1 = arith.constant 0 : i32
    return %c0_i32, %c0_i32_0 : i32, i32
  }
  func.func @transform_24(%arg0: i32) -> (i32, i32) {
    %c0_i32 = arith.constant 0 : i32
    %c0_i32_0 = arith.constant 0 : i32
    %c0_i32_1 = arith.constant 0 : i32
    return %c0_i32, %c0_i32_0 : i32, i32
  }
  func.func @transform_25(%arg0: i32) -> (i32, i32, i32) {
    %c0_i32 = arith.constant 0 : i32
    %c0_i32_0 = arith.constant 0 : i32
    %c0_i32_1 = arith.constant 0 : i32
    return %arg0, %c0_i32, %c0_i32_0 : i32, i32, i32
  }
}

</mosaic_0001>

<llo_original>
// kernel: seq2seq_forward.1
$region0: #{seq2seq_forward.1}
  #allocation0 [shape = 'u32[]', space=smem, size = 0x4, offset = 0x4, fixed_abs, tag = 'smem constant byte address 0x4 - core index']
  #allocation1 [shape = 'u32[72,128]{1,0:T(1,128)}', space=vmem, size = 0x9000, scoped, tag = 'internal scratch']
  %s0 = inlined_call_operand.vmem [shape: f32[2,8,64], index: 0, kind: input, shape index: {}]
  %s1 = inlined_call_operand.vmem [shape: f32[2,8,64], index: 1, kind: input, shape index: {}]
  %s2 = inlined_call_operand.vmem [shape: bf16[64,112], index: 2, kind: input, shape index: {}]
  %s3 = inlined_call_operand.vmem [shape: f32[1,112], index: 3, kind: input, shape index: {}]
  %s4 = inlined_call_operand.vmem [shape: bf16[12,112,112], index: 4, kind: input, shape index: {}]
  %s5 = inlined_call_operand.vmem [shape: f32[4,1,112], index: 5, kind: input, shape index: {}]
  %s6 = inlined_call_operand.vmem [shape: bf16[112,64], index: 6, kind: input, shape index: {}]
  %s7 = inlined_call_operand.vmem [shape: f32[1,64], index: 7, kind: input, shape index: {}]
  %s8 = inlined_call_operand.vmem [shape: bf16[64,112], index: 8, kind: input, shape index: {}]
  %s9 = inlined_call_operand.vmem [shape: f32[1,112], index: 9, kind: input, shape index: {}]
  %s10 = inlined_call_operand.vmem [shape: bf16[12,112,112], index: 10, kind: input, shape index: {}]
  %s11 = inlined_call_operand.vmem [shape: f32[4,1,112], index: 11, kind: input, shape index: {}]
  %s12 = inlined_call_operand.vmem [shape: bf16[112,64], index: 12, kind: input, shape index: {}]
  %s13 = inlined_call_operand.vmem [shape: f32[1,64], index: 13, kind: input, shape index: {}]
  %s14 = inlined_call_operand.vmem [shape: bf16[64,64], index: 14, kind: input, shape index: {}]
  %s15 = inlined_call_operand.vmem [shape: bf16[64,64], index: 15, kind: input, shape index: {}]
  %s16 = inlined_call_operand.vmem [shape: f32[1,64], index: 16, kind: input, shape index: {}]
  %s17 = inlined_call_operand.vmem [shape: bf16[64,64], index: 17, kind: input, shape index: {}]
  %s18 = inlined_call_operand.vmem [shape: f32[1,64], index: 18, kind: input, shape index: {}]
  %s19 = inlined_call_operand.vmem [shape: bf16[64,112], index: 19, kind: input, shape index: {}]
  %s20 = inlined_call_operand.vmem [shape: f32[1,112], index: 20, kind: input, shape index: {}]
  %s21 = inlined_call_operand.vmem [shape: bf16[112,64], index: 21, kind: input, shape index: {}]
  %s22 = inlined_call_operand.vmem [shape: f32[1,64], index: 22, kind: input, shape index: {}]
  %s23 = inlined_call_operand.vmem [shape: bf16[64,16384], index: 23, kind: input, shape index: {}]
  %s24 = inlined_call_operand.vmem [shape: f32[1,16384], index: 24, kind: input, shape index: {}]
  %s25 = inlined_call_operand.hbm [shape: f32[2,8,16384], index: 25, kind: output, shape index: {}]
  %s26 = sld [smem:[#allocation0]]
  $region133: #{seq2seq_forward.1} parent=0
    _
  %s28 = ssub.s32 1, %s26
  %s29 = scalar_select 0, %s28, %s26
  $region1: #{seq2seq_forward.1} parent=0
    #allocation2 [shape = 'u8[1048576]{0}', space=vmem, size = 0x100000, scoped, tag = 'output window, operand 0']
    #allocation3 [shape = 's32[2]{0}', space=sflag, size = 0x8, scoped, tag = 'scoped memory for seq2seq_forward.1']
    %30 = vsyncpa [#allocation3], 0
    %s31 = scalar_lea.sflag [#allocation3], 1
    %32 = vsyncpa %s31, 0
    loop: start=0, step=1, limit=4
    $region2: #{seq2seq_forward.1} parent=1 // loop_pre_header
      _
    $region3: #{seq2seq_forward.1} parent=1 // loop_header
      %s34 = sphi 0, %s38
      %p35 = scmp.ge.s32.totalorder %s34, 4
      %s44 = sphi 0, %s46
      %s47 = sphi 0, %s44
      %s48 = sphi 0, %s47
      %s64 = sphi 0, %s48
      %s70 = sphi 0, %s72
      %s73 = sphi 0, %s70
      %s74 = sphi 0, %s73
      %s90 = sphi 0, %s74
      %s94 = sphi 0, %s94
      %s96 = sphi 0, %s94
      %s97 = sphi 0, %s96
      %s111 = sphi 0, %s97
      %s115 = sphi 0, %s115
      %s117 = sphi 0, %s115
      %s118 = sphi 0, %s117
      %s132 = sphi 0, %s118
      %s136 = sphi 0, %s136
      %s138 = sphi 0, %s136
      %s139 = sphi 0, %s138
      %s153 = sphi 0, %s139
      %s157 = sphi 0, %s157
      %s159 = sphi 0, %s157
      %s160 = sphi 0, %s159
      %s174 = sphi 0, %s160
      %s178 = sphi 0, %s178
      %s180 = sphi 0, %s178
      %s181 = sphi 0, %s180
      %s195 = sphi 0, %s181
      %s199 = sphi 0, %s199
      %s201 = sphi 0, %s199
      %s202 = sphi 0, %s201
      %s216 = sphi 0, %s202
      %s220 = sphi 0, %s220
      %s222 = sphi 0, %s220
      %s223 = sphi 0, %s222
      %s237 = sphi 0, %s223
      %s241 = sphi 0, %s241
      %s243 = sphi 0, %s241
      %s244 = sphi 0, %s243
      %s258 = sphi 0, %s244
      %s262 = sphi 0, %s262
      %s264 = sphi 0, %s262
      %s265 = sphi 0, %s264
      %s279 = sphi 0, %s265
      %s283 = sphi 0, %s283
      %s285 = sphi 0, %s283
      %s286 = sphi 0, %s285
      %s300 = sphi 0, %s286
      %s304 = sphi 0, %s304
      %s306 = sphi 0, %s304
      %s307 = sphi 0, %s306
      %s321 = sphi 0, %s307
      %s325 = sphi 0, %s325
      %s327 = sphi 0, %s325
      %s328 = sphi 0, %s327
      %s342 = sphi 0, %s328
      %s346 = sphi 0, %s346
      %s348 = sphi 0, %s346
      %s349 = sphi 0, %s348
      %s363 = sphi 0, %s349
      %s367 = sphi 0, %s367
      %s369 = sphi 0, %s367
      %s370 = sphi 0, %s369
      %s384 = sphi 0, %s370
      %s388 = sphi 0, %s388
      %s390 = sphi 0, %s388
      %s391 = sphi 0, %s390
      %s405 = sphi 0, %s391
      %s409 = sphi 0, %s409
      %s411 = sphi 0, %s409
      %s412 = sphi 0, %s411
      %s426 = sphi 0, %s412
      %s430 = sphi 0, %s430
      %s432 = sphi 0, %s430
      %s433 = sphi 0, %s432
      %s447 = sphi 0, %s433
      %s451 = sphi 0, %s451
      %s453 = sphi 0, %s451
      %s454 = sphi 0, %s453
      %s468 = sphi 0, %s454
      %s472 = sphi 0, %s472
      %s474 = sphi 0, %s472
      %s475 = sphi 0, %s474
      %s489 = sphi 0, %s475
      %s493 = sphi 0, %s493
      %s495 = sphi 0, %s493
      %s496 = sphi 0, %s495
      %s510 = sphi 0, %s496
      %s514 = sphi 0, %s514
      %s516 = sphi 0, %s514
      %s517 = sphi 0, %s516
      %s531 = sphi 0, %s517
      %s535 = sphi 0, %s535
      %s537 = sphi 0, %s535
      %s538 = sphi 0, %s537
      %s552 = sphi 0, %s538
      %s556 = sphi 0, %s556
      %s558 = sphi 0, %s556
      %s559 = sphi 0, %s558
      %s573 = sphi 0, %s559
      %s579 = sphi 0, %s581
      %s582 = sphi 0, %s579
      %s583 = sphi 0, %s582
      %s599 = sphi 0, %s583
    $region4: #{seq2seq_forward.1} parent=1 // loop_header_branch
      %37 = sbr.rel (%p35) target = $region8
    $region5: #{seq2seq_forward.1} parent=1 // loop_body
      %s39 = ssub.s32 %s34, 1
      %s40 = ssub.s32 %s34, 2
      %s41 = sadd.s32 %s34, 1
      %s42 = ssub.s32 %s34, %s41
      %p43 = scmp.eq.s32.totalorder %s42, 0
      %s45 = sadd.s32 %s44, 1
      %s46 = scalar_select %p43, %s44, %s45
      %p49 = pneg %p43
      %p50 = scmp.eq.s32.totalorder %s34, 1
      %p51 = por %p49, %p50
      %p52 = scmp.ne.s32.totalorder %s44, %s47
      %p53 = scmp.eq.s32.totalorder %s34, 0
      %p54 = por %p52, %p53
      %p55 = scmp.ne.s32.totalorder %s44, %s47
      %p56 = scmp.eq.s32.totalorder %s39, 1
      %p57 = por %p55, %p56
      %p58 = scmp.ne.s32.totalorder %s47, %s48
      %p59 = scmp.eq.s32.totalorder %s39, 0
      %p60 = por %p58, %p59
      %p61 = scmp.ne.s32.totalorder %s47, %s48
      %p62 = scmp.eq.s32.totalorder %s40, 1
      %p63 = por %p61, %p62
      %p65 = scmp.ne.s32.totalorder %s48, %s64
      %p66 = scmp.eq.s32.totalorder %s40, 0
      %p67 = por %p65, %p66
      %s68 = ssub.s32 %s34, %s41
      %p69 = scmp.eq.s32.totalorder %s68, 0
      %s71 = sadd.s32 %s70, 1
      %s72 = scalar_select %p69, %s70, %s71
      %p75 = pneg %p69
      %p76 = scmp.eq.s32.totalorder %s34, 1
      %p77 = por %p75, %p76
      %p78 = scmp.ne.s32.totalorder %s70, %s73
      %p79 = scmp.eq.s32.totalorder %s34, 0
      %p80 = por %p78, %p79
      %p81 = scmp.ne.s32.totalorder %s70, %s73
      %p82 = scmp.eq.s32.totalorder %s39, 1
      %p83 = por %p81, %p82
      %p84 = scmp.ne.s32.totalorder %s73, %s74
      %p85 = scmp.eq.s32.totalorder %s39, 0
      %p86 = por %p84, %p85
      %p87 = scmp.ne.s32.totalorder %s73, %s74
      %p88 = scmp.eq.s32.totalorder %s40, 1
      %p89 = por %p87, %p88
      %p91 = scmp.ne.s32.totalorder %s74, %s90
      %p92 = scmp.eq.s32.totalorder %s40, 0
      %p93 = por %p91, %p92
      %s95 = sadd.s32 %s94, 1
      %p98 = scmp.eq.s32.totalorder %s34, 1
      %p99 = scmp.ne.s32.totalorder %s94, %s96
      %p100 = scmp.eq.s32.totalorder %s34, 0
      %p101 = por %p99, %p100
      %p102 = scmp.ne.s32.totalorder %s94, %s96
      %p103 = scmp.eq.s32.totalorder %s39, 1
      %p104 = por %p102, %p103
      %p105 = scmp.ne.s32.totalorder %s96, %s97
      %p106 = scmp.eq.s32.totalorder %s39, 0
      %p107 = por %p105, %p106
      %p108 = scmp.ne.s32.totalorder %s96, %s97
      %p109 = scmp.eq.s32.totalorder %s40, 1
      %p110 = por %p108, %p109
      %p112 = scmp.ne.s32.totalorder %s97, %s111
      %p113 = scmp.eq.s32.totalorder %s40, 0
      %p114 = por %p112, %p113
      %s116 = sadd.s32 %s115, 1
      %p119 = scmp.eq.s32.totalorder %s34, 1
      %p120 = scmp.ne.s32.totalorder %s115, %s117
      %p121 = scmp.eq.s32.totalorder %s34, 0
      %p122 = por %p120, %p121
      %p123 = scmp.ne.s32.totalorder %s115, %s117
      %p124 = scmp.eq.s32.totalorder %s39, 1
      %p125 = por %p123, %p124
      %p126 = scmp.ne.s32.totalorder %s117, %s118
      %p127 = scmp.eq.s32.totalorder %s39, 0
      %p128 = por %p126, %p127
      %p129 = scmp.ne.s32.totalorder %s117, %s118
      %p130 = scmp.eq.s32.totalorder %s40, 1
      %p131 = por %p129, %p130
      %p133 = scmp.ne.s32.totalorder %s118, %s132
      %p134 = scmp.eq.s32.totalorder %s40, 0
      %p135 = por %p133, %p134
      %s137 = sadd.s32 %s136, 1
      %p140 = scmp.eq.s32.totalorder %s34, 1
      %p141 = scmp.ne.s32.totalorder %s136, %s138
      %p142 = scmp.eq.s32.totalorder %s34, 0
      %p143 = por %p141, %p142
      %p144 = scmp.ne.s32.totalorder %s136, %s138
      %p145 = scmp.eq.s32.totalorder %s39, 1
      %p146 = por %p144, %p145
      %p147 = scmp.ne.s32.totalorder %s138, %s139
      %p148 = scmp.eq.s32.totalorder %s39, 0
      %p149 = por %p147, %p148
      %p150 = scmp.ne.s32.totalorder %s138, %s139
      %p151 = scmp.eq.s32.totalorder %s40, 1
      %p152 = por %p150, %p151
      %p154 = scmp.ne.s32.totalorder %s139, %s153
      %p155 = scmp.eq.s32.totalorder %s40, 0
      %p156 = por %p154, %p155
      %s158 = sadd.s32 %s157, 1
      %p161 = scmp.eq.s32.totalorder %s34, 1
      %p162 = scmp.ne.s32.totalorder %s157, %s159
      %p163 = scmp.eq.s32.totalorder %s34, 0
      %p164 = por %p162, %p163
      %p165 = scmp.ne.s32.totalorder %s157, %s159
      %p166 = scmp.eq.s32.totalorder %s39, 1
      %p167 = por %p165, %p166
      %p168 = scmp.ne.s32.totalorder %s159, %s160
      %p169 = scmp.eq.s32.totalorder %s39, 0
      %p170 = por %p168, %p169
      %p171 = scmp.ne.s32.totalorder %s159, %s160
      %p172 = scmp.eq.s32.totalorder %s40, 1
      %p173 = por %p171, %p172
      %p175 = scmp.ne.s32.totalorder %s160, %s174
      %p176 = scmp.eq.s32.totalorder %s40, 0
      %p177 = por %p175, %p176
      %s179 = sadd.s32 %s178, 1
      %p182 = scmp.eq.s32.totalorder %s34, 1
      %p183 = scmp.ne.s32.totalorder %s178, %s180
      %p184 = scmp.eq.s32.totalorder %s34, 0
      %p185 = por %p183, %p184
      %p186 = scmp.ne.s32.totalorder %s178, %s180
      %p187 = scmp.eq.s32.totalorder %s39, 1
      %p188 = por %p186, %p187
      %p189 = scmp.ne.s32.totalorder %s180, %s181
      %p190 = scmp.eq.s32.totalorder %s39, 0
      %p191 = por %p189, %p190
      %p192 = scmp.ne.s32.totalorder %s180, %s181
      %p193 = scmp.eq.s32.totalorder %s40, 1
      %p194 = por %p192, %p193
      %p196 = scmp.ne.s32.totalorder %s181, %s195
      %p197 = scmp.eq.s32.totalorder %s40, 0
      %p198 = por %p196, %p197
      %s200 = sadd.s32 %s199, 1
      %p203 = scmp.eq.s32.totalorder %s34, 1
      %p204 = scmp.ne.s32.totalorder %s199, %s201
      %p205 = scmp.eq.s32.totalorder %s34, 0
      %p206 = por %p204, %p205
      %p207 = scmp.ne.s32.totalorder %s199, %s201
      %p208 = scmp.eq.s32.totalorder %s39, 1
      %p209 = por %p207, %p208
      %p210 = scmp.ne.s32.totalorder %s201, %s202
      %p211 = scmp.eq.s32.totalorder %s39, 0
      %p212 = por %p210, %p211
      %p213 = scmp.ne.s32.totalorder %s201, %s202
      %p214 = scmp.eq.s32.totalorder %s40, 1
      %p215 = por %p213, %p214
      %p217 = scmp.ne.s32.totalorder %s202, %s216
      %p218 = scmp.eq.s32.totalorder %s40, 0
      %p219 = por %p217, %p218
      %s221 = sadd.s32 %s220, 1
      %p224 = scmp.eq.s32.totalorder %s34, 1
      %p225 = scmp.ne.s32.totalorder %s220, %s222
      %p226 = scmp.eq.s32.totalorder %s34, 0
      %p227 = por %p225, %p226
      %p228 = scmp.ne.s32.totalorder %s220, %s222
      %p229 = scmp.eq.s32.totalorder %s39, 1
      %p230 = por %p228, %p229
      %p231 = scmp.ne.s32.totalorder %s222, %s223
      %p232 = scmp.eq.s32.totalorder %s39, 0
      %p233 = por %p231, %p232
      %p234 = scmp.ne.s32.totalorder %s222, %s223
      %p235 = scmp.eq.s32.totalorder %s40, 1
      %p236 = por %p234, %p235
      %p238 = scmp.ne.s32.totalorder %s223, %s237
      %p239 = scmp.eq.s32.totalorder %s40, 0
      %p240 = por %p238, %p239
      %s242 = sadd.s32 %s241, 1
      %p245 = scmp.eq.s32.totalorder %s34, 1
      %p246 = scmp.ne.s32.totalorder %s241, %s243
      %p247 = scmp.eq.s32.totalorder %s34, 0
      %p248 = por %p246, %p247
      %p249 = scmp.ne.s32.totalorder %s241, %s243
      %p250 = scmp.eq.s32.totalorder %s39, 1
      %p251 = por %p249, %p250
      %p252 = scmp.ne.s32.totalorder %s243, %s244
      %p253 = scmp.eq.s32.totalorder %s39, 0
      %p254 = por %p252, %p253
      %p255 = scmp.ne.s32.totalorder %s243, %s244
      %p256 = scmp.eq.s32.totalorder %s40, 1
      %p257 = por %p255, %p256
      %p259 = scmp.ne.s32.totalorder %s244, %s258
      %p260 = scmp.eq.s32.totalorder %s40, 0
      %p261 = por %p259, %p260
      %s263 = sadd.s32 %s262, 1
      %p266 = scmp.eq.s32.totalorder %s34, 1
      %p267 = scmp.ne.s32.totalorder %s262, %s264
      %p268 = scmp.eq.s32.totalorder %s34, 0
      %p269 = por %p267, %p268
      %p270 = scmp.ne.s32.totalorder %s262, %s264
      %p271 = scmp.eq.s32.totalorder %s39, 1
      %p272 = por %p270, %p271
      %p273 = scmp.ne.s32.totalorder %s264, %s265
      %p274 = scmp.eq.s32.totalorder %s39, 0
      %p275 = por %p273, %p274
      %p276 = scmp.ne.s32.totalorder %s264, %s265
      %p277 = scmp.eq.s32.totalorder %s40, 1
      %p278 = por %p276, %p277
      %p280 = scmp.ne.s32.totalorder %s265, %s279
      %p281 = scmp.eq.s32.totalorder %s40, 0
      %p282 = por %p280, %p281
      %s284 = sadd.s32 %s283, 1
      %p287 = scmp.eq.s32.totalorder %s34, 1
      %p288 = scmp.ne.s32.totalorder %s283, %s285
      %p289 = scmp.eq.s32.totalorder %s34, 0
      %p290 = por %p288, %p289
      %p291 = scmp.ne.s32.totalorder %s283, %s285
      %p292 = scmp.eq.s32.totalorder %s39, 1
      %p293 = por %p291, %p292
      %p294 = scmp.ne.s32.totalorder %s285, %s286
      %p295 = scmp.eq.s32.totalorder %s39, 0
      %p296 = por %p294, %p295
      %p297 = scmp.ne.s32.totalorder %s285, %s286
      %p298 = scmp.eq.s32.totalorder %s40, 1
      %p299 = por %p297, %p298
      %p301 = scmp.ne.s32.totalorder %s286, %s300
      %p302 = scmp.eq.s32.totalorder %s40, 0
      %p303 = por %p301, %p302
      %s305 = sadd.s32 %s304, 1
      %p308 = scmp.eq.s32.totalorder %s34, 1
      %p309 = scmp.ne.s32.totalorder %s304, %s306
      %p310 = scmp.eq.s32.totalorder %s34, 0
      %p311 = por %p309, %p310
      %p312 = scmp.ne.s32.totalorder %s304, %s306
      %p313 = scmp.eq.s32.totalorder %s39, 1
      %p314 = por %p312, %p313
      %p315 = scmp.ne.s32.totalorder %s306, %s307
      %p316 = scmp.eq.s32.totalorder %s39, 0
      %p317 = por %p315, %p316
      %p318 = scmp.ne.s32.totalorder %s306, %s307
      %p319 = scmp.eq.s32.totalorder %s40, 1
      %p320 = por %p318, %p319
      %p322 = scmp.ne.s32.totalorder %s307, %s321
      %p323 = scmp.eq.s32.totalorder %s40, 0
      %p324 = por %p322, %p323
      %s326 = sadd.s32 %s325, 1
      %p329 = scmp.eq.s32.totalorder %s34, 1
      %p330 = scmp.ne.s32.totalorder %s325, %s327
      %p331 = scmp.eq.s32.totalorder %s34, 0
      %p332 = por %p330, %p331
      %p333 = scmp.ne.s32.totalorder %s325, %s327
      %p334 = scmp.eq.s32.totalorder %s39, 1
      %p335 = por %p333, %p334
      %p336 = scmp.ne.s32.totalorder %s327, %s328
      %p337 = scmp.eq.s32.totalorder %s39, 0
      %p338 = por %p336, %p337
      %p339 = scmp.ne.s32.totalorder %s327, %s328
      %p340 = scmp.eq.s32.totalorder %s40, 1
      %p341 = por %p339, %p340
      %p343 = scmp.ne.s32.totalorder %s328, %s342
      %p344 = scmp.eq.s32.totalorder %s40, 0
      %p345 = por %p343, %p344
      %s347 = sadd.s32 %s346, 1
      %p350 = scmp.eq.s32.totalorder %s34, 1
      %p351 = scmp.ne.s32.totalorder %s346, %s348
      %p352 = scmp.eq.s32.totalorder %s34, 0
      %p353 = por %p351, %p352
      %p354 = scmp.ne.s32.totalorder %s346, %s348
      %p355 = scmp.eq.s32.totalorder %s39, 1
      %p356 = por %p354, %p355
      %p357 = scmp.ne.s32.totalorder %s348, %s349
      %p358 = scmp.eq.s32.totalorder %s39, 0
      %p359 = por %p357, %p358
      %p360 = scmp.ne.s32.totalorder %s348, %s349
      %p361 = scmp.eq.s32.totalorder %s40, 1
      %p362 = por %p360, %p361
      %p364 = scmp.ne.s32.totalorder %s349, %s363
      %p365 = scmp.eq.s32.totalorder %s40, 0
      %p366 = por %p364, %p365
      %s368 = sadd.s32 %s367, 1
      %p371 = scmp.eq.s32.totalorder %s34, 1
      %p372 = scmp.ne.s32.totalorder %s367, %s369
      %p373 = scmp.eq.s32.totalorder %s34, 0
      %p374 = por %p372, %p373
      %p375 = scmp.ne.s32.totalorder %s367, %s369
      %p376 = scmp.eq.s32.totalorder %s39, 1
      %p377 = por %p375, %p376
      %p378 = scmp.ne.s32.totalorder %s369, %s370
      %p379 = scmp.eq.s32.totalorder %s39, 0
      %p380 = por %p378, %p379
      %p381 = scmp.ne.s32.totalorder %s369, %s370
      %p382 = scmp.eq.s32.totalorder %s40, 1
      %p383 = por %p381, %p382
      %p385 = scmp.ne.s32.totalorder %s370, %s384
      %p386 = scmp.eq.s32.totalorder %s40, 0
      %p387 = por %p385, %p386
      %s389 = sadd.s32 %s388, 1
      %p392 = scmp.eq.s32.totalorder %s34, 1
      %p393 = scmp.ne.s32.totalorder %s388, %s390
      %p394 = scmp.eq.s32.totalorder %s34, 0
      %p395 = por %p393, %p394
      %p396 = scmp.ne.s32.totalorder %s388, %s390
      %p397 = scmp.eq.s32.totalorder %s39, 1
      %p398 = por %p396, %p397
      %p399 = scmp.ne.s32.totalorder %s390, %s391
      %p400 = scmp.eq.s32.totalorder %s39, 0
      %p401 = por %p399, %p400
      %p402 = scmp.ne.s32.totalorder %s390, %s391
      %p403 = scmp.eq.s32.totalorder %s40, 1
      %p404 = por %p402, %p403
      %p406 = scmp.ne.s32.totalorder %s391, %s405
      %p407 = scmp.eq.s32.totalorder %s40, 0
      %p408 = por %p406, %p407
      %s410 = sadd.s32 %s409, 1
      %p413 = scmp.eq.s32.totalorder %s34, 1
      %p414 = scmp.ne.s32.totalorder %s409, %s411
      %p415 = scmp.eq.s32.totalorder %s34, 0
      %p416 = por %p414, %p415
      %p417 = scmp.ne.s32.totalorder %s409, %s411
      %p418 = scmp.eq.s32.totalorder %s39, 1
      %p419 = por %p417, %p418
      %p420 = scmp.ne.s32.totalorder %s411, %s412
      %p421 = scmp.eq.s32.totalorder %s39, 0
      %p422 = por %p420, %p421
      %p423 = scmp.ne.s32.totalorder %s411, %s412
      %p424 = scmp.eq.s32.totalorder %s40, 1
      %p425 = por %p423, %p424
      %p427 = scmp.ne.s32.totalorder %s412, %s426
      %p428 = scmp.eq.s32.totalorder %s40, 0
      %p429 = por %p427, %p428
      %s431 = sadd.s32 %s430, 1
      %p434 = scmp.eq.s32.totalorder %s34, 1
      %p435 = scmp.ne.s32.totalorder %s430, %s432
      %p436 = scmp.eq.s32.totalorder %s34, 0
      %p437 = por %p435, %p436
      %p438 = scmp.ne.s32.totalorder %s430, %s432
      %p439 = scmp.eq.s32.totalorder %s39, 1
      %p440 = por %p438, %p439
      %p441 = scmp.ne.s32.totalorder %s432, %s433
      %p442 = scmp.eq.s32.totalorder %s39, 0
      %p443 = por %p441, %p442
      %p444 = scmp.ne.s32.totalorder %s432, %s433
      %p445 = scmp.eq.s32.totalorder %s40, 1
      %p446 = por %p444, %p445
      %p448 = scmp.ne.s32.totalorder %s433, %s447
      %p449 = scmp.eq.s32.totalorder %s40, 0
      %p450 = por %p448, %p449
      %s452 = sadd.s32 %s451, 1
      %p455 = scmp.eq.s32.totalorder %s34, 1
      %p456 = scmp.ne.s32.totalorder %s451, %s453
      %p457 = scmp.eq.s32.totalorder %s34, 0
      %p458 = por %p456, %p457
      %p459 = scmp.ne.s32.totalorder %s451, %s453
      %p460 = scmp.eq.s32.totalorder %s39, 1
      %p461 = por %p459, %p460
      %p462 = scmp.ne.s32.totalorder %s453, %s454
      %p463 = scmp.eq.s32.totalorder %s39, 0
      %p464 = por %p462, %p463
      %p465 = scmp.ne.s32.totalorder %s453, %s454
      %p466 = scmp.eq.s32.totalorder %s40, 1
      %p467 = por %p465, %p466
      %p469 = scmp.ne.s32.totalorder %s454, %s468
      %p470 = scmp.eq.s32.totalorder %s40, 0
      %p471 = por %p469, %p470
      %s473 = sadd.s32 %s472, 1
      %p476 = scmp.eq.s32.totalorder %s34, 1
      %p477 = scmp.ne.s32.totalorder %s472, %s474
      %p478 = scmp.eq.s32.totalorder %s34, 0
      %p479 = por %p477, %p478
      %p480 = scmp.ne.s32.totalorder %s472, %s474
      %p481 = scmp.eq.s32.totalorder %s39, 1
      %p482 = por %p480, %p481
      %p483 = scmp.ne.s32.totalorder %s474, %s475
      %p484 = scmp.eq.s32.totalorder %s39, 0
      %p485 = por %p483, %p484
      %p486 = scmp.ne.s32.totalorder %s474, %s475
      %p487 = scmp.eq.s32.totalorder %s40, 1
      %p488 = por %p486, %p487
      %p490 = scmp.ne.s32.totalorder %s475, %s489
      %p491 = scmp.eq.s32.totalorder %s40, 0
      %p492 = por %p490, %p491
      %s494 = sadd.s32 %s493, 1
      %p497 = scmp.eq.s32.totalorder %s34, 1
      %p498 = scmp.ne.s32.totalorder %s493, %s495
      %p499 = scmp.eq.s32.totalorder %s34, 0
      %p500 = por %p498, %p499
      %p501 = scmp.ne.s32.totalorder %s493, %s495
      %p502 = scmp.eq.s32.totalorder %s39, 1
      %p503 = por %p501, %p502
      %p504 = scmp.ne.s32.totalorder %s495, %s496
      %p505 = scmp.eq.s32.totalorder %s39, 0
      %p506 = por %p504, %p505
      %p507 = scmp.ne.s32.totalorder %s495, %s496
      %p508 = scmp.eq.s32.totalorder %s40, 1
      %p509 = por %p507, %p508
      %p511 = scmp.ne.s32.totalorder %s496, %s510
      %p512 = scmp.eq.s32.totalorder %s40, 0
      %p513 = por %p511, %p512
      %s515 = sadd.s32 %s514, 1
      %p518 = scmp.eq.s32.totalorder %s34, 1
      %p519 = scmp.ne.s32.totalorder %s514, %s516
      %p520 = scmp.eq.s32.totalorder %s34, 0
      %p521 = por %p519, %p520
      %p522 = scmp.ne.s32.totalorder %s514, %s516
      %p523 = scmp.eq.s32.totalorder %s39, 1
      %p524 = por %p522, %p523
      %p525 = scmp.ne.s32.totalorder %s516, %s517
      %p526 = scmp.eq.s32.totalorder %s39, 0
      %p527 = por %p525, %p526
      %p528 = scmp.ne.s32.totalorder %s516, %s517
      %p529 = scmp.eq.s32.totalorder %s40, 1
      %p530 = por %p528, %p529
      %p532 = scmp.ne.s32.totalorder %s517, %s531
      %p533 = scmp.eq.s32.totalorder %s40, 0
      %p534 = por %p532, %p533
      %s536 = sadd.s32 %s535, 1
      %p539 = scmp.eq.s32.totalorder %s34, 1
      %p540 = scmp.ne.s32.totalorder %s535, %s537
      %p541 = scmp.eq.s32.totalorder %s34, 0
      %p542 = por %p540, %p541
      %p543 = scmp.ne.s32.totalorder %s535, %s537
      %p544 = scmp.eq.s32.totalorder %s39, 1
      %p545 = por %p543, %p544
      %p546 = scmp.ne.s32.totalorder %s537, %s538
      %p547 = scmp.eq.s32.totalorder %s39, 0
      %p548 = por %p546, %p547
      %p549 = scmp.ne.s32.totalorder %s537, %s538
      %p550 = scmp.eq.s32.totalorder %s40, 1
      %p551 = por %p549, %p550
      %p553 = scmp.ne.s32.totalorder %s538, %s552
      %p554 = scmp.eq.s32.totalorder %s40, 0
      %p555 = por %p553, %p554
      %s557 = sadd.s32 %s556, 1
      %p560 = scmp.eq.s32.totalorder %s34, 1
      %p561 = scmp.ne.s32.totalorder %s556, %s558
      %p562 = scmp.eq.s32.totalorder %s34, 0
      %p563 = por %p561, %p562
      %p564 = scmp.ne.s32.totalorder %s556, %s558
      %p565 = scmp.eq.s32.totalorder %s39, 1
      %p566 = por %p564, %p565
      %p567 = scmp.ne.s32.totalorder %s558, %s559
      %p568 = scmp.eq.s32.totalorder %s39, 0
      %p569 = por %p567, %p568
      %p570 = scmp.ne.s32.totalorder %s558, %s559
      %p571 = scmp.eq.s32.totalorder %s40, 1
      %p572 = por %p570, %p571
      %p574 = scmp.ne.s32.totalorder %s559, %s573
      %p575 = scmp.eq.s32.totalorder %s40, 0
      %p576 = por %p574, %p575
      %s577 = ssub.s32 %s34, %s41
      %p578 = scmp.eq.s32.totalorder %s577, 0
      %s580 = sadd.s32 %s579, 1
      %s581 = scalar_select %p578, %s579, %s580
      %p584 = pneg %p578
      %p585 = scmp.eq.s32.totalorder %s34, 1
      %p586 = por %p584, %p585
      %p587 = scmp.ne.s32.totalorder %s579, %s582
      %p588 = scmp.eq.s32.totalorder %s34, 0
      %p589 = por %p587, %p588
      %p590 = scmp.ne.s32.totalorder %s579, %s582
      %p591 = scmp.eq.s32.totalorder %s39, 1
      %p592 = por %p590, %p591
      %p593 = scmp.ne.s32.totalorder %s582, %s583
      %p594 = scmp.eq.s32.totalorder %s39, 0
      %p595 = por %p593, %p594
      %p596 = scmp.ne.s32.totalorder %s582, %s583
      %p597 = scmp.eq.s32.totalorder %s40, 1
      %p598 = por %p596, %p597
      %p600 = scmp.ne.s32.totalorder %s583, %s599
      %p601 = scmp.eq.s32.totalorder %s40, 0
      %p602 = por %p600, %p601
      %p603 = scmp.le.s32.totalorder 1, %s34
      %p604 = scmp.lt.s32.totalorder %s34, 3
      %p605 = pnand %p603, %p604
      %p606 = pneg %p605
      // Predicated region
      $region9: #{seq2seq_forward.1} parent=5 // pred_check
        _
      $region10: #{seq2seq_forward.1} parent=5 // pred_check_branch
        %608 = sbr.rel (%p605) target = $region12
      $region11: #{seq2seq_forward.1} parent=5 // pred_region
        %s609 = ssub.s32 %s34, 1
        // Predicated region
        $region13: #{seq2seq_forward.1} parent=11 // pred_check
          %p610 = pneg %p107
        $region14: #{seq2seq_forward.1} parent=11 // pred_check_branch
          %612 = sbr.rel (%p610) target = $region16
        $region15: #{seq2seq_forward.1} parent=11 // pred_region
          _
        $region16: #{seq2seq_forward.1} parent=11 // pred_fallthru
          _
        // Predicated region
        $region17: #{seq2seq_forward.1} parent=11 // pred_check
          %p613 = pneg %p128
        $region18: #{seq2seq_forward.1} parent=11 // pred_check_branch
          %615 = sbr.rel (%p613) target = $region20
        $region19: #{seq2seq_forward.1} parent=11 // pred_region
          _
        $region20: #{seq2seq_forward.1} parent=11 // pred_fallthru
          _
        // Predicated region
        $region21: #{seq2seq_forward.1} parent=11 // pred_check
          %p616 = pneg %p149
        $region22: #{seq2seq_forward.1} parent=11 // pred_check_branch
          %618 = sbr.rel (%p616) target = $region24
        $region23: #{seq2seq_forward.1} parent=11 // pred_region
          _
        $region24: #{seq2seq_forward.1} parent=11 // pred_fallthru
          _
        // Predicated region
        $region25: #{seq2seq_forward.1} parent=11 // pred_check
          %p619 = pneg %p170
        $region26: #{seq2seq_forward.1} parent=11 // pred_check_branch
          %621 = sbr.rel (%p619) target = $region28
        $region27: #{seq2seq_forward.1} parent=11 // pred_region
          _
        $region28: #{seq2seq_forward.1} parent=11 // pred_fallthru
          _
        // Predicated region
        $region29: #{seq2seq_forward.1} parent=11 // pred_check
          %p622 = pneg %p191
        $region30: #{seq2seq_forward.1} parent=11 // pred_check_branch
          %624 = sbr.rel (%p622) target = $region32
        $region31: #{seq2seq_forward.1} parent=11 // pred_region
          _
        $region32: #{seq2seq_forward.1} parent=11 // pred_fallthru
          _
        // Predicated region
        $region33: #{seq2seq_forward.1} parent=11 // pred_check
          %p625 = pneg %p212
        $region34: #{seq2seq_forward.1} parent=11 // pred_check_branch
          %627 = sbr.rel (%p625) target = $region36
        $region35: #{seq2seq_forward.1} parent=11 // pred_region
          _
        $region36: #{seq2seq_forward.1} parent=11 // pred_fallthru
          _
        // Predicated region
        $region37: #{seq2seq_forward.1} parent=11 // pred_check
          %p628 = pneg %p233
        $region38: #{seq2seq_forward.1} parent=11 // pred_check_branch
          %630 = sbr.rel (%p628) target = $region40
        $region39: #{seq2seq_forward.1} parent=11 // pred_region
          _
        $region40: #{seq2seq_forward.1} parent=11 // pred_fallthru
          _
        // Predicated region
        $region41: #{seq2seq_forward.1} parent=11 // pred_check
          %p631 = pneg %p254
        $region42: #{seq2seq_forward.1} parent=11 // pred_check_branch
          %633 = sbr.rel (%p631) target = $region44
        $region43: #{seq2seq_forward.1} parent=11 // pred_region
          _
        $region44: #{seq2seq_forward.1} parent=11 // pred_fallthru
          _
        // Predicated region
        $region45: #{seq2seq_forward.1} parent=11 // pred_check
          %p634 = pneg %p275
        $region46: #{seq2seq_forward.1} parent=11 // pred_check_branch
          %636 = sbr.rel (%p634) target = $region48
        $region47: #{seq2seq_forward.1} parent=11 // pred_region
          _
        $region48: #{seq2seq_forward.1} parent=11 // pred_fallthru
          _
        // Predicated region
        $region49: #{seq2seq_forward.1} parent=11 // pred_check
          %p637 = pneg %p296
        $region50: #{seq2seq_forward.1} parent=11 // pred_check_branch
          %639 = sbr.rel (%p637) target = $region52
        $region51: #{seq2seq_forward.1} parent=11 // pred_region
          _
        $region52: #{seq2seq_forward.1} parent=11 // pred_fallthru
          _
        // Predicated region
        $region53: #{seq2seq_forward.1} parent=11 // pred_check
          %p640 = pneg %p317
        $region54: #{seq2seq_forward.1} parent=11 // pred_check_branch
          %642 = sbr.rel (%p640) target = $region56
        $region55: #{seq2seq_forward.1} parent=11 // pred_region
          _
        $region56: #{seq2seq_forward.1} parent=11 // pred_fallthru
          _
        // Predicated region
        $region57: #{seq2seq_forward.1} parent=11 // pred_check
          %p643 = pneg %p338
        $region58: #{seq2seq_forward.1} parent=11 // pred_check_branch
          %645 = sbr.rel (%p643) target = $region60
        $region59: #{seq2seq_forward.1} parent=11 // pred_region
          _
        $region60: #{seq2seq_forward.1} parent=11 // pred_fallthru
          _
        // Predicated region
        $region61: #{seq2seq_forward.1} parent=11 // pred_check
          %p646 = pneg %p359
        $region62: #{seq2seq_forward.1} parent=11 // pred_check_branch
          %648 = sbr.rel (%p646) target = $region64
        $region63: #{seq2seq_forward.1} parent=11 // pred_region
          _
        $region64: #{seq2seq_forward.1} parent=11 // pred_fallthru
          _
        // Predicated region
        $region65: #{seq2seq_forward.1} parent=11 // pred_check
          %p649 = pneg %p380
        $region66: #{seq2seq_forward.1} parent=11 // pred_check_branch
          %651 = sbr.rel (%p649) target = $region68
        $region67: #{seq2seq_forward.1} parent=11 // pred_region
          _
        $region68: #{seq2seq_forward.1} parent=11 // pred_fallthru
          _
        // Predicated region
        $region69: #{seq2seq_forward.1} parent=11 // pred_check
          %p652 = pneg %p401
        $region70: #{seq2seq_forward.1} parent=11 // pred_check_branch
          %654 = sbr.rel (%p652) target = $region72
        $region71: #{seq2seq_forward.1} parent=11 // pred_region
          _
        $region72: #{seq2seq_forward.1} parent=11 // pred_fallthru
          _
        // Predicated region
        $region73: #{seq2seq_forward.1} parent=11 // pred_check
          %p655 = pneg %p422
        $region74: #{seq2seq_forward.1} parent=11 // pred_check_branch
          %657 = sbr.rel (%p655) target = $region76
        $region75: #{seq2seq_forward.1} parent=11 // pred_region
          _
        $region76: #{seq2seq_forward.1} parent=11 // pred_fallthru
          _
        // Predicated region
        $region77: #{seq2seq_forward.1} parent=11 // pred_check
          %p658 = pneg %p443
        $region78: #{seq2seq_forward.1} parent=11 // pred_check_branch
          %660 = sbr.rel (%p658) target = $region80
        $region79: #{seq2seq_forward.1} parent=11 // pred_region
          _
        $region80: #{seq2seq_forward.1} parent=11 // pred_fallthru
          _
        // Predicated region
        $region81: #{seq2seq_forward.1} parent=11 // pred_check
          %p661 = pneg %p464
        $region82: #{seq2seq_forward.1} parent=11 // pred_check_branch
          %663 = sbr.rel (%p661) target = $region84
        $region83: #{seq2seq_forward.1} parent=11 // pred_region
          _
        $region84: #{seq2seq_forward.1} parent=11 // pred_fallthru
          _
        // Predicated region
        $region85: #{seq2seq_forward.1} parent=11 // pred_check
          %p664 = pneg %p485
        $region86: #{seq2seq_forward.1} parent=11 // pred_check_branch
          %666 = sbr.rel (%p664) target = $region88
        $region87: #{seq2seq_forward.1} parent=11 // pred_region
          _
        $region88: #{seq2seq_forward.1} parent=11 // pred_fallthru
          _
        // Predicated region
        $region89: #{seq2seq_forward.1} parent=11 // pred_check
          %p667 = pneg %p506
        $region90: #{seq2seq_forward.1} parent=11 // pred_check_branch
          %669 = sbr.rel (%p667) target = $region92
        $region91: #{seq2seq_forward.1} parent=11 // pred_region
          _
        $region92: #{seq2seq_forward.1} parent=11 // pred_fallthru
          _
        // Predicated region
        $region93: #{seq2seq_forward.1} parent=11 // pred_check
          %p670 = pneg %p527
        $region94: #{seq2seq_forward.1} parent=11 // pred_check_branch
          %672 = sbr.rel (%p670) target = $region96
        $region95: #{seq2seq_forward.1} parent=11 // pred_region
          _
        $region96: #{seq2seq_forward.1} parent=11 // pred_fallthru
          _
        // Predicated region
        $region97: #{seq2seq_forward.1} parent=11 // pred_check
          %p673 = pneg %p548
        $region98: #{seq2seq_forward.1} parent=11 // pred_check_branch
          %675 = sbr.rel (%p673) target = $region100
        $region99: #{seq2seq_forward.1} parent=11 // pred_region
          _
        $region100: #{seq2seq_forward.1} parent=11 // pred_fallthru
          _
        // Predicated region
        $region101: #{seq2seq_forward.1} parent=11 // pred_check
          %p676 = pneg %p569
        $region102: #{seq2seq_forward.1} parent=11 // pred_check_branch
          %678 = sbr.rel (%p676) target = $region104
        $region103: #{seq2seq_forward.1} parent=11 // pred_region
          _
        $region104: #{seq2seq_forward.1} parent=11 // pred_fallthru
          _
      $region12: #{seq2seq_forward.1} parent=5 // pred_fallthru
        _
      %p679 = scmp.lt.s32.totalorder %s34, 2
      // Predicated region
      $region105: #{seq2seq_forward.1} parent=5 // pred_check
        %p680 = pneg %p679
      $region106: #{seq2seq_forward.1} parent=5 // pred_check_branch
        %682 = sbr.rel (%p680) target = $region108
      $region107: #{seq2seq_forward.1} parent=5 // pred_region
        // Predicated region
        $region109: #{seq2seq_forward.1} parent=107 // pred_check
          %p683 = pneg %p54
        $region110: #{seq2seq_forward.1} parent=107 // pred_check_branch
          %685 = sbr.rel (%p683) target = $region112
        $region111: #{seq2seq_forward.1} parent=107 // pred_region
          %p686 = scmp.lt.s32.totalorder %s34, 1
          %s687 = scalar_select %p686, %s34, 1
          %s688 = smul.addr %s687, 8
          %s689 = scalar_lea.vmem %s0, %s688
        $region112: #{seq2seq_forward.1} parent=107 // pred_fallthru
          _
        // Predicated region
        $region113: #{seq2seq_forward.1} parent=107 // pred_check
          %p690 = pneg %p80
        $region114: #{seq2seq_forward.1} parent=107 // pred_check_branch
          %692 = sbr.rel (%p690) target = $region116
        $region115: #{seq2seq_forward.1} parent=107 // pred_region
          %p693 = scmp.lt.s32.totalorder %s34, 1
          %s694 = scalar_select %p693, %s34, 1
          %s695 = smul.addr %s694, 8
          %s696 = scalar_lea.vmem %s1, %s695
        $region116: #{seq2seq_forward.1} parent=107 // pred_fallthru
          _
      $region108: #{seq2seq_forward.1} parent=5 // pred_fallthru
        _
      %p697 = scmp.le.s32.totalorder 1, %s34
      %p698 = scmp.lt.s32.totalorder %s34, 3
      %p699 = pnand %p697, %p698
      %p700 = pneg %p699
      // Predicated region
      $region117: #{seq2seq_forward.1} parent=5 // pred_check
        _
      $region118: #{seq2seq_forward.1} parent=5 // pred_check_branch
        %702 = sbr.rel (%p699) target = $region120
      $region119: #{seq2seq_forward.1} parent=5 // pred_region
        %s703 = ssub.s32 %s34, 1
        %p704 = scmp.lt.s32.totalorder %s39, 1
        %s705 = scalar_select %p704, %s39, 1
        %s706 = smul.addr %s705, 8
        %s707 = scalar_lea.vmem %s0, %s706
        %p708 = pneg %p60
        %p709 = pneg %p57
        %p710 = scmp.lt.s32.totalorder %s39, 1
        %s711 = scalar_select %p710, %s39, 1
        %s712 = smul.addr %s711, 8
        %s713 = scalar_lea.vmem %s1, %s712
        %p714 = pneg %p86
        %p715 = pneg %p83
        %p716 = pneg %p107
        %p717 = pneg %p104
        %p718 = pneg %p128
        %p719 = pneg %p125
        %p720 = pneg %p149
        %p721 = pneg %p146
        %p722 = pneg %p170
        %p723 = pneg %p167
        %p724 = pneg %p191
        %p725 = pneg %p188
        %p726 = pneg %p212
        %p727 = pneg %p209
        %p728 = pneg %p233
        %p729 = pneg %p230
        %p730 = pneg %p254
        %p731 = pneg %p251
        %p732 = pneg %p275
        %p733 = pneg %p272
        %p734 = pneg %p296
        %p735 = pneg %p293
        %p736 = pneg %p317
        %p737 = pneg %p314
        %p738 = pneg %p338
        %p739 = pneg %p335
        %p740 = pneg %p359
        %p741 = pneg %p356
        %p742 = pneg %p380
        %p743 = pneg %p377
        %p744 = pneg %p401
        %p745 = pneg %p398
        %p746 = pneg %p422
        %p747 = pneg %p419
        %p748 = pneg %p443
        %p749 = pneg %p440
        %p750 = pneg %p464
        %p751 = pneg %p461
        %p752 = pneg %p485
        %p753 = pneg %p482
        %p754 = pneg %p506
        %p755 = pneg %p503
        %p756 = pneg %p527
        %p757 = pneg %p524
        %p758 = pneg %p548
        %p759 = pneg %p545
        %p760 = pneg %p569
        %p761 = pneg %p566
        %p762 = pneg %p595
        %p763 = pneg %p592
        %s764 = sand.u32 %s582, 1
        %s765 = scalar_lea.sflag [#allocation3], %s764
        %s766 = sand.u32 %s582, 1
        %s767 = smul.addr %s766, 1024
        %s768 = scalar_lea.vmem [#allocation2], %s767
        %p769 = scmp.lt.s32.totalorder %s39, 1
        %s770 = scalar_select %p769, %s39, 1
        %s771 = smul.addr %s770, 8
        %s772 = scalar_lea.vmem %s0, %s771
        %p773 = scmp.lt.s32.totalorder %s39, 1
        %s774 = scalar_select %p773, %s39, 1
        %s775 = smul.addr %s774, 8
        %s776 = scalar_lea.vmem %s1, %s775
        %v778 = vld [vmem:[%s772] sm:$0xff]
        %v779 = vlaneseq
        %v780 = vshrl.u32 %v779, 7
        %v781 = vld [vmem:[%s2] sm:$0xf]
        %v782 = vld [vmem:[%s2 + $0x4] sm:$0xf]
        %v783 = vld [vmem:[%s2 + $0x8] sm:$0xf]
        %v784 = vld [vmem:[%s2 + $0xc] sm:$0xf]
        %v785 = vld [vmem:[%s2 + $0x10] sm:$0xf]
        %v786 = vld [vmem:[%s2 + $0x14] sm:$0xf]
        %v787 = vld [vmem:[%s2 + $0x18] sm:$0xf]
        %v788 = vld [vmem:[%s2 + $0x1c] sm:$0xf]
        %v789 = vpack.c.bf16 %v778, %v778
        %v790 = vld [vmem:[%s3] sm:$0x1]
        %v792 = vperm.slane %v790, 0
        %v802 = vunpack.c.l.b16 %v781
        %v803 = vunpack.c.l.b16 %v782
        %v804 = vunpack.c.l.b16 %v783
        %v805 = vunpack.c.l.b16 %v784
        %v806 = vunpack.c.l.b16 %v785
        %v807 = vunpack.c.l.b16 %v786
        %v808 = vunpack.c.l.b16 %v787
        %v809 = vunpack.c.l.b16 %v788
        %v810 = vpack.c.b16 %v803, %v802
        %v811 = vpack.c.b16 %v805, %v804
        %v812 = vpack.c.b16 %v807, %v806
        %v813 = vpack.c.b16 %v809, %v808
        %vm818 = vcmask 523264
        %v820 = vsel %vm818, %v789, 0
        %822 = vmatpush.bf16.msra.mxu0 0
        %823 = vmatpush.bf16.msra.mxu0 0
        %824 = vmatpush.bf16.msra.mxu0 0
        %825 = vmatpush.bf16.msra.mxu0 0
        %826 = vmatpush.bf16.msra.mxu0 %v813
        %827 = vmatpush.bf16.msra.mxu0 %v812
        %828 = vmatpush.bf16.msra.mxu0 %v811
        %829 = vmatpush.bf16.msra.mxu0 %v810
        %830 = vmatmul.bf16.gmra.mxu0 %v820
        %v831 = vpop.f32.mrf.mxu0
        %v832 = vadd.f32 %v792, %v831
        %v833 = vpop.f32.mrf.mxu0
        %834 = vdwg.mxu0
        %vm835 = vcmp.lt.s32.totalorder %v780, 1
        %v836 = vrot.slane %v832, 7
        %v837 = vsel %vm835, 0.0, %v836
        %vm838 = vcmp.ge.s32.totalorder %v780, 7
        %v839 = vrot.slane %v832, 1
        %v840 = vsel %vm838, 0.0, %v839
        %v841 = vld [vmem:[%s4] sm:$0xf]
        %v842 = vld [vmem:[%s4 + $0x4] sm:$0xf]
        %v843 = vld [vmem:[%s4 + $0x8] sm:$0xf]
        %v844 = vld [vmem:[%s4 + $0xc] sm:$0xf]
        %v845 = vld [vmem:[%s4 + $0x10] sm:$0xf]
        %v846 = vld [vmem:[%s4 + $0x14] sm:$0xf]
        %v847 = vld [vmem:[%s4 + $0x18] sm:$0xf]
        %v848 = vld [vmem:[%s4 + $0x1c] sm:$0xf]
        %v849 = vld [vmem:[%s4 + $0x20] sm:$0xf]
        %v850 = vld [vmem:[%s4 + $0x24] sm:$0xf]
        %v851 = vld [vmem:[%s4 + $0x28] sm:$0xf]
        %v852 = vld [vmem:[%s4 + $0x2c] sm:$0xf]
        %v853 = vld [vmem:[%s4 + $0x30] sm:$0xf]
        %v854 = vld [vmem:[%s4 + $0x34] sm:$0xf]
        %v855 = vpack.c.bf16 %v837, %v837
        %s856 = scalar_lea.vmem %s4, 56
        %v857 = vld [vmem:[%s856] sm:$0xf]
        %v858 = vld [vmem:[%s856 + $0x4] sm:$0xf]
        %v859 = vld [vmem:[%s856 + $0x8] sm:$0xf]
        %v860 = vld [vmem:[%s856 + $0xc] sm:$0xf]
        %v861 = vld [vmem:[%s856 + $0x10] sm:$0xf]
        %v862 = vld [vmem:[%s856 + $0x14] sm:$0xf]
        %v863 = vld [vmem:[%s856 + $0x18] sm:$0xf]
        %v864 = vld [vmem:[%s856 + $0x1c] sm:$0xf]
        %v865 = vld [vmem:[%s856 + $0x20] sm:$0xf]
        %v866 = vld [vmem:[%s856 + $0x24] sm:$0xf]
        %v867 = vld [vmem:[%s856 + $0x28] sm:$0xf]
        %v868 = vld [vmem:[%s856 + $0x2c] sm:$0xf]
        %v869 = vld [vmem:[%s856 + $0x30] sm:$0xf]
        %v870 = vld [vmem:[%s856 + $0x34] sm:$0xf]
        %v871 = vpack.c.bf16 %v832, %v832
        %v886 = vunpack.c.l.b16 %v857
        %v887 = vunpack.c.l.b16 %v858
        %v888 = vunpack.c.l.b16 %v859
        %v889 = vunpack.c.l.b16 %v860
        %v890 = vunpack.c.l.b16 %v861
        %v891 = vunpack.c.l.b16 %v862
        %v892 = vunpack.c.l.b16 %v863
        %v893 = vunpack.c.l.b16 %v864
        %v894 = vunpack.c.l.b16 %v865
        %v895 = vunpack.c.l.b16 %v866
        %v896 = vunpack.c.l.b16 %v867
        %v897 = vunpack.c.l.b16 %v868
        %v898 = vunpack.c.l.b16 %v869
        %v899 = vunpack.c.l.b16 %v870
        %v900 = vpack.c.b16 %v887, %v886
        %v901 = vpack.c.b16 %v889, %v888
        %v902 = vpack.c.b16 %v891, %v890
        %v903 = vpack.c.b16 %v893, %v892
        %v904 = vpack.c.b16 %v895, %v894
        %v905 = vpack.c.b16 %v897, %v896
        %v906 = vpack.c.b16 %v899, %v898
        %vm914 = vcmask 916480
        %v916 = vsel %vm914, %v871, 0
        %918 = vmatpush.bf16.msra.mxu0 0
        %919 = vmatpush.bf16.msra.mxu0 %v906
        %920 = vmatpush.bf16.msra.mxu0 %v905
        %921 = vmatpush.bf16.msra.mxu0 %v904
        %922 = vmatpush.bf16.msra.mxu0 %v903
        %923 = vmatpush.bf16.msra.mxu0 %v902
        %924 = vmatpush.bf16.msra.mxu0 %v901
        %925 = vmatpush.bf16.msra.mxu0 %v900
        %926 = vmatmul.bf16.gmra.mxu0 %v916
        %v927 = vpop.f32.mrf.mxu0
        %v928 = vadd.f32 0.0, %v927
        %v929 = vpop.f32.mrf.mxu0
        %930 = vdwg.mxu0
        %v945 = vunpack.c.l.b16 %v841
        %v946 = vunpack.c.l.b16 %v842
        %v947 = vunpack.c.l.b16 %v843
        %v948 = vunpack.c.l.b16 %v844
        %v949 = vunpack.c.l.b16 %v845
        %v950 = vunpack.c.l.b16 %v846
        %v951 = vunpack.c.l.b16 %v847
        %v952 = vunpack.c.l.b16 %v848
        %v953 = vunpack.c.l.b16 %v849
        %v954 = vunpack.c.l.b16 %v850
        %v955 = vunpack.c.l.b16 %v851
        %v956 = vunpack.c.l.b16 %v852
        %v957 = vunpack.c.l.b16 %v853
        %v958 = vunpack.c.l.b16 %v854
        %v959 = vpack.c.b16 %v946, %v945
        %v960 = vpack.c.b16 %v948, %v947
        %v961 = vpack.c.b16 %v950, %v949
        %v962 = vpack.c.b16 %v952, %v951
        %v963 = vpack.c.b16 %v954, %v953
        %v964 = vpack.c.b16 %v956, %v955
        %v965 = vpack.c.b16 %v958, %v957
        %v974 = vsel %vm914, %v855, 0
        %976 = vmatpush.bf16.msra.mxu0 0
        %977 = vmatpush.bf16.msra.mxu0 %v965
        %978 = vmatpush.bf16.msra.mxu0 %v964
        %979 = vmatpush.bf16.msra.mxu0 %v963
        %980 = vmatpush.bf16.msra.mxu0 %v962
        %981 = vmatpush.bf16.msra.mxu0 %v961
        %982 = vmatpush.bf16.msra.mxu0 %v960
        %983 = vmatpush.bf16.msra.mxu0 %v959
        %984 = vmatmul.bf16.gmra.mxu0 %v974
        %v985 = vpop.f32.mrf.mxu0
        %v986 = vadd.f32 %v928, %v985
        %v987 = vpop.f32.mrf.mxu0
        %988 = vdwg.mxu0
        %s989 = scalar_lea.vmem %s4, 112
        %v990 = vld [vmem:[%s989] sm:$0xf]
        %v991 = vld [vmem:[%s989 + $0x4] sm:$0xf]
        %v992 = vld [vmem:[%s989 + $0x8] sm:$0xf]
        %v993 = vld [vmem:[%s989 + $0xc] sm:$0xf]
        %v994 = vld [vmem:[%s989 + $0x10] sm:$0xf]
        %v995 = vld [vmem:[%s989 + $0x14] sm:$0xf]
        %v996 = vld [vmem:[%s989 + $0x18] sm:$0xf]
        %v997 = vld [vmem:[%s989 + $0x1c] sm:$0xf]
        %v998 = vld [vmem:[%s989 + $0x20] sm:$0xf]
        %v999 = vld [vmem:[%s989 + $0x24] sm:$0xf]
        %v1000 = vld [vmem:[%s989 + $0x28] sm:$0xf]
        %v1001 = vld [vmem:[%s989 + $0x2c] sm:$0xf]
        %v1002 = vld [vmem:[%s989 + $0x30] sm:$0xf]
        %v1003 = vld [vmem:[%s989 + $0x34] sm:$0xf]
        %v1004 = vpack.c.bf16 %v840, %v840
        %v1019 = vunpack.c.l.b16 %v990
        %v1020 = vunpack.c.l.b16 %v991
        %v1021 = vunpack.c.l.b16 %v992
        %v1022 = vunpack.c.l.b16 %v993
        %v1023 = vunpack.c.l.b16 %v994
        %v1024 = vunpack.c.l.b16 %v995
        %v1025 = vunpack.c.l.b16 %v996
        %v1026 = vunpack.c.l.b16 %v997
        %v1027 = vunpack.c.l.b16 %v998
        %v1028 = vunpack.c.l.b16 %v999
        %v1029 = vunpack.c.l.b16 %v1000
        %v1030 = vunpack.c.l.b16 %v1001
        %v1031 = vunpack.c.l.b16 %v1002
        %v1032 = vunpack.c.l.b16 %v1003
        %v1033 = vpack.c.b16 %v1020, %v1019
        %v1034 = vpack.c.b16 %v1022, %v1021
        %v1035 = vpack.c.b16 %v1024, %v1023
        %v1036 = vpack.c.b16 %v1026, %v1025
        %v1037 = vpack.c.b16 %v1028, %v1027
        %v1038 = vpack.c.b16 %v1030, %v1029
        %v1039 = vpack.c.b16 %v1032, %v1031
        %v1048 = vsel %vm914, %v1004, 0
        %1050 = vmatpush.bf16.msra.mxu0 0
        %1051 = vmatpush.bf16.msra.mxu0 %v1039
        %1052 = vmatpush.bf16.msra.mxu0 %v1038
        %1053 = vmatpush.bf16.msra.mxu0 %v1037
        %1054 = vmatpush.bf16.msra.mxu0 %v1036
        %1055 = vmatpush.bf16.msra.mxu0 %v1035
        %1056 = vmatpush.bf16.msra.mxu0 %v1034
        %1057 = vmatpush.bf16.msra.mxu0 %v1033
        %1058 = vmatmul.bf16.gmra.mxu0 %v1048
        %v1059 = vpop.f32.mrf.mxu0
        %v1060 = vadd.f32 0.0, %v1059
        %v1061 = vpop.f32.mrf.mxu0
        %1062 = vdwg.mxu0
        %v1063 = vadd.f32 %v986, %v1060
        %v1064 = vld [vmem:[%s5] sm:$0x1]
        %v1066 = vperm.slane %v1064, 0
        %v1068 = vadd.f32 %v1063, %v1066
        %v1069 = vmax.f32 %v1068, 0.0
        %v1070 = vadd.f32 %v1069, %v832
        %v1071 = vrot.slane %v1070, 7
        %v1072 = vsel %vm835, 0.0, %v1071
        %v1073 = vrot.slane %v1070, 1
        %v1074 = vsel %vm838, 0.0, %v1073
        %s1075 = scalar_lea.vmem %s4, 168
        %v1076 = vld [vmem:[%s1075] sm:$0xf]
        %v1077 = vld [vmem:[%s1075 + $0x4] sm:$0xf]
        %v1078 = vld [vmem:[%s1075 + $0x8] sm:$0xf]
        %v1079 = vld [vmem:[%s1075 + $0xc] sm:$0xf]
        %v1080 = vld [vmem:[%s1075 + $0x10] sm:$0xf]
        %v1081 = vld [vmem:[%s1075 + $0x14] sm:$0xf]
        %v1082 = vld [vmem:[%s1075 + $0x18] sm:$0xf]
        %v1083 = vld [vmem:[%s1075 + $0x1c] sm:$0xf]
        %v1084 = vld [vmem:[%s1075 + $0x20] sm:$0xf]
        %v1085 = vld [vmem:[%s1075 + $0x24] sm:$0xf]
        %v1086 = vld [vmem:[%s1075 + $0x28] sm:$0xf]
        %v1087 = vld [vmem:[%s1075 + $0x2c] sm:$0xf]
        %v1088 = vld [vmem:[%s1075 + $0x30] sm:$0xf]
        %v1089 = vld [vmem:[%s1075 + $0x34] sm:$0xf]
        %v1090 = vpack.c.bf16 %v1072, %v1072
        %s1091 = scalar_lea.vmem %s4, 224
        %v1092 = vld [vmem:[%s1091] sm:$0xf]
        %v1093 = vld [vmem:[%s1091 + $0x4] sm:$0xf]
        %v1094 = vld [vmem:[%s1091 + $0x8] sm:$0xf]
        %v1095 = vld [vmem:[%s1091 + $0xc] sm:$0xf]
        %v1096 = vld [vmem:[%s1091 + $0x10] sm:$0xf]
        %v1097 = vld [vmem:[%s1091 + $0x14] sm:$0xf]
        %v1098 = vld [vmem:[%s1091 + $0x18] sm:$0xf]
        %v1099 = vld [vmem:[%s1091 + $0x1c] sm:$0xf]
        %v1100 = vld [vmem:[%s1091 + $0x20] sm:$0xf]
        %v1101 = vld [vmem:[%s1091 + $0x24] sm:$0xf]
        %v1102 = vld [vmem:[%s1091 + $0x28] sm:$0xf]
        %v1103 = vld [vmem:[%s1091 + $0x2c] sm:$0xf]
        %v1104 = vld [vmem:[%s1091 + $0x30] sm:$0xf]
        %v1105 = vld [vmem:[%s1091 + $0x34] sm:$0xf]
        %v1106 = vpack.c.bf16 %v1070, %v1070
        %v1121 = vunpack.c.l.b16 %v1092
        %v1122 = vunpack.c.l.b16 %v1093
        %v1123 = vunpack.c.l.b16 %v1094
        %v1124 = vunpack.c.l.b16 %v1095
        %v1125 = vunpack.c.l.b16 %v1096
        %v1126 = vunpack.c.l.b16 %v1097
        %v1127 = vunpack.c.l.b16 %v1098
        %v1128 = vunpack.c.l.b16 %v1099
        %v1129 = vunpack.c.l.b16 %v1100
        %v1130 = vunpack.c.l.b16 %v1101
        %v1131 = vunpack.c.l.b16 %v1102
        %v1132 = vunpack.c.l.b16 %v1103
        %v1133 = vunpack.c.l.b16 %v1104
        %v1134 = vunpack.c.l.b16 %v1105
        %v1135 = vpack.c.b16 %v1122, %v1121
        %v1136 = vpack.c.b16 %v1124, %v1123
        %v1137 = vpack.c.b16 %v1126, %v1125
        %v1138 = vpack.c.b16 %v1128, %v1127
        %v1139 = vpack.c.b16 %v1130, %v1129
        %v1140 = vpack.c.b16 %v1132, %v1131
        %v1141 = vpack.c.b16 %v1134, %v1133
        %v1150 = vsel %vm914, %v1106, 0
        %1152 = vmatpush.bf16.msra.mxu0 0
        %1153 = vmatpush.bf16.msra.mxu0 %v1141
        %1154 = vmatpush.bf16.msra.mxu0 %v1140
        %1155 = vmatpush.bf16.msra.mxu0 %v1139
        %1156 = vmatpush.bf16.msra.mxu0 %v1138
        %1157 = vmatpush.bf16.msra.mxu0 %v1137
        %1158 = vmatpush.bf16.msra.mxu0 %v1136
        %1159 = vmatpush.bf16.msra.mxu0 %v1135
        %1160 = vmatmul.bf16.gmra.mxu0 %v1150
        %v1161 = vpop.f32.mrf.mxu0
        %v1162 = vadd.f32 0.0, %v1161
        %v1163 = vpop.f32.mrf.mxu0
        %1164 = vdwg.mxu0
        %v1179 = vunpack.c.l.b16 %v1076
        %v1180 = vunpack.c.l.b16 %v1077
        %v1181 = vunpack.c.l.b16 %v1078
        %v1182 = vunpack.c.l.b16 %v1079
        %v1183 = vunpack.c.l.b16 %v1080
        %v1184 = vunpack.c.l.b16 %v1081
        %v1185 = vunpack.c.l.b16 %v1082
        %v1186 = vunpack.c.l.b16 %v1083
        %v1187 = vunpack.c.l.b16 %v1084
        %v1188 = vunpack.c.l.b16 %v1085
        %v1189 = vunpack.c.l.b16 %v1086
        %v1190 = vunpack.c.l.b16 %v1087
        %v1191 = vunpack.c.l.b16 %v1088
        %v1192 = vunpack.c.l.b16 %v1089
        %v1193 = vpack.c.b16 %v1180, %v1179
        %v1194 = vpack.c.b16 %v1182, %v1181
        %v1195 = vpack.c.b16 %v1184, %v1183
        %v1196 = vpack.c.b16 %v1186, %v1185
        %v1197 = vpack.c.b16 %v1188, %v1187
        %v1198 = vpack.c.b16 %v1190, %v1189
        %v1199 = vpack.c.b16 %v1192, %v1191
        %v1208 = vsel %vm914, %v1090, 0
        %1210 = vmatpush.bf16.msra.mxu0 0
        %1211 = vmatpush.bf16.msra.mxu0 %v1199
        %1212 = vmatpush.bf16.msra.mxu0 %v1198
        %1213 = vmatpush.bf16.msra.mxu0 %v1197
        %1214 = vmatpush.bf16.msra.mxu0 %v1196
        %1215 = vmatpush.bf16.msra.mxu0 %v1195
        %1216 = vmatpush.bf16.msra.mxu0 %v1194
        %1217 = vmatpush.bf16.msra.mxu0 %v1193
        %1218 = vmatmul.bf16.gmra.mxu0 %v1208
        %v1219 = vpop.f32.mrf.mxu0
        %v1220 = vadd.f32 %v1162, %v1219
        %v1221 = vpop.f32.mrf.mxu0
        %1222 = vdwg.mxu0
        %s1223 = scalar_lea.vmem %s4, 280
        %v1224 = vld [vmem:[%s1223] sm:$0xf]
        %v1225 = vld [vmem:[%s1223 + $0x4] sm:$0xf]
        %v1226 = vld [vmem:[%s1223 + $0x8] sm:$0xf]
        %v1227 = vld [vmem:[%s1223 + $0xc] sm:$0xf]
        %v1228 = vld [vmem:[%s1223 + $0x10] sm:$0xf]
        %v1229 = vld [vmem:[%s1223 + $0x14] sm:$0xf]
        %v1230 = vld [vmem:[%s1223 + $0x18] sm:$0xf]
        %v1231 = vld [vmem:[%s1223 + $0x1c] sm:$0xf]
        %v1232 = vld [vmem:[%s1223 + $0x20] sm:$0xf]
        %v1233 = vld [vmem:[%s1223 + $0x24] sm:$0xf]
        %v1234 = vld [vmem:[%s1223 + $0x28] sm:$0xf]
        %v1235 = vld [vmem:[%s1223 + $0x2c] sm:$0xf]
        %v1236 = vld [vmem:[%s1223 + $0x30] sm:$0xf]
        %v1237 = vld [vmem:[%s1223 + $0x34] sm:$0xf]
        %v1238 = vpack.c.bf16 %v1074, %v1074
        %v1253 = vunpack.c.l.b16 %v1224
        %v1254 = vunpack.c.l.b16 %v1225
        %v1255 = vunpack.c.l.b16 %v1226
        %v1256 = vunpack.c.l.b16 %v1227
        %v1257 = vunpack.c.l.b16 %v1228
        %v1258 = vunpack.c.l.b16 %v1229
        %v1259 = vunpack.c.l.b16 %v1230
        %v1260 = vunpack.c.l.b16 %v1231
        %v1261 = vunpack.c.l.b16 %v1232
        %v1262 = vunpack.c.l.b16 %v1233
        %v1263 = vunpack.c.l.b16 %v1234
        %v1264 = vunpack.c.l.b16 %v1235
        %v1265 = vunpack.c.l.b16 %v1236
        %v1266 = vunpack.c.l.b16 %v1237
        %v1267 = vpack.c.b16 %v1254, %v1253
        %v1268 = vpack.c.b16 %v1256, %v1255
        %v1269 = vpack.c.b16 %v1258, %v1257
        %v1270 = vpack.c.b16 %v1260, %v1259
        %v1271 = vpack.c.b16 %v1262, %v1261
        %v1272 = vpack.c.b16 %v1264, %v1263
        %v1273 = vpack.c.b16 %v1266, %v1265
        %v1282 = vsel %vm914, %v1238, 0
        %1284 = vmatpush.bf16.msra.mxu0 0
        %1285 = vmatpush.bf16.msra.mxu0 %v1273
        %1286 = vmatpush.bf16.msra.mxu0 %v1272
        %1287 = vmatpush.bf16.msra.mxu0 %v1271
        %1288 = vmatpush.bf16.msra.mxu0 %v1270
        %1289 = vmatpush.bf16.msra.mxu0 %v1269
        %1290 = vmatpush.bf16.msra.mxu0 %v1268
        %1291 = vmatpush.bf16.msra.mxu0 %v1267
        %1292 = vmatmul.bf16.gmra.mxu0 %v1282
        %v1293 = vpop.f32.mrf.mxu0
        %v1294 = vadd.f32 0.0, %v1293
        %v1295 = vpop.f32.mrf.mxu0
        %1296 = vdwg.mxu0
        %v1297 = vadd.f32 %v1220, %v1294
        %s1298 = scalar_lea.vmem %s5, 1
        %v1299 = vld [vmem:[%s1298] sm:$0x1]
        %v1301 = vperm.slane %v1299, 0
        %v1303 = vadd.f32 %v1297, %v1301
        %v1304 = vmax.f32 %v1303, 0.0
        %v1305 = vadd.f32 %v1304, %v1070
        %v1306 = vrot.slane %v1305, 7
        %v1307 = vsel %vm835, 0.0, %v1306
        %v1308 = vrot.slane %v1305, 1
        %v1309 = vsel %vm838, 0.0, %v1308
        %s1310 = scalar_lea.vmem %s4, 336
        %v1311 = vld [vmem:[%s1310] sm:$0xf]
        %v1312 = vld [vmem:[%s1310 + $0x4] sm:$0xf]
        %v1313 = vld [vmem:[%s1310 + $0x8] sm:$0xf]
        %v1314 = vld [vmem:[%s1310 + $0xc] sm:$0xf]
        %v1315 = vld [vmem:[%s1310 + $0x10] sm:$0xf]
        %v1316 = vld [vmem:[%s1310 + $0x14] sm:$0xf]
        %v1317 = vld [vmem:[%s1310 + $0x18] sm:$0xf]
        %v1318 = vld [vmem:[%s1310 + $0x1c] sm:$0xf]
        %v1319 = vld [vmem:[%s1310 + $0x20] sm:$0xf]
        %v1320 = vld [vmem:[%s1310 + $0x24] sm:$0xf]
        %v1321 = vld [vmem:[%s1310 + $0x28] sm:$0xf]
        %v1322 = vld [vmem:[%s1310 + $0x2c] sm:$0xf]
        %v1323 = vld [vmem:[%s1310 + $0x30] sm:$0xf]
        %v1324 = vld [vmem:[%s1310 + $0x34] sm:$0xf]
        %v1325 = vpack.c.bf16 %v1307, %v1307
        %s1326 = scalar_lea.vmem %s4, 392
        %v1327 = vld [vmem:[%s1326] sm:$0xf]
        %v1328 = vld [vmem:[%s1326 + $0x4] sm:$0xf]
        %v1329 = vld [vmem:[%s1326 + $0x8] sm:$0xf]
        %v1330 = vld [vmem:[%s1326 + $0xc] sm:$0xf]
        %v1331 = vld [vmem:[%s1326 + $0x10] sm:$0xf]
        %v1332 = vld [vmem:[%s1326 + $0x14] sm:$0xf]
        %v1333 = vld [vmem:[%s1326 + $0x18] sm:$0xf]
        %v1334 = vld [vmem:[%s1326 + $0x1c] sm:$0xf]
        %v1335 = vld [vmem:[%s1326 + $0x20] sm:$0xf]
        %v1336 = vld [vmem:[%s1326 + $0x24] sm:$0xf]
        %v1337 = vld [vmem:[%s1326 + $0x28] sm:$0xf]
        %v1338 = vld [vmem:[%s1326 + $0x2c] sm:$0xf]
        %v1339 = vld [vmem:[%s1326 + $0x30] sm:$0xf]
        %v1340 = vld [vmem:[%s1326 + $0x34] sm:$0xf]
        %v1341 = vpack.c.bf16 %v1305, %v1305
        %v1356 = vunpack.c.l.b16 %v1327
        %v1357 = vunpack.c.l.b16 %v1328
        %v1358 = vunpack.c.l.b16 %v1329
        %v1359 = vunpack.c.l.b16 %v1330
        %v1360 = vunpack.c.l.b16 %v1331
        %v1361 = vunpack.c.l.b16 %v1332
        %v1362 = vunpack.c.l.b16 %v1333
        %v1363 = vunpack.c.l.b16 %v1334
        %v1364 = vunpack.c.l.b16 %v1335
        %v1365 = vunpack.c.l.b16 %v1336
        %v1366 = vunpack.c.l.b16 %v1337
        %v1367 = vunpack.c.l.b16 %v1338
        %v1368 = vunpack.c.l.b16 %v1339
        %v1369 = vunpack.c.l.b16 %v1340
        %v1370 = vpack.c.b16 %v1357, %v1356
        %v1371 = vpack.c.b16 %v1359, %v1358
        %v1372 = vpack.c.b16 %v1361, %v1360
        %v1373 = vpack.c.b16 %v1363, %v1362
        %v1374 = vpack.c.b16 %v1365, %v1364
        %v1375 = vpack.c.b16 %v1367, %v1366
        %v1376 = vpack.c.b16 %v1369, %v1368
        %v1385 = vsel %vm914, %v1341, 0
        %1387 = vmatpush.bf16.msra.mxu0 0
        %1388 = vmatpush.bf16.msra.mxu0 %v1376
        %1389 = vmatpush.bf16.msra.mxu0 %v1375
        %1390 = vmatpush.bf16.msra.mxu0 %v1374
        %1391 = vmatpush.bf16.msra.mxu0 %v1373
        %1392 = vmatpush.bf16.msra.mxu0 %v1372
        %1393 = vmatpush.bf16.msra.mxu0 %v1371
        %1394 = vmatpush.bf16.msra.mxu0 %v1370
        %1395 = vmatmul.bf16.gmra.mxu0 %v1385
        %v1396 = vpop.f32.mrf.mxu0
        %v1397 = vadd.f32 0.0, %v1396
        %v1398 = vpop.f32.mrf.mxu0
        %1399 = vdwg.mxu0
        %v1414 = vunpack.c.l.b16 %v1311
        %v1415 = vunpack.c.l.b16 %v1312
        %v1416 = vunpack.c.l.b16 %v1313
        %v1417 = vunpack.c.l.b16 %v1314
        %v1418 = vunpack.c.l.b16 %v1315
        %v1419 = vunpack.c.l.b16 %v1316
        %v1420 = vunpack.c.l.b16 %v1317
        %v1421 = vunpack.c.l.b16 %v1318
        %v1422 = vunpack.c.l.b16 %v1319
        %v1423 = vunpack.c.l.b16 %v1320
        %v1424 = vunpack.c.l.b16 %v1321
        %v1425 = vunpack.c.l.b16 %v1322
        %v1426 = vunpack.c.l.b16 %v1323
        %v1427 = vunpack.c.l.b16 %v1324
        %v1428 = vpack.c.b16 %v1415, %v1414
        %v1429 = vpack.c.b16 %v1417, %v1416
        %v1430 = vpack.c.b16 %v1419, %v1418
        %v1431 = vpack.c.b16 %v1421, %v1420
        %v1432 = vpack.c.b16 %v1423, %v1422
        %v1433 = vpack.c.b16 %v1425, %v1424
        %v1434 = vpack.c.b16 %v1427, %v1426
        %v1443 = vsel %vm914, %v1325, 0
        %1445 = vmatpush.bf16.msra.mxu0 0
        %1446 = vmatpush.bf16.msra.mxu0 %v1434
        %1447 = vmatpush.bf16.msra.mxu0 %v1433
        %1448 = vmatpush.bf16.msra.mxu0 %v1432
        %1449 = vmatpush.bf16.msra.mxu0 %v1431
        %1450 = vmatpush.bf16.msra.mxu0 %v1430
        %1451 = vmatpush.bf16.msra.mxu0 %v1429
        %1452 = vmatpush.bf16.msra.mxu0 %v1428
        %1453 = vmatmul.bf16.gmra.mxu0 %v1443
        %v1454 = vpop.f32.mrf.mxu0
        %v1455 = vadd.f32 %v1397, %v1454
        %v1456 = vpop.f32.mrf.mxu0
        %1457 = vdwg.mxu0
        %s1458 = scalar_lea.vmem %s4, 448
        %v1459 = vld [vmem:[%s1458] sm:$0xf]
        %v1460 = vld [vmem:[%s1458 + $0x4] sm:$0xf]
        %v1461 = vld [vmem:[%s1458 + $0x8] sm:$0xf]
        %v1462 = vld [vmem:[%s1458 + $0xc] sm:$0xf]
        %v1463 = vld [vmem:[%s1458 + $0x10] sm:$0xf]
        %v1464 = vld [vmem:[%s1458 + $0x14] sm:$0xf]
        %v1465 = vld [vmem:[%s1458 + $0x18] sm:$0xf]
        %v1466 = vld [vmem:[%s1458 + $0x1c] sm:$0xf]
        %v1467 = vld [vmem:[%s1458 + $0x20] sm:$0xf]
        %v1468 = vld [vmem:[%s1458 + $0x24] sm:$0xf]
        %v1469 = vld [vmem:[%s1458 + $0x28] sm:$0xf]
        %v1470 = vld [vmem:[%s1458 + $0x2c] sm:$0xf]
        %v1471 = vld [vmem:[%s1458 + $0x30] sm:$0xf]
        %v1472 = vld [vmem:[%s1458 + $0x34] sm:$0xf]
        %v1473 = vpack.c.bf16 %v1309, %v1309
        %v1488 = vunpack.c.l.b16 %v1459
        %v1489 = vunpack.c.l.b16 %v1460
        %v1490 = vunpack.c.l.b16 %v1461
        %v1491 = vunpack.c.l.b16 %v1462
        %v1492 = vunpack.c.l.b16 %v1463
        %v1493 = vunpack.c.l.b16 %v1464
        %v1494 = vunpack.c.l.b16 %v1465
        %v1495 = vunpack.c.l.b16 %v1466
        %v1496 = vunpack.c.l.b16 %v1467
        %v1497 = vunpack.c.l.b16 %v1468
        %v1498 = vunpack.c.l.b16 %v1469
        %v1499 = vunpack.c.l.b16 %v1470
        %v1500 = vunpack.c.l.b16 %v1471
        %v1501 = vunpack.c.l.b16 %v1472
        %v1502 = vpack.c.b16 %v1489, %v1488
        %v1503 = vpack.c.b16 %v1491, %v1490
        %v1504 = vpack.c.b16 %v1493, %v1492
        %v1505 = vpack.c.b16 %v1495, %v1494
        %v1506 = vpack.c.b16 %v1497, %v1496
        %v1507 = vpack.c.b16 %v1499, %v1498
        %v1508 = vpack.c.b16 %v1501, %v1500
        %v1517 = vsel %vm914, %v1473, 0
        %1519 = vmatpush.bf16.msra.mxu0 0
        %1520 = vmatpush.bf16.msra.mxu0 %v1508
        %1521 = vmatpush.bf16.msra.mxu0 %v1507
        %1522 = vmatpush.bf16.msra.mxu0 %v1506
        %1523 = vmatpush.bf16.msra.mxu0 %v1505
        %1524 = vmatpush.bf16.msra.mxu0 %v1504
        %1525 = vmatpush.bf16.msra.mxu0 %v1503
        %1526 = vmatpush.bf16.msra.mxu0 %v1502
        %1527 = vmatmul.bf16.gmra.mxu0 %v1517
        %v1528 = vpop.f32.mrf.mxu0
        %v1529 = vadd.f32 0.0, %v1528
        %v1530 = vpop.f32.mrf.mxu0
        %1531 = vdwg.mxu0
        %v1532 = vadd.f32 %v1455, %v1529
        %s1533 = scalar_lea.vmem %s5, 2
        %v1534 = vld [vmem:[%s1533] sm:$0x1]
        %v1536 = vperm.slane %v1534, 0
        %v1538 = vadd.f32 %v1532, %v1536
        %v1539 = vmax.f32 %v1538, 0.0
        %v1540 = vadd.f32 %v1539, %v1305
        %v1541 = vrot.slane %v1540, 7
        %v1542 = vsel %vm835, 0.0, %v1541
        %v1543 = vrot.slane %v1540, 1
        %v1544 = vsel %vm838, 0.0, %v1543
        %s1545 = scalar_lea.vmem %s4, 504
        %v1546 = vld [vmem:[%s1545] sm:$0xf]
        %v1547 = vld [vmem:[%s1545 + $0x4] sm:$0xf]
        %v1548 = vld [vmem:[%s1545 + $0x8] sm:$0xf]
        %v1549 = vld [vmem:[%s1545 + $0xc] sm:$0xf]
        %v1550 = vld [vmem:[%s1545 + $0x10] sm:$0xf]
        %v1551 = vld [vmem:[%s1545 + $0x14] sm:$0xf]
        %v1552 = vld [vmem:[%s1545 + $0x18] sm:$0xf]
        %v1553 = vld [vmem:[%s1545 + $0x1c] sm:$0xf]
        %v1554 = vld [vmem:[%s1545 + $0x20] sm:$0xf]
        %v1555 = vld [vmem:[%s1545 + $0x24] sm:$0xf]
        %v1556 = vld [vmem:[%s1545 + $0x28] sm:$0xf]
        %v1557 = vld [vmem:[%s1545 + $0x2c] sm:$0xf]
        %v1558 = vld [vmem:[%s1545 + $0x30] sm:$0xf]
        %v1559 = vld [vmem:[%s1545 + $0x34] sm:$0xf]
        %v1560 = vpack.c.bf16 %v1542, %v1542
        %s1561 = scalar_lea.vmem %s4, 560
        %v1562 = vld [vmem:[%s1561] sm:$0xf]
        %v1563 = vld [vmem:[%s1561 + $0x4] sm:$0xf]
        %v1564 = vld [vmem:[%s1561 + $0x8] sm:$0xf]
        %v1565 = vld [vmem:[%s1561 + $0xc] sm:$0xf]
        %v1566 = vld [vmem:[%s1561 + $0x10] sm:$0xf]
        %v1567 = vld [vmem:[%s1561 + $0x14] sm:$0xf]
        %v1568 = vld [vmem:[%s1561 + $0x18] sm:$0xf]
        %v1569 = vld [vmem:[%s1561 + $0x1c] sm:$0xf]
        %v1570 = vld [vmem:[%s1561 + $0x20] sm:$0xf]
        %v1571 = vld [vmem:[%s1561 + $0x24] sm:$0xf]
        %v1572 = vld [vmem:[%s1561 + $0x28] sm:$0xf]
        %v1573 = vld [vmem:[%s1561 + $0x2c] sm:$0xf]
        %v1574 = vld [vmem:[%s1561 + $0x30] sm:$0xf]
        %v1575 = vld [vmem:[%s1561 + $0x34] sm:$0xf]
        %v1576 = vpack.c.bf16 %v1540, %v1540
        %v1591 = vunpack.c.l.b16 %v1562
        %v1592 = vunpack.c.l.b16 %v1563
        %v1593 = vunpack.c.l.b16 %v1564
        %v1594 = vunpack.c.l.b16 %v1565
        %v1595 = vunpack.c.l.b16 %v1566
        %v1596 = vunpack.c.l.b16 %v1567
        %v1597 = vunpack.c.l.b16 %v1568
        %v1598 = vunpack.c.l.b16 %v1569
        %v1599 = vunpack.c.l.b16 %v1570
        %v1600 = vunpack.c.l.b16 %v1571
        %v1601 = vunpack.c.l.b16 %v1572
        %v1602 = vunpack.c.l.b16 %v1573
        %v1603 = vunpack.c.l.b16 %v1574
        %v1604 = vunpack.c.l.b16 %v1575
        %v1605 = vpack.c.b16 %v1592, %v1591
        %v1606 = vpack.c.b16 %v1594, %v1593
        %v1607 = vpack.c.b16 %v1596, %v1595
        %v1608 = vpack.c.b16 %v1598, %v1597
        %v1609 = vpack.c.b16 %v1600, %v1599
        %v1610 = vpack.c.b16 %v1602, %v1601
        %v1611 = vpack.c.b16 %v1604, %v1603
        %v1620 = vsel %vm914, %v1576, 0
        %1622 = vmatpush.bf16.msra.mxu0 0
        %1623 = vmatpush.bf16.msra.mxu0 %v1611
        %1624 = vmatpush.bf16.msra.mxu0 %v1610
        %1625 = vmatpush.bf16.msra.mxu0 %v1609
        %1626 = vmatpush.bf16.msra.mxu0 %v1608
        %1627 = vmatpush.bf16.msra.mxu0 %v1607
        %1628 = vmatpush.bf16.msra.mxu0 %v1606
        %1629 = vmatpush.bf16.msra.mxu0 %v1605
        %1630 = vmatmul.bf16.gmra.mxu0 %v1620
        %v1631 = vpop.f32.mrf.mxu0
        %v1632 = vadd.f32 0.0, %v1631
        %v1633 = vpop.f32.mrf.mxu0
        %1634 = vdwg.mxu0
        %v1649 = vunpack.c.l.b16 %v1546
        %v1650 = vunpack.c.l.b16 %v1547
        %v1651 = vunpack.c.l.b16 %v1548
        %v1652 = vunpack.c.l.b16 %v1549
        %v1653 = vunpack.c.l.b16 %v1550
        %v1654 = vunpack.c.l.b16 %v1551
        %v1655 = vunpack.c.l.b16 %v1552
        %v1656 = vunpack.c.l.b16 %v1553
        %v1657 = vunpack.c.l.b16 %v1554
        %v1658 = vunpack.c.l.b16 %v1555
        %v1659 = vunpack.c.l.b16 %v1556
        %v1660 = vunpack.c.l.b16 %v1557
        %v1661 = vunpack.c.l.b16 %v1558
        %v1662 = vunpack.c.l.b16 %v1559
        %v1663 = vpack.c.b16 %v1650, %v1649
        %v1664 = vpack.c.b16 %v1652, %v1651
        %v1665 = vpack.c.b16 %v1654, %v1653
        %v1666 = vpack.c.b16 %v1656, %v1655
        %v1667 = vpack.c.b16 %v1658, %v1657
        %v1668 = vpack.c.b16 %v1660, %v1659
        %v1669 = vpack.c.b16 %v1662, %v1661
        %v1678 = vsel %vm914, %v1560, 0
        %1680 = vmatpush.bf16.msra.mxu0 0
        %1681 = vmatpush.bf16.msra.mxu0 %v1669
        %1682 = vmatpush.bf16.msra.mxu0 %v1668
        %1683 = vmatpush.bf16.msra.mxu0 %v1667
        %1684 = vmatpush.bf16.msra.mxu0 %v1666
        %1685 = vmatpush.bf16.msra.mxu0 %v1665
        %1686 = vmatpush.bf16.msra.mxu0 %v1664
        %1687 = vmatpush.bf16.msra.mxu0 %v1663
        %1688 = vmatmul.bf16.gmra.mxu0 %v1678
        %v1689 = vpop.f32.mrf.mxu0
        %v1690 = vadd.f32 %v1632, %v1689
        %v1691 = vpop.f32.mrf.mxu0
        %1692 = vdwg.mxu0
        %s1693 = scalar_lea.vmem %s4, 616
        %v1694 = vld [vmem:[%s1693] sm:$0xf]
        %v1695 = vld [vmem:[%s1693 + $0x4] sm:$0xf]
        %v1696 = vld [vmem:[%s1693 + $0x8] sm:$0xf]
        %v1697 = vld [vmem:[%s1693 + $0xc] sm:$0xf]
        %v1698 = vld [vmem:[%s1693 + $0x10] sm:$0xf]
        %v1699 = vld [vmem:[%s1693 + $0x14] sm:$0xf]
        %v1700 = vld [vmem:[%s1693 + $0x18] sm:$0xf]
        %v1701 = vld [vmem:[%s1693 + $0x1c] sm:$0xf]
        %v1702 = vld [vmem:[%s1693 + $0x20] sm:$0xf]
        %v1703 = vld [vmem:[%s1693 + $0x24] sm:$0xf]
        %v1704 = vld [vmem:[%s1693 + $0x28] sm:$0xf]
        %v1705 = vld [vmem:[%s1693 + $0x2c] sm:$0xf]
        %v1706 = vld [vmem:[%s1693 + $0x30] sm:$0xf]
        %v1707 = vld [vmem:[%s1693 + $0x34] sm:$0xf]
        %v1708 = vpack.c.bf16 %v1544, %v1544
        %v1723 = vunpack.c.l.b16 %v1694
        %v1724 = vunpack.c.l.b16 %v1695
        %v1725 = vunpack.c.l.b16 %v1696
        %v1726 = vunpack.c.l.b16 %v1697
        %v1727 = vunpack.c.l.b16 %v1698
        %v1728 = vunpack.c.l.b16 %v1699
        %v1729 = vunpack.c.l.b16 %v1700
        %v1730 = vunpack.c.l.b16 %v1701
        %v1731 = vunpack.c.l.b16 %v1702
        %v1732 = vunpack.c.l.b16 %v1703
        %v1733 = vunpack.c.l.b16 %v1704
        %v1734 = vunpack.c.l.b16 %v1705
        %v1735 = vunpack.c.l.b16 %v1706
        %v1736 = vunpack.c.l.b16 %v1707
        %v1737 = vpack.c.b16 %v1724, %v1723
        %v1738 = vpack.c.b16 %v1726, %v1725
        %v1739 = vpack.c.b16 %v1728, %v1727
        %v1740 = vpack.c.b16 %v1730, %v1729
        %v1741 = vpack.c.b16 %v1732, %v1731
        %v1742 = vpack.c.b16 %v1734, %v1733
        %v1743 = vpack.c.b16 %v1736, %v1735
        %v1752 = vsel %vm914, %v1708, 0
        %1754 = vmatpush.bf16.msra.mxu0 0
        %1755 = vmatpush.bf16.msra.mxu0 %v1743
        %1756 = vmatpush.bf16.msra.mxu0 %v1742
        %1757 = vmatpush.bf16.msra.mxu0 %v1741
        %1758 = vmatpush.bf16.msra.mxu0 %v1740
        %1759 = vmatpush.bf16.msra.mxu0 %v1739
        %1760 = vmatpush.bf16.msra.mxu0 %v1738
        %1761 = vmatpush.bf16.msra.mxu0 %v1737
        %1762 = vmatmul.bf16.gmra.mxu0 %v1752
        %v1763 = vpop.f32.mrf.mxu0
        %v1764 = vadd.f32 0.0, %v1763
        %v1765 = vpop.f32.mrf.mxu0
        %1766 = vdwg.mxu0
        %v1767 = vadd.f32 %v1690, %v1764
        %s1768 = scalar_lea.vmem %s5, 3
        %v1769 = vld [vmem:[%s1768] sm:$0x1]
        %v1771 = vperm.slane %v1769, 0
        %v1773 = vadd.f32 %v1767, %v1771
        %v1774 = vmax.f32 %v1773, 0.0
        %v1775 = vadd.f32 %v1774, %v1540
        %v1776 = vld [vmem:[%s6] sm:$0xf]
        %v1777 = vld [vmem:[%s6 + $0x4] sm:$0xf]
        %v1778 = vld [vmem:[%s6 + $0x8] sm:$0xf]
        %v1779 = vld [vmem:[%s6 + $0xc] sm:$0xf]
        %v1780 = vld [vmem:[%s6 + $0x10] sm:$0xf]
        %v1781 = vld [vmem:[%s6 + $0x14] sm:$0xf]
        %v1782 = vld [vmem:[%s6 + $0x18] sm:$0xf]
        %v1783 = vld [vmem:[%s6 + $0x1c] sm:$0xf]
        %v1784 = vld [vmem:[%s6 + $0x20] sm:$0xf]
        %v1785 = vld [vmem:[%s6 + $0x24] sm:$0xf]
        %v1786 = vld [vmem:[%s6 + $0x28] sm:$0xf]
        %v1787 = vld [vmem:[%s6 + $0x2c] sm:$0xf]
        %v1788 = vld [vmem:[%s6 + $0x30] sm:$0xf]
        %v1789 = vld [vmem:[%s6 + $0x34] sm:$0xf]
        %v1790 = vpack.c.bf16 %v1775, %v1775
        %v1791 = vld [vmem:[%s7] sm:$0x1]
        %v1793 = vperm.slane %v1791, 0
        %v1809 = vunpack.c.l.b16 %v1776
        %v1810 = vunpack.c.l.b16 %v1777
        %v1811 = vunpack.c.l.b16 %v1778
        %v1812 = vunpack.c.l.b16 %v1779
        %v1813 = vunpack.c.l.b16 %v1780
        %v1814 = vunpack.c.l.b16 %v1781
        %v1815 = vunpack.c.l.b16 %v1782
        %v1816 = vunpack.c.l.b16 %v1783
        %v1817 = vunpack.c.l.b16 %v1784
        %v1818 = vunpack.c.l.b16 %v1785
        %v1819 = vunpack.c.l.b16 %v1786
        %v1820 = vunpack.c.l.b16 %v1787
        %v1821 = vunpack.c.l.b16 %v1788
        %v1822 = vunpack.c.l.b16 %v1789
        %v1823 = vpack.c.b16 %v1810, %v1809
        %v1824 = vpack.c.b16 %v1812, %v1811
        %v1825 = vpack.c.b16 %v1814, %v1813
        %v1826 = vpack.c.b16 %v1816, %v1815
        %v1827 = vpack.c.b16 %v1818, %v1817
        %v1828 = vpack.c.b16 %v1820, %v1819
        %v1829 = vpack.c.b16 %v1822, %v1821
        %v1838 = vsel %vm914, %v1790, 0
        %1840 = vmatpush.bf16.msra.mxu0 0
        %1841 = vmatpush.bf16.msra.mxu0 %v1829
        %1842 = vmatpush.bf16.msra.mxu0 %v1828
        %1843 = vmatpush.bf16.msra.mxu0 %v1827
        %1844 = vmatpush.bf16.msra.mxu0 %v1826
        %1845 = vmatpush.bf16.msra.mxu0 %v1825
        %1846 = vmatpush.bf16.msra.mxu0 %v1824
        %1847 = vmatpush.bf16.msra.mxu0 %v1823
        %1848 = vmatmul.bf16.gmra.mxu0 %v1838
        %v1849 = vpop.f32.mrf.mxu0
        %v1850 = vadd.f32 %v1793, %v1849
        %v1851 = vpop.f32.mrf.mxu0
        %1852 = vdwg.mxu0
        %v1853 = vadd.f32 %v1850, %v778
        %v1854 = vld [vmem:[%s776] sm:$0xff]
        %v1855 = vld [vmem:[%s8] sm:$0xf]
        %v1856 = vld [vmem:[%s8 + $0x4] sm:$0xf]
        %v1857 = vld [vmem:[%s8 + $0x8] sm:$0xf]
        %v1858 = vld [vmem:[%s8 + $0xc] sm:$0xf]
        %v1859 = vld [vmem:[%s8 + $0x10] sm:$0xf]
        %v1860 = vld [vmem:[%s8 + $0x14] sm:$0xf]
        %v1861 = vld [vmem:[%s8 + $0x18] sm:$0xf]
        %v1862 = vld [vmem:[%s8 + $0x1c] sm:$0xf]
        %v1863 = vpack.c.bf16 %v1854, %v1854
        %v1864 = vld [vmem:[%s9] sm:$0x1]
        %v1866 = vperm.slane %v1864, 0
        %v1876 = vunpack.c.l.b16 %v1855
        %v1877 = vunpack.c.l.b16 %v1856
        %v1878 = vunpack.c.l.b16 %v1857
        %v1879 = vunpack.c.l.b16 %v1858
        %v1880 = vunpack.c.l.b16 %v1859
        %v1881 = vunpack.c.l.b16 %v1860
        %v1882 = vunpack.c.l.b16 %v1861
        %v1883 = vunpack.c.l.b16 %v1862
        %v1884 = vpack.c.b16 %v1877, %v1876
        %v1885 = vpack.c.b16 %v1879, %v1878
        %v1886 = vpack.c.b16 %v1881, %v1880
        %v1887 = vpack.c.b16 %v1883, %v1882
        %v1893 = vsel %vm818, %v1863, 0
        %1895 = vmatpush.bf16.msra.mxu0 0
        %1896 = vmatpush.bf16.msra.mxu0 0
        %1897 = vmatpush.bf16.msra.mxu0 0
        %1898 = vmatpush.bf16.msra.mxu0 0
        %1899 = vmatpush.bf16.msra.mxu0 %v1887
        %1900 = vmatpush.bf16.msra.mxu0 %v1886
        %1901 = vmatpush.bf16.msra.mxu0 %v1885
        %1902 = vmatpush.bf16.msra.mxu0 %v1884
        %1903 = vmatmul.bf16.gmra.mxu0 %v1893
        %v1904 = vpop.f32.mrf.mxu0
        %v1905 = vadd.f32 %v1866, %v1904
        %v1906 = vpop.f32.mrf.mxu0
        %1907 = vdwg.mxu0
        %v1908 = vld [vmem:[%s15] sm:$0xf]
        %v1909 = vld [vmem:[%s15 + $0x4] sm:$0xf]
        %v1910 = vld [vmem:[%s15 + $0x8] sm:$0xf]
        %v1911 = vld [vmem:[%s15 + $0xc] sm:$0xf]
        %v1912 = vld [vmem:[%s15 + $0x10] sm:$0xf]
        %v1913 = vld [vmem:[%s15 + $0x14] sm:$0xf]
        %v1914 = vld [vmem:[%s15 + $0x18] sm:$0xf]
        %v1915 = vld [vmem:[%s15 + $0x1c] sm:$0xf]
        %v1916 = vpack.c.bf16 %v1853, %v1853
        %v1925 = vunpack.c.l.b16 %v1908
        %v1926 = vunpack.c.l.b16 %v1909
        %v1927 = vunpack.c.l.b16 %v1910
        %v1928 = vunpack.c.l.b16 %v1911
        %v1929 = vunpack.c.l.b16 %v1912
        %v1930 = vunpack.c.l.b16 %v1913
        %v1931 = vunpack.c.l.b16 %v1914
        %v1932 = vunpack.c.l.b16 %v1915
        %v1933 = vpack.c.b16 %v1926, %v1925
        %v1934 = vpack.c.b16 %v1928, %v1927
        %v1935 = vpack.c.b16 %v1930, %v1929
        %v1936 = vpack.c.b16 %v1932, %v1931
        %v1942 = vsel %vm818, %v1916, 0
        %1944 = vmatpush.bf16.msra.mxu0 0
        %1945 = vmatpush.bf16.msra.mxu0 0
        %1946 = vmatpush.bf16.msra.mxu0 0
        %1947 = vmatpush.bf16.msra.mxu0 0
        %1948 = vmatpush.bf16.msra.mxu0 %v1936
        %1949 = vmatpush.bf16.msra.mxu0 %v1935
        %1950 = vmatpush.bf16.msra.mxu0 %v1934
        %1951 = vmatpush.bf16.msra.mxu0 %v1933
        %1952 = vmatmul.bf16.gmra.mxu0 %v1942
        %v1953 = vpop.f32.mrf.mxu0
        %v1954 = vadd.f32 0.0, %v1953
        %v1955 = vpop.f32.mrf.mxu0
        %1956 = vdwg.mxu0
        %vm1957 = vcmp.lt.s32.totalorder %v780, 2
        %v1958 = vrot.slane %v1905, 6
        %v1959 = vsel %vm1957, 1.0, %v1958
        %v1960 = vrot.slane %v1905, 7
        %v1961 = vsel %vm835, 1.0, %v1960
        %v1962 = vld [vmem:[%s10] sm:$0xf]
        %v1963 = vld [vmem:[%s10 + $0x4] sm:$0xf]
        %v1964 = vld [vmem:[%s10 + $0x8] sm:$0xf]
        %v1965 = vld [vmem:[%s10 + $0xc] sm:$0xf]
        %v1966 = vld [vmem:[%s10 + $0x10] sm:$0xf]
        %v1967 = vld [vmem:[%s10 + $0x14] sm:$0xf]
        %v1968 = vld [vmem:[%s10 + $0x18] sm:$0xf]
        %v1969 = vld [vmem:[%s10 + $0x1c] sm:$0xf]
        %v1970 = vld [vmem:[%s10 + $0x20] sm:$0xf]
        %v1971 = vld [vmem:[%s10 + $0x24] sm:$0xf]
        %v1972 = vld [vmem:[%s10 + $0x28] sm:$0xf]
        %v1973 = vld [vmem:[%s10 + $0x2c] sm:$0xf]
        %v1974 = vld [vmem:[%s10 + $0x30] sm:$0xf]
        %v1975 = vld [vmem:[%s10 + $0x34] sm:$0xf]
        %v1976 = vpack.c.bf16 %v1959, %v1959
        %s1977 = scalar_lea.vmem %s10, 56
        %v1978 = vld [vmem:[%s1977] sm:$0xf]
        %v1979 = vld [vmem:[%s1977 + $0x4] sm:$0xf]
        %v1980 = vld [vmem:[%s1977 + $0x8] sm:$0xf]
        %v1981 = vld [vmem:[%s1977 + $0xc] sm:$0xf]
        %v1982 = vld [vmem:[%s1977 + $0x10] sm:$0xf]
        %v1983 = vld [vmem:[%s1977 + $0x14] sm:$0xf]
        %v1984 = vld [vmem:[%s1977 + $0x18] sm:$0xf]
        %v1985 = vld [vmem:[%s1977 + $0x1c] sm:$0xf]
        %v1986 = vld [vmem:[%s1977 + $0x20] sm:$0xf]
        %v1987 = vld [vmem:[%s1977 + $0x24] sm:$0xf]
        %v1988 = vld [vmem:[%s1977 + $0x28] sm:$0xf]
        %v1989 = vld [vmem:[%s1977 + $0x2c] sm:$0xf]
        %v1990 = vld [vmem:[%s1977 + $0x30] sm:$0xf]
        %v1991 = vld [vmem:[%s1977 + $0x34] sm:$0xf]
        %v1992 = vpack.c.bf16 %v1961, %v1961
        %v2007 = vunpack.c.l.b16 %v1978
        %v2008 = vunpack.c.l.b16 %v1979
        %v2009 = vunpack.c.l.b16 %v1980
        %v2010 = vunpack.c.l.b16 %v1981
        %v2011 = vunpack.c.l.b16 %v1982
        %v2012 = vunpack.c.l.b16 %v1983
        %v2013 = vunpack.c.l.b16 %v1984
        %v2014 = vunpack.c.l.b16 %v1985
        %v2015 = vunpack.c.l.b16 %v1986
        %v2016 = vunpack.c.l.b16 %v1987
        %v2017 = vunpack.c.l.b16 %v1988
        %v2018 = vunpack.c.l.b16 %v1989
        %v2019 = vunpack.c.l.b16 %v1990
        %v2020 = vunpack.c.l.b16 %v1991
        %v2021 = vpack.c.b16 %v2008, %v2007
        %v2022 = vpack.c.b16 %v2010, %v2009
        %v2023 = vpack.c.b16 %v2012, %v2011
        %v2024 = vpack.c.b16 %v2014, %v2013
        %v2025 = vpack.c.b16 %v2016, %v2015
        %v2026 = vpack.c.b16 %v2018, %v2017
        %v2027 = vpack.c.b16 %v2020, %v2019
        %v2036 = vsel %vm914, %v1992, 0
        %2038 = vmatpush.bf16.msra.mxu0 0
        %2039 = vmatpush.bf16.msra.mxu0 %v2027
        %2040 = vmatpush.bf16.msra.mxu0 %v2026
        %2041 = vmatpush.bf16.msra.mxu0 %v2025
        %2042 = vmatpush.bf16.msra.mxu0 %v2024
        %2043 = vmatpush.bf16.msra.mxu0 %v2023
        %2044 = vmatpush.bf16.msra.mxu0 %v2022
        %2045 = vmatpush.bf16.msra.mxu0 %v2021
        %2046 = vmatmul.bf16.gmra.mxu0 %v2036
        %v2047 = vpop.f32.mrf.mxu0
        %v2048 = vadd.f32 0.0, %v2047
        %v2049 = vpop.f32.mrf.mxu0
        %2050 = vdwg.mxu0
        %v2065 = vunpack.c.l.b16 %v1962
        %v2066 = vunpack.c.l.b16 %v1963
        %v2067 = vunpack.c.l.b16 %v1964
        %v2068 = vunpack.c.l.b16 %v1965
        %v2069 = vunpack.c.l.b16 %v1966
        %v2070 = vunpack.c.l.b16 %v1967
        %v2071 = vunpack.c.l.b16 %v1968
        %v2072 = vunpack.c.l.b16 %v1969
        %v2073 = vunpack.c.l.b16 %v1970
        %v2074 = vunpack.c.l.b16 %v1971
        %v2075 = vunpack.c.l.b16 %v1972
        %v2076 = vunpack.c.l.b16 %v1973
        %v2077 = vunpack.c.l.b16 %v1974
        %v2078 = vunpack.c.l.b16 %v1975
        %v2079 = vpack.c.b16 %v2066, %v2065
        %v2080 = vpack.c.b16 %v2068, %v2067
        %v2081 = vpack.c.b16 %v2070, %v2069
        %v2082 = vpack.c.b16 %v2072, %v2071
        %v2083 = vpack.c.b16 %v2074, %v2073
        %v2084 = vpack.c.b16 %v2076, %v2075
        %v2085 = vpack.c.b16 %v2078, %v2077
        %v2094 = vsel %vm914, %v1976, 0
        %2096 = vmatpush.bf16.msra.mxu0 0
        %2097 = vmatpush.bf16.msra.mxu0 %v2085
        %2098 = vmatpush.bf16.msra.mxu0 %v2084
        %2099 = vmatpush.bf16.msra.mxu0 %v2083
        %2100 = vmatpush.bf16.msra.mxu0 %v2082
        %2101 = vmatpush.bf16.msra.mxu0 %v2081
        %2102 = vmatpush.bf16.msra.mxu0 %v2080
        %2103 = vmatpush.bf16.msra.mxu0 %v2079
        %2104 = vmatmul.bf16.gmra.mxu0 %v2094
        %v2105 = vpop.f32.mrf.mxu0
        %v2106 = vadd.f32 %v2048, %v2105
        %v2107 = vpop.f32.mrf.mxu0
        %2108 = vdwg.mxu0
        %s2109 = scalar_lea.vmem %s10, 112
        %v2110 = vld [vmem:[%s2109] sm:$0xf]
        %v2111 = vld [vmem:[%s2109 + $0x4] sm:$0xf]
        %v2112 = vld [vmem:[%s2109 + $0x8] sm:$0xf]
        %v2113 = vld [vmem:[%s2109 + $0xc] sm:$0xf]
        %v2114 = vld [vmem:[%s2109 + $0x10] sm:$0xf]
        %v2115 = vld [vmem:[%s2109 + $0x14] sm:$0xf]
        %v2116 = vld [vmem:[%s2109 + $0x18] sm:$0xf]
        %v2117 = vld [vmem:[%s2109 + $0x1c] sm:$0xf]
        %v2118 = vld [vmem:[%s2109 + $0x20] sm:$0xf]
        %v2119 = vld [vmem:[%s2109 + $0x24] sm:$0xf]
        %v2120 = vld [vmem:[%s2109 + $0x28] sm:$0xf]
        %v2121 = vld [vmem:[%s2109 + $0x2c] sm:$0xf]
        %v2122 = vld [vmem:[%s2109 + $0x30] sm:$0xf]
        %v2123 = vld [vmem:[%s2109 + $0x34] sm:$0xf]
        %v2124 = vpack.c.bf16 %v1905, %v1905
        %v2139 = vunpack.c.l.b16 %v2110
        %v2140 = vunpack.c.l.b16 %v2111
        %v2141 = vunpack.c.l.b16 %v2112
        %v2142 = vunpack.c.l.b16 %v2113
        %v2143 = vunpack.c.l.b16 %v2114
        %v2144 = vunpack.c.l.b16 %v2115
        %v2145 = vunpack.c.l.b16 %v2116
        %v2146 = vunpack.c.l.b16 %v2117
        %v2147 = vunpack.c.l.b16 %v2118
        %v2148 = vunpack.c.l.b16 %v2119
        %v2149 = vunpack.c.l.b16 %v2120
        %v2150 = vunpack.c.l.b16 %v2121
        %v2151 = vunpack.c.l.b16 %v2122
        %v2152 = vunpack.c.l.b16 %v2123
        %v2153 = vpack.c.b16 %v2140, %v2139
        %v2154 = vpack.c.b16 %v2142, %v2141
        %v2155 = vpack.c.b16 %v2144, %v2143
        %v2156 = vpack.c.b16 %v2146, %v2145
        %v2157 = vpack.c.b16 %v2148, %v2147
        %v2158 = vpack.c.b16 %v2150, %v2149
        %v2159 = vpack.c.b16 %v2152, %v2151
        %v2168 = vsel %vm914, %v2124, 0
        %2170 = vmatpush.bf16.msra.mxu0 0
        %2171 = vmatpush.bf16.msra.mxu0 %v2159
        %2172 = vmatpush.bf16.msra.mxu0 %v2158
        %2173 = vmatpush.bf16.msra.mxu0 %v2157
        %2174 = vmatpush.bf16.msra.mxu0 %v2156
        %2175 = vmatpush.bf16.msra.mxu0 %v2155
        %2176 = vmatpush.bf16.msra.mxu0 %v2154
        %2177 = vmatpush.bf16.msra.mxu0 %v2153
        %2178 = vmatmul.bf16.gmra.mxu0 %v2168
        %v2179 = vpop.f32.mrf.mxu0
        %v2180 = vadd.f32 0.0, %v2179
        %v2181 = vpop.f32.mrf.mxu0
        %2182 = vdwg.mxu0
        %v2183 = vadd.f32 %v2106, %v2180
        %v2184 = vld [vmem:[%s11] sm:$0x1]
        %v2186 = vperm.slane %v2184, 0
        %v2188 = vadd.f32 %v2183, %v2186
        %v2189 = vmax.f32 %v2188, 0.0
        %v2190 = vld [vmem:[%s12] sm:$0xf]
        %v2191 = vld [vmem:[%s12 + $0x4] sm:$0xf]
        %v2192 = vld [vmem:[%s12 + $0x8] sm:$0xf]
        %v2193 = vld [vmem:[%s12 + $0xc] sm:$0xf]
        %v2194 = vld [vmem:[%s12 + $0x10] sm:$0xf]
        %v2195 = vld [vmem:[%s12 + $0x14] sm:$0xf]
        %v2196 = vld [vmem:[%s12 + $0x18] sm:$0xf]
        %v2197 = vld [vmem:[%s12 + $0x1c] sm:$0xf]
        %v2198 = vld [vmem:[%s12 + $0x20] sm:$0xf]
        %v2199 = vld [vmem:[%s12 + $0x24] sm:$0xf]
        %v2200 = vld [vmem:[%s12 + $0x28] sm:$0xf]
        %v2201 = vld [vmem:[%s12 + $0x2c] sm:$0xf]
        %v2202 = vld [vmem:[%s12 + $0x30] sm:$0xf]
        %v2203 = vld [vmem:[%s12 + $0x34] sm:$0xf]
        %v2204 = vpack.c.bf16 %v2189, %v2189
        %v2205 = vld [vmem:[%s13] sm:$0x1]
        %v2207 = vperm.slane %v2205, 0
        %v2223 = vunpack.c.l.b16 %v2190
        %v2224 = vunpack.c.l.b16 %v2191
        %v2225 = vunpack.c.l.b16 %v2192
        %v2226 = vunpack.c.l.b16 %v2193
        %v2227 = vunpack.c.l.b16 %v2194
        %v2228 = vunpack.c.l.b16 %v2195
        %v2229 = vunpack.c.l.b16 %v2196
        %v2230 = vunpack.c.l.b16 %v2197
        %v2231 = vunpack.c.l.b16 %v2198
        %v2232 = vunpack.c.l.b16 %v2199
        %v2233 = vunpack.c.l.b16 %v2200
        %v2234 = vunpack.c.l.b16 %v2201
        %v2235 = vunpack.c.l.b16 %v2202
        %v2236 = vunpack.c.l.b16 %v2203
        %v2237 = vpack.c.b16 %v2224, %v2223
        %v2238 = vpack.c.b16 %v2226, %v2225
        %v2239 = vpack.c.b16 %v2228, %v2227
        %v2240 = vpack.c.b16 %v2230, %v2229
        %v2241 = vpack.c.b16 %v2232, %v2231
        %v2242 = vpack.c.b16 %v2234, %v2233
        %v2243 = vpack.c.b16 %v2236, %v2235
        %v2252 = vsel %vm914, %v2204, 0
        %2254 = vmatpush.bf16.msra.mxu0 0
        %2255 = vmatpush.bf16.msra.mxu0 %v2243
        %2256 = vmatpush.bf16.msra.mxu0 %v2242
        %2257 = vmatpush.bf16.msra.mxu0 %v2241
        %2258 = vmatpush.bf16.msra.mxu0 %v2240
        %2259 = vmatpush.bf16.msra.mxu0 %v2239
        %2260 = vmatpush.bf16.msra.mxu0 %v2238
        %2261 = vmatpush.bf16.msra.mxu0 %v2237
        %2262 = vmatmul.bf16.gmra.mxu0 %v2252
        %v2263 = vpop.f32.mrf.mxu0
        %v2264 = vadd.f32 %v2207, %v2263
        %v2265 = vpop.f32.mrf.mxu0
        %2266 = vdwg.mxu0
        %v2267 = vld [vmem:[%s14] sm:$0xf]
        %v2268 = vld [vmem:[%s14 + $0x4] sm:$0xf]
        %v2269 = vld [vmem:[%s14 + $0x8] sm:$0xf]
        %v2270 = vld [vmem:[%s14 + $0xc] sm:$0xf]
        %v2271 = vld [vmem:[%s14 + $0x10] sm:$0xf]
        %v2272 = vld [vmem:[%s14 + $0x14] sm:$0xf]
        %v2273 = vld [vmem:[%s14 + $0x18] sm:$0xf]
        %v2274 = vld [vmem:[%s14 + $0x1c] sm:$0xf]
        %v2275 = vpack.c.bf16 %v2264, %v2264
        %v2276 = vld [vmem:[%s16] sm:$0x1]
        %v2278 = vperm.slane %v2276, 0
        %v2288 = vunpack.c.l.b16 %v2267
        %v2289 = vunpack.c.l.b16 %v2268
        %v2290 = vunpack.c.l.b16 %v2269
        %v2291 = vunpack.c.l.b16 %v2270
        %v2292 = vunpack.c.l.b16 %v2271
        %v2293 = vunpack.c.l.b16 %v2272
        %v2294 = vunpack.c.l.b16 %v2273
        %v2295 = vunpack.c.l.b16 %v2274
        %v2296 = vpack.c.b16 %v2289, %v2288
        %v2297 = vpack.c.b16 %v2291, %v2290
        %v2298 = vpack.c.b16 %v2293, %v2292
        %v2299 = vpack.c.b16 %v2295, %v2294
        %v2305 = vsel %vm818, %v2275, 0
        %2307 = vmatpush.bf16.msra.mxu0 0
        %2308 = vmatpush.bf16.msra.mxu0 0
        %2309 = vmatpush.bf16.msra.mxu0 0
        %2310 = vmatpush.bf16.msra.mxu0 0
        %2311 = vmatpush.bf16.msra.mxu0 %v2299
        %2312 = vmatpush.bf16.msra.mxu0 %v2298
        %2313 = vmatpush.bf16.msra.mxu0 %v2297
        %2314 = vmatpush.bf16.msra.mxu0 %v2296
        %2315 = vmatmul.bf16.gmra.mxu0 %v2305
        %v2316 = vpop.f32.mrf.mxu0
        %v2317 = vadd.f32 %v2278, %v2316
        %v2318 = vpop.f32.mrf.mxu0
        %2319 = vdwg.mxu0
        %v2320 = vperm.slane %v1954, 0
        %v2321 = vadd.f32 %v2317, %v2320
        %v2322 = vmax.f32 %v2321, 0.0
        %v2323 = vperm.slane %v1954, 1
        %v2324 = vadd.f32 %v2317, %v2323
        %v2325 = vmax.f32 %v2324, 0.0
        %v2326 = vperm.slane %v1954, 2
        %v2327 = vadd.f32 %v2317, %v2326
        %v2328 = vmax.f32 %v2327, 0.0
        %v2329 = vperm.slane %v1954, 3
        %v2330 = vadd.f32 %v2317, %v2329
        %v2331 = vmax.f32 %v2330, 0.0
        %v2332 = vperm.slane %v1954, 4
        %v2333 = vadd.f32 %v2317, %v2332
        %v2334 = vmax.f32 %v2333, 0.0
        %v2335 = vperm.slane %v1954, 5
        %v2336 = vadd.f32 %v2317, %v2335
        %v2337 = vmax.f32 %v2336, 0.0
        %v2338 = vperm.slane %v1954, 6
        %v2339 = vadd.f32 %v2317, %v2338
        %v2340 = vmax.f32 %v2339, 0.0
        %v2341 = vperm.slane %v1954, 7
        %v2342 = vadd.f32 %v2317, %v2341
        %v2343 = vmax.f32 %v2342, 0.0
        %v2344 = vld [vmem:[%s17] sm:$0xf]
        %v2345 = vld [vmem:[%s17 + $0x4] sm:$0xf]
        %v2346 = vld [vmem:[%s17 + $0x8] sm:$0xf]
        %v2347 = vld [vmem:[%s17 + $0xc] sm:$0xf]
        %v2348 = vld [vmem:[%s17 + $0x10] sm:$0xf]
        %v2349 = vld [vmem:[%s17 + $0x14] sm:$0xf]
        %v2350 = vld [vmem:[%s17 + $0x18] sm:$0xf]
        %v2351 = vld [vmem:[%s17 + $0x1c] sm:$0xf]
        %v2352 = vpack.c.bf16 %v2325, %v2322
        %v2353 = vpack.c.bf16 %v2331, %v2328
        %v2354 = vpack.c.bf16 %v2337, %v2334
        %v2355 = vpack.c.bf16 %v2343, %v2340
        %v2356 = vld [vmem:[%s18] sm:$0x1]
        %v2358 = vperm.slane %v2356, 0
        %v2368 = vunpack.c.l.b16 %v2344
        %v2369 = vunpack.c.l.b16 %v2345
        %v2370 = vunpack.c.l.b16 %v2346
        %v2371 = vunpack.c.l.b16 %v2347
        %v2372 = vunpack.c.l.b16 %v2348
        %v2373 = vunpack.c.l.b16 %v2349
        %v2374 = vunpack.c.l.b16 %v2350
        %v2375 = vunpack.c.l.b16 %v2351
        %v2376 = vpack.c.b16 %v2369, %v2368
        %v2377 = vpack.c.b16 %v2371, %v2370
        %v2378 = vpack.c.b16 %v2373, %v2372
        %v2379 = vpack.c.b16 %v2375, %v2374
        %v2385 = vsel %vm818, %v2352, 0
        %v2388 = vsel %vm818, %v2353, 0
        %v2391 = vsel %vm818, %v2354, 0
        %v2394 = vsel %vm818, %v2355, 0
        %2396 = vmatpush.bf16.msra.mxu0 0
        %2397 = vmatpush.bf16.msra.mxu0 0
        %2398 = vmatpush.bf16.msra.mxu0 0
        %2399 = vmatpush.bf16.msra.mxu0 0
        %2400 = vmatpush.bf16.msra.mxu0 %v2379
        %2401 = vmatpush.bf16.msra.mxu0 %v2378
        %2402 = vmatpush.bf16.msra.mxu0 %v2377
        %2403 = vmatpush.bf16.msra.mxu0 %v2376
        %2404 = vmatmul.bf16.gmra.mxu0 %v2385
        %v2405 = vpop.f32.mrf.mxu0
        %v2406 = vadd.f32 %v2358, %v2405
        %v2407 = vpop.f32.mrf.mxu0
        %v2408 = vadd.f32 %v2358, %v2407
        %2409 = vmatmul.bf16.gmra.mxu0 %v2388
        %v2410 = vpop.f32.mrf.mxu0
        %v2411 = vadd.f32 %v2358, %v2410
        %v2412 = vpop.f32.mrf.mxu0
        %v2413 = vadd.f32 %v2358, %v2412
        %2414 = vmatmul.bf16.gmra.mxu0 %v2391
        %v2415 = vpop.f32.mrf.mxu0
        %v2416 = vadd.f32 %v2358, %v2415
        %v2417 = vpop.f32.mrf.mxu0
        %v2418 = vadd.f32 %v2358, %v2417
        %2419 = vmatmul.bf16.gmra.mxu0 %v2394
        %v2420 = vpop.f32.mrf.mxu0
        %v2421 = vadd.f32 %v2358, %v2420
        %v2422 = vpop.f32.mrf.mxu0
        %v2423 = vadd.f32 %v2358, %v2422
        %2424 = vdwg.mxu0
        %v2425 = vmax.f32 %v2406, 0.0
        %v2426 = vmax.f32 %v2408, 0.0
        %v2427 = vmax.f32 %v2411, 0.0
        %v2428 = vmax.f32 %v2413, 0.0
        %v2429 = vmax.f32 %v2416, 0.0
        %v2430 = vmax.f32 %v2418, 0.0
        %v2431 = vmax.f32 %v2421, 0.0
        %v2432 = vmax.f32 %v2423, 0.0
        %v2433 = vmax.f32 %v2425, %v2426
        %v2434 = vmax.f32 %v2433, %v2427
        %v2435 = vmax.f32 %v2434, %v2428
        %v2436 = vmax.f32 %v2435, %v2429
        %v2437 = vmax.f32 %v2436, %v2430
        %v2438 = vmax.f32 %v2437, %v2431
        %v2439 = vmax.f32 %v2438, %v2432
        %v2440 = vld [vmem:[%s19] sm:$0xf]
        %v2441 = vld [vmem:[%s19 + $0x4] sm:$0xf]
        %v2442 = vld [vmem:[%s19 + $0x8] sm:$0xf]
        %v2443 = vld [vmem:[%s19 + $0xc] sm:$0xf]
        %v2444 = vld [vmem:[%s19 + $0x10] sm:$0xf]
        %v2445 = vld [vmem:[%s19 + $0x14] sm:$0xf]
        %v2446 = vld [vmem:[%s19 + $0x18] sm:$0xf]
        %v2447 = vld [vmem:[%s19 + $0x1c] sm:$0xf]
        %v2448 = vpack.c.bf16 %v2439, %v2439
        %v2449 = vld [vmem:[%s20] sm:$0x1]
        %v2451 = vperm.slane %v2449, 0
        %v2461 = vunpack.c.l.b16 %v2440
        %v2462 = vunpack.c.l.b16 %v2441
        %v2463 = vunpack.c.l.b16 %v2442
        %v2464 = vunpack.c.l.b16 %v2443
        %v2465 = vunpack.c.l.b16 %v2444
        %v2466 = vunpack.c.l.b16 %v2445
        %v2467 = vunpack.c.l.b16 %v2446
        %v2468 = vunpack.c.l.b16 %v2447
        %v2469 = vpack.c.b16 %v2462, %v2461
        %v2470 = vpack.c.b16 %v2464, %v2463
        %v2471 = vpack.c.b16 %v2466, %v2465
        %v2472 = vpack.c.b16 %v2468, %v2467
        %v2478 = vsel %vm818, %v2448, 0
        %2480 = vmatpush.bf16.msra.mxu0 0
        %2481 = vmatpush.bf16.msra.mxu0 0
        %2482 = vmatpush.bf16.msra.mxu0 0
        %2483 = vmatpush.bf16.msra.mxu0 0
        %2484 = vmatpush.bf16.msra.mxu0 %v2472
        %2485 = vmatpush.bf16.msra.mxu0 %v2471
        %2486 = vmatpush.bf16.msra.mxu0 %v2470
        %2487 = vmatpush.bf16.msra.mxu0 %v2469
        %2488 = vmatmul.bf16.gmra.mxu0 %v2478
        %v2489 = vpop.f32.mrf.mxu0
        %v2490 = vadd.f32 %v2451, %v2489
        %v2491 = vpop.f32.mrf.mxu0
        %2492 = vdwg.mxu0
        %v2493 = vadd.f32 %v2490, %v2189
        %v2494 = vrot.slane %v2493, 6
        %v2495 = vsel %vm1957, 1.0, %v2494
        %v2496 = vrot.slane %v2493, 7
        %v2497 = vsel %vm835, 1.0, %v2496
        %s2498 = scalar_lea.vmem %s10, 168
        %v2499 = vld [vmem:[%s2498] sm:$0xf]
        %v2500 = vld [vmem:[%s2498 + $0x4] sm:$0xf]
        %v2501 = vld [vmem:[%s2498 + $0x8] sm:$0xf]
        %v2502 = vld [vmem:[%s2498 + $0xc] sm:$0xf]
        %v2503 = vld [vmem:[%s2498 + $0x10] sm:$0xf]
        %v2504 = vld [vmem:[%s2498 + $0x14] sm:$0xf]
        %v2505 = vld [vmem:[%s2498 + $0x18] sm:$0xf]
        %v2506 = vld [vmem:[%s2498 + $0x1c] sm:$0xf]
        %v2507 = vld [vmem:[%s2498 + $0x20] sm:$0xf]
        %v2508 = vld [vmem:[%s2498 + $0x24] sm:$0xf]
        %v2509 = vld [vmem:[%s2498 + $0x28] sm:$0xf]
        %v2510 = vld [vmem:[%s2498 + $0x2c] sm:$0xf]
        %v2511 = vld [vmem:[%s2498 + $0x30] sm:$0xf]
        %v2512 = vld [vmem:[%s2498 + $0x34] sm:$0xf]
        %v2513 = vpack.c.bf16 %v2495, %v2495
        %s2514 = scalar_lea.vmem %s10, 224
        %v2515 = vld [vmem:[%s2514] sm:$0xf]
        %v2516 = vld [vmem:[%s2514 + $0x4] sm:$0xf]
        %v2517 = vld [vmem:[%s2514 + $0x8] sm:$0xf]
        %v2518 = vld [vmem:[%s2514 + $0xc] sm:$0xf]
        %v2519 = vld [vmem:[%s2514 + $0x10] sm:$0xf]
        %v2520 = vld [vmem:[%s2514 + $0x14] sm:$0xf]
        %v2521 = vld [vmem:[%s2514 + $0x18] sm:$0xf]
        %v2522 = vld [vmem:[%s2514 + $0x1c] sm:$0xf]
        %v2523 = vld [vmem:[%s2514 + $0x20] sm:$0xf]
        %v2524 = vld [vmem:[%s2514 + $0x24] sm:$0xf]
        %v2525 = vld [vmem:[%s2514 + $0x28] sm:$0xf]
        %v2526 = vld [vmem:[%s2514 + $0x2c] sm:$0xf]
        %v2527 = vld [vmem:[%s2514 + $0x30] sm:$0xf]
        %v2528 = vld [vmem:[%s2514 + $0x34] sm:$0xf]
        %v2529 = vpack.c.bf16 %v2497, %v2497
        %v2544 = vunpack.c.l.b16 %v2515
        %v2545 = vunpack.c.l.b16 %v2516
        %v2546 = vunpack.c.l.b16 %v2517
        %v2547 = vunpack.c.l.b16 %v2518
        %v2548 = vunpack.c.l.b16 %v2519
        %v2549 = vunpack.c.l.b16 %v2520
        %v2550 = vunpack.c.l.b16 %v2521
        %v2551 = vunpack.c.l.b16 %v2522
        %v2552 = vunpack.c.l.b16 %v2523
        %v2553 = vunpack.c.l.b16 %v2524
        %v2554 = vunpack.c.l.b16 %v2525
        %v2555 = vunpack.c.l.b16 %v2526
        %v2556 = vunpack.c.l.b16 %v2527
        %v2557 = vunpack.c.l.b16 %v2528
        %v2558 = vpack.c.b16 %v2545, %v2544
        %v2559 = vpack.c.b16 %v2547, %v2546
        %v2560 = vpack.c.b16 %v2549, %v2548
        %v2561 = vpack.c.b16 %v2551, %v2550
        %v2562 = vpack.c.b16 %v2553, %v2552
        %v2563 = vpack.c.b16 %v2555, %v2554
        %v2564 = vpack.c.b16 %v2557, %v2556
        %v2573 = vsel %vm914, %v2529, 0
        %2575 = vmatpush.bf16.msra.mxu0 0
        %2576 = vmatpush.bf16.msra.mxu0 %v2564
        %2577 = vmatpush.bf16.msra.mxu0 %v2563
        %2578 = vmatpush.bf16.msra.mxu0 %v2562
        %2579 = vmatpush.bf16.msra.mxu0 %v2561
        %2580 = vmatpush.bf16.msra.mxu0 %v2560
        %2581 = vmatpush.bf16.msra.mxu0 %v2559
        %2582 = vmatpush.bf16.msra.mxu0 %v2558
        %2583 = vmatmul.bf16.gmra.mxu0 %v2573
        %v2584 = vpop.f32.mrf.mxu0
        %v2585 = vadd.f32 0.0, %v2584
        %v2586 = vpop.f32.mrf.mxu0
        %2587 = vdwg.mxu0
        %v2602 = vunpack.c.l.b16 %v2499
        %v2603 = vunpack.c.l.b16 %v2500
        %v2604 = vunpack.c.l.b16 %v2501
        %v2605 = vunpack.c.l.b16 %v2502
        %v2606 = vunpack.c.l.b16 %v2503
        %v2607 = vunpack.c.l.b16 %v2504
        %v2608 = vunpack.c.l.b16 %v2505
        %v2609 = vunpack.c.l.b16 %v2506
        %v2610 = vunpack.c.l.b16 %v2507
        %v2611 = vunpack.c.l.b16 %v2508
        %v2612 = vunpack.c.l.b16 %v2509
        %v2613 = vunpack.c.l.b16 %v2510
        %v2614 = vunpack.c.l.b16 %v2511
        %v2615 = vunpack.c.l.b16 %v2512
        %v2616 = vpack.c.b16 %v2603, %v2602
        %v2617 = vpack.c.b16 %v2605, %v2604
        %v2618 = vpack.c.b16 %v2607, %v2606
        %v2619 = vpack.c.b16 %v2609, %v2608
        %v2620 = vpack.c.b16 %v2611, %v2610
        %v2621 = vpack.c.b16 %v2613, %v2612
        %v2622 = vpack.c.b16 %v2615, %v2614
        %v2631 = vsel %vm914, %v2513, 0
        %2633 = vmatpush.bf16.msra.mxu0 0
        %2634 = vmatpush.bf16.msra.mxu0 %v2622
        %2635 = vmatpush.bf16.msra.mxu0 %v2621
        %2636 = vmatpush.bf16.msra.mxu0 %v2620
        %2637 = vmatpush.bf16.msra.mxu0 %v2619
        %2638 = vmatpush.bf16.msra.mxu0 %v2618
        %2639 = vmatpush.bf16.msra.mxu0 %v2617
        %2640 = vmatpush.bf16.msra.mxu0 %v2616
        %2641 = vmatmul.bf16.gmra.mxu0 %v2631
        %v2642 = vpop.f32.mrf.mxu0
        %v2643 = vadd.f32 %v2585, %v2642
        %v2644 = vpop.f32.mrf.mxu0
        %2645 = vdwg.mxu0
        %s2646 = scalar_lea.vmem %s10, 280
        %v2647 = vld [vmem:[%s2646] sm:$0xf]
        %v2648 = vld [vmem:[%s2646 + $0x4] sm:$0xf]
        %v2649 = vld [vmem:[%s2646 + $0x8] sm:$0xf]
        %v2650 = vld [vmem:[%s2646 + $0xc] sm:$0xf]
        %v2651 = vld [vmem:[%s2646 + $0x10] sm:$0xf]
        %v2652 = vld [vmem:[%s2646 + $0x14] sm:$0xf]
        %v2653 = vld [vmem:[%s2646 + $0x18] sm:$0xf]
        %v2654 = vld [vmem:[%s2646 + $0x1c] sm:$0xf]
        %v2655 = vld [vmem:[%s2646 + $0x20] sm:$0xf]
        %v2656 = vld [vmem:[%s2646 + $0x24] sm:$0xf]
        %v2657 = vld [vmem:[%s2646 + $0x28] sm:$0xf]
        %v2658 = vld [vmem:[%s2646 + $0x2c] sm:$0xf]
        %v2659 = vld [vmem:[%s2646 + $0x30] sm:$0xf]
        %v2660 = vld [vmem:[%s2646 + $0x34] sm:$0xf]
        %v2661 = vpack.c.bf16 %v2493, %v2493
        %v2676 = vunpack.c.l.b16 %v2647
        %v2677 = vunpack.c.l.b16 %v2648
        %v2678 = vunpack.c.l.b16 %v2649
        %v2679 = vunpack.c.l.b16 %v2650
        %v2680 = vunpack.c.l.b16 %v2651
        %v2681 = vunpack.c.l.b16 %v2652
        %v2682 = vunpack.c.l.b16 %v2653
        %v2683 = vunpack.c.l.b16 %v2654
        %v2684 = vunpack.c.l.b16 %v2655
        %v2685 = vunpack.c.l.b16 %v2656
        %v2686 = vunpack.c.l.b16 %v2657
        %v2687 = vunpack.c.l.b16 %v2658
        %v2688 = vunpack.c.l.b16 %v2659
        %v2689 = vunpack.c.l.b16 %v2660
        %v2690 = vpack.c.b16 %v2677, %v2676
        %v2691 = vpack.c.b16 %v2679, %v2678
        %v2692 = vpack.c.b16 %v2681, %v2680
        %v2693 = vpack.c.b16 %v2683, %v2682
        %v2694 = vpack.c.b16 %v2685, %v2684
        %v2695 = vpack.c.b16 %v2687, %v2686
        %v2696 = vpack.c.b16 %v2689, %v2688
        %v2705 = vsel %vm914, %v2661, 0
        %2707 = vmatpush.bf16.msra.mxu0 0
        %2708 = vmatpush.bf16.msra.mxu0 %v2696
        %2709 = vmatpush.bf16.msra.mxu0 %v2695
        %2710 = vmatpush.bf16.msra.mxu0 %v2694
        %2711 = vmatpush.bf16.msra.mxu0 %v2693
        %2712 = vmatpush.bf16.msra.mxu0 %v2692
        %2713 = vmatpush.bf16.msra.mxu0 %v2691
        %2714 = vmatpush.bf16.msra.mxu0 %v2690
        %2715 = vmatmul.bf16.gmra.mxu0 %v2705
        %v2716 = vpop.f32.mrf.mxu0
        %v2717 = vadd.f32 0.0, %v2716
        %v2718 = vpop.f32.mrf.mxu0
        %2719 = vdwg.mxu0
        %v2720 = vadd.f32 %v2643, %v2717
        %s2721 = scalar_lea.vmem %s11, 1
        %v2722 = vld [vmem:[%s2721] sm:$0x1]
        %v2724 = vperm.slane %v2722, 0
        %v2726 = vadd.f32 %v2720, %v2724
        %v2727 = vmax.f32 %v2726, 0.0
        %v2728 = vpack.c.bf16 %v2727, %v2727
        %v2730 = vsel %vm914, %v2728, 0
        %2732 = vmatpush.bf16.msra.mxu0 0
        %2733 = vmatpush.bf16.msra.mxu0 %v2243
        %2734 = vmatpush.bf16.msra.mxu0 %v2242
        %2735 = vmatpush.bf16.msra.mxu0 %v2241
        %2736 = vmatpush.bf16.msra.mxu0 %v2240
        %2737 = vmatpush.bf16.msra.mxu0 %v2239
        %2738 = vmatpush.bf16.msra.mxu0 %v2238
        %2739 = vmatpush.bf16.msra.mxu0 %v2237
        %2740 = vmatmul.bf16.gmra.mxu0 %v2730
        %v2741 = vpop.f32.mrf.mxu0
        %v2742 = vadd.f32 %v2207, %v2741
        %v2743 = vpop.f32.mrf.mxu0
        %2744 = vdwg.mxu0
        %v2745 = vpack.c.bf16 %v2742, %v2742
        %v2747 = vsel %vm818, %v2745, 0
        %2749 = vmatpush.bf16.msra.mxu0 0
        %2750 = vmatpush.bf16.msra.mxu0 0
        %2751 = vmatpush.bf16.msra.mxu0 0
        %2752 = vmatpush.bf16.msra.mxu0 0
        %2753 = vmatpush.bf16.msra.mxu0 %v2299
        %2754 = vmatpush.bf16.msra.mxu0 %v2298
        %2755 = vmatpush.bf16.msra.mxu0 %v2297
        %2756 = vmatpush.bf16.msra.mxu0 %v2296
        %2757 = vmatmul.bf16.gmra.mxu0 %v2747
        %v2758 = vpop.f32.mrf.mxu0
        %v2759 = vadd.f32 %v2278, %v2758
        %v2760 = vpop.f32.mrf.mxu0
        %2761 = vdwg.mxu0
        %v2762 = vadd.f32 %v2759, %v2320
        %v2763 = vmax.f32 %v2762, 0.0
        %v2764 = vadd.f32 %v2759, %v2323
        %v2765 = vmax.f32 %v2764, 0.0
        %v2766 = vadd.f32 %v2759, %v2326
        %v2767 = vmax.f32 %v2766, 0.0
        %v2768 = vadd.f32 %v2759, %v2329
        %v2769 = vmax.f32 %v2768, 0.0
        %v2770 = vadd.f32 %v2759, %v2332
        %v2771 = vmax.f32 %v2770, 0.0
        %v2772 = vadd.f32 %v2759, %v2335
        %v2773 = vmax.f32 %v2772, 0.0
        %v2774 = vadd.f32 %v2759, %v2338
        %v2775 = vmax.f32 %v2774, 0.0
        %v2776 = vadd.f32 %v2759, %v2341
        %v2777 = vmax.f32 %v2776, 0.0
        %v2778 = vpack.c.bf16 %v2765, %v2763
        %v2779 = vpack.c.bf16 %v2769, %v2767
        %v2780 = vpack.c.bf16 %v2773, %v2771
        %v2781 = vpack.c.bf16 %v2777, %v2775
        %v2783 = vsel %vm818, %v2778, 0
        %v2786 = vsel %vm818, %v2779, 0
        %v2789 = vsel %vm818, %v2780, 0
        %v2792 = vsel %vm818, %v2781, 0
        %2794 = vmatpush.bf16.msra.mxu0 0
        %2795 = vmatpush.bf16.msra.mxu0 0
        %2796 = vmatpush.bf16.msra.mxu0 0
        %2797 = vmatpush.bf16.msra.mxu0 0
        %2798 = vmatpush.bf16.msra.mxu0 %v2379
        %2799 = vmatpush.bf16.msra.mxu0 %v2378
        %2800 = vmatpush.bf16.msra.mxu0 %v2377
        %2801 = vmatpush.bf16.msra.mxu0 %v2376
        %2802 = vmatmul.bf16.gmra.mxu0 %v2783
        %v2803 = vpop.f32.mrf.mxu0
        %v2804 = vadd.f32 %v2358, %v2803
        %v2805 = vpop.f32.mrf.mxu0
        %v2806 = vadd.f32 %v2358, %v2805
        %2807 = vmatmul.bf16.gmra.mxu0 %v2786
        %v2808 = vpop.f32.mrf.mxu0
        %v2809 = vadd.f32 %v2358, %v2808
        %v2810 = vpop.f32.mrf.mxu0
        %v2811 = vadd.f32 %v2358, %v2810
        %2812 = vmatmul.bf16.gmra.mxu0 %v2789
        %v2813 = vpop.f32.mrf.mxu0
        %v2814 = vadd.f32 %v2358, %v2813
        %v2815 = vpop.f32.mrf.mxu0
        %v2816 = vadd.f32 %v2358, %v2815
        %2817 = vmatmul.bf16.gmra.mxu0 %v2792
        %v2818 = vpop.f32.mrf.mxu0
        %v2819 = vadd.f32 %v2358, %v2818
        %v2820 = vpop.f32.mrf.mxu0
        %v2821 = vadd.f32 %v2358, %v2820
        %2822 = vdwg.mxu0
        %v2823 = vmax.f32 %v2804, 0.0
        %v2824 = vmax.f32 %v2806, 0.0
        %v2825 = vmax.f32 %v2809, 0.0
        %v2826 = vmax.f32 %v2811, 0.0
        %v2827 = vmax.f32 %v2814, 0.0
        %v2828 = vmax.f32 %v2816, 0.0
        %v2829 = vmax.f32 %v2819, 0.0
        %v2830 = vmax.f32 %v2821, 0.0
        %v2831 = vmax.f32 %v2823, %v2824
        %v2832 = vmax.f32 %v2831, %v2825
        %v2833 = vmax.f32 %v2832, %v2826
        %v2834 = vmax.f32 %v2833, %v2827
        %v2835 = vmax.f32 %v2834, %v2828
        %v2836 = vmax.f32 %v2835, %v2829
        %v2837 = vmax.f32 %v2836, %v2830
        %v2838 = vpack.c.bf16 %v2837, %v2837
        %v2840 = vsel %vm818, %v2838, 0
        %2842 = vmatpush.bf16.msra.mxu0 0
        %2843 = vmatpush.bf16.msra.mxu0 0
        %2844 = vmatpush.bf16.msra.mxu0 0
        %2845 = vmatpush.bf16.msra.mxu0 0
        %2846 = vmatpush.bf16.msra.mxu0 %v2472
        %2847 = vmatpush.bf16.msra.mxu0 %v2471
        %2848 = vmatpush.bf16.msra.mxu0 %v2470
        %2849 = vmatpush.bf16.msra.mxu0 %v2469
        %2850 = vmatmul.bf16.gmra.mxu0 %v2840
        %v2851 = vpop.f32.mrf.mxu0
        %v2852 = vadd.f32 %v2451, %v2851
        %v2853 = vpop.f32.mrf.mxu0
        %2854 = vdwg.mxu0
        %v2855 = vadd.f32 %v2852, %v2727
        %v2856 = vrot.slane %v2855, 6
        %v2857 = vsel %vm1957, 1.0, %v2856
        %v2858 = vrot.slane %v2855, 7
        %v2859 = vsel %vm835, 1.0, %v2858
        %s2860 = scalar_lea.vmem %s10, 336
        %v2861 = vld [vmem:[%s2860] sm:$0xf]
        %v2862 = vld [vmem:[%s2860 + $0x4] sm:$0xf]
        %v2863 = vld [vmem:[%s2860 + $0x8] sm:$0xf]
        %v2864 = vld [vmem:[%s2860 + $0xc] sm:$0xf]
        %v2865 = vld [vmem:[%s2860 + $0x10] sm:$0xf]
        %v2866 = vld [vmem:[%s2860 + $0x14] sm:$0xf]
        %v2867 = vld [vmem:[%s2860 + $0x18] sm:$0xf]
        %v2868 = vld [vmem:[%s2860 + $0x1c] sm:$0xf]
        %v2869 = vld [vmem:[%s2860 + $0x20] sm:$0xf]
        %v2870 = vld [vmem:[%s2860 + $0x24] sm:$0xf]
        %v2871 = vld [vmem:[%s2860 + $0x28] sm:$0xf]
        %v2872 = vld [vmem:[%s2860 + $0x2c] sm:$0xf]
        %v2873 = vld [vmem:[%s2860 + $0x30] sm:$0xf]
        %v2874 = vld [vmem:[%s2860 + $0x34] sm:$0xf]
        %v2875 = vpack.c.bf16 %v2857, %v2857
        %s2876 = scalar_lea.vmem %s10, 392
        %v2877 = vld [vmem:[%s2876] sm:$0xf]
        %v2878 = vld [vmem:[%s2876 + $0x4] sm:$0xf]
        %v2879 = vld [vmem:[%s2876 + $0x8] sm:$0xf]
        %v2880 = vld [vmem:[%s2876 + $0xc] sm:$0xf]
        %v2881 = vld [vmem:[%s2876 + $0x10] sm:$0xf]
        %v2882 = vld [vmem:[%s2876 + $0x14] sm:$0xf]
        %v2883 = vld [vmem:[%s2876 + $0x18] sm:$0xf]
        %v2884 = vld [vmem:[%s2876 + $0x1c] sm:$0xf]
        %v2885 = vld [vmem:[%s2876 + $0x20] sm:$0xf]
        %v2886 = vld [vmem:[%s2876 + $0x24] sm:$0xf]
        %v2887 = vld [vmem:[%s2876 + $0x28] sm:$0xf]
        %v2888 = vld [vmem:[%s2876 + $0x2c] sm:$0xf]
        %v2889 = vld [vmem:[%s2876 + $0x30] sm:$0xf]
        %v2890 = vld [vmem:[%s2876 + $0x34] sm:$0xf]
        %v2891 = vpack.c.bf16 %v2859, %v2859
        %v2906 = vunpack.c.l.b16 %v2877
        %v2907 = vunpack.c.l.b16 %v2878
        %v2908 = vunpack.c.l.b16 %v2879
        %v2909 = vunpack.c.l.b16 %v2880
        %v2910 = vunpack.c.l.b16 %v2881
        %v2911 = vunpack.c.l.b16 %v2882
        %v2912 = vunpack.c.l.b16 %v2883
        %v2913 = vunpack.c.l.b16 %v2884
        %v2914 = vunpack.c.l.b16 %v2885
        %v2915 = vunpack.c.l.b16 %v2886
        %v2916 = vunpack.c.l.b16 %v2887
        %v2917 = vunpack.c.l.b16 %v2888
        %v2918 = vunpack.c.l.b16 %v2889
        %v2919 = vunpack.c.l.b16 %v2890
        %v2920 = vpack.c.b16 %v2907, %v2906
        %v2921 = vpack.c.b16 %v2909, %v2908
        %v2922 = vpack.c.b16 %v2911, %v2910
        %v2923 = vpack.c.b16 %v2913, %v2912
        %v2924 = vpack.c.b16 %v2915, %v2914
        %v2925 = vpack.c.b16 %v2917, %v2916
        %v2926 = vpack.c.b16 %v2919, %v2918
        %v2935 = vsel %vm914, %v2891, 0
        %2937 = vmatpush.bf16.msra.mxu0 0
        %2938 = vmatpush.bf16.msra.mxu0 %v2926
        %2939 = vmatpush.bf16.msra.mxu0 %v2925
        %2940 = vmatpush.bf16.msra.mxu0 %v2924
        %2941 = vmatpush.bf16.msra.mxu0 %v2923
        %2942 = vmatpush.bf16.msra.mxu0 %v2922
        %2943 = vmatpush.bf16.msra.mxu0 %v2921
        %2944 = vmatpush.bf16.msra.mxu0 %v2920
        %2945 = vmatmul.bf16.gmra.mxu0 %v2935
        %v2946 = vpop.f32.mrf.mxu0
        %v2947 = vadd.f32 0.0, %v2946
        %v2948 = vpop.f32.mrf.mxu0
        %2949 = vdwg.mxu0
        %v2964 = vunpack.c.l.b16 %v2861
        %v2965 = vunpack.c.l.b16 %v2862
        %v2966 = vunpack.c.l.b16 %v2863
        %v2967 = vunpack.c.l.b16 %v2864
        %v2968 = vunpack.c.l.b16 %v2865
        %v2969 = vunpack.c.l.b16 %v2866
        %v2970 = vunpack.c.l.b16 %v2867
        %v2971 = vunpack.c.l.b16 %v2868
        %v2972 = vunpack.c.l.b16 %v2869
        %v2973 = vunpack.c.l.b16 %v2870
        %v2974 = vunpack.c.l.b16 %v2871
        %v2975 = vunpack.c.l.b16 %v2872
        %v2976 = vunpack.c.l.b16 %v2873
        %v2977 = vunpack.c.l.b16 %v2874
        %v2978 = vpack.c.b16 %v2965, %v2964
        %v2979 = vpack.c.b16 %v2967, %v2966
        %v2980 = vpack.c.b16 %v2969, %v2968
        %v2981 = vpack.c.b16 %v2971, %v2970
        %v2982 = vpack.c.b16 %v2973, %v2972
        %v2983 = vpack.c.b16 %v2975, %v2974
        %v2984 = vpack.c.b16 %v2977, %v2976
        %v2993 = vsel %vm914, %v2875, 0
        %2995 = vmatpush.bf16.msra.mxu0 0
        %2996 = vmatpush.bf16.msra.mxu0 %v2984
        %2997 = vmatpush.bf16.msra.mxu0 %v2983
        %2998 = vmatpush.bf16.msra.mxu0 %v2982
        %2999 = vmatpush.bf16.msra.mxu0 %v2981
        %3000 = vmatpush.bf16.msra.mxu0 %v2980
        %3001 = vmatpush.bf16.msra.mxu0 %v2979
        %3002 = vmatpush.bf16.msra.mxu0 %v2978
        %3003 = vmatmul.bf16.gmra.mxu0 %v2993
        %v3004 = vpop.f32.mrf.mxu0
        %v3005 = vadd.f32 %v2947, %v3004
        %v3006 = vpop.f32.mrf.mxu0
        %3007 = vdwg.mxu0
        %s3008 = scalar_lea.vmem %s10, 448
        %v3009 = vld [vmem:[%s3008] sm:$0xf]
        %v3010 = vld [vmem:[%s3008 + $0x4] sm:$0xf]
        %v3011 = vld [vmem:[%s3008 + $0x8] sm:$0xf]
        %v3012 = vld [vmem:[%s3008 + $0xc] sm:$0xf]
        %v3013 = vld [vmem:[%s3008 + $0x10] sm:$0xf]
        %v3014 = vld [vmem:[%s3008 + $0x14] sm:$0xf]
        %v3015 = vld [vmem:[%s3008 + $0x18] sm:$0xf]
        %v3016 = vld [vmem:[%s3008 + $0x1c] sm:$0xf]
        %v3017 = vld [vmem:[%s3008 + $0x20] sm:$0xf]
        %v3018 = vld [vmem:[%s3008 + $0x24] sm:$0xf]
        %v3019 = vld [vmem:[%s3008 + $0x28] sm:$0xf]
        %v3020 = vld [vmem:[%s3008 + $0x2c] sm:$0xf]
        %v3021 = vld [vmem:[%s3008 + $0x30] sm:$0xf]
        %v3022 = vld [vmem:[%s3008 + $0x34] sm:$0xf]
        %v3023 = vpack.c.bf16 %v2855, %v2855
        %v3038 = vunpack.c.l.b16 %v3009
        %v3039 = vunpack.c.l.b16 %v3010
        %v3040 = vunpack.c.l.b16 %v3011
        %v3041 = vunpack.c.l.b16 %v3012
        %v3042 = vunpack.c.l.b16 %v3013
        %v3043 = vunpack.c.l.b16 %v3014
        %v3044 = vunpack.c.l.b16 %v3015
        %v3045 = vunpack.c.l.b16 %v3016
        %v3046 = vunpack.c.l.b16 %v3017
        %v3047 = vunpack.c.l.b16 %v3018
        %v3048 = vunpack.c.l.b16 %v3019
        %v3049 = vunpack.c.l.b16 %v3020
        %v3050 = vunpack.c.l.b16 %v3021
        %v3051 = vunpack.c.l.b16 %v3022
        %v3052 = vpack.c.b16 %v3039, %v3038
        %v3053 = vpack.c.b16 %v3041, %v3040
        %v3054 = vpack.c.b16 %v3043, %v3042
        %v3055 = vpack.c.b16 %v3045, %v3044
        %v3056 = vpack.c.b16 %v3047, %v3046
        %v3057 = vpack.c.b16 %v3049, %v3048
        %v3058 = vpack.c.b16 %v3051, %v3050
        %v3067 = vsel %vm914, %v3023, 0
        %3069 = vmatpush.bf16.msra.mxu0 0
        %3070 = vmatpush.bf16.msra.mxu0 %v3058
        %3071 = vmatpush.bf16.msra.mxu0 %v3057
        %3072 = vmatpush.bf16.msra.mxu0 %v3056
        %3073 = vmatpush.bf16.msra.mxu0 %v3055
        %3074 = vmatpush.bf16.msra.mxu0 %v3054
        %3075 = vmatpush.bf16.msra.mxu0 %v3053
        %3076 = vmatpush.bf16.msra.mxu0 %v3052
        %3077 = vmatmul.bf16.gmra.mxu0 %v3067
        %v3078 = vpop.f32.mrf.mxu0
        %v3079 = vadd.f32 0.0, %v3078
        %v3080 = vpop.f32.mrf.mxu0
        %3081 = vdwg.mxu0
        %v3082 = vadd.f32 %v3005, %v3079
        %s3083 = scalar_lea.vmem %s11, 2
        %v3084 = vld [vmem:[%s3083] sm:$0x1]
        %v3086 = vperm.slane %v3084, 0
        %v3088 = vadd.f32 %v3082, %v3086
        %v3089 = vmax.f32 %v3088, 0.0
        %v3090 = vpack.c.bf16 %v3089, %v3089
        %v3092 = vsel %vm914, %v3090, 0
        %3094 = vmatpush.bf16.msra.mxu0 0
        %3095 = vmatpush.bf16.msra.mxu0 %v2243
        %3096 = vmatpush.bf16.msra.mxu0 %v2242
        %3097 = vmatpush.bf16.msra.mxu0 %v2241
        %3098 = vmatpush.bf16.msra.mxu0 %v2240
        %3099 = vmatpush.bf16.msra.mxu0 %v2239
        %3100 = vmatpush.bf16.msra.mxu0 %v2238
        %3101 = vmatpush.bf16.msra.mxu0 %v2237
        %3102 = vmatmul.bf16.gmra.mxu0 %v3092
        %v3103 = vpop.f32.mrf.mxu0
        %v3104 = vadd.f32 %v2207, %v3103
        %v3105 = vpop.f32.mrf.mxu0
        %3106 = vdwg.mxu0
        %v3107 = vpack.c.bf16 %v3104, %v3104
        %v3109 = vsel %vm818, %v3107, 0
        %3111 = vmatpush.bf16.msra.mxu0 0
        %3112 = vmatpush.bf16.msra.mxu0 0
        %3113 = vmatpush.bf16.msra.mxu0 0
        %3114 = vmatpush.bf16.msra.mxu0 0
        %3115 = vmatpush.bf16.msra.mxu0 %v2299
        %3116 = vmatpush.bf16.msra.mxu0 %v2298
        %3117 = vmatpush.bf16.msra.mxu0 %v2297
        %3118 = vmatpush.bf16.msra.mxu0 %v2296
        %3119 = vmatmul.bf16.gmra.mxu0 %v3109
        %v3120 = vpop.f32.mrf.mxu0
        %v3121 = vadd.f32 %v2278, %v3120
        %v3122 = vpop.f32.mrf.mxu0
        %3123 = vdwg.mxu0
        %v3124 = vadd.f32 %v3121, %v2320
        %v3125 = vmax.f32 %v3124, 0.0
        %v3126 = vadd.f32 %v3121, %v2323
        %v3127 = vmax.f32 %v3126, 0.0
        %v3128 = vadd.f32 %v3121, %v2326
        %v3129 = vmax.f32 %v3128, 0.0
        %v3130 = vadd.f32 %v3121, %v2329
        %v3131 = vmax.f32 %v3130, 0.0
        %v3132 = vadd.f32 %v3121, %v2332
        %v3133 = vmax.f32 %v3132, 0.0
        %v3134 = vadd.f32 %v3121, %v2335
        %v3135 = vmax.f32 %v3134, 0.0
        %v3136 = vadd.f32 %v3121, %v2338
        %v3137 = vmax.f32 %v3136, 0.0
        %v3138 = vadd.f32 %v3121, %v2341
        %v3139 = vmax.f32 %v3138, 0.0
        %v3140 = vpack.c.bf16 %v3127, %v3125
        %v3141 = vpack.c.bf16 %v3131, %v3129
        %v3142 = vpack.c.bf16 %v3135, %v3133
        %v3143 = vpack.c.bf16 %v3139, %v3137
        %v3145 = vsel %vm818, %v3140, 0
        %v3148 = vsel %vm818, %v3141, 0
        %v3151 = vsel %vm818, %v3142, 0
        %v3154 = vsel %vm818, %v3143, 0
        %3156 = vmatpush.bf16.msra.mxu0 0
        %3157 = vmatpush.bf16.msra.mxu0 0
        %3158 = vmatpush.bf16.msra.mxu0 0
        %3159 = vmatpush.bf16.msra.mxu0 0
        %3160 = vmatpush.bf16.msra.mxu0 %v2379
        %3161 = vmatpush.bf16.msra.mxu0 %v2378
        %3162 = vmatpush.bf16.msra.mxu0 %v2377
        %3163 = vmatpush.bf16.msra.mxu0 %v2376
        %3164 = vmatmul.bf16.gmra.mxu0 %v3145
        %v3165 = vpop.f32.mrf.mxu0
        %v3166 = vadd.f32 %v2358, %v3165
        %v3167 = vpop.f32.mrf.mxu0
        %v3168 = vadd.f32 %v2358, %v3167
        %3169 = vmatmul.bf16.gmra.mxu0 %v3148
        %v3170 = vpop.f32.mrf.mxu0
        %v3171 = vadd.f32 %v2358, %v3170
        %v3172 = vpop.f32.mrf.mxu0
        %v3173 = vadd.f32 %v2358, %v3172
        %3174 = vmatmul.bf16.gmra.mxu0 %v3151
        %v3175 = vpop.f32.mrf.mxu0
        %v3176 = vadd.f32 %v2358, %v3175
        %v3177 = vpop.f32.mrf.mxu0
        %v3178 = vadd.f32 %v2358, %v3177
        %3179 = vmatmul.bf16.gmra.mxu0 %v3154
        %v3180 = vpop.f32.mrf.mxu0
        %v3181 = vadd.f32 %v2358, %v3180
        %v3182 = vpop.f32.mrf.mxu0
        %v3183 = vadd.f32 %v2358, %v3182
        %3184 = vdwg.mxu0
        %v3185 = vmax.f32 %v3166, 0.0
        %v3186 = vmax.f32 %v3168, 0.0
        %v3187 = vmax.f32 %v3171, 0.0
        %v3188 = vmax.f32 %v3173, 0.0
        %v3189 = vmax.f32 %v3176, 0.0
        %v3190 = vmax.f32 %v3178, 0.0
        %v3191 = vmax.f32 %v3181, 0.0
        %v3192 = vmax.f32 %v3183, 0.0
        %v3193 = vmax.f32 %v3185, %v3186
        %v3194 = vmax.f32 %v3193, %v3187
        %v3195 = vmax.f32 %v3194, %v3188
        %v3196 = vmax.f32 %v3195, %v3189
        %v3197 = vmax.f32 %v3196, %v3190
        %v3198 = vmax.f32 %v3197, %v3191
        %v3199 = vmax.f32 %v3198, %v3192
        %v3200 = vpack.c.bf16 %v3199, %v3199
        %v3202 = vsel %vm818, %v3200, 0
        %3204 = vmatpush.bf16.msra.mxu0 0
        %3205 = vmatpush.bf16.msra.mxu0 0
        %3206 = vmatpush.bf16.msra.mxu0 0
        %3207 = vmatpush.bf16.msra.mxu0 0
        %3208 = vmatpush.bf16.msra.mxu0 %v2472
        %3209 = vmatpush.bf16.msra.mxu0 %v2471
        %3210 = vmatpush.bf16.msra.mxu0 %v2470
        %3211 = vmatpush.bf16.msra.mxu0 %v2469
        %3212 = vmatmul.bf16.gmra.mxu0 %v3202
        %v3213 = vpop.f32.mrf.mxu0
        %v3214 = vadd.f32 %v2451, %v3213
        %v3215 = vpop.f32.mrf.mxu0
        %3216 = vdwg.mxu0
        %v3217 = vadd.f32 %v3214, %v3089
        %v3218 = vrot.slane %v3217, 6
        %v3219 = vsel %vm1957, 1.0, %v3218
        %v3220 = vrot.slane %v3217, 7
        %v3221 = vsel %vm835, 1.0, %v3220
        %s3222 = scalar_lea.vmem %s10, 504
        %v3223 = vld [vmem:[%s3222] sm:$0xf]
        %v3224 = vld [vmem:[%s3222 + $0x4] sm:$0xf]
        %v3225 = vld [vmem:[%s3222 + $0x8] sm:$0xf]
        %v3226 = vld [vmem:[%s3222 + $0xc] sm:$0xf]
        %v3227 = vld [vmem:[%s3222 + $0x10] sm:$0xf]
        %v3228 = vld [vmem:[%s3222 + $0x14] sm:$0xf]
        %v3229 = vld [vmem:[%s3222 + $0x18] sm:$0xf]
        %v3230 = vld [vmem:[%s3222 + $0x1c] sm:$0xf]
        %v3231 = vld [vmem:[%s3222 + $0x20] sm:$0xf]
        %v3232 = vld [vmem:[%s3222 + $0x24] sm:$0xf]
        %v3233 = vld [vmem:[%s3222 + $0x28] sm:$0xf]
        %v3234 = vld [vmem:[%s3222 + $0x2c] sm:$0xf]
        %v3235 = vld [vmem:[%s3222 + $0x30] sm:$0xf]
        %v3236 = vld [vmem:[%s3222 + $0x34] sm:$0xf]
        %v3237 = vpack.c.bf16 %v3219, %v3219
        %s3238 = scalar_lea.vmem %s10, 560
        %v3239 = vld [vmem:[%s3238] sm:$0xf]
        %v3240 = vld [vmem:[%s3238 + $0x4] sm:$0xf]
        %v3241 = vld [vmem:[%s3238 + $0x8] sm:$0xf]
        %v3242 = vld [vmem:[%s3238 + $0xc] sm:$0xf]
        %v3243 = vld [vmem:[%s3238 + $0x10] sm:$0xf]
        %v3244 = vld [vmem:[%s3238 + $0x14] sm:$0xf]
        %v3245 = vld [vmem:[%s3238 + $0x18] sm:$0xf]
        %v3246 = vld [vmem:[%s3238 + $0x1c] sm:$0xf]
        %v3247 = vld [vmem:[%s3238 + $0x20] sm:$0xf]
        %v3248 = vld [vmem:[%s3238 + $0x24] sm:$0xf]
        %v3249 = vld [vmem:[%s3238 + $0x28] sm:$0xf]
        %v3250 = vld [vmem:[%s3238 + $0x2c] sm:$0xf]
        %v3251 = vld [vmem:[%s3238 + $0x30] sm:$0xf]
        %v3252 = vld [vmem:[%s3238 + $0x34] sm:$0xf]
        %v3253 = vpack.c.bf16 %v3221, %v3221
        %v3268 = vunpack.c.l.b16 %v3239
        %v3269 = vunpack.c.l.b16 %v3240
        %v3270 = vunpack.c.l.b16 %v3241
        %v3271 = vunpack.c.l.b16 %v3242
        %v3272 = vunpack.c.l.b16 %v3243
        %v3273 = vunpack.c.l.b16 %v3244
        %v3274 = vunpack.c.l.b16 %v3245
        %v3275 = vunpack.c.l.b16 %v3246
        %v3276 = vunpack.c.l.b16 %v3247
        %v3277 = vunpack.c.l.b16 %v3248
        %v3278 = vunpack.c.l.b16 %v3249
        %v3279 = vunpack.c.l.b16 %v3250
        %v3280 = vunpack.c.l.b16 %v3251
        %v3281 = vunpack.c.l.b16 %v3252
        %v3282 = vpack.c.b16 %v3269, %v3268
        %v3283 = vpack.c.b16 %v3271, %v3270
        %v3284 = vpack.c.b16 %v3273, %v3272
        %v3285 = vpack.c.b16 %v3275, %v3274
        %v3286 = vpack.c.b16 %v3277, %v3276
        %v3287 = vpack.c.b16 %v3279, %v3278
        %v3288 = vpack.c.b16 %v3281, %v3280
        %v3297 = vsel %vm914, %v3253, 0
        %3299 = vmatpush.bf16.msra.mxu0 0
        %3300 = vmatpush.bf16.msra.mxu0 %v3288
        %3301 = vmatpush.bf16.msra.mxu0 %v3287
        %3302 = vmatpush.bf16.msra.mxu0 %v3286
        %3303 = vmatpush.bf16.msra.mxu0 %v3285
        %3304 = vmatpush.bf16.msra.mxu0 %v3284
        %3305 = vmatpush.bf16.msra.mxu0 %v3283
        %3306 = vmatpush.bf16.msra.mxu0 %v3282
        %3307 = vmatmul.bf16.gmra.mxu0 %v3297
        %v3308 = vpop.f32.mrf.mxu0
        %v3309 = vadd.f32 0.0, %v3308
        %v3310 = vpop.f32.mrf.mxu0
        %3311 = vdwg.mxu0
        %v3326 = vunpack.c.l.b16 %v3223
        %v3327 = vunpack.c.l.b16 %v3224
        %v3328 = vunpack.c.l.b16 %v3225
        %v3329 = vunpack.c.l.b16 %v3226
        %v3330 = vunpack.c.l.b16 %v3227
        %v3331 = vunpack.c.l.b16 %v3228
        %v3332 = vunpack.c.l.b16 %v3229
        %v3333 = vunpack.c.l.b16 %v3230
        %v3334 = vunpack.c.l.b16 %v3231
        %v3335 = vunpack.c.l.b16 %v3232
        %v3336 = vunpack.c.l.b16 %v3233
        %v3337 = vunpack.c.l.b16 %v3234
        %v3338 = vunpack.c.l.b16 %v3235
        %v3339 = vunpack.c.l.b16 %v3236
        %v3340 = vpack.c.b16 %v3327, %v3326
        %v3341 = vpack.c.b16 %v3329, %v3328
        %v3342 = vpack.c.b16 %v3331, %v3330
        %v3343 = vpack.c.b16 %v3333, %v3332
        %v3344 = vpack.c.b16 %v3335, %v3334
        %v3345 = vpack.c.b16 %v3337, %v3336
        %v3346 = vpack.c.b16 %v3339, %v3338
        %v3355 = vsel %vm914, %v3237, 0
        %3357 = vmatpush.bf16.msra.mxu0 0
        %3358 = vmatpush.bf16.msra.mxu0 %v3346
        %3359 = vmatpush.bf16.msra.mxu0 %v3345
        %3360 = vmatpush.bf16.msra.mxu0 %v3344
        %3361 = vmatpush.bf16.msra.mxu0 %v3343
        %3362 = vmatpush.bf16.msra.mxu0 %v3342
        %3363 = vmatpush.bf16.msra.mxu0 %v3341
        %3364 = vmatpush.bf16.msra.mxu0 %v3340
        %3365 = vmatmul.bf16.gmra.mxu0 %v3355
        %v3366 = vpop.f32.mrf.mxu0
        %v3367 = vadd.f32 %v3309, %v3366
        %v3368 = vpop.f32.mrf.mxu0
        %3369 = vdwg.mxu0
        %s3370 = scalar_lea.vmem %s10, 616
        %v3371 = vld [vmem:[%s3370] sm:$0xf]
        %v3372 = vld [vmem:[%s3370 + $0x4] sm:$0xf]
        %v3373 = vld [vmem:[%s3370 + $0x8] sm:$0xf]
        %v3374 = vld [vmem:[%s3370 + $0xc] sm:$0xf]
        %v3375 = vld [vmem:[%s3370 + $0x10] sm:$0xf]
        %v3376 = vld [vmem:[%s3370 + $0x14] sm:$0xf]
        %v3377 = vld [vmem:[%s3370 + $0x18] sm:$0xf]
        %v3378 = vld [vmem:[%s3370 + $0x1c] sm:$0xf]
        %v3379 = vld [vmem:[%s3370 + $0x20] sm:$0xf]
        %v3380 = vld [vmem:[%s3370 + $0x24] sm:$0xf]
        %v3381 = vld [vmem:[%s3370 + $0x28] sm:$0xf]
        %v3382 = vld [vmem:[%s3370 + $0x2c] sm:$0xf]
        %v3383 = vld [vmem:[%s3370 + $0x30] sm:$0xf]
        %v3384 = vld [vmem:[%s3370 + $0x34] sm:$0xf]
        %v3385 = vpack.c.bf16 %v3217, %v3217
        %v3400 = vunpack.c.l.b16 %v3371
        %v3401 = vunpack.c.l.b16 %v3372
        %v3402 = vunpack.c.l.b16 %v3373
        %v3403 = vunpack.c.l.b16 %v3374
        %v3404 = vunpack.c.l.b16 %v3375
        %v3405 = vunpack.c.l.b16 %v3376
        %v3406 = vunpack.c.l.b16 %v3377
        %v3407 = vunpack.c.l.b16 %v3378
        %v3408 = vunpack.c.l.b16 %v3379
        %v3409 = vunpack.c.l.b16 %v3380
        %v3410 = vunpack.c.l.b16 %v3381
        %v3411 = vunpack.c.l.b16 %v3382
        %v3412 = vunpack.c.l.b16 %v3383
        %v3413 = vunpack.c.l.b16 %v3384
        %v3414 = vpack.c.b16 %v3401, %v3400
        %v3415 = vpack.c.b16 %v3403, %v3402
        %v3416 = vpack.c.b16 %v3405, %v3404
        %v3417 = vpack.c.b16 %v3407, %v3406
        %v3418 = vpack.c.b16 %v3409, %v3408
        %v3419 = vpack.c.b16 %v3411, %v3410
        %v3420 = vpack.c.b16 %v3413, %v3412
        %v3429 = vsel %vm914, %v3385, 0
        %3431 = vmatpush.bf16.msra.mxu0 0
        %3432 = vmatpush.bf16.msra.mxu0 %v3420
        %3433 = vmatpush.bf16.msra.mxu0 %v3419
        %3434 = vmatpush.bf16.msra.mxu0 %v3418
        %3435 = vmatpush.bf16.msra.mxu0 %v3417
        %3436 = vmatpush.bf16.msra.mxu0 %v3416
        %3437 = vmatpush.bf16.msra.mxu0 %v3415
        %3438 = vmatpush.bf16.msra.mxu0 %v3414
        %3439 = vmatmul.bf16.gmra.mxu0 %v3429
        %v3440 = vpop.f32.mrf.mxu0
        %v3441 = vadd.f32 0.0, %v3440
        %v3442 = vpop.f32.mrf.mxu0
        %3443 = vdwg.mxu0
        %v3444 = vadd.f32 %v3367, %v3441
        %s3445 = scalar_lea.vmem %s11, 3
        %v3446 = vld [vmem:[%s3445] sm:$0x1]
        %v3448 = vperm.slane %v3446, 0
        %v3450 = vadd.f32 %v3444, %v3448
        %v3451 = vmax.f32 %v3450, 0.0
        %v3452 = vpack.c.bf16 %v3451, %v3451
        %v3454 = vsel %vm914, %v3452, 0
        %3456 = vmatpush.bf16.msra.mxu0 0
        %3457 = vmatpush.bf16.msra.mxu0 %v2243
        %3458 = vmatpush.bf16.msra.mxu0 %v2242
        %3459 = vmatpush.bf16.msra.mxu0 %v2241
        %3460 = vmatpush.bf16.msra.mxu0 %v2240
        %3461 = vmatpush.bf16.msra.mxu0 %v2239
        %3462 = vmatpush.bf16.msra.mxu0 %v2238
        %3463 = vmatpush.bf16.msra.mxu0 %v2237
        %3464 = vmatmul.bf16.gmra.mxu0 %v3454
        %v3465 = vpop.f32.mrf.mxu0
        %v3466 = vadd.f32 %v2207, %v3465
        %v3467 = vpop.f32.mrf.mxu0
        %3468 = vdwg.mxu0
        %v3469 = vpack.c.bf16 %v3466, %v3466
        %v3471 = vsel %vm818, %v3469, 0
        %3473 = vmatpush.bf16.msra.mxu0 0
        %3474 = vmatpush.bf16.msra.mxu0 0
        %3475 = vmatpush.bf16.msra.mxu0 0
        %3476 = vmatpush.bf16.msra.mxu0 0
        %3477 = vmatpush.bf16.msra.mxu0 %v2299
        %3478 = vmatpush.bf16.msra.mxu0 %v2298
        %3479 = vmatpush.bf16.msra.mxu0 %v2297
        %3480 = vmatpush.bf16.msra.mxu0 %v2296
        %3481 = vmatmul.bf16.gmra.mxu0 %v3471
        %v3482 = vpop.f32.mrf.mxu0
        %v3483 = vadd.f32 %v2278, %v3482
        %v3484 = vpop.f32.mrf.mxu0
        %3485 = vdwg.mxu0
        %v3486 = vadd.f32 %v3483, %v2320
        %v3487 = vmax.f32 %v3486, 0.0
        %v3488 = vadd.f32 %v3483, %v2323
        %v3489 = vmax.f32 %v3488, 0.0
        %v3490 = vadd.f32 %v3483, %v2326
        %v3491 = vmax.f32 %v3490, 0.0
        %v3492 = vadd.f32 %v3483, %v2329
        %v3493 = vmax.f32 %v3492, 0.0
        %v3494 = vadd.f32 %v3483, %v2332
        %v3495 = vmax.f32 %v3494, 0.0
        %v3496 = vadd.f32 %v3483, %v2335
        %v3497 = vmax.f32 %v3496, 0.0
        %v3498 = vadd.f32 %v3483, %v2338
        %v3499 = vmax.f32 %v3498, 0.0
        %v3500 = vadd.f32 %v3483, %v2341
        %v3501 = vmax.f32 %v3500, 0.0
        %v3502 = vpack.c.bf16 %v3489, %v3487
        %v3503 = vpack.c.bf16 %v3493, %v3491
        %v3504 = vpack.c.bf16 %v3497, %v3495
        %v3505 = vpack.c.bf16 %v3501, %v3499
        %v3507 = vsel %vm818, %v3502, 0
        %v3510 = vsel %vm818, %v3503, 0
        %v3513 = vsel %vm818, %v3504, 0
        %v3516 = vsel %vm818, %v3505, 0
        %3518 = vmatpush.bf16.msra.mxu0 0
        %3519 = vmatpush.bf16.msra.mxu0 0
        %3520 = vmatpush.bf16.msra.mxu0 0
        %3521 = vmatpush.bf16.msra.mxu0 0
        %3522 = vmatpush.bf16.msra.mxu0 %v2379
        %3523 = vmatpush.bf16.msra.mxu0 %v2378
        %3524 = vmatpush.bf16.msra.mxu0 %v2377
        %3525 = vmatpush.bf16.msra.mxu0 %v2376
        %3526 = vmatmul.bf16.gmra.mxu0 %v3507
        %v3527 = vpop.f32.mrf.mxu0
        %v3528 = vadd.f32 %v2358, %v3527
        %v3529 = vpop.f32.mrf.mxu0
        %v3530 = vadd.f32 %v2358, %v3529
        %3531 = vmatmul.bf16.gmra.mxu0 %v3510
        %v3532 = vpop.f32.mrf.mxu0
        %v3533 = vadd.f32 %v2358, %v3532
        %v3534 = vpop.f32.mrf.mxu0
        %v3535 = vadd.f32 %v2358, %v3534
        %3536 = vmatmul.bf16.gmra.mxu0 %v3513
        %v3537 = vpop.f32.mrf.mxu0
        %v3538 = vadd.f32 %v2358, %v3537
        %v3539 = vpop.f32.mrf.mxu0
        %v3540 = vadd.f32 %v2358, %v3539
        %3541 = vmatmul.bf16.gmra.mxu0 %v3516
        %v3542 = vpop.f32.mrf.mxu0
        %v3543 = vadd.f32 %v2358, %v3542
        %v3544 = vpop.f32.mrf.mxu0
        %v3545 = vadd.f32 %v2358, %v3544
        %3546 = vdwg.mxu0
        %v3547 = vmax.f32 %v3528, 0.0
        %v3548 = vmax.f32 %v3530, 0.0
        %v3549 = vmax.f32 %v3533, 0.0
        %v3550 = vmax.f32 %v3535, 0.0
        %v3551 = vmax.f32 %v3538, 0.0
        %v3552 = vmax.f32 %v3540, 0.0
        %v3553 = vmax.f32 %v3543, 0.0
        %v3554 = vmax.f32 %v3545, 0.0
        %v3555 = vmax.f32 %v3547, %v3548
        %v3556 = vmax.f32 %v3555, %v3549
        %v3557 = vmax.f32 %v3556, %v3550
        %v3558 = vmax.f32 %v3557, %v3551
        %v3559 = vmax.f32 %v3558, %v3552
        %v3560 = vmax.f32 %v3559, %v3553
        %v3561 = vmax.f32 %v3560, %v3554
        %v3562 = vpack.c.bf16 %v3561, %v3561
        %v3564 = vsel %vm818, %v3562, 0
        %3566 = vmatpush.bf16.msra.mxu0 0
        %3567 = vmatpush.bf16.msra.mxu0 0
        %3568 = vmatpush.bf16.msra.mxu0 0
        %3569 = vmatpush.bf16.msra.mxu0 0
        %3570 = vmatpush.bf16.msra.mxu0 %v2472
        %3571 = vmatpush.bf16.msra.mxu0 %v2471
        %3572 = vmatpush.bf16.msra.mxu0 %v2470
        %3573 = vmatpush.bf16.msra.mxu0 %v2469
        %3574 = vmatmul.bf16.gmra.mxu0 %v3564
        %v3575 = vpop.f32.mrf.mxu0
        %v3576 = vadd.f32 %v2451, %v3575
        %v3577 = vpop.f32.mrf.mxu0
        %3578 = vdwg.mxu0
        %v3579 = vadd.f32 %v3576, %v3451
        %v3580 = vld [vmem:[%s21] sm:$0xf]
        %v3581 = vld [vmem:[%s21 + $0x4] sm:$0xf]
        %v3582 = vld [vmem:[%s21 + $0x8] sm:$0xf]
        %v3583 = vld [vmem:[%s21 + $0xc] sm:$0xf]
        %v3584 = vld [vmem:[%s21 + $0x10] sm:$0xf]
        %v3585 = vld [vmem:[%s21 + $0x14] sm:$0xf]
        %v3586 = vld [vmem:[%s21 + $0x18] sm:$0xf]
        %v3587 = vld [vmem:[%s21 + $0x1c] sm:$0xf]
        %v3588 = vld [vmem:[%s21 + $0x20] sm:$0xf]
        %v3589 = vld [vmem:[%s21 + $0x24] sm:$0xf]
        %v3590 = vld [vmem:[%s21 + $0x28] sm:$0xf]
        %v3591 = vld [vmem:[%s21 + $0x2c] sm:$0xf]
        %v3592 = vld [vmem:[%s21 + $0x30] sm:$0xf]
        %v3593 = vld [vmem:[%s21 + $0x34] sm:$0xf]
        %v3594 = vpack.c.bf16 %v3579, %v3579
        %v3595 = vld [vmem:[%s22] sm:$0x1]
        %v3597 = vperm.slane %v3595, 0
        %v3613 = vunpack.c.l.b16 %v3580
        %v3614 = vunpack.c.l.b16 %v3581
        %v3615 = vunpack.c.l.b16 %v3582
        %v3616 = vunpack.c.l.b16 %v3583
        %v3617 = vunpack.c.l.b16 %v3584
        %v3618 = vunpack.c.l.b16 %v3585
        %v3619 = vunpack.c.l.b16 %v3586
        %v3620 = vunpack.c.l.b16 %v3587
        %v3621 = vunpack.c.l.b16 %v3588
        %v3622 = vunpack.c.l.b16 %v3589
        %v3623 = vunpack.c.l.b16 %v3590
        %v3624 = vunpack.c.l.b16 %v3591
        %v3625 = vunpack.c.l.b16 %v3592
        %v3626 = vunpack.c.l.b16 %v3593
        %v3627 = vpack.c.b16 %v3614, %v3613
        %v3628 = vpack.c.b16 %v3616, %v3615
        %v3629 = vpack.c.b16 %v3618, %v3617
        %v3630 = vpack.c.b16 %v3620, %v3619
        %v3631 = vpack.c.b16 %v3622, %v3621
        %v3632 = vpack.c.b16 %v3624, %v3623
        %v3633 = vpack.c.b16 %v3626, %v3625
        %v3642 = vsel %vm914, %v3594, 0
        %3644 = vmatpush.bf16.msra.mxu0 0
        %3645 = vmatpush.bf16.msra.mxu0 %v3633
        %3646 = vmatpush.bf16.msra.mxu0 %v3632
        %3647 = vmatpush.bf16.msra.mxu0 %v3631
        %3648 = vmatpush.bf16.msra.mxu0 %v3630
        %3649 = vmatpush.bf16.msra.mxu0 %v3629
        %3650 = vmatpush.bf16.msra.mxu0 %v3628
        %3651 = vmatpush.bf16.msra.mxu0 %v3627
        %3652 = vmatmul.bf16.gmra.mxu0 %v3642
        %v3653 = vpop.f32.mrf.mxu0
        %v3654 = vadd.f32 %v3597, %v3653
        %v3655 = vpop.f32.mrf.mxu0
        %3656 = vdwg.mxu0
        %v3657 = vpack.c.bf16 %v3654, %v3654
        %v3658 = vld [vmem:[%s23] sm:$0xff]
        %v3659 = vld [vmem:[%s23 + $0x8] sm:$0xff]
        %v3660 = vld [vmem:[%s23 + $0x10] sm:$0xff]
        %v3661 = vld [vmem:[%s23 + $0x18] sm:$0xff]
        %v3662 = vld [vmem:[%s23 + $0x20] sm:$0xff]
        %v3663 = vld [vmem:[%s23 + $0x28] sm:$0xff]
        %v3664 = vld [vmem:[%s23 + $0x30] sm:$0xff]
        %v3665 = vld [vmem:[%s23 + $0x38] sm:$0xff]
        %v3666 = vld [vmem:[%s23 + $0x40] sm:$0xff]
        %v3667 = vld [vmem:[%s23 + $0x48] sm:$0xff]
        %v3668 = vld [vmem:[%s23 + $0x50] sm:$0xff]
        %v3669 = vld [vmem:[%s23 + $0x58] sm:$0xff]
        %v3670 = vld [vmem:[%s23 + $0x60] sm:$0xff]
        %v3671 = vld [vmem:[%s23 + $0x68] sm:$0xff]
        %v3672 = vld [vmem:[%s23 + $0x70] sm:$0xff]
        %v3673 = vld [vmem:[%s23 + $0x78] sm:$0xff]
        %v3674 = vld [vmem:[%s23 + $0x200] sm:$0xff]
        %v3675 = vld [vmem:[%s23 + $0x208] sm:$0xff]
        %v3676 = vld [vmem:[%s23 + $0x210] sm:$0xff]
        %v3677 = vld [vmem:[%s23 + $0x218] sm:$0xff]
        %v3678 = vld [vmem:[%s23 + $0x220] sm:$0xff]
        %v3679 = vld [vmem:[%s23 + $0x228] sm:$0xff]
        %v3680 = vld [vmem:[%s23 + $0x230] sm:$0xff]
        %v3681 = vld [vmem:[%s23 + $0x238] sm:$0xff]
        %v3682 = vld [vmem:[%s23 + $0x240] sm:$0xff]
        %v3683 = vld [vmem:[%s23 + $0x248] sm:$0xff]
        %v3684 = vld [vmem:[%s23 + $0x250] sm:$0xff]
        %v3685 = vld [vmem:[%s23 + $0x258] sm:$0xff]
        %v3686 = vld [vmem:[%s23 + $0x260] sm:$0xff]
        %v3687 = vld [vmem:[%s23 + $0x268] sm:$0xff]
        %v3688 = vld [vmem:[%s23 + $0x270] sm:$0xff]
        %v3689 = vld [vmem:[%s23 + $0x278] sm:$0xff]
        %v3690 = vld [vmem:[%s23 + $0x400] sm:$0xff]
        %v3691 = vld [vmem:[%s23 + $0x408] sm:$0xff]
        %v3692 = vld [vmem:[%s23 + $0x410] sm:$0xff]
        %v3693 = vld [vmem:[%s23 + $0x418] sm:$0xff]
        %v3694 = vld [vmem:[%s23 + $0x420] sm:$0xff]
        %v3695 = vld [vmem:[%s23 + $0x428] sm:$0xff]
        %v3696 = vld [vmem:[%s23 + $0x430] sm:$0xff]
        %v3697 = vld [vmem:[%s23 + $0x438] sm:$0xff]
        %v3698 = vld [vmem:[%s23 + $0x440] sm:$0xff]
        %v3699 = vld [vmem:[%s23 + $0x448] sm:$0xff]
        %v3700 = vld [vmem:[%s23 + $0x450] sm:$0xff]
        %v3701 = vld [vmem:[%s23 + $0x458] sm:$0xff]
        %v3702 = vld [vmem:[%s23 + $0x460] sm:$0xff]
        %v3703 = vld [vmem:[%s23 + $0x468] sm:$0xff]
        %v3704 = vld [vmem:[%s23 + $0x470] sm:$0xff]
        %v3705 = vld [vmem:[%s23 + $0x478] sm:$0xff]
        %v3706 = vld [vmem:[%s23 + $0x600] sm:$0xff]
        %v3707 = vld [vmem:[%s23 + $0x608] sm:$0xff]
        %v3708 = vld [vmem:[%s23 + $0x610] sm:$0xff]
        %v3709 = vld [vmem:[%s23 + $0x618] sm:$0xff]
        %v3710 = vld [vmem:[%s23 + $0x620] sm:$0xff]
        %v3711 = vld [vmem:[%s23 + $0x628] sm:$0xff]
        %v3712 = vld [vmem:[%s23 + $0x630] sm:$0xff]
        %v3713 = vld [vmem:[%s23 + $0x638] sm:$0xff]
        %v3714 = vld [vmem:[%s23 + $0x640] sm:$0xff]
        %v3715 = vld [vmem:[%s23 + $0x648] sm:$0xff]
        %v3716 = vld [vmem:[%s23 + $0x650] sm:$0xff]
        %v3717 = vld [vmem:[%s23 + $0x658] sm:$0xff]
        %v3718 = vld [vmem:[%s23 + $0x660] sm:$0xff]
        %v3719 = vld [vmem:[%s23 + $0x668] sm:$0xff]
        %v3720 = vld [vmem:[%s23 + $0x670] sm:$0xff]
        %v3721 = vld [vmem:[%s23 + $0x678] sm:$0xff]
        %v3722 = vld [vmem:[%s23 + $0x800] sm:$0xff]
        %v3723 = vld [vmem:[%s23 + $0x808] sm:$0xff]
        %v3724 = vld [vmem:[%s23 + $0x810] sm:$0xff]
        %v3725 = vld [vmem:[%s23 + $0x818] sm:$0xff]
        %v3726 = vld [vmem:[%s23 + $0x820] sm:$0xff]
        %v3727 = vld [vmem:[%s23 + $0x828] sm:$0xff]
        %v3728 = vld [vmem:[%s23 + $0x830] sm:$0xff]
        %v3729 = vld [vmem:[%s23 + $0x838] sm:$0xff]
        %v3730 = vld [vmem:[%s23 + $0x840] sm:$0xff]
        %v3731 = vld [vmem:[%s23 + $0x848] sm:$0xff]
        %v3732 = vld [vmem:[%s23 + $0x850] sm:$0xff]
        %v3733 = vld [vmem:[%s23 + $0x858] sm:$0xff]
        %v3734 = vld [vmem:[%s23 + $0x860] sm:$0xff]
        %v3735 = vld [vmem:[%s23 + $0x868] sm:$0xff]
        %v3736 = vld [vmem:[%s23 + $0x870] sm:$0xff]
        %v3737 = vld [vmem:[%s23 + $0x878] sm:$0xff]
        %v3738 = vld [vmem:[%s23 + $0xa00] sm:$0xff]
        %v3739 = vld [vmem:[%s23 + $0xa08] sm:$0xff]
        %v3740 = vld [vmem:[%s23 + $0xa10] sm:$0xff]
        %v3741 = vld [vmem:[%s23 + $0xa18] sm:$0xff]
        %v3742 = vld [vmem:[%s23 + $0xa20] sm:$0xff]
        %v3743 = vld [vmem:[%s23 + $0xa28] sm:$0xff]
        %v3744 = vld [vmem:[%s23 + $0xa30] sm:$0xff]
        %v3745 = vld [vmem:[%s23 + $0xa38] sm:$0xff]
        %v3746 = vld [vmem:[%s23 + $0xa40] sm:$0xff]
        %v3747 = vld [vmem:[%s23 + $0xa48] sm:$0xff]
        %v3748 = vld [vmem:[%s23 + $0xa50] sm:$0xff]
        %v3749 = vld [vmem:[%s23 + $0xa58] sm:$0xff]
        %v3750 = vld [vmem:[%s23 + $0xa60] sm:$0xff]
        %v3751 = vld [vmem:[%s23 + $0xa68] sm:$0xff]
        %v3752 = vld [vmem:[%s23 + $0xa70] sm:$0xff]
        %v3753 = vld [vmem:[%s23 + $0xa78] sm:$0xff]
        %v3754 = vld [vmem:[%s23 + $0xc00] sm:$0xff]
        %v3755 = vld [vmem:[%s23 + $0xc08] sm:$0xff]
        %v3756 = vld [vmem:[%s23 + $0xc10] sm:$0xff]
        %v3757 = vld [vmem:[%s23 + $0xc18] sm:$0xff]
        %v3758 = vld [vmem:[%s23 + $0xc20] sm:$0xff]
        %v3759 = vld [vmem:[%s23 + $0xc28] sm:$0xff]
        %v3760 = vld [vmem:[%s23 + $0xc30] sm:$0xff]
        %v3761 = vld [vmem:[%s23 + $0xc38] sm:$0xff]
        %v3762 = vld [vmem:[%s23 + $0xc40] sm:$0xff]
        %v3763 = vld [vmem:[%s23 + $0xc48] sm:$0xff]
        %v3764 = vld [vmem:[%s23 + $0xc50] sm:$0xff]
        %v3765 = vld [vmem:[%s23 + $0xc58] sm:$0xff]
        %v3766 = vld [vmem:[%s23 + $0xc60] sm:$0xff]
        %v3767 = vld [vmem:[%s23 + $0xc68] sm:$0xff]
        %v3768 = vld [vmem:[%s23 + $0xc70] sm:$0xff]
        %v3769 = vld [vmem:[%s23 + $0xc78] sm:$0xff]
        %v3770 = vld [vmem:[%s23 + $0xe00] sm:$0xff]
        %v3771 = vld [vmem:[%s23 + $0xe08] sm:$0xff]
        %v3772 = vld [vmem:[%s23 + $0xe10] sm:$0xff]
        %v3773 = vld [vmem:[%s23 + $0xe18] sm:$0xff]
        %v3774 = vld [vmem:[%s23 + $0xe20] sm:$0xff]
        %v3775 = vld [vmem:[%s23 + $0xe28] sm:$0xff]
        %v3776 = vld [vmem:[%s23 + $0xe30] sm:$0xff]
        %v3777 = vld [vmem:[%s23 + $0xe38] sm:$0xff]
        %v3778 = vld [vmem:[%s23 + $0xe40] sm:$0xff]
        %v3779 = vld [vmem:[%s23 + $0xe48] sm:$0xff]
        %v3780 = vld [vmem:[%s23 + $0xe50] sm:$0xff]
        %v3781 = vld [vmem:[%s23 + $0xe58] sm:$0xff]
        %v3782 = vld [vmem:[%s23 + $0xe60] sm:$0xff]
        %v3783 = vld [vmem:[%s23 + $0xe68] sm:$0xff]
        %v3784 = vld [vmem:[%s23 + $0xe70] sm:$0xff]
        %v3785 = vld [vmem:[%s23 + $0xe78] sm:$0xff]
        %v3786 = vld [vmem:[%s24] sm:$0xff]
        %v3787 = vld [vmem:[%s24 + $0x8] sm:$0xff]
        %v3788 = vld [vmem:[%s24 + $0x10] sm:$0xff]
        %v3789 = vld [vmem:[%s24 + $0x18] sm:$0xff]
        %v3794 = vperm.slane %v3786, 0
        %v3795 = vperm.slane %v3786, 1
        %v3796 = vperm.slane %v3786, 2
        %v3797 = vperm.slane %v3786, 3
        %v3798 = vperm.slane %v3786, 4
        %v3799 = vperm.slane %v3786, 5
        %v3800 = vperm.slane %v3786, 6
        %v3801 = vperm.slane %v3786, 7
        %v3802 = vperm.slane %v3787, 0
        %v3803 = vperm.slane %v3787, 1
        %v3804 = vperm.slane %v3787, 2
        %v3805 = vperm.slane %v3787, 3
        %v3806 = vperm.slane %v3787, 4
        %v3807 = vperm.slane %v3787, 5
        %v3808 = vperm.slane %v3787, 6
        %v3809 = vperm.slane %v3787, 7
        %v3810 = vperm.slane %v3788, 0
        %v3811 = vperm.slane %v3788, 1
        %v3812 = vperm.slane %v3788, 2
        %v3813 = vperm.slane %v3788, 3
        %v3814 = vperm.slane %v3788, 4
        %v3815 = vperm.slane %v3788, 5
        %v3816 = vperm.slane %v3788, 6
        %v3817 = vperm.slane %v3788, 7
        %v3818 = vperm.slane %v3789, 0
        %v3819 = vperm.slane %v3789, 1
        %v3820 = vperm.slane %v3789, 2
        %v3821 = vperm.slane %v3789, 3
        %v3822 = vperm.slane %v3789, 4
        %v3823 = vperm.slane %v3789, 5
        %v3824 = vperm.slane %v3789, 6
        %v3825 = vperm.slane %v3789, 7
        %v3986 = vunpack.c.l.b16 %v3658
        %v3987 = vunpack.c.h.b16 %v3658
        %v3988 = vunpack.c.l.b16 %v3659
        %v3989 = vunpack.c.h.b16 %v3659
        %v3990 = vunpack.c.l.b16 %v3660
        %v3991 = vunpack.c.h.b16 %v3660
        %v3992 = vunpack.c.l.b16 %v3661
        %v3993 = vunpack.c.h.b16 %v3661
        %v3994 = vunpack.c.l.b16 %v3662
        %v3995 = vunpack.c.h.b16 %v3662
        %v3996 = vunpack.c.l.b16 %v3663
        %v3997 = vunpack.c.h.b16 %v3663
        %v3998 = vunpack.c.l.b16 %v3664
        %v3999 = vunpack.c.h.b16 %v3664
        %v4000 = vunpack.c.l.b16 %v3665
        %v4001 = vunpack.c.h.b16 %v3665
        %v4002 = vunpack.c.l.b16 %v3666
        %v4003 = vunpack.c.h.b16 %v3666
        %v4004 = vunpack.c.l.b16 %v3667
        %v4005 = vunpack.c.h.b16 %v3667
        %v4006 = vunpack.c.l.b16 %v3668
        %v4007 = vunpack.c.h.b16 %v3668
        %v4008 = vunpack.c.l.b16 %v3669
        %v4009 = vunpack.c.h.b16 %v3669
        %v4010 = vunpack.c.l.b16 %v3670
        %v4011 = vunpack.c.h.b16 %v3670
        %v4012 = vunpack.c.l.b16 %v3671
        %v4013 = vunpack.c.h.b16 %v3671
        %v4014 = vunpack.c.l.b16 %v3672
        %v4015 = vunpack.c.h.b16 %v3672
        %v4016 = vunpack.c.l.b16 %v3673
        %v4017 = vunpack.c.h.b16 %v3673
        %v4018 = vunpack.c.l.b16 %v3674
        %v4019 = vunpack.c.h.b16 %v3674
        %v4020 = vunpack.c.l.b16 %v3675
        %v4021 = vunpack.c.h.b16 %v3675
        %v4022 = vunpack.c.l.b16 %v3676
        %v4023 = vunpack.c.h.b16 %v3676
        %v4024 = vunpack.c.l.b16 %v3677
        %v4025 = vunpack.c.h.b16 %v3677
        %v4026 = vunpack.c.l.b16 %v3678
        %v4027 = vunpack.c.h.b16 %v3678
        %v4028 = vunpack.c.l.b16 %v3679
        %v4029 = vunpack.c.h.b16 %v3679
        %v4030 = vunpack.c.l.b16 %v3680
        %v4031 = vunpack.c.h.b16 %v3680
        %v4032 = vunpack.c.l.b16 %v3681
        %v4033 = vunpack.c.h.b16 %v3681
        %v4034 = vunpack.c.l.b16 %v3682
        %v4035 = vunpack.c.h.b16 %v3682
        %v4036 = vunpack.c.l.b16 %v3683
        %v4037 = vunpack.c.h.b16 %v3683
        %v4038 = vunpack.c.l.b16 %v3684
        %v4039 = vunpack.c.h.b16 %v3684
        %v4040 = vunpack.c.l.b16 %v3685
        %v4041 = vunpack.c.h.b16 %v3685
        %v4042 = vunpack.c.l.b16 %v3686
        %v4043 = vunpack.c.h.b16 %v3686
        %v4044 = vunpack.c.l.b16 %v3687
        %v4045 = vunpack.c.h.b16 %v3687
        %v4046 = vunpack.c.l.b16 %v3688
        %v4047 = vunpack.c.h.b16 %v3688
        %v4048 = vunpack.c.l.b16 %v3689
        %v4049 = vunpack.c.h.b16 %v3689
        %v4050 = vunpack.c.l.b16 %v3690
        %v4051 = vunpack.c.h.b16 %v3690
        %v4052 = vunpack.c.l.b16 %v3691
        %v4053 = vunpack.c.h.b16 %v3691
        %v4054 = vunpack.c.l.b16 %v3692
        %v4055 = vunpack.c.h.b16 %v3692
        %v4056 = vunpack.c.l.b16 %v3693
        %v4057 = vunpack.c.h.b16 %v3693
        %v4058 = vunpack.c.l.b16 %v3694
        %v4059 = vunpack.c.h.b16 %v3694
        %v4060 = vunpack.c.l.b16 %v3695
        %v4061 = vunpack.c.h.b16 %v3695
        %v4062 = vunpack.c.l.b16 %v3696
        %v4063 = vunpack.c.h.b16 %v3696
        %v4064 = vunpack.c.l.b16 %v3697
        %v4065 = vunpack.c.h.b16 %v3697
        %v4066 = vunpack.c.l.b16 %v3698
        %v4067 = vunpack.c.h.b16 %v3698
        %v4068 = vunpack.c.l.b16 %v3699
        %v4069 = vunpack.c.h.b16 %v3699
        %v4070 = vunpack.c.l.b16 %v3700
        %v4071 = vunpack.c.h.b16 %v3700
        %v4072 = vunpack.c.l.b16 %v3701
        %v4073 = vunpack.c.h.b16 %v3701
        %v4074 = vunpack.c.l.b16 %v3702
        %v4075 = vunpack.c.h.b16 %v3702
        %v4076 = vunpack.c.l.b16 %v3703
        %v4077 = vunpack.c.h.b16 %v3703
        %v4078 = vunpack.c.l.b16 %v3704
        %v4079 = vunpack.c.h.b16 %v3704
        %v4080 = vunpack.c.l.b16 %v3705
        %v4081 = vunpack.c.h.b16 %v3705
        %v4082 = vunpack.c.l.b16 %v3706
        %v4083 = vunpack.c.h.b16 %v3706
        %v4084 = vunpack.c.l.b16 %v3707
        %v4085 = vunpack.c.h.b16 %v3707
        %v4086 = vunpack.c.l.b16 %v3708
        %v4087 = vunpack.c.h.b16 %v3708
        %v4088 = vunpack.c.l.b16 %v3709
        %v4089 = vunpack.c.h.b16 %v3709
        %v4090 = vunpack.c.l.b16 %v3710
        %v4091 = vunpack.c.h.b16 %v3710
        %v4092 = vunpack.c.l.b16 %v3711
        %v4093 = vunpack.c.h.b16 %v3711
        %v4094 = vunpack.c.l.b16 %v3712
        %v4095 = vunpack.c.h.b16 %v3712
        %v4096 = vunpack.c.l.b16 %v3713
        %v4097 = vunpack.c.h.b16 %v3713
        %v4098 = vunpack.c.l.b16 %v3714
        %v4099 = vunpack.c.h.b16 %v3714
        %v4100 = vunpack.c.l.b16 %v3715
        %v4101 = vunpack.c.h.b16 %v3715
        %v4102 = vunpack.c.l.b16 %v3716
        %v4103 = vunpack.c.h.b16 %v3716
        %v4104 = vunpack.c.l.b16 %v3717
        %v4105 = vunpack.c.h.b16 %v3717
        %v4106 = vunpack.c.l.b16 %v3718
        %v4107 = vunpack.c.h.b16 %v3718
        %v4108 = vunpack.c.l.b16 %v3719
        %v4109 = vunpack.c.h.b16 %v3719
        %v4110 = vunpack.c.l.b16 %v3720
        %v4111 = vunpack.c.h.b16 %v3720
        %v4112 = vunpack.c.l.b16 %v3721
        %v4113 = vunpack.c.h.b16 %v3721
        %v4114 = vunpack.c.l.b16 %v3722
        %v4115 = vunpack.c.h.b16 %v3722
        %v4116 = vunpack.c.l.b16 %v3723
        %v4117 = vunpack.c.h.b16 %v3723
        %v4118 = vunpack.c.l.b16 %v3724
        %v4119 = vunpack.c.h.b16 %v3724
        %v4120 = vunpack.c.l.b16 %v3725
        %v4121 = vunpack.c.h.b16 %v3725
        %v4122 = vunpack.c.l.b16 %v3726
        %v4123 = vunpack.c.h.b16 %v3726
        %v4124 = vunpack.c.l.b16 %v3727
        %v4125 = vunpack.c.h.b16 %v3727
        %v4126 = vunpack.c.l.b16 %v3728
        %v4127 = vunpack.c.h.b16 %v3728
        %v4128 = vunpack.c.l.b16 %v3729
        %v4129 = vunpack.c.h.b16 %v3729
        %v4130 = vunpack.c.l.b16 %v3730
        %v4131 = vunpack.c.h.b16 %v3730
        %v4132 = vunpack.c.l.b16 %v3731
        %v4133 = vunpack.c.h.b16 %v3731
        %v4134 = vunpack.c.l.b16 %v3732
        %v4135 = vunpack.c.h.b16 %v3732
        %v4136 = vunpack.c.l.b16 %v3733
        %v4137 = vunpack.c.h.b16 %v3733
        %v4138 = vunpack.c.l.b16 %v3734
        %v4139 = vunpack.c.h.b16 %v3734
        %v4140 = vunpack.c.l.b16 %v3735
        %v4141 = vunpack.c.h.b16 %v3735
        %v4142 = vunpack.c.l.b16 %v3736
        %v4143 = vunpack.c.h.b16 %v3736
        %v4144 = vunpack.c.l.b16 %v3737
        %v4145 = vunpack.c.h.b16 %v3737
        %v4146 = vunpack.c.l.b16 %v3738
        %v4147 = vunpack.c.h.b16 %v3738
        %v4148 = vunpack.c.l.b16 %v3739
        %v4149 = vunpack.c.h.b16 %v3739
        %v4150 = vunpack.c.l.b16 %v3740
        %v4151 = vunpack.c.h.b16 %v3740
        %v4152 = vunpack.c.l.b16 %v3741
        %v4153 = vunpack.c.h.b16 %v3741
        %v4154 = vunpack.c.l.b16 %v3742
        %v4155 = vunpack.c.h.b16 %v3742
        %v4156 = vunpack.c.l.b16 %v3743
        %v4157 = vunpack.c.h.b16 %v3743
        %v4158 = vunpack.c.l.b16 %v3744
        %v4159 = vunpack.c.h.b16 %v3744
        %v4160 = vunpack.c.l.b16 %v3745
        %v4161 = vunpack.c.h.b16 %v3745
        %v4162 = vunpack.c.l.b16 %v3746
        %v4163 = vunpack.c.h.b16 %v3746
        %v4164 = vunpack.c.l.b16 %v3747
        %v4165 = vunpack.c.h.b16 %v3747
        %v4166 = vunpack.c.l.b16 %v3748
        %v4167 = vunpack.c.h.b16 %v3748
        %v4168 = vunpack.c.l.b16 %v3749
        %v4169 = vunpack.c.h.b16 %v3749
        %v4170 = vunpack.c.l.b16 %v3750
        %v4171 = vunpack.c.h.b16 %v3750
        %v4172 = vunpack.c.l.b16 %v3751
        %v4173 = vunpack.c.h.b16 %v3751
        %v4174 = vunpack.c.l.b16 %v3752
        %v4175 = vunpack.c.h.b16 %v3752
        %v4176 = vunpack.c.l.b16 %v3753
        %v4177 = vunpack.c.h.b16 %v3753
        %v4178 = vunpack.c.l.b16 %v3754
        %v4179 = vunpack.c.h.b16 %v3754
        %v4180 = vunpack.c.l.b16 %v3755
        %v4181 = vunpack.c.h.b16 %v3755
        %v4182 = vunpack.c.l.b16 %v3756
        %v4183 = vunpack.c.h.b16 %v3756
        %v4184 = vunpack.c.l.b16 %v3757
        %v4185 = vunpack.c.h.b16 %v3757
        %v4186 = vunpack.c.l.b16 %v3758
        %v4187 = vunpack.c.h.b16 %v3758
        %v4188 = vunpack.c.l.b16 %v3759
        %v4189 = vunpack.c.h.b16 %v3759
        %v4190 = vunpack.c.l.b16 %v3760
        %v4191 = vunpack.c.h.b16 %v3760
        %v4192 = vunpack.c.l.b16 %v3761
        %v4193 = vunpack.c.h.b16 %v3761
        %v4194 = vunpack.c.l.b16 %v3762
        %v4195 = vunpack.c.h.b16 %v3762
        %v4196 = vunpack.c.l.b16 %v3763
        %v4197 = vunpack.c.h.b16 %v3763
        %v4198 = vunpack.c.l.b16 %v3764
        %v4199 = vunpack.c.h.b16 %v3764
        %v4200 = vunpack.c.l.b16 %v3765
        %v4201 = vunpack.c.h.b16 %v3765
        %v4202 = vunpack.c.l.b16 %v3766
        %v4203 = vunpack.c.h.b16 %v3766
        %v4204 = vunpack.c.l.b16 %v3767
        %v4205 = vunpack.c.h.b16 %v3767
        %v4206 = vunpack.c.l.b16 %v3768
        %v4207 = vunpack.c.h.b16 %v3768
        %v4208 = vunpack.c.l.b16 %v3769
        %v4209 = vunpack.c.h.b16 %v3769
        %v4210 = vunpack.c.l.b16 %v3770
        %v4211 = vunpack.c.h.b16 %v3770
        %v4212 = vunpack.c.l.b16 %v3771
        %v4213 = vunpack.c.h.b16 %v3771
        %v4214 = vunpack.c.l.b16 %v3772
        %v4215 = vunpack.c.h.b16 %v3772
        %v4216 = vunpack.c.l.b16 %v3773
        %v4217 = vunpack.c.h.b16 %v3773
        %v4218 = vunpack.c.l.b16 %v3774
        %v4219 = vunpack.c.h.b16 %v3774
        %v4220 = vunpack.c.l.b16 %v3775
        %v4221 = vunpack.c.h.b16 %v3775
        %v4222 = vunpack.c.l.b16 %v3776
        %v4223 = vunpack.c.h.b16 %v3776
        %v4224 = vunpack.c.l.b16 %v3777
        %v4225 = vunpack.c.h.b16 %v3777
        %v4226 = vunpack.c.l.b16 %v3778
        %v4227 = vunpack.c.h.b16 %v3778
        %v4228 = vunpack.c.l.b16 %v3779
        %v4229 = vunpack.c.h.b16 %v3779
        %v4230 = vunpack.c.l.b16 %v3780
        %v4231 = vunpack.c.h.b16 %v3780
        %v4232 = vunpack.c.l.b16 %v3781
        %v4233 = vunpack.c.h.b16 %v3781
        %v4234 = vunpack.c.l.b16 %v3782
        %v4235 = vunpack.c.h.b16 %v3782
        %v4236 = vunpack.c.l.b16 %v3783
        %v4237 = vunpack.c.h.b16 %v3783
        %v4238 = vunpack.c.l.b16 %v3784
        %v4239 = vunpack.c.h.b16 %v3784
        %v4240 = vunpack.c.l.b16 %v3785
        %v4241 = vunpack.c.h.b16 %v3785
        %v4242 = vpack.c.b16 %v4018, %v3986
        %v4243 = vpack.c.b16 %v4019, %v3987
        %v4244 = vpack.c.b16 %v4020, %v3988
        %v4245 = vpack.c.b16 %v4021, %v3989
        %v4246 = vpack.c.b16 %v4022, %v3990
        %v4247 = vpack.c.b16 %v4023, %v3991
        %v4248 = vpack.c.b16 %v4024, %v3992
        %v4249 = vpack.c.b16 %v4025, %v3993
        %v4250 = vpack.c.b16 %v4026, %v3994
        %v4251 = vpack.c.b16 %v4027, %v3995
        %v4252 = vpack.c.b16 %v4028, %v3996
        %v4253 = vpack.c.b16 %v4029, %v3997
        %v4254 = vpack.c.b16 %v4030, %v3998
        %v4255 = vpack.c.b16 %v4031, %v3999
        %v4256 = vpack.c.b16 %v4032, %v4000
        %v4257 = vpack.c.b16 %v4033, %v4001
        %v4258 = vpack.c.b16 %v4034, %v4002
        %v4259 = vpack.c.b16 %v4035, %v4003
        %v4260 = vpack.c.b16 %v4036, %v4004
        %v4261 = vpack.c.b16 %v4037, %v4005
        %v4262 = vpack.c.b16 %v4038, %v4006
        %v4263 = vpack.c.b16 %v4039, %v4007
        %v4264 = vpack.c.b16 %v4040, %v4008
        %v4265 = vpack.c.b16 %v4041, %v4009
        %v4266 = vpack.c.b16 %v4042, %v4010
        %v4267 = vpack.c.b16 %v4043, %v4011
        %v4268 = vpack.c.b16 %v4044, %v4012
        %v4269 = vpack.c.b16 %v4045, %v4013
        %v4270 = vpack.c.b16 %v4046, %v4014
        %v4271 = vpack.c.b16 %v4047, %v4015
        %v4272 = vpack.c.b16 %v4048, %v4016
        %v4273 = vpack.c.b16 %v4049, %v4017
        %v4274 = vpack.c.b16 %v4082, %v4050
        %v4275 = vpack.c.b16 %v4083, %v4051
        %v4276 = vpack.c.b16 %v4084, %v4052
        %v4277 = vpack.c.b16 %v4085, %v4053
        %v4278 = vpack.c.b16 %v4086, %v4054
        %v4279 = vpack.c.b16 %v4087, %v4055
        %v4280 = vpack.c.b16 %v4088, %v4056
        %v4281 = vpack.c.b16 %v4089, %v4057
        %v4282 = vpack.c.b16 %v4090, %v4058
        %v4283 = vpack.c.b16 %v4091, %v4059
        %v4284 = vpack.c.b16 %v4092, %v4060
        %v4285 = vpack.c.b16 %v4093, %v4061
        %v4286 = vpack.c.b16 %v4094, %v4062
        %v4287 = vpack.c.b16 %v4095, %v4063
        %v4288 = vpack.c.b16 %v4096, %v4064
        %v4289 = vpack.c.b16 %v4097, %v4065
        %v4290 = vpack.c.b16 %v4098, %v4066
        %v4291 = vpack.c.b16 %v4099, %v4067
        %v4292 = vpack.c.b16 %v4100, %v4068
        %v4293 = vpack.c.b16 %v4101, %v4069
        %v4294 = vpack.c.b16 %v4102, %v4070
        %v4295 = vpack.c.b16 %v4103, %v4071
        %v4296 = vpack.c.b16 %v4104, %v4072
        %v4297 = vpack.c.b16 %v4105, %v4073
        %v4298 = vpack.c.b16 %v4106, %v4074
        %v4299 = vpack.c.b16 %v4107, %v4075
        %v4300 = vpack.c.b16 %v4108, %v4076
        %v4301 = vpack.c.b16 %v4109, %v4077
        %v4302 = vpack.c.b16 %v4110, %v4078
        %v4303 = vpack.c.b16 %v4111, %v4079
        %v4304 = vpack.c.b16 %v4112, %v4080
        %v4305 = vpack.c.b16 %v4113, %v4081
        %v4306 = vpack.c.b16 %v4146, %v4114
        %v4307 = vpack.c.b16 %v4147, %v4115
        %v4308 = vpack.c.b16 %v4148, %v4116
        %v4309 = vpack.c.b16 %v4149, %v4117
        %v4310 = vpack.c.b16 %v4150, %v4118
        %v4311 = vpack.c.b16 %v4151, %v4119
        %v4312 = vpack.c.b16 %v4152, %v4120
        %v4313 = vpack.c.b16 %v4153, %v4121
        %v4314 = vpack.c.b16 %v4154, %v4122
        %v4315 = vpack.c.b16 %v4155, %v4123
        %v4316 = vpack.c.b16 %v4156, %v4124
        %v4317 = vpack.c.b16 %v4157, %v4125
        %v4318 = vpack.c.b16 %v4158, %v4126
        %v4319 = vpack.c.b16 %v4159, %v4127
        %v4320 = vpack.c.b16 %v4160, %v4128
        %v4321 = vpack.c.b16 %v4161, %v4129
        %v4322 = vpack.c.b16 %v4162, %v4130
        %v4323 = vpack.c.b16 %v4163, %v4131
        %v4324 = vpack.c.b16 %v4164, %v4132
        %v4325 = vpack.c.b16 %v4165, %v4133
        %v4326 = vpack.c.b16 %v4166, %v4134
        %v4327 = vpack.c.b16 %v4167, %v4135
        %v4328 = vpack.c.b16 %v4168, %v4136
        %v4329 = vpack.c.b16 %v4169, %v4137
        %v4330 = vpack.c.b16 %v4170, %v4138
        %v4331 = vpack.c.b16 %v4171, %v4139
        %v4332 = vpack.c.b16 %v4172, %v4140
        %v4333 = vpack.c.b16 %v4173, %v4141
        %v4334 = vpack.c.b16 %v4174, %v4142
        %v4335 = vpack.c.b16 %v4175, %v4143
        %v4336 = vpack.c.b16 %v4176, %v4144
        %v4337 = vpack.c.b16 %v4177, %v4145
        %v4338 = vpack.c.b16 %v4210, %v4178
        %v4339 = vpack.c.b16 %v4211, %v4179
        %v4340 = vpack.c.b16 %v4212, %v4180
        %v4341 = vpack.c.b16 %v4213, %v4181
        %v4342 = vpack.c.b16 %v4214, %v4182
        %v4343 = vpack.c.b16 %v4215, %v4183
        %v4344 = vpack.c.b16 %v4216, %v4184
        %v4345 = vpack.c.b16 %v4217, %v4185
        %v4346 = vpack.c.b16 %v4218, %v4186
        %v4347 = vpack.c.b16 %v4219, %v4187
        %v4348 = vpack.c.b16 %v4220, %v4188
        %v4349 = vpack.c.b16 %v4221, %v4189
        %v4350 = vpack.c.b16 %v4222, %v4190
        %v4351 = vpack.c.b16 %v4223, %v4191
        %v4352 = vpack.c.b16 %v4224, %v4192
        %v4353 = vpack.c.b16 %v4225, %v4193
        %v4354 = vpack.c.b16 %v4226, %v4194
        %v4355 = vpack.c.b16 %v4227, %v4195
        %v4356 = vpack.c.b16 %v4228, %v4196
        %v4357 = vpack.c.b16 %v4229, %v4197
        %v4358 = vpack.c.b16 %v4230, %v4198
        %v4359 = vpack.c.b16 %v4231, %v4199
        %v4360 = vpack.c.b16 %v4232, %v4200
        %v4361 = vpack.c.b16 %v4233, %v4201
        %v4362 = vpack.c.b16 %v4234, %v4202
        %v4363 = vpack.c.b16 %v4235, %v4203
        %v4364 = vpack.c.b16 %v4236, %v4204
        %v4365 = vpack.c.b16 %v4237, %v4205
        %v4366 = vpack.c.b16 %v4238, %v4206
        %v4367 = vpack.c.b16 %v4239, %v4207
        %v4368 = vpack.c.b16 %v4240, %v4208
        %v4369 = vpack.c.b16 %v4241, %v4209
        %v4499 = vsel %vm818, %v3657, 0
        %4501 = vmatpush.bf16.msra.mxu0 0
        %4502 = vmatpush.bf16.msra.mxu0 0
        %4503 = vmatpush.bf16.msra.mxu0 0
        %4504 = vmatpush.bf16.msra.mxu0 0
        %4505 = vmatpush.bf16.msra.mxu0 %v4338
        %4506 = vmatpush.bf16.msra.mxu0 %v4306
        %4507 = vmatpush.bf16.msra.mxu0 %v4274
        %4508 = vmatpush.bf16.msra.mxu0 %v4242
        %4509 = vmatmul.bf16.gmra.mxu0 %v4499
        %v4510 = vpop.f32.mrf.mxu0
        %v4511 = vadd.f32 %v3794, %v4510
        %v4512 = vpop.f32.mrf.mxu0
        %4513 = vdwg.mxu0
        %4514 = vmatpush.bf16.msra.mxu0 0
        %4515 = vmatpush.bf16.msra.mxu0 0
        %4516 = vmatpush.bf16.msra.mxu0 0
        %4517 = vmatpush.bf16.msra.mxu0 0
        %4518 = vmatpush.bf16.msra.mxu0 %v4339
        %4519 = vmatpush.bf16.msra.mxu0 %v4307
        %4520 = vmatpush.bf16.msra.mxu0 %v4275
        %4521 = vmatpush.bf16.msra.mxu0 %v4243
        %4522 = vmatmul.bf16.gmra.mxu0 %v4499
        %v4523 = vpop.f32.mrf.mxu0
        %v4524 = vadd.f32 %v3795, %v4523
        %v4525 = vpop.f32.mrf.mxu0
        %4526 = vdwg.mxu0
        %4527 = vmatpush.bf16.msra.mxu0 0
        %4528 = vmatpush.bf16.msra.mxu0 0
        %4529 = vmatpush.bf16.msra.mxu0 0
        %4530 = vmatpush.bf16.msra.mxu0 0
        %4531 = vmatpush.bf16.msra.mxu0 %v4340
        %4532 = vmatpush.bf16.msra.mxu0 %v4308
        %4533 = vmatpush.bf16.msra.mxu0 %v4276
        %4534 = vmatpush.bf16.msra.mxu0 %v4244
        %4535 = vmatmul.bf16.gmra.mxu0 %v4499
        %v4536 = vpop.f32.mrf.mxu0
        %v4537 = vadd.f32 %v3796, %v4536
        %v4538 = vpop.f32.mrf.mxu0
        %4539 = vdwg.mxu0
        %4540 = vmatpush.bf16.msra.mxu0 0
        %4541 = vmatpush.bf16.msra.mxu0 0
        %4542 = vmatpush.bf16.msra.mxu0 0
        %4543 = vmatpush.bf16.msra.mxu0 0
        %4544 = vmatpush.bf16.msra.mxu0 %v4341
        %4545 = vmatpush.bf16.msra.mxu0 %v4309
        %4546 = vmatpush.bf16.msra.mxu0 %v4277
        %4547 = vmatpush.bf16.msra.mxu0 %v4245
        %4548 = vmatmul.bf16.gmra.mxu0 %v4499
        %v4549 = vpop.f32.mrf.mxu0
        %v4550 = vadd.f32 %v3797, %v4549
        %v4551 = vpop.f32.mrf.mxu0
        %4552 = vdwg.mxu0
        %4553 = vmatpush.bf16.msra.mxu0 0
        %4554 = vmatpush.bf16.msra.mxu0 0
        %4555 = vmatpush.bf16.msra.mxu0 0
        %4556 = vmatpush.bf16.msra.mxu0 0
        %4557 = vmatpush.bf16.msra.mxu0 %v4342
        %4558 = vmatpush.bf16.msra.mxu0 %v4310
        %4559 = vmatpush.bf16.msra.mxu0 %v4278
        %4560 = vmatpush.bf16.msra.mxu0 %v4246
        %4561 = vmatmul.bf16.gmra.mxu0 %v4499
        %v4562 = vpop.f32.mrf.mxu0
        %v4563 = vadd.f32 %v3798, %v4562
        %v4564 = vpop.f32.mrf.mxu0
        %4565 = vdwg.mxu0
        %4566 = vmatpush.bf16.msra.mxu0 0
        %4567 = vmatpush.bf16.msra.mxu0 0
        %4568 = vmatpush.bf16.msra.mxu0 0
        %4569 = vmatpush.bf16.msra.mxu0 0
        %4570 = vmatpush.bf16.msra.mxu0 %v4343
        %4571 = vmatpush.bf16.msra.mxu0 %v4311
        %4572 = vmatpush.bf16.msra.mxu0 %v4279
        %4573 = vmatpush.bf16.msra.mxu0 %v4247
        %4574 = vmatmul.bf16.gmra.mxu0 %v4499
        %v4575 = vpop.f32.mrf.mxu0
        %v4576 = vadd.f32 %v3799, %v4575
        %v4577 = vpop.f32.mrf.mxu0
        %4578 = vdwg.mxu0
        %4579 = vmatpush.bf16.msra.mxu0 0
        %4580 = vmatpush.bf16.msra.mxu0 0
        %4581 = vmatpush.bf16.msra.mxu0 0
        %4582 = vmatpush.bf16.msra.mxu0 0
        %4583 = vmatpush.bf16.msra.mxu0 %v4344
        %4584 = vmatpush.bf16.msra.mxu0 %v4312
        %4585 = vmatpush.bf16.msra.mxu0 %v4280
        %4586 = vmatpush.bf16.msra.mxu0 %v4248
        %4587 = vmatmul.bf16.gmra.mxu0 %v4499
        %v4588 = vpop.f32.mrf.mxu0
        %v4589 = vadd.f32 %v3800, %v4588
        %v4590 = vpop.f32.mrf.mxu0
        %4591 = vdwg.mxu0
        %4592 = vmatpush.bf16.msra.mxu0 0
        %4593 = vmatpush.bf16.msra.mxu0 0
        %4594 = vmatpush.bf16.msra.mxu0 0
        %4595 = vmatpush.bf16.msra.mxu0 0
        %4596 = vmatpush.bf16.msra.mxu0 %v4345
        %4597 = vmatpush.bf16.msra.mxu0 %v4313
        %4598 = vmatpush.bf16.msra.mxu0 %v4281
        %4599 = vmatpush.bf16.msra.mxu0 %v4249
        %4600 = vmatmul.bf16.gmra.mxu0 %v4499
        %v4601 = vpop.f32.mrf.mxu0
        %v4602 = vadd.f32 %v3801, %v4601
        %v4603 = vpop.f32.mrf.mxu0
        %4604 = vdwg.mxu0
        %4605 = vmatpush.bf16.msra.mxu0 0
        %4606 = vmatpush.bf16.msra.mxu0 0
        %4607 = vmatpush.bf16.msra.mxu0 0
        %4608 = vmatpush.bf16.msra.mxu0 0
        %4609 = vmatpush.bf16.msra.mxu0 %v4346
        %4610 = vmatpush.bf16.msra.mxu0 %v4314
        %4611 = vmatpush.bf16.msra.mxu0 %v4282
        %4612 = vmatpush.bf16.msra.mxu0 %v4250
        %4613 = vmatmul.bf16.gmra.mxu0 %v4499
        %v4614 = vpop.f32.mrf.mxu0
        %v4615 = vadd.f32 %v3802, %v4614
        %v4616 = vpop.f32.mrf.mxu0
        %4617 = vdwg.mxu0
        %4618 = vmatpush.bf16.msra.mxu0 0
        %4619 = vmatpush.bf16.msra.mxu0 0
        %4620 = vmatpush.bf16.msra.mxu0 0
        %4621 = vmatpush.bf16.msra.mxu0 0
        %4622 = vmatpush.bf16.msra.mxu0 %v4347
        %4623 = vmatpush.bf16.msra.mxu0 %v4315
        %4624 = vmatpush.bf16.msra.mxu0 %v4283
        %4625 = vmatpush.bf16.msra.mxu0 %v4251
        %4626 = vmatmul.bf16.gmra.mxu0 %v4499
        %v4627 = vpop.f32.mrf.mxu0
        %v4628 = vadd.f32 %v3803, %v4627
        %v4629 = vpop.f32.mrf.mxu0
        %4630 = vdwg.mxu0
        %4631 = vmatpush.bf16.msra.mxu0 0
        %4632 = vmatpush.bf16.msra.mxu0 0
        %4633 = vmatpush.bf16.msra.mxu0 0
        %4634 = vmatpush.bf16.msra.mxu0 0
        %4635 = vmatpush.bf16.msra.mxu0 %v4348
        %4636 = vmatpush.bf16.msra.mxu0 %v4316
        %4637 = vmatpush.bf16.msra.mxu0 %v4284
        %4638 = vmatpush.bf16.msra.mxu0 %v4252
        %4639 = vmatmul.bf16.gmra.mxu0 %v4499
        %v4640 = vpop.f32.mrf.mxu0
        %v4641 = vadd.f32 %v3804, %v4640
        %v4642 = vpop.f32.mrf.mxu0
        %4643 = vdwg.mxu0
        %4644 = vmatpush.bf16.msra.mxu0 0
        %4645 = vmatpush.bf16.msra.mxu0 0
        %4646 = vmatpush.bf16.msra.mxu0 0
        %4647 = vmatpush.bf16.msra.mxu0 0
        %4648 = vmatpush.bf16.msra.mxu0 %v4349
        %4649 = vmatpush.bf16.msra.mxu0 %v4317
        %4650 = vmatpush.bf16.msra.mxu0 %v4285
        %4651 = vmatpush.bf16.msra.mxu0 %v4253
        %4652 = vmatmul.bf16.gmra.mxu0 %v4499
        %v4653 = vpop.f32.mrf.mxu0
        %v4654 = vadd.f32 %v3805, %v4653
        %v4655 = vpop.f32.mrf.mxu0
        %4656 = vdwg.mxu0
        %4657 = vmatpush.bf16.msra.mxu0 0
        %4658 = vmatpush.bf16.msra.mxu0 0
        %4659 = vmatpush.bf16.msra.mxu0 0
        %4660 = vmatpush.bf16.msra.mxu0 0
        %4661 = vmatpush.bf16.msra.mxu0 %v4350
        %4662 = vmatpush.bf16.msra.mxu0 %v4318
        %4663 = vmatpush.bf16.msra.mxu0 %v4286
        %4664 = vmatpush.bf16.msra.mxu0 %v4254
        %4665 = vmatmul.bf16.gmra.mxu0 %v4499
        %v4666 = vpop.f32.mrf.mxu0
        %v4667 = vadd.f32 %v3806, %v4666
        %v4668 = vpop.f32.mrf.mxu0
        %4669 = vdwg.mxu0
        %4670 = vmatpush.bf16.msra.mxu0 0
        %4671 = vmatpush.bf16.msra.mxu0 0
        %4672 = vmatpush.bf16.msra.mxu0 0
        %4673 = vmatpush.bf16.msra.mxu0 0
        %4674 = vmatpush.bf16.msra.mxu0 %v4351
        %4675 = vmatpush.bf16.msra.mxu0 %v4319
        %4676 = vmatpush.bf16.msra.mxu0 %v4287
        %4677 = vmatpush.bf16.msra.mxu0 %v4255
        %4678 = vmatmul.bf16.gmra.mxu0 %v4499
        %v4679 = vpop.f32.mrf.mxu0
        %v4680 = vadd.f32 %v3807, %v4679
        %v4681 = vpop.f32.mrf.mxu0
        %4682 = vdwg.mxu0
        %4683 = vmatpush.bf16.msra.mxu0 0
        %4684 = vmatpush.bf16.msra.mxu0 0
        %4685 = vmatpush.bf16.msra.mxu0 0
        %4686 = vmatpush.bf16.msra.mxu0 0
        %4687 = vmatpush.bf16.msra.mxu0 %v4352
        %4688 = vmatpush.bf16.msra.mxu0 %v4320
        %4689 = vmatpush.bf16.msra.mxu0 %v4288
        %4690 = vmatpush.bf16.msra.mxu0 %v4256
        %4691 = vmatmul.bf16.gmra.mxu0 %v4499
        %v4692 = vpop.f32.mrf.mxu0
        %v4693 = vadd.f32 %v3808, %v4692
        %v4694 = vpop.f32.mrf.mxu0
        %4695 = vdwg.mxu0
        %4696 = vmatpush.bf16.msra.mxu0 0
        %4697 = vmatpush.bf16.msra.mxu0 0
        %4698 = vmatpush.bf16.msra.mxu0 0
        %4699 = vmatpush.bf16.msra.mxu0 0
        %4700 = vmatpush.bf16.msra.mxu0 %v4353
        %4701 = vmatpush.bf16.msra.mxu0 %v4321
        %4702 = vmatpush.bf16.msra.mxu0 %v4289
        %4703 = vmatpush.bf16.msra.mxu0 %v4257
        %4704 = vmatmul.bf16.gmra.mxu0 %v4499
        %v4705 = vpop.f32.mrf.mxu0
        %v4706 = vadd.f32 %v3809, %v4705
        %v4707 = vpop.f32.mrf.mxu0
        %4708 = vdwg.mxu0
        %4709 = vmatpush.bf16.msra.mxu0 0
        %4710 = vmatpush.bf16.msra.mxu0 0
        %4711 = vmatpush.bf16.msra.mxu0 0
        %4712 = vmatpush.bf16.msra.mxu0 0
        %4713 = vmatpush.bf16.msra.mxu0 %v4354
        %4714 = vmatpush.bf16.msra.mxu0 %v4322
        %4715 = vmatpush.bf16.msra.mxu0 %v4290
        %4716 = vmatpush.bf16.msra.mxu0 %v4258
        %4717 = vmatmul.bf16.gmra.mxu0 %v4499
        %v4718 = vpop.f32.mrf.mxu0
        %v4719 = vadd.f32 %v3810, %v4718
        %v4720 = vpop.f32.mrf.mxu0
        %4721 = vdwg.mxu0
        %4722 = vmatpush.bf16.msra.mxu0 0
        %4723 = vmatpush.bf16.msra.mxu0 0
        %4724 = vmatpush.bf16.msra.mxu0 0
        %4725 = vmatpush.bf16.msra.mxu0 0
        %4726 = vmatpush.bf16.msra.mxu0 %v4355
        %4727 = vmatpush.bf16.msra.mxu0 %v4323
        %4728 = vmatpush.bf16.msra.mxu0 %v4291
        %4729 = vmatpush.bf16.msra.mxu0 %v4259
        %4730 = vmatmul.bf16.gmra.mxu0 %v4499
        %v4731 = vpop.f32.mrf.mxu0
        %v4732 = vadd.f32 %v3811, %v4731
        %v4733 = vpop.f32.mrf.mxu0
        %4734 = vdwg.mxu0
        %4735 = vmatpush.bf16.msra.mxu0 0
        %4736 = vmatpush.bf16.msra.mxu0 0
        %4737 = vmatpush.bf16.msra.mxu0 0
        %4738 = vmatpush.bf16.msra.mxu0 0
        %4739 = vmatpush.bf16.msra.mxu0 %v4356
        %4740 = vmatpush.bf16.msra.mxu0 %v4324
        %4741 = vmatpush.bf16.msra.mxu0 %v4292
        %4742 = vmatpush.bf16.msra.mxu0 %v4260
        %4743 = vmatmul.bf16.gmra.mxu0 %v4499
        %v4744 = vpop.f32.mrf.mxu0
        %v4745 = vadd.f32 %v3812, %v4744
        %v4746 = vpop.f32.mrf.mxu0
        %4747 = vdwg.mxu0
        %4748 = vmatpush.bf16.msra.mxu0 0
        %4749 = vmatpush.bf16.msra.mxu0 0
        %4750 = vmatpush.bf16.msra.mxu0 0
        %4751 = vmatpush.bf16.msra.mxu0 0
        %4752 = vmatpush.bf16.msra.mxu0 %v4357
        %4753 = vmatpush.bf16.msra.mxu0 %v4325
        %4754 = vmatpush.bf16.msra.mxu0 %v4293
        %4755 = vmatpush.bf16.msra.mxu0 %v4261
        %4756 = vmatmul.bf16.gmra.mxu0 %v4499
        %v4757 = vpop.f32.mrf.mxu0
        %v4758 = vadd.f32 %v3813, %v4757
        %v4759 = vpop.f32.mrf.mxu0
        %4760 = vdwg.mxu0
        %4761 = vmatpush.bf16.msra.mxu0 0
        %4762 = vmatpush.bf16.msra.mxu0 0
        %4763 = vmatpush.bf16.msra.mxu0 0
        %4764 = vmatpush.bf16.msra.mxu0 0
        %4765 = vmatpush.bf16.msra.mxu0 %v4358
        %4766 = vmatpush.bf16.msra.mxu0 %v4326
        %4767 = vmatpush.bf16.msra.mxu0 %v4294
        %4768 = vmatpush.bf16.msra.mxu0 %v4262
        %4769 = vmatmul.bf16.gmra.mxu0 %v4499
        %v4770 = vpop.f32.mrf.mxu0
        %v4771 = vadd.f32 %v3814, %v4770
        %v4772 = vpop.f32.mrf.mxu0
        %4773 = vdwg.mxu0
        %4774 = vmatpush.bf16.msra.mxu0 0
        %4775 = vmatpush.bf16.msra.mxu0 0
        %4776 = vmatpush.bf16.msra.mxu0 0
        %4777 = vmatpush.bf16.msra.mxu0 0
        %4778 = vmatpush.bf16.msra.mxu0 %v4359
        %4779 = vmatpush.bf16.msra.mxu0 %v4327
        %4780 = vmatpush.bf16.msra.mxu0 %v4295
        %4781 = vmatpush.bf16.msra.mxu0 %v4263
        %4782 = vmatmul.bf16.gmra.mxu0 %v4499
        %v4783 = vpop.f32.mrf.mxu0
        %v4784 = vadd.f32 %v3815, %v4783
        %v4785 = vpop.f32.mrf.mxu0
        %4786 = vdwg.mxu0
        %4787 = vmatpush.bf16.msra.mxu0 0
        %4788 = vmatpush.bf16.msra.mxu0 0
        %4789 = vmatpush.bf16.msra.mxu0 0
        %4790 = vmatpush.bf16.msra.mxu0 0
        %4791 = vmatpush.bf16.msra.mxu0 %v4360
        %4792 = vmatpush.bf16.msra.mxu0 %v4328
        %4793 = vmatpush.bf16.msra.mxu0 %v4296
        %4794 = vmatpush.bf16.msra.mxu0 %v4264
        %4795 = vmatmul.bf16.gmra.mxu0 %v4499
        %v4796 = vpop.f32.mrf.mxu0
        %v4797 = vadd.f32 %v3816, %v4796
        %v4798 = vpop.f32.mrf.mxu0
        %4799 = vdwg.mxu0
        %4800 = vmatpush.bf16.msra.mxu0 0
        %4801 = vmatpush.bf16.msra.mxu0 0
        %4802 = vmatpush.bf16.msra.mxu0 0
        %4803 = vmatpush.bf16.msra.mxu0 0
        %4804 = vmatpush.bf16.msra.mxu0 %v4361
        %4805 = vmatpush.bf16.msra.mxu0 %v4329
        %4806 = vmatpush.bf16.msra.mxu0 %v4297
        %4807 = vmatpush.bf16.msra.mxu0 %v4265
        %4808 = vmatmul.bf16.gmra.mxu0 %v4499
        %v4809 = vpop.f32.mrf.mxu0
        %v4810 = vadd.f32 %v3817, %v4809
        %v4811 = vpop.f32.mrf.mxu0
        %4812 = vdwg.mxu0
        %4813 = vmatpush.bf16.msra.mxu0 0
        %4814 = vmatpush.bf16.msra.mxu0 0
        %4815 = vmatpush.bf16.msra.mxu0 0
        %4816 = vmatpush.bf16.msra.mxu0 0
        %4817 = vmatpush.bf16.msra.mxu0 %v4362
        %4818 = vmatpush.bf16.msra.mxu0 %v4330
        %4819 = vmatpush.bf16.msra.mxu0 %v4298
        %4820 = vmatpush.bf16.msra.mxu0 %v4266
        %4821 = vmatmul.bf16.gmra.mxu0 %v4499
        %v4822 = vpop.f32.mrf.mxu0
        %v4823 = vadd.f32 %v3818, %v4822
        %v4824 = vpop.f32.mrf.mxu0
        %4825 = vdwg.mxu0
        %4826 = vmatpush.bf16.msra.mxu0 0
        %4827 = vmatpush.bf16.msra.mxu0 0
        %4828 = vmatpush.bf16.msra.mxu0 0
        %4829 = vmatpush.bf16.msra.mxu0 0
        %4830 = vmatpush.bf16.msra.mxu0 %v4363
        %4831 = vmatpush.bf16.msra.mxu0 %v4331
        %4832 = vmatpush.bf16.msra.mxu0 %v4299
        %4833 = vmatpush.bf16.msra.mxu0 %v4267
        %4834 = vmatmul.bf16.gmra.mxu0 %v4499
        %v4835 = vpop.f32.mrf.mxu0
        %v4836 = vadd.f32 %v3819, %v4835
        %v4837 = vpop.f32.mrf.mxu0
        %4838 = vdwg.mxu0
        %4839 = vmatpush.bf16.msra.mxu0 0
        %4840 = vmatpush.bf16.msra.mxu0 0
        %4841 = vmatpush.bf16.msra.mxu0 0
        %4842 = vmatpush.bf16.msra.mxu0 0
        %4843 = vmatpush.bf16.msra.mxu0 %v4364
        %4844 = vmatpush.bf16.msra.mxu0 %v4332
        %4845 = vmatpush.bf16.msra.mxu0 %v4300
        %4846 = vmatpush.bf16.msra.mxu0 %v4268
        %4847 = vmatmul.bf16.gmra.mxu0 %v4499
        %v4848 = vpop.f32.mrf.mxu0
        %v4849 = vadd.f32 %v3820, %v4848
        %v4850 = vpop.f32.mrf.mxu0
        %4851 = vdwg.mxu0
        %4852 = vmatpush.bf16.msra.mxu0 0
        %4853 = vmatpush.bf16.msra.mxu0 0
        %4854 = vmatpush.bf16.msra.mxu0 0
        %4855 = vmatpush.bf16.msra.mxu0 0
        %4856 = vmatpush.bf16.msra.mxu0 %v4365
        %4857 = vmatpush.bf16.msra.mxu0 %v4333
        %4858 = vmatpush.bf16.msra.mxu0 %v4301
        %4859 = vmatpush.bf16.msra.mxu0 %v4269
        %4860 = vmatmul.bf16.gmra.mxu0 %v4499
        %v4861 = vpop.f32.mrf.mxu0
        %v4862 = vadd.f32 %v3821, %v4861
        %v4863 = vpop.f32.mrf.mxu0
        %4864 = vdwg.mxu0
        %4865 = vmatpush.bf16.msra.mxu0 0
        %4866 = vmatpush.bf16.msra.mxu0 0
        %4867 = vmatpush.bf16.msra.mxu0 0
        %4868 = vmatpush.bf16.msra.mxu0 0
        %4869 = vmatpush.bf16.msra.mxu0 %v4366
        %4870 = vmatpush.bf16.msra.mxu0 %v4334
        %4871 = vmatpush.bf16.msra.mxu0 %v4302
        %4872 = vmatpush.bf16.msra.mxu0 %v4270
        %4873 = vmatmul.bf16.gmra.mxu0 %v4499
        %v4874 = vpop.f32.mrf.mxu0
        %v4875 = vadd.f32 %v3822, %v4874
        %v4876 = vpop.f32.mrf.mxu0
        %4877 = vdwg.mxu0
        %4878 = vmatpush.bf16.msra.mxu0 0
        %4879 = vmatpush.bf16.msra.mxu0 0
        %4880 = vmatpush.bf16.msra.mxu0 0
        %4881 = vmatpush.bf16.msra.mxu0 0
        %4882 = vmatpush.bf16.msra.mxu0 %v4367
        %4883 = vmatpush.bf16.msra.mxu0 %v4335
        %4884 = vmatpush.bf16.msra.mxu0 %v4303
        %4885 = vmatpush.bf16.msra.mxu0 %v4271
        %4886 = vmatmul.bf16.gmra.mxu0 %v4499
        %v4887 = vpop.f32.mrf.mxu0
        %v4888 = vadd.f32 %v3823, %v4887
        %v4889 = vpop.f32.mrf.mxu0
        %4890 = vdwg.mxu0
        %4891 = vmatpush.bf16.msra.mxu0 0
        %4892 = vmatpush.bf16.msra.mxu0 0
        %4893 = vmatpush.bf16.msra.mxu0 0
        %4894 = vmatpush.bf16.msra.mxu0 0
        %4895 = vmatpush.bf16.msra.mxu0 %v4368
        %4896 = vmatpush.bf16.msra.mxu0 %v4336
        %4897 = vmatpush.bf16.msra.mxu0 %v4304
        %4898 = vmatpush.bf16.msra.mxu0 %v4272
        %4899 = vmatmul.bf16.gmra.mxu0 %v4499
        %v4900 = vpop.f32.mrf.mxu0
        %v4901 = vadd.f32 %v3824, %v4900
        %v4902 = vpop.f32.mrf.mxu0
        %4903 = vdwg.mxu0
        %4904 = vmatpush.bf16.msra.mxu0 0
        %4905 = vmatpush.bf16.msra.mxu0 0
        %4906 = vmatpush.bf16.msra.mxu0 0
        %4907 = vmatpush.bf16.msra.mxu0 0
        %4908 = vmatpush.bf16.msra.mxu0 %v4369
        %4909 = vmatpush.bf16.msra.mxu0 %v4337
        %4910 = vmatpush.bf16.msra.mxu0 %v4305
        %4911 = vmatpush.bf16.msra.mxu0 %v4273
        %4912 = vmatmul.bf16.gmra.mxu0 %v4499
        %v4913 = vpop.f32.mrf.mxu0
        %v4914 = vadd.f32 %v3825, %v4913
        %v4915 = vpop.f32.mrf.mxu0
        %4916 = vdwg.mxu0
        %4917 = vst [vmem:[%s768] sm:$0xff] %v4511
        %4918 = vst [vmem:[%s768 + $0x8] sm:$0xff] %v4524
        %4919 = vst [vmem:[%s768 + $0x10] sm:$0xff] %v4537
        %4920 = vst [vmem:[%s768 + $0x18] sm:$0xff] %v4550
        %4921 = vst [vmem:[%s768 + $0x20] sm:$0xff] %v4563
        %4922 = vst [vmem:[%s768 + $0x28] sm:$0xff] %v4576
        %4923 = vst [vmem:[%s768 + $0x30] sm:$0xff] %v4589
        %4924 = vst [vmem:[%s768 + $0x38] sm:$0xff] %v4602
        %4925 = vst [vmem:[%s768 + $0x40] sm:$0xff] %v4615
        %4926 = vst [vmem:[%s768 + $0x48] sm:$0xff] %v4628
        %4927 = vst [vmem:[%s768 + $0x50] sm:$0xff] %v4641
        %4928 = vst [vmem:[%s768 + $0x58] sm:$0xff] %v4654
        %4929 = vst [vmem:[%s768 + $0x60] sm:$0xff] %v4667
        %4930 = vst [vmem:[%s768 + $0x68] sm:$0xff] %v4680
        %4931 = vst [vmem:[%s768 + $0x70] sm:$0xff] %v4693
        %4932 = vst [vmem:[%s768 + $0x78] sm:$0xff] %v4706
        %4933 = vst [vmem:[%s768 + $0x80] sm:$0xff] %v4719
        %4934 = vst [vmem:[%s768 + $0x88] sm:$0xff] %v4732
        %4935 = vst [vmem:[%s768 + $0x90] sm:$0xff] %v4745
        %4936 = vst [vmem:[%s768 + $0x98] sm:$0xff] %v4758
        %4937 = vst [vmem:[%s768 + $0xa0] sm:$0xff] %v4771
        %4938 = vst [vmem:[%s768 + $0xa8] sm:$0xff] %v4784
        %4939 = vst [vmem:[%s768 + $0xb0] sm:$0xff] %v4797
        %4940 = vst [vmem:[%s768 + $0xb8] sm:$0xff] %v4810
        %4941 = vst [vmem:[%s768 + $0xc0] sm:$0xff] %v4823
        %4942 = vst [vmem:[%s768 + $0xc8] sm:$0xff] %v4836
        %4943 = vst [vmem:[%s768 + $0xd0] sm:$0xff] %v4849
        %4944 = vst [vmem:[%s768 + $0xd8] sm:$0xff] %v4862
        %4945 = vst [vmem:[%s768 + $0xe0] sm:$0xff] %v4875
        %4946 = vst [vmem:[%s768 + $0xe8] sm:$0xff] %v4888
        %4947 = vst [vmem:[%s768 + $0xf0] sm:$0xff] %v4901
        %4948 = vst [vmem:[%s768 + $0xf8] sm:$0xff] %v4914
        %v4949 = vld [vmem:[%s23 + $0x80] sm:$0xff]
        %v4950 = vld [vmem:[%s23 + $0x88] sm:$0xff]
        %v4951 = vld [vmem:[%s23 + $0x90] sm:$0xff]
        %v4952 = vld [vmem:[%s23 + $0x98] sm:$0xff]
        %v4953 = vld [vmem:[%s23 + $0xa0] sm:$0xff]
        %v4954 = vld [vmem:[%s23 + $0xa8] sm:$0xff]
        %v4955 = vld [vmem:[%s23 + $0xb0] sm:$0xff]
        %v4956 = vld [vmem:[%s23 + $0xb8] sm:$0xff]
        %v4957 = vld [vmem:[%s23 + $0xc0] sm:$0xff]
        %v4958 = vld [vmem:[%s23 + $0xc8] sm:$0xff]
        %v4959 = vld [vmem:[%s23 + $0xd0] sm:$0xff]
        %v4960 = vld [vmem:[%s23 + $0xd8] sm:$0xff]
        %v4961 = vld [vmem:[%s23 + $0xe0] sm:$0xff]
        %v4962 = vld [vmem:[%s23 + $0xe8] sm:$0xff]
        %v4963 = vld [vmem:[%s23 + $0xf0] sm:$0xff]
        %v4964 = vld [vmem:[%s23 + $0xf8] sm:$0xff]
        %v4965 = vld [vmem:[%s23 + $0x280] sm:$0xff]
        %v4966 = vld [vmem:[%s23 + $0x288] sm:$0xff]
        %v4967 = vld [vmem:[%s23 + $0x290] sm:$0xff]
        %v4968 = vld [vmem:[%s23 + $0x298] sm:$0xff]
        %v4969 = vld [vmem:[%s23 + $0x2a0] sm:$0xff]
        %v4970 = vld [vmem:[%s23 + $0x2a8] sm:$0xff]
        %v4971 = vld [vmem:[%s23 + $0x2b0] sm:$0xff]
        %v4972 = vld [vmem:[%s23 + $0x2b8] sm:$0xff]
        %v4973 = vld [vmem:[%s23 + $0x2c0] sm:$0xff]
        %v4974 = vld [vmem:[%s23 + $0x2c8] sm:$0xff]
        %v4975 = vld [vmem:[%s23 + $0x2d0] sm:$0xff]
        %v4976 = vld [vmem:[%s23 + $0x2d8] sm:$0xff]
        %v4977 = vld [vmem:[%s23 + $0x2e0] sm:$0xff]
        %v4978 = vld [vmem:[%s23 + $0x2e8] sm:$0xff]
        %v4979 = vld [vmem:[%s23 + $0x2f0] sm:$0xff]
        %v4980 = vld [vmem:[%s23 + $0x2f8] sm:$0xff]
        %v4981 = vld [vmem:[%s23 + $0x480] sm:$0xff]
        %v4982 = vld [vmem:[%s23 + $0x488] sm:$0xff]
        %v4983 = vld [vmem:[%s23 + $0x490] sm:$0xff]
        %v4984 = vld [vmem:[%s23 + $0x498] sm:$0xff]
        %v4985 = vld [vmem:[%s23 + $0x4a0] sm:$0xff]
        %v4986 = vld [vmem:[%s23 + $0x4a8] sm:$0xff]
        %v4987 = vld [vmem:[%s23 + $0x4b0] sm:$0xff]
        %v4988 = vld [vmem:[%s23 + $0x4b8] sm:$0xff]
        %v4989 = vld [vmem:[%s23 + $0x4c0] sm:$0xff]
        %v4990 = vld [vmem:[%s23 + $0x4c8] sm:$0xff]
        %v4991 = vld [vmem:[%s23 + $0x4d0] sm:$0xff]
        %v4992 = vld [vmem:[%s23 + $0x4d8] sm:$0xff]
        %v4993 = vld [vmem:[%s23 + $0x4e0] sm:$0xff]
        %v4994 = vld [vmem:[%s23 + $0x4e8] sm:$0xff]
        %v4995 = vld [vmem:[%s23 + $0x4f0] sm:$0xff]
        %v4996 = vld [vmem:[%s23 + $0x4f8] sm:$0xff]
        %v4997 = vld [vmem:[%s23 + $0x680] sm:$0xff]
        %v4998 = vld [vmem:[%s23 + $0x688] sm:$0xff]
        %v4999 = vld [vmem:[%s23 + $0x690] sm:$0xff]
        %v5000 = vld [vmem:[%s23 + $0x698] sm:$0xff]
        %v5001 = vld [vmem:[%s23 + $0x6a0] sm:$0xff]
        %v5002 = vld [vmem:[%s23 + $0x6a8] sm:$0xff]
        %v5003 = vld [vmem:[%s23 + $0x6b0] sm:$0xff]
        %v5004 = vld [vmem:[%s23 + $0x6b8] sm:$0xff]
        %v5005 = vld [vmem:[%s23 + $0x6c0] sm:$0xff]
        %v5006 = vld [vmem:[%s23 + $0x6c8] sm:$0xff]
        %v5007 = vld [vmem:[%s23 + $0x6d0] sm:$0xff]
        %v5008 = vld [vmem:[%s23 + $0x6d8] sm:$0xff]
        %v5009 = vld [vmem:[%s23 + $0x6e0] sm:$0xff]
        %v5010 = vld [vmem:[%s23 + $0x6e8] sm:$0xff]
        %v5011 = vld [vmem:[%s23 + $0x6f0] sm:$0xff]
        %v5012 = vld [vmem:[%s23 + $0x6f8] sm:$0xff]
        %v5013 = vld [vmem:[%s23 + $0x880] sm:$0xff]
        %v5014 = vld [vmem:[%s23 + $0x888] sm:$0xff]
        %v5015 = vld [vmem:[%s23 + $0x890] sm:$0xff]
        %v5016 = vld [vmem:[%s23 + $0x898] sm:$0xff]
        %v5017 = vld [vmem:[%s23 + $0x8a0] sm:$0xff]
        %v5018 = vld [vmem:[%s23 + $0x8a8] sm:$0xff]
        %v5019 = vld [vmem:[%s23 + $0x8b0] sm:$0xff]
        %v5020 = vld [vmem:[%s23 + $0x8b8] sm:$0xff]
        %v5021 = vld [vmem:[%s23 + $0x8c0] sm:$0xff]
        %v5022 = vld [vmem:[%s23 + $0x8c8] sm:$0xff]
        %v5023 = vld [vmem:[%s23 + $0x8d0] sm:$0xff]
        %v5024 = vld [vmem:[%s23 + $0x8d8] sm:$0xff]
        %v5025 = vld [vmem:[%s23 + $0x8e0] sm:$0xff]
        %v5026 = vld [vmem:[%s23 + $0x8e8] sm:$0xff]
        %v5027 = vld [vmem:[%s23 + $0x8f0] sm:$0xff]
        %v5028 = vld [vmem:[%s23 + $0x8f8] sm:$0xff]
        %v5029 = vld [vmem:[%s23 + $0xa80] sm:$0xff]
        %v5030 = vld [vmem:[%s23 + $0xa88] sm:$0xff]
        %v5031 = vld [vmem:[%s23 + $0xa90] sm:$0xff]
        %v5032 = vld [vmem:[%s23 + $0xa98] sm:$0xff]
        %v5033 = vld [vmem:[%s23 + $0xaa0] sm:$0xff]
        %v5034 = vld [vmem:[%s23 + $0xaa8] sm:$0xff]
        %v5035 = vld [vmem:[%s23 + $0xab0] sm:$0xff]
        %v5036 = vld [vmem:[%s23 + $0xab8] sm:$0xff]
        %v5037 = vld [vmem:[%s23 + $0xac0] sm:$0xff]
        %v5038 = vld [vmem:[%s23 + $0xac8] sm:$0xff]
        %v5039 = vld [vmem:[%s23 + $0xad0] sm:$0xff]
        %v5040 = vld [vmem:[%s23 + $0xad8] sm:$0xff]
        %v5041 = vld [vmem:[%s23 + $0xae0] sm:$0xff]
        %v5042 = vld [vmem:[%s23 + $0xae8] sm:$0xff]
        %v5043 = vld [vmem:[%s23 + $0xaf0] sm:$0xff]
        %v5044 = vld [vmem:[%s23 + $0xaf8] sm:$0xff]
        %v5045 = vld [vmem:[%s23 + $0xc80] sm:$0xff]
        %v5046 = vld [vmem:[%s23 + $0xc88] sm:$0xff]
        %v5047 = vld [vmem:[%s23 + $0xc90] sm:$0xff]
        %v5048 = vld [vmem:[%s23 + $0xc98] sm:$0xff]
        %v5049 = vld [vmem:[%s23 + $0xca0] sm:$0xff]
        %v5050 = vld [vmem:[%s23 + $0xca8] sm:$0xff]
        %v5051 = vld [vmem:[%s23 + $0xcb0] sm:$0xff]
        %v5052 = vld [vmem:[%s23 + $0xcb8] sm:$0xff]
        %v5053 = vld [vmem:[%s23 + $0xcc0] sm:$0xff]
        %v5054 = vld [vmem:[%s23 + $0xcc8] sm:$0xff]
        %v5055 = vld [vmem:[%s23 + $0xcd0] sm:$0xff]
        %v5056 = vld [vmem:[%s23 + $0xcd8] sm:$0xff]
        %v5057 = vld [vmem:[%s23 + $0xce0] sm:$0xff]
        %v5058 = vld [vmem:[%s23 + $0xce8] sm:$0xff]
        %v5059 = vld [vmem:[%s23 + $0xcf0] sm:$0xff]
        %v5060 = vld [vmem:[%s23 + $0xcf8] sm:$0xff]
        %v5061 = vld [vmem:[%s23 + $0xe80] sm:$0xff]
        %v5062 = vld [vmem:[%s23 + $0xe88] sm:$0xff]
        %v5063 = vld [vmem:[%s23 + $0xe90] sm:$0xff]
        %v5064 = vld [vmem:[%s23 + $0xe98] sm:$0xff]
        %v5065 = vld [vmem:[%s23 + $0xea0] sm:$0xff]
        %v5066 = vld [vmem:[%s23 + $0xea8] sm:$0xff]
        %v5067 = vld [vmem:[%s23 + $0xeb0] sm:$0xff]
        %v5068 = vld [vmem:[%s23 + $0xeb8] sm:$0xff]
        %v5069 = vld [vmem:[%s23 + $0xec0] sm:$0xff]
        %v5070 = vld [vmem:[%s23 + $0xec8] sm:$0xff]
        %v5071 = vld [vmem:[%s23 + $0xed0] sm:$0xff]
        %v5072 = vld [vmem:[%s23 + $0xed8] sm:$0xff]
        %v5073 = vld [vmem:[%s23 + $0xee0] sm:$0xff]
        %v5074 = vld [vmem:[%s23 + $0xee8] sm:$0xff]
        %v5075 = vld [vmem:[%s23 + $0xef0] sm:$0xff]
        %v5076 = vld [vmem:[%s23 + $0xef8] sm:$0xff]
        %v5077 = vld [vmem:[%s24 + $0x20] sm:$0xff]
        %v5078 = vld [vmem:[%s24 + $0x28] sm:$0xff]
        %v5079 = vld [vmem:[%s24 + $0x30] sm:$0xff]
        %v5080 = vld [vmem:[%s24 + $0x38] sm:$0xff]
        %v5085 = vperm.slane %v5077, 0
        %v5086 = vperm.slane %v5077, 1
        %v5087 = vperm.slane %v5077, 2
        %v5088 = vperm.slane %v5077, 3
        %v5089 = vperm.slane %v5077, 4
        %v5090 = vperm.slane %v5077, 5
        %v5091 = vperm.slane %v5077, 6
        %v5092 = vperm.slane %v5077, 7
        %v5093 = vperm.slane %v5078, 0
        %v5094 = vperm.slane %v5078, 1
        %v5095 = vperm.slane %v5078, 2
        %v5096 = vperm.slane %v5078, 3
        %v5097 = vperm.slane %v5078, 4
        %v5098 = vperm.slane %v5078, 5
        %v5099 = vperm.slane %v5078, 6
        %v5100 = vperm.slane %v5078, 7
        %v5101 = vperm.slane %v5079, 0
        %v5102 = vperm.slane %v5079, 1
        %v5103 = vperm.slane %v5079, 2
        %v5104 = vperm.slane %v5079, 3
        %v5105 = vperm.slane %v5079, 4
        %v5106 = vperm.slane %v5079, 5
        %v5107 = vperm.slane %v5079, 6
        %v5108 = vperm.slane %v5079, 7
        %v5109 = vperm.slane %v5080, 0
        %v5110 = vperm.slane %v5080, 1
        %v5111 = vperm.slane %v5080, 2
        %v5112 = vperm.slane %v5080, 3
        %v5113 = vperm.slane %v5080, 4
        %v5114 = vperm.slane %v5080, 5
        %v5115 = vperm.slane %v5080, 6
        %v5116 = vperm.slane %v5080, 7
        %v5277 = vunpack.c.l.b16 %v4949
        %v5278 = vunpack.c.h.b16 %v4949
        %v5279 = vunpack.c.l.b16 %v4950
        %v5280 = vunpack.c.h.b16 %v4950
        %v5281 = vunpack.c.l.b16 %v4951
        %v5282 = vunpack.c.h.b16 %v4951
        %v5283 = vunpack.c.l.b16 %v4952
        %v5284 = vunpack.c.h.b16 %v4952
        %v5285 = vunpack.c.l.b16 %v4953
        %v5286 = vunpack.c.h.b16 %v4953
        %v5287 = vunpack.c.l.b16 %v4954
        %v5288 = vunpack.c.h.b16 %v4954
        %v5289 = vunpack.c.l.b16 %v4955
        %v5290 = vunpack.c.h.b16 %v4955
        %v5291 = vunpack.c.l.b16 %v4956
        %v5292 = vunpack.c.h.b16 %v4956
        %v5293 = vunpack.c.l.b16 %v4957
        %v5294 = vunpack.c.h.b16 %v4957
        %v5295 = vunpack.c.l.b16 %v4958
        %v5296 = vunpack.c.h.b16 %v4958
        %v5297 = vunpack.c.l.b16 %v4959
        %v5298 = vunpack.c.h.b16 %v4959
        %v5299 = vunpack.c.l.b16 %v4960
        %v5300 = vunpack.c.h.b16 %v4960
        %v5301 = vunpack.c.l.b16 %v4961
        %v5302 = vunpack.c.h.b16 %v4961
        %v5303 = vunpack.c.l.b16 %v4962
        %v5304 = vunpack.c.h.b16 %v4962
        %v5305 = vunpack.c.l.b16 %v4963
        %v5306 = vunpack.c.h.b16 %v4963
        %v5307 = vunpack.c.l.b16 %v4964
        %v5308 = vunpack.c.h.b16 %v4964
        %v5309 = vunpack.c.l.b16 %v4965
        %v5310 = vunpack.c.h.b16 %v4965
        %v5311 = vunpack.c.l.b16 %v4966
        %v5312 = vunpack.c.h.b16 %v4966
        %v5313 = vunpack.c.l.b16 %v4967
        %v5314 = vunpack.c.h.b16 %v4967
        %v5315 = vunpack.c.l.b16 %v4968
        %v5316 = vunpack.c.h.b16 %v4968
        %v5317 = vunpack.c.l.b16 %v4969
        %v5318 = vunpack.c.h.b16 %v4969
        %v5319 = vunpack.c.l.b16 %v4970
        %v5320 = vunpack.c.h.b16 %v4970
        %v5321 = vunpack.c.l.b16 %v4971
        %v5322 = vunpack.c.h.b16 %v4971
        %v5323 = vunpack.c.l.b16 %v4972
        %v5324 = vunpack.c.h.b16 %v4972
        %v5325 = vunpack.c.l.b16 %v4973
        %v5326 = vunpack.c.h.b16 %v4973
        %v5327 = vunpack.c.l.b16 %v4974
        %v5328 = vunpack.c.h.b16 %v4974
        %v5329 = vunpack.c.l.b16 %v4975
        %v5330 = vunpack.c.h.b16 %v4975
        %v5331 = vunpack.c.l.b16 %v4976
        %v5332 = vunpack.c.h.b16 %v4976
        %v5333 = vunpack.c.l.b16 %v4977
        %v5334 = vunpack.c.h.b16 %v4977
        %v5335 = vunpack.c.l.b16 %v4978
        %v5336 = vunpack.c.h.b16 %v4978
        %v5337 = vunpack.c.l.b16 %v4979
        %v5338 = vunpack.c.h.b16 %v4979
        %v5339 = vunpack.c.l.b16 %v4980
        %v5340 = vunpack.c.h.b16 %v4980
        %v5341 = vunpack.c.l.b16 %v4981
        %v5342 = vunpack.c.h.b16 %v4981
        %v5343 = vunpack.c.l.b16 %v4982
        %v5344 = vunpack.c.h.b16 %v4982
        %v5345 = vunpack.c.l.b16 %v4983
        %v5346 = vunpack.c.h.b16 %v4983
        %v5347 = vunpack.c.l.b16 %v4984
        %v5348 = vunpack.c.h.b16 %v4984
        %v5349 = vunpack.c.l.b16 %v4985
        %v5350 = vunpack.c.h.b16 %v4985
        %v5351 = vunpack.c.l.b16 %v4986
        %v5352 = vunpack.c.h.b16 %v4986
        %v5353 = vunpack.c.l.b16 %v4987
        %v5354 = vunpack.c.h.b16 %v4987
        %v5355 = vunpack.c.l.b16 %v4988
        %v5356 = vunpack.c.h.b16 %v4988
        %v5357 = vunpack.c.l.b16 %v4989
        %v5358 = vunpack.c.h.b16 %v4989
        %v5359 = vunpack.c.l.b16 %v4990
        %v5360 = vunpack.c.h.b16 %v4990
        %v5361 = vunpack.c.l.b16 %v4991
        %v5362 = vunpack.c.h.b16 %v4991
        %v5363 = vunpack.c.l.b16 %v4992
        %v5364 = vunpack.c.h.b16 %v4992
        %v5365 = vunpack.c.l.b16 %v4993
        %v5366 = vunpack.c.h.b16 %v4993
        %v5367 = vunpack.c.l.b16 %v4994
        %v5368 = vunpack.c.h.b16 %v4994
        %v5369 = vunpack.c.l.b16 %v4995
        %v5370 = vunpack.c.h.b16 %v4995
        %v5371 = vunpack.c.l.b16 %v4996
        %v5372 = vunpack.c.h.b16 %v4996
        %v5373 = vunpack.c.l.b16 %v4997
        %v5374 = vunpack.c.h.b16 %v4997
        %v5375 = vunpack.c.l.b16 %v4998
        %v5376 = vunpack.c.h.b16 %v4998
        %v5377 = vunpack.c.l.b16 %v4999
        %v5378 = vunpack.c.h.b16 %v4999
        %v5379 = vunpack.c.l.b16 %v5000
        %v5380 = vunpack.c.h.b16 %v5000
        %v5381 = vunpack.c.l.b16 %v5001
        %v5382 = vunpack.c.h.b16 %v5001
        %v5383 = vunpack.c.l.b16 %v5002
        %v5384 = vunpack.c.h.b16 %v5002
        %v5385 = vunpack.c.l.b16 %v5003
        %v5386 = vunpack.c.h.b16 %v5003
        %v5387 = vunpack.c.l.b16 %v5004
        %v5388 = vunpack.c.h.b16 %v5004
        %v5389 = vunpack.c.l.b16 %v5005
        %v5390 = vunpack.c.h.b16 %v5005
        %v5391 = vunpack.c.l.b16 %v5006
        %v5392 = vunpack.c.h.b16 %v5006
        %v5393 = vunpack.c.l.b16 %v5007
        %v5394 = vunpack.c.h.b16 %v5007
        %v5395 = vunpack.c.l.b16 %v5008
        %v5396 = vunpack.c.h.b16 %v5008
        %v5397 = vunpack.c.l.b16 %v5009
        %v5398 = vunpack.c.h.b16 %v5009
        %v5399 = vunpack.c.l.b16 %v5010
        %v5400 = vunpack.c.h.b16 %v5010
        %v5401 = vunpack.c.l.b16 %v5011
        %v5402 = vunpack.c.h.b16 %v5011
        %v5403 = vunpack.c.l.b16 %v5012
        %v5404 = vunpack.c.h.b16 %v5012
        %v5405 = vunpack.c.l.b16 %v5013
        %v5406 = vunpack.c.h.b16 %v5013
        %v5407 = vunpack.c.l.b16 %v5014
        %v5408 = vunpack.c.h.b16 %v5014
        %v5409 = vunpack.c.l.b16 %v5015
        %v5410 = vunpack.c.h.b16 %v5015
        %v5411 = vunpack.c.l.b16 %v5016
        %v5412 = vunpack.c.h.b16 %v5016
        %v5413 = vunpack.c.l.b16 %v5017
        %v5414 = vunpack.c.h.b16 %v5017
        %v5415 = vunpack.c.l.b16 %v5018
        %v5416 = vunpack.c.h.b16 %v5018
        %v5417 = vunpack.c.l.b16 %v5019
        %v5418 = vunpack.c.h.b16 %v5019
        %v5419 = vunpack.c.l.b16 %v5020
        %v5420 = vunpack.c.h.b16 %v5020
        %v5421 = vunpack.c.l.b16 %v5021
        %v5422 = vunpack.c.h.b16 %v5021
        %v5423 = vunpack.c.l.b16 %v5022
        %v5424 = vunpack.c.h.b16 %v5022
        %v5425 = vunpack.c.l.b16 %v5023
        %v5426 = vunpack.c.h.b16 %v5023
        %v5427 = vunpack.c.l.b16 %v5024
        %v5428 = vunpack.c.h.b16 %v5024
        %v5429 = vunpack.c.l.b16 %v5025
        %v5430 = vunpack.c.h.b16 %v5025
        %v5431 = vunpack.c.l.b16 %v5026
        %v5432 = vunpack.c.h.b16 %v5026
        %v5433 = vunpack.c.l.b16 %v5027
        %v5434 = vunpack.c.h.b16 %v5027
        %v5435 = vunpack.c.l.b16 %v5028
        %v5436 = vunpack.c.h.b16 %v5028
        %v5437 = vunpack.c.l.b16 %v5029
        %v5438 = vunpack.c.h.b16 %v5029
        %v5439 = vunpack.c.l.b16 %v5030
        %v5440 = vunpack.c.h.b16 %v5030
        %v5441 = vunpack.c.l.b16 %v5031
        %v5442 = vunpack.c.h.b16 %v5031
        %v5443 = vunpack.c.l.b16 %v5032
        %v5444 = vunpack.c.h.b16 %v5032
        %v5445 = vunpack.c.l.b16 %v5033
        %v5446 = vunpack.c.h.b16 %v5033
        %v5447 = vunpack.c.l.b16 %v5034
        %v5448 = vunpack.c.h.b16 %v5034
        %v5449 = vunpack.c.l.b16 %v5035
        %v5450 = vunpack.c.h.b16 %v5035
        %v5451 = vunpack.c.l.b16 %v5036
        %v5452 = vunpack.c.h.b16 %v5036
        %v5453 = vunpack.c.l.b16 %v5037
        %v5454 = vunpack.c.h.b16 %v5037
        %v5455 = vunpack.c.l.b16 %v5038
        %v5456 = vunpack.c.h.b16 %v5038
        %v5457 = vunpack.c.l.b16 %v5039
        %v5458 = vunpack.c.h.b16 %v5039
        %v5459 = vunpack.c.l.b16 %v5040
        %v5460 = vunpack.c.h.b16 %v5040
        %v5461 = vunpack.c.l.b16 %v5041
        %v5462 = vunpack.c.h.b16 %v5041
        %v5463 = vunpack.c.l.b16 %v5042
        %v5464 = vunpack.c.h.b16 %v5042
        %v5465 = vunpack.c.l.b16 %v5043
        %v5466 = vunpack.c.h.b16 %v5043
        %v5467 = vunpack.c.l.b16 %v5044
        %v5468 = vunpack.c.h.b16 %v5044
        %v5469 = vunpack.c.l.b16 %v5045
        %v5470 = vunpack.c.h.b16 %v5045
        %v5471 = vunpack.c.l.b16 %v5046
        %v5472 = vunpack.c.h.b16 %v5046
        %v5473 = vunpack.c.l.b16 %v5047
        %v5474 = vunpack.c.h.b16 %v5047
        %v5475 = vunpack.c.l.b16 %v5048
        %v5476 = vunpack.c.h.b16 %v5048
        %v5477 = vunpack.c.l.b16 %v5049
        %v5478 = vunpack.c.h.b16 %v5049
        %v5479 = vunpack.c.l.b16 %v5050
        %v5480 = vunpack.c.h.b16 %v5050
        %v5481 = vunpack.c.l.b16 %v5051
        %v5482 = vunpack.c.h.b16 %v5051
        %v5483 = vunpack.c.l.b16 %v5052
        %v5484 = vunpack.c.h.b16 %v5052
        %v5485 = vunpack.c.l.b16 %v5053
        %v5486 = vunpack.c.h.b16 %v5053
        %v5487 = vunpack.c.l.b16 %v5054
        %v5488 = vunpack.c.h.b16 %v5054
        %v5489 = vunpack.c.l.b16 %v5055
        %v5490 = vunpack.c.h.b16 %v5055
        %v5491 = vunpack.c.l.b16 %v5056
        %v5492 = vunpack.c.h.b16 %v5056
        %v5493 = vunpack.c.l.b16 %v5057
        %v5494 = vunpack.c.h.b16 %v5057
        %v5495 = vunpack.c.l.b16 %v5058
        %v5496 = vunpack.c.h.b16 %v5058
        %v5497 = vunpack.c.l.b16 %v5059
        %v5498 = vunpack.c.h.b16 %v5059
        %v5499 = vunpack.c.l.b16 %v5060
        %v5500 = vunpack.c.h.b16 %v5060
        %v5501 = vunpack.c.l.b16 %v5061
        %v5502 = vunpack.c.h.b16 %v5061
        %v5503 = vunpack.c.l.b16 %v5062
        %v5504 = vunpack.c.h.b16 %v5062
        %v5505 = vunpack.c.l.b16 %v5063
        %v5506 = vunpack.c.h.b16 %v5063
        %v5507 = vunpack.c.l.b16 %v5064
        %v5508 = vunpack.c.h.b16 %v5064
        %v5509 = vunpack.c.l.b16 %v5065
        %v5510 = vunpack.c.h.b16 %v5065
        %v5511 = vunpack.c.l.b16 %v5066
        %v5512 = vunpack.c.h.b16 %v5066
        %v5513 = vunpack.c.l.b16 %v5067
        %v5514 = vunpack.c.h.b16 %v5067
        %v5515 = vunpack.c.l.b16 %v5068
        %v5516 = vunpack.c.h.b16 %v5068
        %v5517 = vunpack.c.l.b16 %v5069
        %v5518 = vunpack.c.h.b16 %v5069
        %v5519 = vunpack.c.l.b16 %v5070
        %v5520 = vunpack.c.h.b16 %v5070
        %v5521 = vunpack.c.l.b16 %v5071
        %v5522 = vunpack.c.h.b16 %v5071
        %v5523 = vunpack.c.l.b16 %v5072
        %v5524 = vunpack.c.h.b16 %v5072
        %v5525 = vunpack.c.l.b16 %v5073
        %v5526 = vunpack.c.h.b16 %v5073
        %v5527 = vunpack.c.l.b16 %v5074
        %v5528 = vunpack.c.h.b16 %v5074
        %v5529 = vunpack.c.l.b16 %v5075
        %v5530 = vunpack.c.h.b16 %v5075
        %v5531 = vunpack.c.l.b16 %v5076
        %v5532 = vunpack.c.h.b16 %v5076
        %v5533 = vpack.c.b16 %v5309, %v5277
        %v5534 = vpack.c.b16 %v5310, %v5278
        %v5535 = vpack.c.b16 %v5311, %v5279
        %v5536 = vpack.c.b16 %v5312, %v5280
        %v5537 = vpack.c.b16 %v5313, %v5281
        %v5538 = vpack.c.b16 %v5314, %v5282
        %v5539 = vpack.c.b16 %v5315, %v5283
        %v5540 = vpack.c.b16 %v5316, %v5284
        %v5541 = vpack.c.b16 %v5317, %v5285
        %v5542 = vpack.c.b16 %v5318, %v5286
        %v5543 = vpack.c.b16 %v5319, %v5287
        %v5544 = vpack.c.b16 %v5320, %v5288
        %v5545 = vpack.c.b16 %v5321, %v5289
        %v5546 = vpack.c.b16 %v5322, %v5290
        %v5547 = vpack.c.b16 %v5323, %v5291
        %v5548 = vpack.c.b16 %v5324, %v5292
        %v5549 = vpack.c.b16 %v5325, %v5293
        %v5550 = vpack.c.b16 %v5326, %v5294
        %v5551 = vpack.c.b16 %v5327, %v5295
        %v5552 = vpack.c.b16 %v5328, %v5296
        %v5553 = vpack.c.b16 %v5329, %v5297
        %v5554 = vpack.c.b16 %v5330, %v5298
        %v5555 = vpack.c.b16 %v5331, %v5299
        %v5556 = vpack.c.b16 %v5332, %v5300
        %v5557 = vpack.c.b16 %v5333, %v5301
        %v5558 = vpack.c.b16 %v5334, %v5302
        %v5559 = vpack.c.b16 %v5335, %v5303
        %v5560 = vpack.c.b16 %v5336, %v5304
        %v5561 = vpack.c.b16 %v5337, %v5305
        %v5562 = vpack.c.b16 %v5338, %v5306
        %v5563 = vpack.c.b16 %v5339, %v5307
        %v5564 = vpack.c.b16 %v5340, %v5308
        %v5565 = vpack.c.b16 %v5373, %v5341
        %v5566 = vpack.c.b16 %v5374, %v5342
        %v5567 = vpack.c.b16 %v5375, %v5343
        %v5568 = vpack.c.b16 %v5376, %v5344
        %v5569 = vpack.c.b16 %v5377, %v5345
        %v5570 = vpack.c.b16 %v5378, %v5346
        %v5571 = vpack.c.b16 %v5379, %v5347
        %v5572 = vpack.c.b16 %v5380, %v5348
        %v5573 = vpack.c.b16 %v5381, %v5349
        %v5574 = vpack.c.b16 %v5382, %v5350
        %v5575 = vpack.c.b16 %v5383, %v5351
        %v5576 = vpack.c.b16 %v5384, %v5352
        %v5577 = vpack.c.b16 %v5385, %v5353
        %v5578 = vpack.c.b16 %v5386, %v5354
        %v5579 = vpack.c.b16 %v5387, %v5355
        %v5580 = vpack.c.b16 %v5388, %v5356
        %v5581 = vpack.c.b16 %v5389, %v5357
        %v5582 = vpack.c.b16 %v5390, %v5358
        %v5583 = vpack.c.b16 %v5391, %v5359
        %v5584 = vpack.c.b16 %v5392, %v5360
        %v5585 = vpack.c.b16 %v5393, %v5361
        %v5586 = vpack.c.b16 %v5394, %v5362
        %v5587 = vpack.c.b16 %v5395, %v5363
        %v5588 = vpack.c.b16 %v5396, %v5364
        %v5589 = vpack.c.b16 %v5397, %v5365
        %v5590 = vpack.c.b16 %v5398, %v5366
        %v5591 = vpack.c.b16 %v5399, %v5367
        %v5592 = vpack.c.b16 %v5400, %v5368
        %v5593 = vpack.c.b16 %v5401, %v5369
        %v5594 = vpack.c.b16 %v5402, %v5370
        %v5595 = vpack.c.b16 %v5403, %v5371
        %v5596 = vpack.c.b16 %v5404, %v5372
        %v5597 = vpack.c.b16 %v5437, %v5405
        %v5598 = vpack.c.b16 %v5438, %v5406
        %v5599 = vpack.c.b16 %v5439, %v5407
        %v5600 = vpack.c.b16 %v5440, %v5408
        %v5601 = vpack.c.b16 %v5441, %v5409
        %v5602 = vpack.c.b16 %v5442, %v5410
        %v5603 = vpack.c.b16 %v5443, %v5411
        %v5604 = vpack.c.b16 %v5444, %v5412
        %v5605 = vpack.c.b16 %v5445, %v5413
        %v5606 = vpack.c.b16 %v5446, %v5414
        %v5607 = vpack.c.b16 %v5447, %v5415
        %v5608 = vpack.c.b16 %v5448, %v5416
        %v5609 = vpack.c.b16 %v5449, %v5417
        %v5610 = vpack.c.b16 %v5450, %v5418
        %v5611 = vpack.c.b16 %v5451, %v5419
        %v5612 = vpack.c.b16 %v5452, %v5420
        %v5613 = vpack.c.b16 %v5453, %v5421
        %v5614 = vpack.c.b16 %v5454, %v5422
        %v5615 = vpack.c.b16 %v5455, %v5423
        %v5616 = vpack.c.b16 %v5456, %v5424
        %v5617 = vpack.c.b16 %v5457, %v5425
        %v5618 = vpack.c.b16 %v5458, %v5426
        %v5619 = vpack.c.b16 %v5459, %v5427
        %v5620 = vpack.c.b16 %v5460, %v5428
        %v5621 = vpack.c.b16 %v5461, %v5429
        %v5622 = vpack.c.b16 %v5462, %v5430
        %v5623 = vpack.c.b16 %v5463, %v5431
        %v5624 = vpack.c.b16 %v5464, %v5432
        %v5625 = vpack.c.b16 %v5465, %v5433
        %v5626 = vpack.c.b16 %v5466, %v5434
        %v5627 = vpack.c.b16 %v5467, %v5435
        %v5628 = vpack.c.b16 %v5468, %v5436
        %v5629 = vpack.c.b16 %v5501, %v5469
        %v5630 = vpack.c.b16 %v5502, %v5470
        %v5631 = vpack.c.b16 %v5503, %v5471
        %v5632 = vpack.c.b16 %v5504, %v5472
        %v5633 = vpack.c.b16 %v5505, %v5473
        %v5634 = vpack.c.b16 %v5506, %v5474
        %v5635 = vpack.c.b16 %v5507, %v5475
        %v5636 = vpack.c.b16 %v5508, %v5476
        %v5637 = vpack.c.b16 %v5509, %v5477
        %v5638 = vpack.c.b16 %v5510, %v5478
        %v5639 = vpack.c.b16 %v5511, %v5479
        %v5640 = vpack.c.b16 %v5512, %v5480
        %v5641 = vpack.c.b16 %v5513, %v5481
        %v5642 = vpack.c.b16 %v5514, %v5482
        %v5643 = vpack.c.b16 %v5515, %v5483
        %v5644 = vpack.c.b16 %v5516, %v5484
        %v5645 = vpack.c.b16 %v5517, %v5485
        %v5646 = vpack.c.b16 %v5518, %v5486
        %v5647 = vpack.c.b16 %v5519, %v5487
        %v5648 = vpack.c.b16 %v5520, %v5488
        %v5649 = vpack.c.b16 %v5521, %v5489
        %v5650 = vpack.c.b16 %v5522, %v5490
        %v5651 = vpack.c.b16 %v5523, %v5491
        %v5652 = vpack.c.b16 %v5524, %v5492
        %v5653 = vpack.c.b16 %v5525, %v5493
        %v5654 = vpack.c.b16 %v5526, %v5494
        %v5655 = vpack.c.b16 %v5527, %v5495
        %v5656 = vpack.c.b16 %v5528, %v5496
        %v5657 = vpack.c.b16 %v5529, %v5497
        %v5658 = vpack.c.b16 %v5530, %v5498
        %v5659 = vpack.c.b16 %v5531, %v5499
        %v5660 = vpack.c.b16 %v5532, %v5500
        %5789 = vmatpush.bf16.msra.mxu0 0
        %5790 = vmatpush.bf16.msra.mxu0 0
        %5791 = vmatpush.bf16.msra.mxu0 0
        %5792 = vmatpush.bf16.msra.mxu0 0
        %5793 = vmatpush.bf16.msra.mxu0 %v5629
        %5794 = vmatpush.bf16.msra.mxu0 %v5597
        %5795 = vmatpush.bf16.msra.mxu0 %v5565
        %5796 = vmatpush.bf16.msra.mxu0 %v5533
        %5797 = vmatmul.bf16.gmra.mxu0 %v4499
        %v5798 = vpop.f32.mrf.mxu0
        %v5799 = vadd.f32 %v5085, %v5798
        %v5800 = vpop.f32.mrf.mxu0
        %5801 = vdwg.mxu0
        %5802 = vmatpush.bf16.msra.mxu0 0
        %5803 = vmatpush.bf16.msra.mxu0 0
        %5804 = vmatpush.bf16.msra.mxu0 0
        %5805 = vmatpush.bf16.msra.mxu0 0
        %5806 = vmatpush.bf16.msra.mxu0 %v5630
        %5807 = vmatpush.bf16.msra.mxu0 %v5598
        %5808 = vmatpush.bf16.msra.mxu0 %v5566
        %5809 = vmatpush.bf16.msra.mxu0 %v5534
        %5810 = vmatmul.bf16.gmra.mxu0 %v4499
        %v5811 = vpop.f32.mrf.mxu0
        %v5812 = vadd.f32 %v5086, %v5811
        %v5813 = vpop.f32.mrf.mxu0
        %5814 = vdwg.mxu0
        %5815 = vmatpush.bf16.msra.mxu0 0
        %5816 = vmatpush.bf16.msra.mxu0 0
        %5817 = vmatpush.bf16.msra.mxu0 0
        %5818 = vmatpush.bf16.msra.mxu0 0
        %5819 = vmatpush.bf16.msra.mxu0 %v5631
        %5820 = vmatpush.bf16.msra.mxu0 %v5599
        %5821 = vmatpush.bf16.msra.mxu0 %v5567
        %5822 = vmatpush.bf16.msra.mxu0 %v5535
        %5823 = vmatmul.bf16.gmra.mxu0 %v4499
        %v5824 = vpop.f32.mrf.mxu0
        %v5825 = vadd.f32 %v5087, %v5824
        %v5826 = vpop.f32.mrf.mxu0
        %5827 = vdwg.mxu0
        %5828 = vmatpush.bf16.msra.mxu0 0
        %5829 = vmatpush.bf16.msra.mxu0 0
        %5830 = vmatpush.bf16.msra.mxu0 0
        %5831 = vmatpush.bf16.msra.mxu0 0
        %5832 = vmatpush.bf16.msra.mxu0 %v5632
        %5833 = vmatpush.bf16.msra.mxu0 %v5600
        %5834 = vmatpush.bf16.msra.mxu0 %v5568
        %5835 = vmatpush.bf16.msra.mxu0 %v5536
        %5836 = vmatmul.bf16.gmra.mxu0 %v4499
        %v5837 = vpop.f32.mrf.mxu0
        %v5838 = vadd.f32 %v5088, %v5837
        %v5839 = vpop.f32.mrf.mxu0
        %5840 = vdwg.mxu0
        %5841 = vmatpush.bf16.msra.mxu0 0
        %5842 = vmatpush.bf16.msra.mxu0 0
        %5843 = vmatpush.bf16.msra.mxu0 0
        %5844 = vmatpush.bf16.msra.mxu0 0
        %5845 = vmatpush.bf16.msra.mxu0 %v5633
        %5846 = vmatpush.bf16.msra.mxu0 %v5601
        %5847 = vmatpush.bf16.msra.mxu0 %v5569
        %5848 = vmatpush.bf16.msra.mxu0 %v5537
        %5849 = vmatmul.bf16.gmra.mxu0 %v4499
        %v5850 = vpop.f32.mrf.mxu0
        %v5851 = vadd.f32 %v5089, %v5850
        %v5852 = vpop.f32.mrf.mxu0
        %5853 = vdwg.mxu0
        %5854 = vmatpush.bf16.msra.mxu0 0
        %5855 = vmatpush.bf16.msra.mxu0 0
        %5856 = vmatpush.bf16.msra.mxu0 0
        %5857 = vmatpush.bf16.msra.mxu0 0
        %5858 = vmatpush.bf16.msra.mxu0 %v5634
        %5859 = vmatpush.bf16.msra.mxu0 %v5602
        %5860 = vmatpush.bf16.msra.mxu0 %v5570
        %5861 = vmatpush.bf16.msra.mxu0 %v5538
        %5862 = vmatmul.bf16.gmra.mxu0 %v4499
        %v5863 = vpop.f32.mrf.mxu0
        %v5864 = vadd.f32 %v5090, %v5863
        %v5865 = vpop.f32.mrf.mxu0
        %5866 = vdwg.mxu0
        %5867 = vmatpush.bf16.msra.mxu0 0
        %5868 = vmatpush.bf16.msra.mxu0 0
        %5869 = vmatpush.bf16.msra.mxu0 0
        %5870 = vmatpush.bf16.msra.mxu0 0
        %5871 = vmatpush.bf16.msra.mxu0 %v5635
        %5872 = vmatpush.bf16.msra.mxu0 %v5603
        %5873 = vmatpush.bf16.msra.mxu0 %v5571
        %5874 = vmatpush.bf16.msra.mxu0 %v5539
        %5875 = vmatmul.bf16.gmra.mxu0 %v4499
        %v5876 = vpop.f32.mrf.mxu0
        %v5877 = vadd.f32 %v5091, %v5876
        %v5878 = vpop.f32.mrf.mxu0
        %5879 = vdwg.mxu0
        %5880 = vmatpush.bf16.msra.mxu0 0
        %5881 = vmatpush.bf16.msra.mxu0 0
        %5882 = vmatpush.bf16.msra.mxu0 0
        %5883 = vmatpush.bf16.msra.mxu0 0
        %5884 = vmatpush.bf16.msra.mxu0 %v5636
        %5885 = vmatpush.bf16.msra.mxu0 %v5604
        %5886 = vmatpush.bf16.msra.mxu0 %v5572
        %5887 = vmatpush.bf16.msra.mxu0 %v5540
        %5888 = vmatmul.bf16.gmra.mxu0 %v4499
        %v5889 = vpop.f32.mrf.mxu0
        %v5890 = vadd.f32 %v5092, %v5889
        %v5891 = vpop.f32.mrf.mxu0
        %5892 = vdwg.mxu0
        %5893 = vmatpush.bf16.msra.mxu0 0
        %5894 = vmatpush.bf16.msra.mxu0 0
        %5895 = vmatpush.bf16.msra.mxu0 0
        %5896 = vmatpush.bf16.msra.mxu0 0
        %5897 = vmatpush.bf16.msra.mxu0 %v5637
        %5898 = vmatpush.bf16.msra.mxu0 %v5605
        %5899 = vmatpush.bf16.msra.mxu0 %v5573
        %5900 = vmatpush.bf16.msra.mxu0 %v5541
        %5901 = vmatmul.bf16.gmra.mxu0 %v4499
        %v5902 = vpop.f32.mrf.mxu0
        %v5903 = vadd.f32 %v5093, %v5902
        %v5904 = vpop.f32.mrf.mxu0
        %5905 = vdwg.mxu0
        %5906 = vmatpush.bf16.msra.mxu0 0
        %5907 = vmatpush.bf16.msra.mxu0 0
        %5908 = vmatpush.bf16.msra.mxu0 0
        %5909 = vmatpush.bf16.msra.mxu0 0
        %5910 = vmatpush.bf16.msra.mxu0 %v5638
        %5911 = vmatpush.bf16.msra.mxu0 %v5606
        %5912 = vmatpush.bf16.msra.mxu0 %v5574
        %5913 = vmatpush.bf16.msra.mxu0 %v5542
        %5914 = vmatmul.bf16.gmra.mxu0 %v4499
        %v5915 = vpop.f32.mrf.mxu0
        %v5916 = vadd.f32 %v5094, %v5915
        %v5917 = vpop.f32.mrf.mxu0
        %5918 = vdwg.mxu0
        %5919 = vmatpush.bf16.msra.mxu0 0
        %5920 = vmatpush.bf16.msra.mxu0 0
        %5921 = vmatpush.bf16.msra.mxu0 0
        %5922 = vmatpush.bf16.msra.mxu0 0
        %5923 = vmatpush.bf16.msra.mxu0 %v5639
        %5924 = vmatpush.bf16.msra.mxu0 %v5607
        %5925 = vmatpush.bf16.msra.mxu0 %v5575
        %5926 = vmatpush.bf16.msra.mxu0 %v5543
        %5927 = vmatmul.bf16.gmra.mxu0 %v4499
        %v5928 = vpop.f32.mrf.mxu0
        %v5929 = vadd.f32 %v5095, %v5928
        %v5930 = vpop.f32.mrf.mxu0
        %5931 = vdwg.mxu0
        %5932 = vmatpush.bf16.msra.mxu0 0
        %5933 = vmatpush.bf16.msra.mxu0 0
        %5934 = vmatpush.bf16.msra.mxu0 0
        %5935 = vmatpush.bf16.msra.mxu0 0
        %5936 = vmatpush.bf16.msra.mxu0 %v5640
        %5937 = vmatpush.bf16.msra.mxu0 %v5608
        %5938 = vmatpush.bf16.msra.mxu0 %v5576
        %5939 = vmatpush.bf16.msra.mxu0 %v5544
        %5940 = vmatmul.bf16.gmra.mxu0 %v4499
        %v5941 = vpop.f32.mrf.mxu0
        %v5942 = vadd.f32 %v5096, %v5941
        %v5943 = vpop.f32.mrf.mxu0
        %5944 = vdwg.mxu0
        %5945 = vmatpush.bf16.msra.mxu0 0
        %5946 = vmatpush.bf16.msra.mxu0 0
        %5947 = vmatpush.bf16.msra.mxu0 0
        %5948 = vmatpush.bf16.msra.mxu0 0
        %5949 = vmatpush.bf16.msra.mxu0 %v5641
        %5950 = vmatpush.bf16.msra.mxu0 %v5609
        %5951 = vmatpush.bf16.msra.mxu0 %v5577
        %5952 = vmatpush.bf16.msra.mxu0 %v5545
        %5953 = vmatmul.bf16.gmra.mxu0 %v4499
        %v5954 = vpop.f32.mrf.mxu0
        %v5955 = vadd.f32 %v5097, %v5954
        %v5956 = vpop.f32.mrf.mxu0
        %5957 = vdwg.mxu0
        %5958 = vmatpush.bf16.msra.mxu0 0
        %5959 = vmatpush.bf16.msra.mxu0 0
        %5960 = vmatpush.bf16.msra.mxu0 0
        %5961 = vmatpush.bf16.msra.mxu0 0
        %5962 = vmatpush.bf16.msra.mxu0 %v5642
        %5963 = vmatpush.bf16.msra.mxu0 %v5610
        %5964 = vmatpush.bf16.msra.mxu0 %v5578
        %5965 = vmatpush.bf16.msra.mxu0 %v5546
        %5966 = vmatmul.bf16.gmra.mxu0 %v4499
        %v5967 = vpop.f32.mrf.mxu0
        %v5968 = vadd.f32 %v5098, %v5967
        %v5969 = vpop.f32.mrf.mxu0
        %5970 = vdwg.mxu0
        %5971 = vmatpush.bf16.msra.mxu0 0
        %5972 = vmatpush.bf16.msra.mxu0 0
        %5973 = vmatpush.bf16.msra.mxu0 0
        %5974 = vmatpush.bf16.msra.mxu0 0
        %5975 = vmatpush.bf16.msra.mxu0 %v5643
        %5976 = vmatpush.bf16.msra.mxu0 %v5611
        %5977 = vmatpush.bf16.msra.mxu0 %v5579
        %5978 = vmatpush.bf16.msra.mxu0 %v5547
        %5979 = vmatmul.bf16.gmra.mxu0 %v4499
        %v5980 = vpop.f32.mrf.mxu0
        %v5981 = vadd.f32 %v5099, %v5980
        %v5982 = vpop.f32.mrf.mxu0
        %5983 = vdwg.mxu0
        %5984 = vmatpush.bf16.msra.mxu0 0
        %5985 = vmatpush.bf16.msra.mxu0 0
        %5986 = vmatpush.bf16.msra.mxu0 0
        %5987 = vmatpush.bf16.msra.mxu0 0
        %5988 = vmatpush.bf16.msra.mxu0 %v5644
        %5989 = vmatpush.bf16.msra.mxu0 %v5612
        %5990 = vmatpush.bf16.msra.mxu0 %v5580
        %5991 = vmatpush.bf16.msra.mxu0 %v5548
        %5992 = vmatmul.bf16.gmra.mxu0 %v4499
        %v5993 = vpop.f32.mrf.mxu0
        %v5994 = vadd.f32 %v5100, %v5993
        %v5995 = vpop.f32.mrf.mxu0
        %5996 = vdwg.mxu0
        %5997 = vmatpush.bf16.msra.mxu0 0
        %5998 = vmatpush.bf16.msra.mxu0 0
        %5999 = vmatpush.bf16.msra.mxu0 0
        %6000 = vmatpush.bf16.msra.mxu0 0
        %6001 = vmatpush.bf16.msra.mxu0 %v5645
        %6002 = vmatpush.bf16.msra.mxu0 %v5613
        %6003 = vmatpush.bf16.msra.mxu0 %v5581
        %6004 = vmatpush.bf16.msra.mxu0 %v5549
        %6005 = vmatmul.bf16.gmra.mxu0 %v4499
        %v6006 = vpop.f32.mrf.mxu0
        %v6007 = vadd.f32 %v5101, %v6006
        %v6008 = vpop.f32.mrf.mxu0
        %6009 = vdwg.mxu0
        %6010 = vmatpush.bf16.msra.mxu0 0
        %6011 = vmatpush.bf16.msra.mxu0 0
        %6012 = vmatpush.bf16.msra.mxu0 0
        %6013 = vmatpush.bf16.msra.mxu0 0
        %6014 = vmatpush.bf16.msra.mxu0 %v5646
        %6015 = vmatpush.bf16.msra.mxu0 %v5614
        %6016 = vmatpush.bf16.msra.mxu0 %v5582
        %6017 = vmatpush.bf16.msra.mxu0 %v5550
        %6018 = vmatmul.bf16.gmra.mxu0 %v4499
        %v6019 = vpop.f32.mrf.mxu0
        %v6020 = vadd.f32 %v5102, %v6019
        %v6021 = vpop.f32.mrf.mxu0
        %6022 = vdwg.mxu0
        %6023 = vmatpush.bf16.msra.mxu0 0
        %6024 = vmatpush.bf16.msra.mxu0 0
        %6025 = vmatpush.bf16.msra.mxu0 0
        %6026 = vmatpush.bf16.msra.mxu0 0
        %6027 = vmatpush.bf16.msra.mxu0 %v5647
        %6028 = vmatpush.bf16.msra.mxu0 %v5615
        %6029 = vmatpush.bf16.msra.mxu0 %v5583
        %6030 = vmatpush.bf16.msra.mxu0 %v5551
        %6031 = vmatmul.bf16.gmra.mxu0 %v4499
        %v6032 = vpop.f32.mrf.mxu0
        %v6033 = vadd.f32 %v5103, %v6032
        %v6034 = vpop.f32.mrf.mxu0
        %6035 = vdwg.mxu0
        %6036 = vmatpush.bf16.msra.mxu0 0
        %6037 = vmatpush.bf16.msra.mxu0 0
        %6038 = vmatpush.bf16.msra.mxu0 0
        %6039 = vmatpush.bf16.msra.mxu0 0
        %6040 = vmatpush.bf16.msra.mxu0 %v5648
        %6041 = vmatpush.bf16.msra.mxu0 %v5616
        %6042 = vmatpush.bf16.msra.mxu0 %v5584
        %6043 = vmatpush.bf16.msra.mxu0 %v5552
        %6044 = vmatmul.bf16.gmra.mxu0 %v4499
        %v6045 = vpop.f32.mrf.mxu0
        %v6046 = vadd.f32 %v5104, %v6045
        %v6047 = vpop.f32.mrf.mxu0
        %6048 = vdwg.mxu0
        %6049 = vmatpush.bf16.msra.mxu0 0
        %6050 = vmatpush.bf16.msra.mxu0 0
        %6051 = vmatpush.bf16.msra.mxu0 0
        %6052 = vmatpush.bf16.msra.mxu0 0
        %6053 = vmatpush.bf16.msra.mxu0 %v5649
        %6054 = vmatpush.bf16.msra.mxu0 %v5617
        %6055 = vmatpush.bf16.msra.mxu0 %v5585
        %6056 = vmatpush.bf16.msra.mxu0 %v5553
        %6057 = vmatmul.bf16.gmra.mxu0 %v4499
        %v6058 = vpop.f32.mrf.mxu0
        %v6059 = vadd.f32 %v5105, %v6058
        %v6060 = vpop.f32.mrf.mxu0
        %6061 = vdwg.mxu0
        %6062 = vmatpush.bf16.msra.mxu0 0
        %6063 = vmatpush.bf16.msra.mxu0 0
        %6064 = vmatpush.bf16.msra.mxu0 0
        %6065 = vmatpush.bf16.msra.mxu0 0
        %6066 = vmatpush.bf16.msra.mxu0 %v5650
        %6067 = vmatpush.bf16.msra.mxu0 %v5618
        %6068 = vmatpush.bf16.msra.mxu0 %v5586
        %6069 = vmatpush.bf16.msra.mxu0 %v5554
        %6070 = vmatmul.bf16.gmra.mxu0 %v4499
        %v6071 = vpop.f32.mrf.mxu0
        %v6072 = vadd.f32 %v5106, %v6071
        %v6073 = vpop.f32.mrf.mxu0
        %6074 = vdwg.mxu0
        %6075 = vmatpush.bf16.msra.mxu0 0
        %6076 = vmatpush.bf16.msra.mxu0 0
        %6077 = vmatpush.bf16.msra.mxu0 0
        %6078 = vmatpush.bf16.msra.mxu0 0
        %6079 = vmatpush.bf16.msra.mxu0 %v5651
        %6080 = vmatpush.bf16.msra.mxu0 %v5619
        %6081 = vmatpush.bf16.msra.mxu0 %v5587
        %6082 = vmatpush.bf16.msra.mxu0 %v5555
        %6083 = vmatmul.bf16.gmra.mxu0 %v4499
        %v6084 = vpop.f32.mrf.mxu0
        %v6085 = vadd.f32 %v5107, %v6084
        %v6086 = vpop.f32.mrf.mxu0
        %6087 = vdwg.mxu0
        %6088 = vmatpush.bf16.msra.mxu0 0
        %6089 = vmatpush.bf16.msra.mxu0 0
        %6090 = vmatpush.bf16.msra.mxu0 0
        %6091 = vmatpush.bf16.msra.mxu0 0
        %6092 = vmatpush.bf16.msra.mxu0 %v5652
        %6093 = vmatpush.bf16.msra.mxu0 %v5620
        %6094 = vmatpush.bf16.msra.mxu0 %v5588
        %6095 = vmatpush.bf16.msra.mxu0 %v5556
        %6096 = vmatmul.bf16.gmra.mxu0 %v4499
        %v6097 = vpop.f32.mrf.mxu0
        %v6098 = vadd.f32 %v5108, %v6097
        %v6099 = vpop.f32.mrf.mxu0
        %6100 = vdwg.mxu0
        %6101 = vmatpush.bf16.msra.mxu0 0
        %6102 = vmatpush.bf16.msra.mxu0 0
        %6103 = vmatpush.bf16.msra.mxu0 0
        %6104 = vmatpush.bf16.msra.mxu0 0
        %6105 = vmatpush.bf16.msra.mxu0 %v5653
        %6106 = vmatpush.bf16.msra.mxu0 %v5621
        %6107 = vmatpush.bf16.msra.mxu0 %v5589
        %6108 = vmatpush.bf16.msra.mxu0 %v5557
        %6109 = vmatmul.bf16.gmra.mxu0 %v4499
        %v6110 = vpop.f32.mrf.mxu0
        %v6111 = vadd.f32 %v5109, %v6110
        %v6112 = vpop.f32.mrf.mxu0
        %6113 = vdwg.mxu0
        %6114 = vmatpush.bf16.msra.mxu0 0
        %6115 = vmatpush.bf16.msra.mxu0 0
        %6116 = vmatpush.bf16.msra.mxu0 0
        %6117 = vmatpush.bf16.msra.mxu0 0
        %6118 = vmatpush.bf16.msra.mxu0 %v5654
        %6119 = vmatpush.bf16.msra.mxu0 %v5622
        %6120 = vmatpush.bf16.msra.mxu0 %v5590
        %6121 = vmatpush.bf16.msra.mxu0 %v5558
        %6122 = vmatmul.bf16.gmra.mxu0 %v4499
        %v6123 = vpop.f32.mrf.mxu0
        %v6124 = vadd.f32 %v5110, %v6123
        %v6125 = vpop.f32.mrf.mxu0
        %6126 = vdwg.mxu0
        %6127 = vmatpush.bf16.msra.mxu0 0
        %6128 = vmatpush.bf16.msra.mxu0 0
        %6129 = vmatpush.bf16.msra.mxu0 0
        %6130 = vmatpush.bf16.msra.mxu0 0
        %6131 = vmatpush.bf16.msra.mxu0 %v5655
        %6132 = vmatpush.bf16.msra.mxu0 %v5623
        %6133 = vmatpush.bf16.msra.mxu0 %v5591
        %6134 = vmatpush.bf16.msra.mxu0 %v5559
        %6135 = vmatmul.bf16.gmra.mxu0 %v4499
        %v6136 = vpop.f32.mrf.mxu0
        %v6137 = vadd.f32 %v5111, %v6136
        %v6138 = vpop.f32.mrf.mxu0
        %6139 = vdwg.mxu0
        %6140 = vmatpush.bf16.msra.mxu0 0
        %6141 = vmatpush.bf16.msra.mxu0 0
        %6142 = vmatpush.bf16.msra.mxu0 0
        %6143 = vmatpush.bf16.msra.mxu0 0
        %6144 = vmatpush.bf16.msra.mxu0 %v5656
        %6145 = vmatpush.bf16.msra.mxu0 %v5624
        %6146 = vmatpush.bf16.msra.mxu0 %v5592
        %6147 = vmatpush.bf16.msra.mxu0 %v5560
        %6148 = vmatmul.bf16.gmra.mxu0 %v4499
        %v6149 = vpop.f32.mrf.mxu0
        %v6150 = vadd.f32 %v5112, %v6149
        %v6151 = vpop.f32.mrf.mxu0
        %6152 = vdwg.mxu0
        %6153 = vmatpush.bf16.msra.mxu0 0
        %6154 = vmatpush.bf16.msra.mxu0 0
        %6155 = vmatpush.bf16.msra.mxu0 0
        %6156 = vmatpush.bf16.msra.mxu0 0
        %6157 = vmatpush.bf16.msra.mxu0 %v5657
        %6158 = vmatpush.bf16.msra.mxu0 %v5625
        %6159 = vmatpush.bf16.msra.mxu0 %v5593
        %6160 = vmatpush.bf16.msra.mxu0 %v5561
        %6161 = vmatmul.bf16.gmra.mxu0 %v4499
        %v6162 = vpop.f32.mrf.mxu0
        %v6163 = vadd.f32 %v5113, %v6162
        %v6164 = vpop.f32.mrf.mxu0
        %6165 = vdwg.mxu0
        %6166 = vmatpush.bf16.msra.mxu0 0
        %6167 = vmatpush.bf16.msra.mxu0 0
        %6168 = vmatpush.bf16.msra.mxu0 0
        %6169 = vmatpush.bf16.msra.mxu0 0
        %6170 = vmatpush.bf16.msra.mxu0 %v5658
        %6171 = vmatpush.bf16.msra.mxu0 %v5626
        %6172 = vmatpush.bf16.msra.mxu0 %v5594
        %6173 = vmatpush.bf16.msra.mxu0 %v5562
        %6174 = vmatmul.bf16.gmra.mxu0 %v4499
        %v6175 = vpop.f32.mrf.mxu0
        %v6176 = vadd.f32 %v5114, %v6175
        %v6177 = vpop.f32.mrf.mxu0
        %6178 = vdwg.mxu0
        %6179 = vmatpush.bf16.msra.mxu0 0
        %6180 = vmatpush.bf16.msra.mxu0 0
        %6181 = vmatpush.bf16.msra.mxu0 0
        %6182 = vmatpush.bf16.msra.mxu0 0
        %6183 = vmatpush.bf16.msra.mxu0 %v5659
        %6184 = vmatpush.bf16.msra.mxu0 %v5627
        %6185 = vmatpush.bf16.msra.mxu0 %v5595
        %6186 = vmatpush.bf16.msra.mxu0 %v5563
        %6187 = vmatmul.bf16.gmra.mxu0 %v4499
        %v6188 = vpop.f32.mrf.mxu0
        %v6189 = vadd.f32 %v5115, %v6188
        %v6190 = vpop.f32.mrf.mxu0
        %6191 = vdwg.mxu0
        %6192 = vmatpush.bf16.msra.mxu0 0
        %6193 = vmatpush.bf16.msra.mxu0 0
        %6194 = vmatpush.bf16.msra.mxu0 0
        %6195 = vmatpush.bf16.msra.mxu0 0
        %6196 = vmatpush.bf16.msra.mxu0 %v5660
        %6197 = vmatpush.bf16.msra.mxu0 %v5628
        %6198 = vmatpush.bf16.msra.mxu0 %v5596
        %6199 = vmatpush.bf16.msra.mxu0 %v5564
        %6200 = vmatmul.bf16.gmra.mxu0 %v4499
        %v6201 = vpop.f32.mrf.mxu0
        %v6202 = vadd.f32 %v5116, %v6201
        %v6203 = vpop.f32.mrf.mxu0
        %6204 = vdwg.mxu0
        %6205 = vst [vmem:[%s768 + $0x100] sm:$0xff] %v5799
        %6206 = vst [vmem:[%s768 + $0x108] sm:$0xff] %v5812
        %6207 = vst [vmem:[%s768 + $0x110] sm:$0xff] %v5825
        %6208 = vst [vmem:[%s768 + $0x118] sm:$0xff] %v5838
        %6209 = vst [vmem:[%s768 + $0x120] sm:$0xff] %v5851
        %6210 = vst [vmem:[%s768 + $0x128] sm:$0xff] %v5864
        %6211 = vst [vmem:[%s768 + $0x130] sm:$0xff] %v5877
        %6212 = vst [vmem:[%s768 + $0x138] sm:$0xff] %v5890
        %6213 = vst [vmem:[%s768 + $0x140] sm:$0xff] %v5903
        %6214 = vst [vmem:[%s768 + $0x148] sm:$0xff] %v5916
        %6215 = vst [vmem:[%s768 + $0x150] sm:$0xff] %v5929
        %6216 = vst [vmem:[%s768 + $0x158] sm:$0xff] %v5942
        %6217 = vst [vmem:[%s768 + $0x160] sm:$0xff] %v5955
        %6218 = vst [vmem:[%s768 + $0x168] sm:$0xff] %v5968
        %6219 = vst [vmem:[%s768 + $0x170] sm:$0xff] %v5981
        %6220 = vst [vmem:[%s768 + $0x178] sm:$0xff] %v5994
        %6221 = vst [vmem:[%s768 + $0x180] sm:$0xff] %v6007
        %6222 = vst [vmem:[%s768 + $0x188] sm:$0xff] %v6020
        %6223 = vst [vmem:[%s768 + $0x190] sm:$0xff] %v6033
        %6224 = vst [vmem:[%s768 + $0x198] sm:$0xff] %v6046
        %6225 = vst [vmem:[%s768 + $0x1a0] sm:$0xff] %v6059
        %6226 = vst [vmem:[%s768 + $0x1a8] sm:$0xff] %v6072
        %6227 = vst [vmem:[%s768 + $0x1b0] sm:$0xff] %v6085
        %6228 = vst [vmem:[%s768 + $0x1b8] sm:$0xff] %v6098
        %6229 = vst [vmem:[%s768 + $0x1c0] sm:$0xff] %v6111
        %6230 = vst [vmem:[%s768 + $0x1c8] sm:$0xff] %v6124
        %6231 = vst [vmem:[%s768 + $0x1d0] sm:$0xff] %v6137
        %6232 = vst [vmem:[%s768 + $0x1d8] sm:$0xff] %v6150
        %6233 = vst [vmem:[%s768 + $0x1e0] sm:$0xff] %v6163
        %6234 = vst [vmem:[%s768 + $0x1e8] sm:$0xff] %v6176
        %6235 = vst [vmem:[%s768 + $0x1f0] sm:$0xff] %v6189
        %6236 = vst [vmem:[%s768 + $0x1f8] sm:$0xff] %v6202
        %v6237 = vld [vmem:[%s23 + $0x100] sm:$0xff]
        %v6238 = vld [vmem:[%s23 + $0x108] sm:$0xff]
        %v6239 = vld [vmem:[%s23 + $0x110] sm:$0xff]
        %v6240 = vld [vmem:[%s23 + $0x118] sm:$0xff]
        %v6241 = vld [vmem:[%s23 + $0x120] sm:$0xff]
        %v6242 = vld [vmem:[%s23 + $0x128] sm:$0xff]
        %v6243 = vld [vmem:[%s23 + $0x130] sm:$0xff]
        %v6244 = vld [vmem:[%s23 + $0x138] sm:$0xff]
        %v6245 = vld [vmem:[%s23 + $0x140] sm:$0xff]
        %v6246 = vld [vmem:[%s23 + $0x148] sm:$0xff]
        %v6247 = vld [vmem:[%s23 + $0x150] sm:$0xff]
        %v6248 = vld [vmem:[%s23 + $0x158] sm:$0xff]
        %v6249 = vld [vmem:[%s23 + $0x160] sm:$0xff]
        %v6250 = vld [vmem:[%s23 + $0x168] sm:$0xff]
        %v6251 = vld [vmem:[%s23 + $0x170] sm:$0xff]
        %v6252 = vld [vmem:[%s23 + $0x178] sm:$0xff]
        %v6253 = vld [vmem:[%s23 + $0x300] sm:$0xff]
        %v6254 = vld [vmem:[%s23 + $0x308] sm:$0xff]
        %v6255 = vld [vmem:[%s23 + $0x310] sm:$0xff]
        %v6256 = vld [vmem:[%s23 + $0x318] sm:$0xff]
        %v6257 = vld [vmem:[%s23 + $0x320] sm:$0xff]
        %v6258 = vld [vmem:[%s23 + $0x328] sm:$0xff]
        %v6259 = vld [vmem:[%s23 + $0x330] sm:$0xff]
        %v6260 = vld [vmem:[%s23 + $0x338] sm:$0xff]
        %v6261 = vld [vmem:[%s23 + $0x340] sm:$0xff]
        %v6262 = vld [vmem:[%s23 + $0x348] sm:$0xff]
        %v6263 = vld [vmem:[%s23 + $0x350] sm:$0xff]
        %v6264 = vld [vmem:[%s23 + $0x358] sm:$0xff]
        %v6265 = vld [vmem:[%s23 + $0x360] sm:$0xff]
        %v6266 = vld [vmem:[%s23 + $0x368] sm:$0xff]
        %v6267 = vld [vmem:[%s23 + $0x370] sm:$0xff]
        %v6268 = vld [vmem:[%s23 + $0x378] sm:$0xff]
        %v6269 = vld [vmem:[%s23 + $0x500] sm:$0xff]
        %v6270 = vld [vmem:[%s23 + $0x508] sm:$0xff]
        %v6271 = vld [vmem:[%s23 + $0x510] sm:$0xff]
        %v6272 = vld [vmem:[%s23 + $0x518] sm:$0xff]
        %v6273 = vld [vmem:[%s23 + $0x520] sm:$0xff]
        %v6274 = vld [vmem:[%s23 + $0x528] sm:$0xff]
        %v6275 = vld [vmem:[%s23 + $0x530] sm:$0xff]
        %v6276 = vld [vmem:[%s23 + $0x538] sm:$0xff]
        %v6277 = vld [vmem:[%s23 + $0x540] sm:$0xff]
        %v6278 = vld [vmem:[%s23 + $0x548] sm:$0xff]
        %v6279 = vld [vmem:[%s23 + $0x550] sm:$0xff]
        %v6280 = vld [vmem:[%s23 + $0x558] sm:$0xff]
        %v6281 = vld [vmem:[%s23 + $0x560] sm:$0xff]
        %v6282 = vld [vmem:[%s23 + $0x568] sm:$0xff]
        %v6283 = vld [vmem:[%s23 + $0x570] sm:$0xff]
        %v6284 = vld [vmem:[%s23 + $0x578] sm:$0xff]
        %v6285 = vld [vmem:[%s23 + $0x700] sm:$0xff]
        %v6286 = vld [vmem:[%s23 + $0x708] sm:$0xff]
        %v6287 = vld [vmem:[%s23 + $0x710] sm:$0xff]
        %v6288 = vld [vmem:[%s23 + $0x718] sm:$0xff]
        %v6289 = vld [vmem:[%s23 + $0x720] sm:$0xff]
        %v6290 = vld [vmem:[%s23 + $0x728] sm:$0xff]
        %v6291 = vld [vmem:[%s23 + $0x730] sm:$0xff]
        %v6292 = vld [vmem:[%s23 + $0x738] sm:$0xff]
        %v6293 = vld [vmem:[%s23 + $0x740] sm:$0xff]
        %v6294 = vld [vmem:[%s23 + $0x748] sm:$0xff]
        %v6295 = vld [vmem:[%s23 + $0x750] sm:$0xff]
        %v6296 = vld [vmem:[%s23 + $0x758] sm:$0xff]
        %v6297 = vld [vmem:[%s23 + $0x760] sm:$0xff]
        %v6298 = vld [vmem:[%s23 + $0x768] sm:$0xff]
        %v6299 = vld [vmem:[%s23 + $0x770] sm:$0xff]
        %v6300 = vld [vmem:[%s23 + $0x778] sm:$0xff]
        %v6301 = vld [vmem:[%s23 + $0x900] sm:$0xff]
        %v6302 = vld [vmem:[%s23 + $0x908] sm:$0xff]
        %v6303 = vld [vmem:[%s23 + $0x910] sm:$0xff]
        %v6304 = vld [vmem:[%s23 + $0x918] sm:$0xff]
        %v6305 = vld [vmem:[%s23 + $0x920] sm:$0xff]
        %v6306 = vld [vmem:[%s23 + $0x928] sm:$0xff]
        %v6307 = vld [vmem:[%s23 + $0x930] sm:$0xff]
        %v6308 = vld [vmem:[%s23 + $0x938] sm:$0xff]
        %v6309 = vld [vmem:[%s23 + $0x940] sm:$0xff]
        %v6310 = vld [vmem:[%s23 + $0x948] sm:$0xff]
        %v6311 = vld [vmem:[%s23 + $0x950] sm:$0xff]
        %v6312 = vld [vmem:[%s23 + $0x958] sm:$0xff]
        %v6313 = vld [vmem:[%s23 + $0x960] sm:$0xff]
        %v6314 = vld [vmem:[%s23 + $0x968] sm:$0xff]
        %v6315 = vld [vmem:[%s23 + $0x970] sm:$0xff]
        %v6316 = vld [vmem:[%s23 + $0x978] sm:$0xff]
        %v6317 = vld [vmem:[%s23 + $0xb00] sm:$0xff]
        %v6318 = vld [vmem:[%s23 + $0xb08] sm:$0xff]
        %v6319 = vld [vmem:[%s23 + $0xb10] sm:$0xff]
        %v6320 = vld [vmem:[%s23 + $0xb18] sm:$0xff]
        %v6321 = vld [vmem:[%s23 + $0xb20] sm:$0xff]
        %v6322 = vld [vmem:[%s23 + $0xb28] sm:$0xff]
        %v6323 = vld [vmem:[%s23 + $0xb30] sm:$0xff]
        %v6324 = vld [vmem:[%s23 + $0xb38] sm:$0xff]
        %v6325 = vld [vmem:[%s23 + $0xb40] sm:$0xff]
        %v6326 = vld [vmem:[%s23 + $0xb48] sm:$0xff]
        %v6327 = vld [vmem:[%s23 + $0xb50] sm:$0xff]
        %v6328 = vld [vmem:[%s23 + $0xb58] sm:$0xff]
        %v6329 = vld [vmem:[%s23 + $0xb60] sm:$0xff]
        %v6330 = vld [vmem:[%s23 + $0xb68] sm:$0xff]
        %v6331 = vld [vmem:[%s23 + $0xb70] sm:$0xff]
        %v6332 = vld [vmem:[%s23 + $0xb78] sm:$0xff]
        %v6333 = vld [vmem:[%s23 + $0xd00] sm:$0xff]
        %v6334 = vld [vmem:[%s23 + $0xd08] sm:$0xff]
        %v6335 = vld [vmem:[%s23 + $0xd10] sm:$0xff]
        %v6336 = vld [vmem:[%s23 + $0xd18] sm:$0xff]
        %v6337 = vld [vmem:[%s23 + $0xd20] sm:$0xff]
        %v6338 = vld [vmem:[%s23 + $0xd28] sm:$0xff]
        %v6339 = vld [vmem:[%s23 + $0xd30] sm:$0xff]
        %v6340 = vld [vmem:[%s23 + $0xd38] sm:$0xff]
        %v6341 = vld [vmem:[%s23 + $0xd40] sm:$0xff]
        %v6342 = vld [vmem:[%s23 + $0xd48] sm:$0xff]
        %v6343 = vld [vmem:[%s23 + $0xd50] sm:$0xff]
        %v6344 = vld [vmem:[%s23 + $0xd58] sm:$0xff]
        %v6345 = vld [vmem:[%s23 + $0xd60] sm:$0xff]
        %v6346 = vld [vmem:[%s23 + $0xd68] sm:$0xff]
        %v6347 = vld [vmem:[%s23 + $0xd70] sm:$0xff]
        %v6348 = vld [vmem:[%s23 + $0xd78] sm:$0xff]
        %v6349 = vld [vmem:[%s23 + $0xf00] sm:$0xff]
        %v6350 = vld [vmem:[%s23 + $0xf08] sm:$0xff]
        %v6351 = vld [vmem:[%s23 + $0xf10] sm:$0xff]
        %v6352 = vld [vmem:[%s23 + $0xf18] sm:$0xff]
        %v6353 = vld [vmem:[%s23 + $0xf20] sm:$0xff]
        %v6354 = vld [vmem:[%s23 + $0xf28] sm:$0xff]
        %v6355 = vld [vmem:[%s23 + $0xf30] sm:$0xff]
        %v6356 = vld [vmem:[%s23 + $0xf38] sm:$0xff]
        %v6357 = vld [vmem:[%s23 + $0xf40] sm:$0xff]
        %v6358 = vld [vmem:[%s23 + $0xf48] sm:$0xff]
        %v6359 = vld [vmem:[%s23 + $0xf50] sm:$0xff]
        %v6360 = vld [vmem:[%s23 + $0xf58] sm:$0xff]
        %v6361 = vld [vmem:[%s23 + $0xf60] sm:$0xff]
        %v6362 = vld [vmem:[%s23 + $0xf68] sm:$0xff]
        %v6363 = vld [vmem:[%s23 + $0xf70] sm:$0xff]
        %v6364 = vld [vmem:[%s23 + $0xf78] sm:$0xff]
        %v6365 = vld [vmem:[%s24 + $0x40] sm:$0xff]
        %v6366 = vld [vmem:[%s24 + $0x48] sm:$0xff]
        %v6367 = vld [vmem:[%s24 + $0x50] sm:$0xff]
        %v6368 = vld [vmem:[%s24 + $0x58] sm:$0xff]
        %v6373 = vperm.slane %v6365, 0
        %v6374 = vperm.slane %v6365, 1
        %v6375 = vperm.slane %v6365, 2
        %v6376 = vperm.slane %v6365, 3
        %v6377 = vperm.slane %v6365, 4
        %v6378 = vperm.slane %v6365, 5
        %v6379 = vperm.slane %v6365, 6
        %v6380 = vperm.slane %v6365, 7
        %v6381 = vperm.slane %v6366, 0
        %v6382 = vperm.slane %v6366, 1
        %v6383 = vperm.slane %v6366, 2
        %v6384 = vperm.slane %v6366, 3
        %v6385 = vperm.slane %v6366, 4
        %v6386 = vperm.slane %v6366, 5
        %v6387 = vperm.slane %v6366, 6
        %v6388 = vperm.slane %v6366, 7
        %v6389 = vperm.slane %v6367, 0
        %v6390 = vperm.slane %v6367, 1
        %v6391 = vperm.slane %v6367, 2
        %v6392 = vperm.slane %v6367, 3
        %v6393 = vperm.slane %v6367, 4
        %v6394 = vperm.slane %v6367, 5
        %v6395 = vperm.slane %v6367, 6
        %v6396 = vperm.slane %v6367, 7
        %v6397 = vperm.slane %v6368, 0
        %v6398 = vperm.slane %v6368, 1
        %v6399 = vperm.slane %v6368, 2
        %v6400 = vperm.slane %v6368, 3
        %v6401 = vperm.slane %v6368, 4
        %v6402 = vperm.slane %v6368, 5
        %v6403 = vperm.slane %v6368, 6
        %v6404 = vperm.slane %v6368, 7
        %v6565 = vunpack.c.l.b16 %v6237
        %v6566 = vunpack.c.h.b16 %v6237
        %v6567 = vunpack.c.l.b16 %v6238
        %v6568 = vunpack.c.h.b16 %v6238
        %v6569 = vunpack.c.l.b16 %v6239
        %v6570 = vunpack.c.h.b16 %v6239
        %v6571 = vunpack.c.l.b16 %v6240
        %v6572 = vunpack.c.h.b16 %v6240
        %v6573 = vunpack.c.l.b16 %v6241
        %v6574 = vunpack.c.h.b16 %v6241
        %v6575 = vunpack.c.l.b16 %v6242
        %v6576 = vunpack.c.h.b16 %v6242
        %v6577 = vunpack.c.l.b16 %v6243
        %v6578 = vunpack.c.h.b16 %v6243
        %v6579 = vunpack.c.l.b16 %v6244
        %v6580 = vunpack.c.h.b16 %v6244
        %v6581 = vunpack.c.l.b16 %v6245
        %v6582 = vunpack.c.h.b16 %v6245
        %v6583 = vunpack.c.l.b16 %v6246
        %v6584 = vunpack.c.h.b16 %v6246
        %v6585 = vunpack.c.l.b16 %v6247
        %v6586 = vunpack.c.h.b16 %v6247
        %v6587 = vunpack.c.l.b16 %v6248
        %v6588 = vunpack.c.h.b16 %v6248
        %v6589 = vunpack.c.l.b16 %v6249
        %v6590 = vunpack.c.h.b16 %v6249
        %v6591 = vunpack.c.l.b16 %v6250
        %v6592 = vunpack.c.h.b16 %v6250
        %v6593 = vunpack.c.l.b16 %v6251
        %v6594 = vunpack.c.h.b16 %v6251
        %v6595 = vunpack.c.l.b16 %v6252
        %v6596 = vunpack.c.h.b16 %v6252
        %v6597 = vunpack.c.l.b16 %v6253
        %v6598 = vunpack.c.h.b16 %v6253
        %v6599 = vunpack.c.l.b16 %v6254
        %v6600 = vunpack.c.h.b16 %v6254
        %v6601 = vunpack.c.l.b16 %v6255
        %v6602 = vunpack.c.h.b16 %v6255
        %v6603 = vunpack.c.l.b16 %v6256
        %v6604 = vunpack.c.h.b16 %v6256
        %v6605 = vunpack.c.l.b16 %v6257
        %v6606 = vunpack.c.h.b16 %v6257
        %v6607 = vunpack.c.l.b16 %v6258
        %v6608 = vunpack.c.h.b16 %v6258
        %v6609 = vunpack.c.l.b16 %v6259
        %v6610 = vunpack.c.h.b16 %v6259
        %v6611 = vunpack.c.l.b16 %v6260
        %v6612 = vunpack.c.h.b16 %v6260
        %v6613 = vunpack.c.l.b16 %v6261
        %v6614 = vunpack.c.h.b16 %v6261
        %v6615 = vunpack.c.l.b16 %v6262
        %v6616 = vunpack.c.h.b16 %v6262
        %v6617 = vunpack.c.l.b16 %v6263
        %v6618 = vunpack.c.h.b16 %v6263
        %v6619 = vunpack.c.l.b16 %v6264
        %v6620 = vunpack.c.h.b16 %v6264
        %v6621 = vunpack.c.l.b16 %v6265
        %v6622 = vunpack.c.h.b16 %v6265
        %v6623 = vunpack.c.l.b16 %v6266
        %v6624 = vunpack.c.h.b16 %v6266
        %v6625 = vunpack.c.l.b16 %v6267
        %v6626 = vunpack.c.h.b16 %v6267
        %v6627 = vunpack.c.l.b16 %v6268
        %v6628 = vunpack.c.h.b16 %v6268
        %v6629 = vunpack.c.l.b16 %v6269
        %v6630 = vunpack.c.h.b16 %v6269
        %v6631 = vunpack.c.l.b16 %v6270
        %v6632 = vunpack.c.h.b16 %v6270
        %v6633 = vunpack.c.l.b16 %v6271
        %v6634 = vunpack.c.h.b16 %v6271
        %v6635 = vunpack.c.l.b16 %v6272
        %v6636 = vunpack.c.h.b16 %v6272
        %v6637 = vunpack.c.l.b16 %v6273
        %v6638 = vunpack.c.h.b16 %v6273
        %v6639 = vunpack.c.l.b16 %v6274
        %v6640 = vunpack.c.h.b16 %v6274
        %v6641 = vunpack.c.l.b16 %v6275
        %v6642 = vunpack.c.h.b16 %v6275
        %v6643 = vunpack.c.l.b16 %v6276
        %v6644 = vunpack.c.h.b16 %v6276
        %v6645 = vunpack.c.l.b16 %v6277
        %v6646 = vunpack.c.h.b16 %v6277
        %v6647 = vunpack.c.l.b16 %v6278
        %v6648 = vunpack.c.h.b16 %v6278
        %v6649 = vunpack.c.l.b16 %v6279
        %v6650 = vunpack.c.h.b16 %v6279
        %v6651 = vunpack.c.l.b16 %v6280
        %v6652 = vunpack.c.h.b16 %v6280
        %v6653 = vunpack.c.l.b16 %v6281
        %v6654 = vunpack.c.h.b16 %v6281
        %v6655 = vunpack.c.l.b16 %v6282
        %v6656 = vunpack.c.h.b16 %v6282
        %v6657 = vunpack.c.l.b16 %v6283
        %v6658 = vunpack.c.h.b16 %v6283
        %v6659 = vunpack.c.l.b16 %v6284
        %v6660 = vunpack.c.h.b16 %v6284
        %v6661 = vunpack.c.l.b16 %v6285
        %v6662 = vunpack.c.h.b16 %v6285
        %v6663 = vunpack.c.l.b16 %v6286
        %v6664 = vunpack.c.h.b16 %v6286
        %v6665 = vunpack.c.l.b16 %v6287
        %v6666 = vunpack.c.h.b16 %v6287
        %v6667 = vunpack.c.l.b16 %v6288
        %v6668 = vunpack.c.h.b16 %v6288
        %v6669 = vunpack.c.l.b16 %v6289
        %v6670 = vunpack.c.h.b16 %v6289
        %v6671 = vunpack.c.l.b16 %v6290
        %v6672 = vunpack.c.h.b16 %v6290
        %v6673 = vunpack.c.l.b16 %v6291
        %v6674 = vunpack.c.h.b16 %v6291
        %v6675 = vunpack.c.l.b16 %v6292
        %v6676 = vunpack.c.h.b16 %v6292
        %v6677 = vunpack.c.l.b16 %v6293
        %v6678 = vunpack.c.h.b16 %v6293
        %v6679 = vunpack.c.l.b16 %v6294
        %v6680 = vunpack.c.h.b16 %v6294
        %v6681 = vunpack.c.l.b16 %v6295
        %v6682 = vunpack.c.h.b16 %v6295
        %v6683 = vunpack.c.l.b16 %v6296
        %v6684 = vunpack.c.h.b16 %v6296
        %v6685 = vunpack.c.l.b16 %v6297
        %v6686 = vunpack.c.h.b16 %v6297
        %v6687 = vunpack.c.l.b16 %v6298
        %v6688 = vunpack.c.h.b16 %v6298
        %v6689 = vunpack.c.l.b16 %v6299
        %v6690 = vunpack.c.h.b16 %v6299
        %v6691 = vunpack.c.l.b16 %v6300
        %v6692 = vunpack.c.h.b16 %v6300
        %v6693 = vunpack.c.l.b16 %v6301
        %v6694 = vunpack.c.h.b16 %v6301
        %v6695 = vunpack.c.l.b16 %v6302
        %v6696 = vunpack.c.h.b16 %v6302
        %v6697 = vunpack.c.l.b16 %v6303
        %v6698 = vunpack.c.h.b16 %v6303
        %v6699 = vunpack.c.l.b16 %v6304
        %v6700 = vunpack.c.h.b16 %v6304
        %v6701 = vunpack.c.l.b16 %v6305
        %v6702 = vunpack.c.h.b16 %v6305
        %v6703 = vunpack.c.l.b16 %v6306
        %v6704 = vunpack.c.h.b16 %v6306
        %v6705 = vunpack.c.l.b16 %v6307
        %v6706 = vunpack.c.h.b16 %v6307
        %v6707 = vunpack.c.l.b16 %v6308
        %v6708 = vunpack.c.h.b16 %v6308
        %v6709 = vunpack.c.l.b16 %v6309
        %v6710 = vunpack.c.h.b16 %v6309
        %v6711 = vunpack.c.l.b16 %v6310
        %v6712 = vunpack.c.h.b16 %v6310
        %v6713 = vunpack.c.l.b16 %v6311
        %v6714 = vunpack.c.h.b16 %v6311
        %v6715 = vunpack.c.l.b16 %v6312
        %v6716 = vunpack.c.h.b16 %v6312
        %v6717 = vunpack.c.l.b16 %v6313
        %v6718 = vunpack.c.h.b16 %v6313
        %v6719 = vunpack.c.l.b16 %v6314
        %v6720 = vunpack.c.h.b16 %v6314
        %v6721 = vunpack.c.l.b16 %v6315
        %v6722 = vunpack.c.h.b16 %v6315
        %v6723 = vunpack.c.l.b16 %v6316
        %v6724 = vunpack.c.h.b16 %v6316
        %v6725 = vunpack.c.l.b16 %v6317
        %v6726 = vunpack.c.h.b16 %v6317
        %v6727 = vunpack.c.l.b16 %v6318
        %v6728 = vunpack.c.h.b16 %v6318
        %v6729 = vunpack.c.l.b16 %v6319
        %v6730 = vunpack.c.h.b16 %v6319
        %v6731 = vunpack.c.l.b16 %v6320
        %v6732 = vunpack.c.h.b16 %v6320
        %v6733 = vunpack.c.l.b16 %v6321
        %v6734 = vunpack.c.h.b16 %v6321
        %v6735 = vunpack.c.l.b16 %v6322
        %v6736 = vunpack.c.h.b16 %v6322
        %v6737 = vunpack.c.l.b16 %v6323
        %v6738 = vunpack.c.h.b16 %v6323
        %v6739 = vunpack.c.l.b16 %v6324
        %v6740 = vunpack.c.h.b16 %v6324
        %v6741 = vunpack.c.l.b16 %v6325
        %v6742 = vunpack.c.h.b16 %v6325
        %v6743 = vunpack.c.l.b16 %v6326
        %v6744 = vunpack.c.h.b16 %v6326
        %v6745 = vunpack.c.l.b16 %v6327
        %v6746 = vunpack.c.h.b16 %v6327
        %v6747 = vunpack.c.l.b16 %v6328
        %v6748 = vunpack.c.h.b16 %v6328
        %v6749 = vunpack.c.l.b16 %v6329
        %v6750 = vunpack.c.h.b16 %v6329
        %v6751 = vunpack.c.l.b16 %v6330
        %v6752 = vunpack.c.h.b16 %v6330
        %v6753 = vunpack.c.l.b16 %v6331
        %v6754 = vunpack.c.h.b16 %v6331
        %v6755 = vunpack.c.l.b16 %v6332
        %v6756 = vunpack.c.h.b16 %v6332
        %v6757 = vunpack.c.l.b16 %v6333
        %v6758 = vunpack.c.h.b16 %v6333
        %v6759 = vunpack.c.l.b16 %v6334
        %v6760 = vunpack.c.h.b16 %v6334
        %v6761 = vunpack.c.l.b16 %v6335
        %v6762 = vunpack.c.h.b16 %v6335
        %v6763 = vunpack.c.l.b16 %v6336
        %v6764 = vunpack.c.h.b16 %v6336
        %v6765 = vunpack.c.l.b16 %v6337
        %v6766 = vunpack.c.h.b16 %v6337
        %v6767 = vunpack.c.l.b16 %v6338
        %v6768 = vunpack.c.h.b16 %v6338
        %v6769 = vunpack.c.l.b16 %v6339
        %v6770 = vunpack.c.h.b16 %v6339
        %v6771 = vunpack.c.l.b16 %v6340
        %v6772 = vunpack.c.h.b16 %v6340
        %v6773 = vunpack.c.l.b16 %v6341
        %v6774 = vunpack.c.h.b16 %v6341
        %v6775 = vunpack.c.l.b16 %v6342
        %v6776 = vunpack.c.h.b16 %v6342
        %v6777 = vunpack.c.l.b16 %v6343
        %v6778 = vunpack.c.h.b16 %v6343
        %v6779 = vunpack.c.l.b16 %v6344
        %v6780 = vunpack.c.h.b16 %v6344
        %v6781 = vunpack.c.l.b16 %v6345
        %v6782 = vunpack.c.h.b16 %v6345
        %v6783 = vunpack.c.l.b16 %v6346
        %v6784 = vunpack.c.h.b16 %v6346
        %v6785 = vunpack.c.l.b16 %v6347
        %v6786 = vunpack.c.h.b16 %v6347
        %v6787 = vunpack.c.l.b16 %v6348
        %v6788 = vunpack.c.h.b16 %v6348
        %v6789 = vunpack.c.l.b16 %v6349
        %v6790 = vunpack.c.h.b16 %v6349
        %v6791 = vunpack.c.l.b16 %v6350
        %v6792 = vunpack.c.h.b16 %v6350
        %v6793 = vunpack.c.l.b16 %v6351
        %v6794 = vunpack.c.h.b16 %v6351
        %v6795 = vunpack.c.l.b16 %v6352
        %v6796 = vunpack.c.h.b16 %v6352
        %v6797 = vunpack.c.l.b16 %v6353
        %v6798 = vunpack.c.h.b16 %v6353
        %v6799 = vunpack.c.l.b16 %v6354
        %v6800 = vunpack.c.h.b16 %v6354
        %v6801 = vunpack.c.l.b16 %v6355
        %v6802 = vunpack.c.h.b16 %v6355
        %v6803 = vunpack.c.l.b16 %v6356
        %v6804 = vunpack.c.h.b16 %v6356
        %v6805 = vunpack.c.l.b16 %v6357
        %v6806 = vunpack.c.h.b16 %v6357
        %v6807 = vunpack.c.l.b16 %v6358
        %v6808 = vunpack.c.h.b16 %v6358
        %v6809 = vunpack.c.l.b16 %v6359
        %v6810 = vunpack.c.h.b16 %v6359
        %v6811 = vunpack.c.l.b16 %v6360
        %v6812 = vunpack.c.h.b16 %v6360
        %v6813 = vunpack.c.l.b16 %v6361
        %v6814 = vunpack.c.h.b16 %v6361
        %v6815 = vunpack.c.l.b16 %v6362
        %v6816 = vunpack.c.h.b16 %v6362
        %v6817 = vunpack.c.l.b16 %v6363
        %v6818 = vunpack.c.h.b16 %v6363
        %v6819 = vunpack.c.l.b16 %v6364
        %v6820 = vunpack.c.h.b16 %v6364
        %v6821 = vpack.c.b16 %v6597, %v6565
        %v6822 = vpack.c.b16 %v6598, %v6566
        %v6823 = vpack.c.b16 %v6599, %v6567
        %v6824 = vpack.c.b16 %v6600, %v6568
        %v6825 = vpack.c.b16 %v6601, %v6569
        %v6826 = vpack.c.b16 %v6602, %v6570
        %v6827 = vpack.c.b16 %v6603, %v6571
        %v6828 = vpack.c.b16 %v6604, %v6572
        %v6829 = vpack.c.b16 %v6605, %v6573
        %v6830 = vpack.c.b16 %v6606, %v6574
        %v6831 = vpack.c.b16 %v6607, %v6575
        %v6832 = vpack.c.b16 %v6608, %v6576
        %v6833 = vpack.c.b16 %v6609, %v6577
        %v6834 = vpack.c.b16 %v6610, %v6578
        %v6835 = vpack.c.b16 %v6611, %v6579
        %v6836 = vpack.c.b16 %v6612, %v6580
        %v6837 = vpack.c.b16 %v6613, %v6581
        %v6838 = vpack.c.b16 %v6614, %v6582
        %v6839 = vpack.c.b16 %v6615, %v6583
        %v6840 = vpack.c.b16 %v6616, %v6584
        %v6841 = vpack.c.b16 %v6617, %v6585
        %v6842 = vpack.c.b16 %v6618, %v6586
        %v6843 = vpack.c.b16 %v6619, %v6587
        %v6844 = vpack.c.b16 %v6620, %v6588
        %v6845 = vpack.c.b16 %v6621, %v6589
        %v6846 = vpack.c.b16 %v6622, %v6590
        %v6847 = vpack.c.b16 %v6623, %v6591
        %v6848 = vpack.c.b16 %v6624, %v6592
        %v6849 = vpack.c.b16 %v6625, %v6593
        %v6850 = vpack.c.b16 %v6626, %v6594
        %v6851 = vpack.c.b16 %v6627, %v6595
        %v6852 = vpack.c.b16 %v6628, %v6596
        %v6853 = vpack.c.b16 %v6661, %v6629
        %v6854 = vpack.c.b16 %v6662, %v6630
        %v6855 = vpack.c.b16 %v6663, %v6631
        %v6856 = vpack.c.b16 %v6664, %v6632
        %v6857 = vpack.c.b16 %v6665, %v6633
        %v6858 = vpack.c.b16 %v6666, %v6634
        %v6859 = vpack.c.b16 %v6667, %v6635
        %v6860 = vpack.c.b16 %v6668, %v6636
        %v6861 = vpack.c.b16 %v6669, %v6637
        %v6862 = vpack.c.b16 %v6670, %v6638
        %v6863 = vpack.c.b16 %v6671, %v6639
        %v6864 = vpack.c.b16 %v6672, %v6640
        %v6865 = vpack.c.b16 %v6673, %v6641
        %v6866 = vpack.c.b16 %v6674, %v6642
        %v6867 = vpack.c.b16 %v6675, %v6643
        %v6868 = vpack.c.b16 %v6676, %v6644
        %v6869 = vpack.c.b16 %v6677, %v6645
        %v6870 = vpack.c.b16 %v6678, %v6646
        %v6871 = vpack.c.b16 %v6679, %v6647
        %v6872 = vpack.c.b16 %v6680, %v6648
        %v6873 = vpack.c.b16 %v6681, %v6649
        %v6874 = vpack.c.b16 %v6682, %v6650
        %v6875 = vpack.c.b16 %v6683, %v6651
        %v6876 = vpack.c.b16 %v6684, %v6652
        %v6877 = vpack.c.b16 %v6685, %v6653
        %v6878 = vpack.c.b16 %v6686, %v6654
        %v6879 = vpack.c.b16 %v6687, %v6655
        %v6880 = vpack.c.b16 %v6688, %v6656
        %v6881 = vpack.c.b16 %v6689, %v6657
        %v6882 = vpack.c.b16 %v6690, %v6658
        %v6883 = vpack.c.b16 %v6691, %v6659
        %v6884 = vpack.c.b16 %v6692, %v6660
        %v6885 = vpack.c.b16 %v6725, %v6693
        %v6886 = vpack.c.b16 %v6726, %v6694
        %v6887 = vpack.c.b16 %v6727, %v6695
        %v6888 = vpack.c.b16 %v6728, %v6696
        %v6889 = vpack.c.b16 %v6729, %v6697
        %v6890 = vpack.c.b16 %v6730, %v6698
        %v6891 = vpack.c.b16 %v6731, %v6699
        %v6892 = vpack.c.b16 %v6732, %v6700
        %v6893 = vpack.c.b16 %v6733, %v6701
        %v6894 = vpack.c.b16 %v6734, %v6702
        %v6895 = vpack.c.b16 %v6735, %v6703
        %v6896 = vpack.c.b16 %v6736, %v6704
        %v6897 = vpack.c.b16 %v6737, %v6705
        %v6898 = vpack.c.b16 %v6738, %v6706
        %v6899 = vpack.c.b16 %v6739, %v6707
        %v6900 = vpack.c.b16 %v6740, %v6708
        %v6901 = vpack.c.b16 %v6741, %v6709
        %v6902 = vpack.c.b16 %v6742, %v6710
        %v6903 = vpack.c.b16 %v6743, %v6711
        %v6904 = vpack.c.b16 %v6744, %v6712
        %v6905 = vpack.c.b16 %v6745, %v6713
        %v6906 = vpack.c.b16 %v6746, %v6714
        %v6907 = vpack.c.b16 %v6747, %v6715
        %v6908 = vpack.c.b16 %v6748, %v6716
        %v6909 = vpack.c.b16 %v6749, %v6717
        %v6910 = vpack.c.b16 %v6750, %v6718
        %v6911 = vpack.c.b16 %v6751, %v6719
        %v6912 = vpack.c.b16 %v6752, %v6720
        %v6913 = vpack.c.b16 %v6753, %v6721
        %v6914 = vpack.c.b16 %v6754, %v6722
        %v6915 = vpack.c.b16 %v6755, %v6723
        %v6916 = vpack.c.b16 %v6756, %v6724
        %v6917 = vpack.c.b16 %v6789, %v6757
        %v6918 = vpack.c.b16 %v6790, %v6758
        %v6919 = vpack.c.b16 %v6791, %v6759
        %v6920 = vpack.c.b16 %v6792, %v6760
        %v6921 = vpack.c.b16 %v6793, %v6761
        %v6922 = vpack.c.b16 %v6794, %v6762
        %v6923 = vpack.c.b16 %v6795, %v6763
        %v6924 = vpack.c.b16 %v6796, %v6764
        %v6925 = vpack.c.b16 %v6797, %v6765
        %v6926 = vpack.c.b16 %v6798, %v6766
        %v6927 = vpack.c.b16 %v6799, %v6767
        %v6928 = vpack.c.b16 %v6800, %v6768
        %v6929 = vpack.c.b16 %v6801, %v6769
        %v6930 = vpack.c.b16 %v6802, %v6770
        %v6931 = vpack.c.b16 %v6803, %v6771
        %v6932 = vpack.c.b16 %v6804, %v6772
        %v6933 = vpack.c.b16 %v6805, %v6773
        %v6934 = vpack.c.b16 %v6806, %v6774
        %v6935 = vpack.c.b16 %v6807, %v6775
        %v6936 = vpack.c.b16 %v6808, %v6776
        %v6937 = vpack.c.b16 %v6809, %v6777
        %v6938 = vpack.c.b16 %v6810, %v6778
        %v6939 = vpack.c.b16 %v6811, %v6779
        %v6940 = vpack.c.b16 %v6812, %v6780
        %v6941 = vpack.c.b16 %v6813, %v6781
        %v6942 = vpack.c.b16 %v6814, %v6782
        %v6943 = vpack.c.b16 %v6815, %v6783
        %v6944 = vpack.c.b16 %v6816, %v6784
        %v6945 = vpack.c.b16 %v6817, %v6785
        %v6946 = vpack.c.b16 %v6818, %v6786
        %v6947 = vpack.c.b16 %v6819, %v6787
        %v6948 = vpack.c.b16 %v6820, %v6788
        %7077 = vmatpush.bf16.msra.mxu0 0
        %7078 = vmatpush.bf16.msra.mxu0 0
        %7079 = vmatpush.bf16.msra.mxu0 0
        %7080 = vmatpush.bf16.msra.mxu0 0
        %7081 = vmatpush.bf16.msra.mxu0 %v6917
        %7082 = vmatpush.bf16.msra.mxu0 %v6885
        %7083 = vmatpush.bf16.msra.mxu0 %v6853
        %7084 = vmatpush.bf16.msra.mxu0 %v6821
        %7085 = vmatmul.bf16.gmra.mxu0 %v4499
        %v7086 = vpop.f32.mrf.mxu0
        %v7087 = vadd.f32 %v6373, %v7086
        %v7088 = vpop.f32.mrf.mxu0
        %7089 = vdwg.mxu0
        %7090 = vmatpush.bf16.msra.mxu0 0
        %7091 = vmatpush.bf16.msra.mxu0 0
        %7092 = vmatpush.bf16.msra.mxu0 0
        %7093 = vmatpush.bf16.msra.mxu0 0
        %7094 = vmatpush.bf16.msra.mxu0 %v6918
        %7095 = vmatpush.bf16.msra.mxu0 %v6886
        %7096 = vmatpush.bf16.msra.mxu0 %v6854
        %7097 = vmatpush.bf16.msra.mxu0 %v6822
        %7098 = vmatmul.bf16.gmra.mxu0 %v4499
        %v7099 = vpop.f32.mrf.mxu0
        %v7100 = vadd.f32 %v6374, %v7099
        %v7101 = vpop.f32.mrf.mxu0
        %7102 = vdwg.mxu0
        %7103 = vmatpush.bf16.msra.mxu0 0
        %7104 = vmatpush.bf16.msra.mxu0 0
        %7105 = vmatpush.bf16.msra.mxu0 0
        %7106 = vmatpush.bf16.msra.mxu0 0
        %7107 = vmatpush.bf16.msra.mxu0 %v6919
        %7108 = vmatpush.bf16.msra.mxu0 %v6887
        %7109 = vmatpush.bf16.msra.mxu0 %v6855
        %7110 = vmatpush.bf16.msra.mxu0 %v6823
        %7111 = vmatmul.bf16.gmra.mxu0 %v4499
        %v7112 = vpop.f32.mrf.mxu0
        %v7113 = vadd.f32 %v6375, %v7112
        %v7114 = vpop.f32.mrf.mxu0
        %7115 = vdwg.mxu0
        %7116 = vmatpush.bf16.msra.mxu0 0
        %7117 = vmatpush.bf16.msra.mxu0 0
        %7118 = vmatpush.bf16.msra.mxu0 0
        %7119 = vmatpush.bf16.msra.mxu0 0
        %7120 = vmatpush.bf16.msra.mxu0 %v6920
        %7121 = vmatpush.bf16.msra.mxu0 %v6888
        %7122 = vmatpush.bf16.msra.mxu0 %v6856
        %7123 = vmatpush.bf16.msra.mxu0 %v6824
        %7124 = vmatmul.bf16.gmra.mxu0 %v4499
        %v7125 = vpop.f32.mrf.mxu0
        %v7126 = vadd.f32 %v6376, %v7125
        %v7127 = vpop.f32.mrf.mxu0
        %7128 = vdwg.mxu0
        %7129 = vmatpush.bf16.msra.mxu0 0
        %7130 = vmatpush.bf16.msra.mxu0 0
        %7131 = vmatpush.bf16.msra.mxu0 0
        %7132 = vmatpush.bf16.msra.mxu0 0
        %7133 = vmatpush.bf16.msra.mxu0 %v6921
        %7134 = vmatpush.bf16.msra.mxu0 %v6889
        %7135 = vmatpush.bf16.msra.mxu0 %v6857
        %7136 = vmatpush.bf16.msra.mxu0 %v6825
        %7137 = vmatmul.bf16.gmra.mxu0 %v4499
        %v7138 = vpop.f32.mrf.mxu0
        %v7139 = vadd.f32 %v6377, %v7138
        %v7140 = vpop.f32.mrf.mxu0
        %7141 = vdwg.mxu0
        %7142 = vmatpush.bf16.msra.mxu0 0
        %7143 = vmatpush.bf16.msra.mxu0 0
        %7144 = vmatpush.bf16.msra.mxu0 0
        %7145 = vmatpush.bf16.msra.mxu0 0
        %7146 = vmatpush.bf16.msra.mxu0 %v6922
        %7147 = vmatpush.bf16.msra.mxu0 %v6890
        %7148 = vmatpush.bf16.msra.mxu0 %v6858
        %7149 = vmatpush.bf16.msra.mxu0 %v6826
        %7150 = vmatmul.bf16.gmra.mxu0 %v4499
        %v7151 = vpop.f32.mrf.mxu0
        %v7152 = vadd.f32 %v6378, %v7151
        %v7153 = vpop.f32.mrf.mxu0
        %7154 = vdwg.mxu0
        %7155 = vmatpush.bf16.msra.mxu0 0
        %7156 = vmatpush.bf16.msra.mxu0 0
        %7157 = vmatpush.bf16.msra.mxu0 0
        %7158 = vmatpush.bf16.msra.mxu0 0
        %7159 = vmatpush.bf16.msra.mxu0 %v6923
        %7160 = vmatpush.bf16.msra.mxu0 %v6891
        %7161 = vmatpush.bf16.msra.mxu0 %v6859
        %7162 = vmatpush.bf16.msra.mxu0 %v6827
        %7163 = vmatmul.bf16.gmra.mxu0 %v4499
        %v7164 = vpop.f32.mrf.mxu0
        %v7165 = vadd.f32 %v6379, %v7164
        %v7166 = vpop.f32.mrf.mxu0
        %7167 = vdwg.mxu0
        %7168 = vmatpush.bf16.msra.mxu0 0
        %7169 = vmatpush.bf16.msra.mxu0 0
        %7170 = vmatpush.bf16.msra.mxu0 0
        %7171 = vmatpush.bf16.msra.mxu0 0
        %7172 = vmatpush.bf16.msra.mxu0 %v6924
        %7173 = vmatpush.bf16.msra.mxu0 %v6892
        %7174 = vmatpush.bf16.msra.mxu0 %v6860
        %7175 = vmatpush.bf16.msra.mxu0 %v6828
        %7176 = vmatmul.bf16.gmra.mxu0 %v4499
        %v7177 = vpop.f32.mrf.mxu0
        %v7178 = vadd.f32 %v6380, %v7177
        %v7179 = vpop.f32.mrf.mxu0
        %7180 = vdwg.mxu0
        %7181 = vmatpush.bf16.msra.mxu0 0
        %7182 = vmatpush.bf16.msra.mxu0 0
        %7183 = vmatpush.bf16.msra.mxu0 0
        %7184 = vmatpush.bf16.msra.mxu0 0
        %7185 = vmatpush.bf16.msra.mxu0 %v6925
        %7186 = vmatpush.bf16.msra.mxu0 %v6893
        %7187 = vmatpush.bf16.msra.mxu0 %v6861
        %7188 = vmatpush.bf16.msra.mxu0 %v6829
        %7189 = vmatmul.bf16.gmra.mxu0 %v4499
        %v7190 = vpop.f32.mrf.mxu0
        %v7191 = vadd.f32 %v6381, %v7190
        %v7192 = vpop.f32.mrf.mxu0
        %7193 = vdwg.mxu0
        %7194 = vmatpush.bf16.msra.mxu0 0
        %7195 = vmatpush.bf16.msra.mxu0 0
        %7196 = vmatpush.bf16.msra.mxu0 0
        %7197 = vmatpush.bf16.msra.mxu0 0
        %7198 = vmatpush.bf16.msra.mxu0 %v6926
        %7199 = vmatpush.bf16.msra.mxu0 %v6894
        %7200 = vmatpush.bf16.msra.mxu0 %v6862
        %7201 = vmatpush.bf16.msra.mxu0 %v6830
        %7202 = vmatmul.bf16.gmra.mxu0 %v4499
        %v7203 = vpop.f32.mrf.mxu0
        %v7204 = vadd.f32 %v6382, %v7203
        %v7205 = vpop.f32.mrf.mxu0
        %7206 = vdwg.mxu0
        %7207 = vmatpush.bf16.msra.mxu0 0
        %7208 = vmatpush.bf16.msra.mxu0 0
        %7209 = vmatpush.bf16.msra.mxu0 0
        %7210 = vmatpush.bf16.msra.mxu0 0
        %7211 = vmatpush.bf16.msra.mxu0 %v6927
        %7212 = vmatpush.bf16.msra.mxu0 %v6895
        %7213 = vmatpush.bf16.msra.mxu0 %v6863
        %7214 = vmatpush.bf16.msra.mxu0 %v6831
        %7215 = vmatmul.bf16.gmra.mxu0 %v4499
        %v7216 = vpop.f32.mrf.mxu0
        %v7217 = vadd.f32 %v6383, %v7216
        %v7218 = vpop.f32.mrf.mxu0
        %7219 = vdwg.mxu0
        %7220 = vmatpush.bf16.msra.mxu0 0
        %7221 = vmatpush.bf16.msra.mxu0 0
        %7222 = vmatpush.bf16.msra.mxu0 0
        %7223 = vmatpush.bf16.msra.mxu0 0
        %7224 = vmatpush.bf16.msra.mxu0 %v6928
        %7225 = vmatpush.bf16.msra.mxu0 %v6896
        %7226 = vmatpush.bf16.msra.mxu0 %v6864
        %7227 = vmatpush.bf16.msra.mxu0 %v6832
        %7228 = vmatmul.bf16.gmra.mxu0 %v4499
        %v7229 = vpop.f32.mrf.mxu0
        %v7230 = vadd.f32 %v6384, %v7229
        %v7231 = vpop.f32.mrf.mxu0
        %7232 = vdwg.mxu0
        %7233 = vmatpush.bf16.msra.mxu0 0
        %7234 = vmatpush.bf16.msra.mxu0 0
        %7235 = vmatpush.bf16.msra.mxu0 0
        %7236 = vmatpush.bf16.msra.mxu0 0
        %7237 = vmatpush.bf16.msra.mxu0 %v6929
        %7238 = vmatpush.bf16.msra.mxu0 %v6897
        %7239 = vmatpush.bf16.msra.mxu0 %v6865
        %7240 = vmatpush.bf16.msra.mxu0 %v6833
        %7241 = vmatmul.bf16.gmra.mxu0 %v4499
        %v7242 = vpop.f32.mrf.mxu0
        %v7243 = vadd.f32 %v6385, %v7242
        %v7244 = vpop.f32.mrf.mxu0
        %7245 = vdwg.mxu0
        %7246 = vmatpush.bf16.msra.mxu0 0
        %7247 = vmatpush.bf16.msra.mxu0 0
        %7248 = vmatpush.bf16.msra.mxu0 0
        %7249 = vmatpush.bf16.msra.mxu0 0
        %7250 = vmatpush.bf16.msra.mxu0 %v6930
        %7251 = vmatpush.bf16.msra.mxu0 %v6898
        %7252 = vmatpush.bf16.msra.mxu0 %v6866
        %7253 = vmatpush.bf16.msra.mxu0 %v6834
        %7254 = vmatmul.bf16.gmra.mxu0 %v4499
        %v7255 = vpop.f32.mrf.mxu0
        %v7256 = vadd.f32 %v6386, %v7255
        %v7257 = vpop.f32.mrf.mxu0
        %7258 = vdwg.mxu0
        %7259 = vmatpush.bf16.msra.mxu0 0
        %7260 = vmatpush.bf16.msra.mxu0 0
        %7261 = vmatpush.bf16.msra.mxu0 0
        %7262 = vmatpush.bf16.msra.mxu0 0
        %7263 = vmatpush.bf16.msra.mxu0 %v6931
        %7264 = vmatpush.bf16.msra.mxu0 %v6899
        %7265 = vmatpush.bf16.msra.mxu0 %v6867
        %7266 = vmatpush.bf16.msra.mxu0 %v6835
        %7267 = vmatmul.bf16.gmra.mxu0 %v4499
        %v7268 = vpop.f32.mrf.mxu0
        %v7269 = vadd.f32 %v6387, %v7268
        %v7270 = vpop.f32.mrf.mxu0
        %7271 = vdwg.mxu0
        %7272 = vmatpush.bf16.msra.mxu0 0
        %7273 = vmatpush.bf16.msra.mxu0 0
        %7274 = vmatpush.bf16.msra.mxu0 0
        %7275 = vmatpush.bf16.msra.mxu0 0
        %7276 = vmatpush.bf16.msra.mxu0 %v6932
        %7277 = vmatpush.bf16.msra.mxu0 %v6900
        %7278 = vmatpush.bf16.msra.mxu0 %v6868
        %7279 = vmatpush.bf16.msra.mxu0 %v6836
        %7280 = vmatmul.bf16.gmra.mxu0 %v4499
        %v7281 = vpop.f32.mrf.mxu0
        %v7282 = vadd.f32 %v6388, %v7281
        %v7283 = vpop.f32.mrf.mxu0
        %7284 = vdwg.mxu0
        %7285 = vmatpush.bf16.msra.mxu0 0
        %7286 = vmatpush.bf16.msra.mxu0 0
        %7287 = vmatpush.bf16.msra.mxu0 0
        %7288 = vmatpush.bf16.msra.mxu0 0
        %7289 = vmatpush.bf16.msra.mxu0 %v6933
        %7290 = vmatpush.bf16.msra.mxu0 %v6901
        %7291 = vmatpush.bf16.msra.mxu0 %v6869
        %7292 = vmatpush.bf16.msra.mxu0 %v6837
        %7293 = vmatmul.bf16.gmra.mxu0 %v4499
        %v7294 = vpop.f32.mrf.mxu0
        %v7295 = vadd.f32 %v6389, %v7294
        %v7296 = vpop.f32.mrf.mxu0
        %7297 = vdwg.mxu0
        %7298 = vmatpush.bf16.msra.mxu0 0
        %7299 = vmatpush.bf16.msra.mxu0 0
        %7300 = vmatpush.bf16.msra.mxu0 0
        %7301 = vmatpush.bf16.msra.mxu0 0
        %7302 = vmatpush.bf16.msra.mxu0 %v6934
        %7303 = vmatpush.bf16.msra.mxu0 %v6902
        %7304 = vmatpush.bf16.msra.mxu0 %v6870
        %7305 = vmatpush.bf16.msra.mxu0 %v6838
        %7306 = vmatmul.bf16.gmra.mxu0 %v4499
        %v7307 = vpop.f32.mrf.mxu0
        %v7308 = vadd.f32 %v6390, %v7307
        %v7309 = vpop.f32.mrf.mxu0
        %7310 = vdwg.mxu0
        %7311 = vmatpush.bf16.msra.mxu0 0
        %7312 = vmatpush.bf16.msra.mxu0 0
        %7313 = vmatpush.bf16.msra.mxu0 0
        %7314 = vmatpush.bf16.msra.mxu0 0
        %7315 = vmatpush.bf16.msra.mxu0 %v6935
        %7316 = vmatpush.bf16.msra.mxu0 %v6903
        %7317 = vmatpush.bf16.msra.mxu0 %v6871
        %7318 = vmatpush.bf16.msra.mxu0 %v6839
        %7319 = vmatmul.bf16.gmra.mxu0 %v4499
        %v7320 = vpop.f32.mrf.mxu0
        %v7321 = vadd.f32 %v6391, %v7320
        %v7322 = vpop.f32.mrf.mxu0
        %7323 = vdwg.mxu0
        %7324 = vmatpush.bf16.msra.mxu0 0
        %7325 = vmatpush.bf16.msra.mxu0 0
        %7326 = vmatpush.bf16.msra.mxu0 0
        %7327 = vmatpush.bf16.msra.mxu0 0
        %7328 = vmatpush.bf16.msra.mxu0 %v6936
        %7329 = vmatpush.bf16.msra.mxu0 %v6904
        %7330 = vmatpush.bf16.msra.mxu0 %v6872
        %7331 = vmatpush.bf16.msra.mxu0 %v6840
        %7332 = vmatmul.bf16.gmra.mxu0 %v4499
        %v7333 = vpop.f32.mrf.mxu0
        %v7334 = vadd.f32 %v6392, %v7333
        %v7335 = vpop.f32.mrf.mxu0
        %7336 = vdwg.mxu0
        %7337 = vmatpush.bf16.msra.mxu0 0
        %7338 = vmatpush.bf16.msra.mxu0 0
        %7339 = vmatpush.bf16.msra.mxu0 0
        %7340 = vmatpush.bf16.msra.mxu0 0
        %7341 = vmatpush.bf16.msra.mxu0 %v6937
        %7342 = vmatpush.bf16.msra.mxu0 %v6905
        %7343 = vmatpush.bf16.msra.mxu0 %v6873
        %7344 = vmatpush.bf16.msra.mxu0 %v6841
        %7345 = vmatmul.bf16.gmra.mxu0 %v4499
        %v7346 = vpop.f32.mrf.mxu0
        %v7347 = vadd.f32 %v6393, %v7346
        %v7348 = vpop.f32.mrf.mxu0
        %7349 = vdwg.mxu0
        %7350 = vmatpush.bf16.msra.mxu0 0
        %7351 = vmatpush.bf16.msra.mxu0 0
        %7352 = vmatpush.bf16.msra.mxu0 0
        %7353 = vmatpush.bf16.msra.mxu0 0
        %7354 = vmatpush.bf16.msra.mxu0 %v6938
        %7355 = vmatpush.bf16.msra.mxu0 %v6906
        %7356 = vmatpush.bf16.msra.mxu0 %v6874
        %7357 = vmatpush.bf16.msra.mxu0 %v6842
        %7358 = vmatmul.bf16.gmra.mxu0 %v4499
        %v7359 = vpop.f32.mrf.mxu0
        %v7360 = vadd.f32 %v6394, %v7359
        %v7361 = vpop.f32.mrf.mxu0
        %7362 = vdwg.mxu0
        %7363 = vmatpush.bf16.msra.mxu0 0
        %7364 = vmatpush.bf16.msra.mxu0 0
        %7365 = vmatpush.bf16.msra.mxu0 0
        %7366 = vmatpush.bf16.msra.mxu0 0
        %7367 = vmatpush.bf16.msra.mxu0 %v6939
        %7368 = vmatpush.bf16.msra.mxu0 %v6907
        %7369 = vmatpush.bf16.msra.mxu0 %v6875
        %7370 = vmatpush.bf16.msra.mxu0 %v6843
        %7371 = vmatmul.bf16.gmra.mxu0 %v4499
        %v7372 = vpop.f32.mrf.mxu0
        %v7373 = vadd.f32 %v6395, %v7372
        %v7374 = vpop.f32.mrf.mxu0
        %7375 = vdwg.mxu0
        %7376 = vmatpush.bf16.msra.mxu0 0
        %7377 = vmatpush.bf16.msra.mxu0 0
        %7378 = vmatpush.bf16.msra.mxu0 0
        %7379 = vmatpush.bf16.msra.mxu0 0
        %7380 = vmatpush.bf16.msra.mxu0 %v6940
        %7381 = vmatpush.bf16.msra.mxu0 %v6908
        %7382 = vmatpush.bf16.msra.mxu0 %v6876
        %7383 = vmatpush.bf16.msra.mxu0 %v6844
        %7384 = vmatmul.bf16.gmra.mxu0 %v4499
        %v7385 = vpop.f32.mrf.mxu0
        %v7386 = vadd.f32 %v6396, %v7385
        %v7387 = vpop.f32.mrf.mxu0
        %7388 = vdwg.mxu0
        %7389 = vmatpush.bf16.msra.mxu0 0
        %7390 = vmatpush.bf16.msra.mxu0 0
        %7391 = vmatpush.bf16.msra.mxu0 0
        %7392 = vmatpush.bf16.msra.mxu0 0
        %7393 = vmatpush.bf16.msra.mxu0 %v6941
        %7394 = vmatpush.bf16.msra.mxu0 %v6909
        %7395 = vmatpush.bf16.msra.mxu0 %v6877
        %7396 = vmatpush.bf16.msra.mxu0 %v6845
        %7397 = vmatmul.bf16.gmra.mxu0 %v4499
        %v7398 = vpop.f32.mrf.mxu0
        %v7399 = vadd.f32 %v6397, %v7398
        %v7400 = vpop.f32.mrf.mxu0
        %7401 = vdwg.mxu0
        %7402 = vmatpush.bf16.msra.mxu0 0
        %7403 = vmatpush.bf16.msra.mxu0 0
        %7404 = vmatpush.bf16.msra.mxu0 0
        %7405 = vmatpush.bf16.msra.mxu0 0
        %7406 = vmatpush.bf16.msra.mxu0 %v6942
        %7407 = vmatpush.bf16.msra.mxu0 %v6910
        %7408 = vmatpush.bf16.msra.mxu0 %v6878
        %7409 = vmatpush.bf16.msra.mxu0 %v6846
        %7410 = vmatmul.bf16.gmra.mxu0 %v4499
        %v7411 = vpop.f32.mrf.mxu0
        %v7412 = vadd.f32 %v6398, %v7411
        %v7413 = vpop.f32.mrf.mxu0
        %7414 = vdwg.mxu0
        %7415 = vmatpush.bf16.msra.mxu0 0
        %7416 = vmatpush.bf16.msra.mxu0 0
        %7417 = vmatpush.bf16.msra.mxu0 0
        %7418 = vmatpush.bf16.msra.mxu0 0
        %7419 = vmatpush.bf16.msra.mxu0 %v6943
        %7420 = vmatpush.bf16.msra.mxu0 %v6911
        %7421 = vmatpush.bf16.msra.mxu0 %v6879
        %7422 = vmatpush.bf16.msra.mxu0 %v6847
        %7423 = vmatmul.bf16.gmra.mxu0 %v4499
        %v7424 = vpop.f32.mrf.mxu0
        %v7425 = vadd.f32 %v6399, %v7424
        %v7426 = vpop.f32.mrf.mxu0
        %7427 = vdwg.mxu0
        %7428 = vmatpush.bf16.msra.mxu0 0
        %7429 = vmatpush.bf16.msra.mxu0 0
        %7430 = vmatpush.bf16.msra.mxu0 0
        %7431 = vmatpush.bf16.msra.mxu0 0
        %7432 = vmatpush.bf16.msra.mxu0 %v6944
        %7433 = vmatpush.bf16.msra.mxu0 %v6912
        %7434 = vmatpush.bf16.msra.mxu0 %v6880
        %7435 = vmatpush.bf16.msra.mxu0 %v6848
        %7436 = vmatmul.bf16.gmra.mxu0 %v4499
        %v7437 = vpop.f32.mrf.mxu0
        %v7438 = vadd.f32 %v6400, %v7437
        %v7439 = vpop.f32.mrf.mxu0
        %7440 = vdwg.mxu0
        %7441 = vmatpush.bf16.msra.mxu0 0
        %7442 = vmatpush.bf16.msra.mxu0 0
        %7443 = vmatpush.bf16.msra.mxu0 0
        %7444 = vmatpush.bf16.msra.mxu0 0
        %7445 = vmatpush.bf16.msra.mxu0 %v6945
        %7446 = vmatpush.bf16.msra.mxu0 %v6913
        %7447 = vmatpush.bf16.msra.mxu0 %v6881
        %7448 = vmatpush.bf16.msra.mxu0 %v6849
        %7449 = vmatmul.bf16.gmra.mxu0 %v4499
        %v7450 = vpop.f32.mrf.mxu0
        %v7451 = vadd.f32 %v6401, %v7450
        %v7452 = vpop.f32.mrf.mxu0
        %7453 = vdwg.mxu0
        %7454 = vmatpush.bf16.msra.mxu0 0
        %7455 = vmatpush.bf16.msra.mxu0 0
        %7456 = vmatpush.bf16.msra.mxu0 0
        %7457 = vmatpush.bf16.msra.mxu0 0
        %7458 = vmatpush.bf16.msra.mxu0 %v6946
        %7459 = vmatpush.bf16.msra.mxu0 %v6914
        %7460 = vmatpush.bf16.msra.mxu0 %v6882
        %7461 = vmatpush.bf16.msra.mxu0 %v6850
        %7462 = vmatmul.bf16.gmra.mxu0 %v4499
        %v7463 = vpop.f32.mrf.mxu0
        %v7464 = vadd.f32 %v6402, %v7463
        %v7465 = vpop.f32.mrf.mxu0
        %7466 = vdwg.mxu0
        %7467 = vmatpush.bf16.msra.mxu0 0
        %7468 = vmatpush.bf16.msra.mxu0 0
        %7469 = vmatpush.bf16.msra.mxu0 0
        %7470 = vmatpush.bf16.msra.mxu0 0
        %7471 = vmatpush.bf16.msra.mxu0 %v6947
        %7472 = vmatpush.bf16.msra.mxu0 %v6915
        %7473 = vmatpush.bf16.msra.mxu0 %v6883
        %7474 = vmatpush.bf16.msra.mxu0 %v6851
        %7475 = vmatmul.bf16.gmra.mxu0 %v4499
        %v7476 = vpop.f32.mrf.mxu0
        %v7477 = vadd.f32 %v6403, %v7476
        %v7478 = vpop.f32.mrf.mxu0
        %7479 = vdwg.mxu0
        %7480 = vmatpush.bf16.msra.mxu0 0
        %7481 = vmatpush.bf16.msra.mxu0 0
        %7482 = vmatpush.bf16.msra.mxu0 0
        %7483 = vmatpush.bf16.msra.mxu0 0
        %7484 = vmatpush.bf16.msra.mxu0 %v6948
        %7485 = vmatpush.bf16.msra.mxu0 %v6916
        %7486 = vmatpush.bf16.msra.mxu0 %v6884
        %7487 = vmatpush.bf16.msra.mxu0 %v6852
        %7488 = vmatmul.bf16.gmra.mxu0 %v4499
        %v7489 = vpop.f32.mrf.mxu0
        %v7490 = vadd.f32 %v6404, %v7489
        %v7491 = vpop.f32.mrf.mxu0
        %7492 = vdwg.mxu0
        %7493 = vst [vmem:[%s768 + $0x200] sm:$0xff] %v7087
        %7494 = vst [vmem:[%s768 + $0x208] sm:$0xff] %v7100
        %7495 = vst [vmem:[%s768 + $0x210] sm:$0xff] %v7113
        %7496 = vst [vmem:[%s768 + $0x218] sm:$0xff] %v7126
        %7497 = vst [vmem:[%s768 + $0x220] sm:$0xff] %v7139
        %7498 = vst [vmem:[%s768 + $0x228] sm:$0xff] %v7152
        %7499 = vst [vmem:[%s768 + $0x230] sm:$0xff] %v7165
        %7500 = vst [vmem:[%s768 + $0x238] sm:$0xff] %v7178
        %7501 = vst [vmem:[%s768 + $0x240] sm:$0xff] %v7191
        %7502 = vst [vmem:[%s768 + $0x248] sm:$0xff] %v7204
        %7503 = vst [vmem:[%s768 + $0x250] sm:$0xff] %v7217
        %7504 = vst [vmem:[%s768 + $0x258] sm:$0xff] %v7230
        %7505 = vst [vmem:[%s768 + $0x260] sm:$0xff] %v7243
        %7506 = vst [vmem:[%s768 + $0x268] sm:$0xff] %v7256
        %7507 = vst [vmem:[%s768 + $0x270] sm:$0xff] %v7269
        %7508 = vst [vmem:[%s768 + $0x278] sm:$0xff] %v7282
        %7509 = vst [vmem:[%s768 + $0x280] sm:$0xff] %v7295
        %7510 = vst [vmem:[%s768 + $0x288] sm:$0xff] %v7308
        %7511 = vst [vmem:[%s768 + $0x290] sm:$0xff] %v7321
        %7512 = vst [vmem:[%s768 + $0x298] sm:$0xff] %v7334
        %7513 = vst [vmem:[%s768 + $0x2a0] sm:$0xff] %v7347
        %7514 = vst [vmem:[%s768 + $0x2a8] sm:$0xff] %v7360
        %7515 = vst [vmem:[%s768 + $0x2b0] sm:$0xff] %v7373
        %7516 = vst [vmem:[%s768 + $0x2b8] sm:$0xff] %v7386
        %7517 = vst [vmem:[%s768 + $0x2c0] sm:$0xff] %v7399
        %7518 = vst [vmem:[%s768 + $0x2c8] sm:$0xff] %v7412
        %7519 = vst [vmem:[%s768 + $0x2d0] sm:$0xff] %v7425
        %7520 = vst [vmem:[%s768 + $0x2d8] sm:$0xff] %v7438
        %7521 = vst [vmem:[%s768 + $0x2e0] sm:$0xff] %v7451
        %7522 = vst [vmem:[%s768 + $0x2e8] sm:$0xff] %v7464
        %7523 = vst [vmem:[%s768 + $0x2f0] sm:$0xff] %v7477
        %7524 = vst [vmem:[%s768 + $0x2f8] sm:$0xff] %v7490
        %v7525 = vld [vmem:[%s23 + $0x180] sm:$0xff]
        %v7526 = vld [vmem:[%s23 + $0x188] sm:$0xff]
        %v7527 = vld [vmem:[%s23 + $0x190] sm:$0xff]
        %v7528 = vld [vmem:[%s23 + $0x198] sm:$0xff]
        %v7529 = vld [vmem:[%s23 + $0x1a0] sm:$0xff]
        %v7530 = vld [vmem:[%s23 + $0x1a8] sm:$0xff]
        %v7531 = vld [vmem:[%s23 + $0x1b0] sm:$0xff]
        %v7532 = vld [vmem:[%s23 + $0x1b8] sm:$0xff]
        %v7533 = vld [vmem:[%s23 + $0x1c0] sm:$0xff]
        %v7534 = vld [vmem:[%s23 + $0x1c8] sm:$0xff]
        %v7535 = vld [vmem:[%s23 + $0x1d0] sm:$0xff]
        %v7536 = vld [vmem:[%s23 + $0x1d8] sm:$0xff]
        %v7537 = vld [vmem:[%s23 + $0x1e0] sm:$0xff]
        %v7538 = vld [vmem:[%s23 + $0x1e8] sm:$0xff]
        %v7539 = vld [vmem:[%s23 + $0x1f0] sm:$0xff]
        %v7540 = vld [vmem:[%s23 + $0x1f8] sm:$0xff]
        %v7541 = vld [vmem:[%s23 + $0x380] sm:$0xff]
        %v7542 = vld [vmem:[%s23 + $0x388] sm:$0xff]
        %v7543 = vld [vmem:[%s23 + $0x390] sm:$0xff]
        %v7544 = vld [vmem:[%s23 + $0x398] sm:$0xff]
        %v7545 = vld [vmem:[%s23 + $0x3a0] sm:$0xff]
        %v7546 = vld [vmem:[%s23 + $0x3a8] sm:$0xff]
        %v7547 = vld [vmem:[%s23 + $0x3b0] sm:$0xff]
        %v7548 = vld [vmem:[%s23 + $0x3b8] sm:$0xff]
        %v7549 = vld [vmem:[%s23 + $0x3c0] sm:$0xff]
        %v7550 = vld [vmem:[%s23 + $0x3c8] sm:$0xff]
        %v7551 = vld [vmem:[%s23 + $0x3d0] sm:$0xff]
        %v7552 = vld [vmem:[%s23 + $0x3d8] sm:$0xff]
        %v7553 = vld [vmem:[%s23 + $0x3e0] sm:$0xff]
        %v7554 = vld [vmem:[%s23 + $0x3e8] sm:$0xff]
        %v7555 = vld [vmem:[%s23 + $0x3f0] sm:$0xff]
        %v7556 = vld [vmem:[%s23 + $0x3f8] sm:$0xff]
        %v7557 = vld [vmem:[%s23 + $0x580] sm:$0xff]
        %v7558 = vld [vmem:[%s23 + $0x588] sm:$0xff]
        %v7559 = vld [vmem:[%s23 + $0x590] sm:$0xff]
        %v7560 = vld [vmem:[%s23 + $0x598] sm:$0xff]
        %v7561 = vld [vmem:[%s23 + $0x5a0] sm:$0xff]
        %v7562 = vld [vmem:[%s23 + $0x5a8] sm:$0xff]
        %v7563 = vld [vmem:[%s23 + $0x5b0] sm:$0xff]
        %v7564 = vld [vmem:[%s23 + $0x5b8] sm:$0xff]
        %v7565 = vld [vmem:[%s23 + $0x5c0] sm:$0xff]
        %v7566 = vld [vmem:[%s23 + $0x5c8] sm:$0xff]
        %v7567 = vld [vmem:[%s23 + $0x5d0] sm:$0xff]
        %v7568 = vld [vmem:[%s23 + $0x5d8] sm:$0xff]
        %v7569 = vld [vmem:[%s23 + $0x5e0] sm:$0xff]
        %v7570 = vld [vmem:[%s23 + $0x5e8] sm:$0xff]
        %v7571 = vld [vmem:[%s23 + $0x5f0] sm:$0xff]
        %v7572 = vld [vmem:[%s23 + $0x5f8] sm:$0xff]
        %v7573 = vld [vmem:[%s23 + $0x780] sm:$0xff]
        %v7574 = vld [vmem:[%s23 + $0x788] sm:$0xff]
        %v7575 = vld [vmem:[%s23 + $0x790] sm:$0xff]
        %v7576 = vld [vmem:[%s23 + $0x798] sm:$0xff]
        %v7577 = vld [vmem:[%s23 + $0x7a0] sm:$0xff]
        %v7578 = vld [vmem:[%s23 + $0x7a8] sm:$0xff]
        %v7579 = vld [vmem:[%s23 + $0x7b0] sm:$0xff]
        %v7580 = vld [vmem:[%s23 + $0x7b8] sm:$0xff]
        %v7581 = vld [vmem:[%s23 + $0x7c0] sm:$0xff]
        %v7582 = vld [vmem:[%s23 + $0x7c8] sm:$0xff]
        %v7583 = vld [vmem:[%s23 + $0x7d0] sm:$0xff]
        %v7584 = vld [vmem:[%s23 + $0x7d8] sm:$0xff]
        %v7585 = vld [vmem:[%s23 + $0x7e0] sm:$0xff]
        %v7586 = vld [vmem:[%s23 + $0x7e8] sm:$0xff]
        %v7587 = vld [vmem:[%s23 + $0x7f0] sm:$0xff]
        %v7588 = vld [vmem:[%s23 + $0x7f8] sm:$0xff]
        %v7589 = vld [vmem:[%s23 + $0x980] sm:$0xff]
        %v7590 = vld [vmem:[%s23 + $0x988] sm:$0xff]
        %v7591 = vld [vmem:[%s23 + $0x990] sm:$0xff]
        %v7592 = vld [vmem:[%s23 + $0x998] sm:$0xff]
        %v7593 = vld [vmem:[%s23 + $0x9a0] sm:$0xff]
        %v7594 = vld [vmem:[%s23 + $0x9a8] sm:$0xff]
        %v7595 = vld [vmem:[%s23 + $0x9b0] sm:$0xff]
        %v7596 = vld [vmem:[%s23 + $0x9b8] sm:$0xff]
        %v7597 = vld [vmem:[%s23 + $0x9c0] sm:$0xff]
        %v7598 = vld [vmem:[%s23 + $0x9c8] sm:$0xff]
        %v7599 = vld [vmem:[%s23 + $0x9d0] sm:$0xff]
        %v7600 = vld [vmem:[%s23 + $0x9d8] sm:$0xff]
        %v7601 = vld [vmem:[%s23 + $0x9e0] sm:$0xff]
        %v7602 = vld [vmem:[%s23 + $0x9e8] sm:$0xff]
        %v7603 = vld [vmem:[%s23 + $0x9f0] sm:$0xff]
        %v7604 = vld [vmem:[%s23 + $0x9f8] sm:$0xff]
        %v7605 = vld [vmem:[%s23 + $0xb80] sm:$0xff]
        %v7606 = vld [vmem:[%s23 + $0xb88] sm:$0xff]
        %v7607 = vld [vmem:[%s23 + $0xb90] sm:$0xff]
        %v7608 = vld [vmem:[%s23 + $0xb98] sm:$0xff]
        %v7609 = vld [vmem:[%s23 + $0xba0] sm:$0xff]
        %v7610 = vld [vmem:[%s23 + $0xba8] sm:$0xff]
        %v7611 = vld [vmem:[%s23 + $0xbb0] sm:$0xff]
        %v7612 = vld [vmem:[%s23 + $0xbb8] sm:$0xff]
        %v7613 = vld [vmem:[%s23 + $0xbc0] sm:$0xff]
        %v7614 = vld [vmem:[%s23 + $0xbc8] sm:$0xff]
        %v7615 = vld [vmem:[%s23 + $0xbd0] sm:$0xff]
        %v7616 = vld [vmem:[%s23 + $0xbd8] sm:$0xff]
        %v7617 = vld [vmem:[%s23 + $0xbe0] sm:$0xff]
        %v7618 = vld [vmem:[%s23 + $0xbe8] sm:$0xff]
        %v7619 = vld [vmem:[%s23 + $0xbf0] sm:$0xff]
        %v7620 = vld [vmem:[%s23 + $0xbf8] sm:$0xff]
        %v7621 = vld [vmem:[%s23 + $0xd80] sm:$0xff]
        %v7622 = vld [vmem:[%s23 + $0xd88] sm:$0xff]
        %v7623 = vld [vmem:[%s23 + $0xd90] sm:$0xff]
        %v7624 = vld [vmem:[%s23 + $0xd98] sm:$0xff]
        %v7625 = vld [vmem:[%s23 + $0xda0] sm:$0xff]
        %v7626 = vld [vmem:[%s23 + $0xda8] sm:$0xff]
        %v7627 = vld [vmem:[%s23 + $0xdb0] sm:$0xff]
        %v7628 = vld [vmem:[%s23 + $0xdb8] sm:$0xff]
        %v7629 = vld [vmem:[%s23 + $0xdc0] sm:$0xff]
        %v7630 = vld [vmem:[%s23 + $0xdc8] sm:$0xff]
        %v7631 = vld [vmem:[%s23 + $0xdd0] sm:$0xff]
        %v7632 = vld [vmem:[%s23 + $0xdd8] sm:$0xff]
        %v7633 = vld [vmem:[%s23 + $0xde0] sm:$0xff]
        %v7634 = vld [vmem:[%s23 + $0xde8] sm:$0xff]
        %v7635 = vld [vmem:[%s23 + $0xdf0] sm:$0xff]
        %v7636 = vld [vmem:[%s23 + $0xdf8] sm:$0xff]
        %v7637 = vld [vmem:[%s23 + $0xf80] sm:$0xff]
        %v7638 = vld [vmem:[%s23 + $0xf88] sm:$0xff]
        %v7639 = vld [vmem:[%s23 + $0xf90] sm:$0xff]
        %v7640 = vld [vmem:[%s23 + $0xf98] sm:$0xff]
        %v7641 = vld [vmem:[%s23 + $0xfa0] sm:$0xff]
        %v7642 = vld [vmem:[%s23 + $0xfa8] sm:$0xff]
        %v7643 = vld [vmem:[%s23 + $0xfb0] sm:$0xff]
        %v7644 = vld [vmem:[%s23 + $0xfb8] sm:$0xff]
        %v7645 = vld [vmem:[%s23 + $0xfc0] sm:$0xff]
        %v7646 = vld [vmem:[%s23 + $0xfc8] sm:$0xff]
        %v7647 = vld [vmem:[%s23 + $0xfd0] sm:$0xff]
        %v7648 = vld [vmem:[%s23 + $0xfd8] sm:$0xff]
        %v7649 = vld [vmem:[%s23 + $0xfe0] sm:$0xff]
        %v7650 = vld [vmem:[%s23 + $0xfe8] sm:$0xff]
        %v7651 = vld [vmem:[%s23 + $0xff0] sm:$0xff]
        %v7652 = vld [vmem:[%s23 + $0xff8] sm:$0xff]
        %v7653 = vld [vmem:[%s24 + $0x60] sm:$0xff]
        %v7654 = vld [vmem:[%s24 + $0x68] sm:$0xff]
        %v7655 = vld [vmem:[%s24 + $0x70] sm:$0xff]
        %v7656 = vld [vmem:[%s24 + $0x78] sm:$0xff]
        %v7661 = vperm.slane %v7653, 0
        %v7662 = vperm.slane %v7653, 1
        %v7663 = vperm.slane %v7653, 2
        %v7664 = vperm.slane %v7653, 3
        %v7665 = vperm.slane %v7653, 4
        %v7666 = vperm.slane %v7653, 5
        %v7667 = vperm.slane %v7653, 6
        %v7668 = vperm.slane %v7653, 7
        %v7669 = vperm.slane %v7654, 0
        %v7670 = vperm.slane %v7654, 1
        %v7671 = vperm.slane %v7654, 2
        %v7672 = vperm.slane %v7654, 3
        %v7673 = vperm.slane %v7654, 4
        %v7674 = vperm.slane %v7654, 5
        %v7675 = vperm.slane %v7654, 6
        %v7676 = vperm.slane %v7654, 7
        %v7677 = vperm.slane %v7655, 0
        %v7678 = vperm.slane %v7655, 1
        %v7679 = vperm.slane %v7655, 2
        %v7680 = vperm.slane %v7655, 3
        %v7681 = vperm.slane %v7655, 4
        %v7682 = vperm.slane %v7655, 5
        %v7683 = vperm.slane %v7655, 6
        %v7684 = vperm.slane %v7655, 7
        %v7685 = vperm.slane %v7656, 0
        %v7686 = vperm.slane %v7656, 1
        %v7687 = vperm.slane %v7656, 2
        %v7688 = vperm.slane %v7656, 3
        %v7689 = vperm.slane %v7656, 4
        %v7690 = vperm.slane %v7656, 5
        %v7691 = vperm.slane %v7656, 6
        %v7692 = vperm.slane %v7656, 7
        %v7853 = vunpack.c.l.b16 %v7525
        %v7854 = vunpack.c.h.b16 %v7525
        %v7855 = vunpack.c.l.b16 %v7526
        %v7856 = vunpack.c.h.b16 %v7526
        %v7857 = vunpack.c.l.b16 %v7527
        %v7858 = vunpack.c.h.b16 %v7527
        %v7859 = vunpack.c.l.b16 %v7528
        %v7860 = vunpack.c.h.b16 %v7528
        %v7861 = vunpack.c.l.b16 %v7529
        %v7862 = vunpack.c.h.b16 %v7529
        %v7863 = vunpack.c.l.b16 %v7530
        %v7864 = vunpack.c.h.b16 %v7530
        %v7865 = vunpack.c.l.b16 %v7531
        %v7866 = vunpack.c.h.b16 %v7531
        %v7867 = vunpack.c.l.b16 %v7532
        %v7868 = vunpack.c.h.b16 %v7532
        %v7869 = vunpack.c.l.b16 %v7533
        %v7870 = vunpack.c.h.b16 %v7533
        %v7871 = vunpack.c.l.b16 %v7534
        %v7872 = vunpack.c.h.b16 %v7534
        %v7873 = vunpack.c.l.b16 %v7535
        %v7874 = vunpack.c.h.b16 %v7535
        %v7875 = vunpack.c.l.b16 %v7536
        %v7876 = vunpack.c.h.b16 %v7536
        %v7877 = vunpack.c.l.b16 %v7537
        %v7878 = vunpack.c.h.b16 %v7537
        %v7879 = vunpack.c.l.b16 %v7538
        %v7880 = vunpack.c.h.b16 %v7538
        %v7881 = vunpack.c.l.b16 %v7539
        %v7882 = vunpack.c.h.b16 %v7539
        %v7883 = vunpack.c.l.b16 %v7540
        %v7884 = vunpack.c.h.b16 %v7540
        %v7885 = vunpack.c.l.b16 %v7541
        %v7886 = vunpack.c.h.b16 %v7541
        %v7887 = vunpack.c.l.b16 %v7542
        %v7888 = vunpack.c.h.b16 %v7542
        %v7889 = vunpack.c.l.b16 %v7543
        %v7890 = vunpack.c.h.b16 %v7543
        %v7891 = vunpack.c.l.b16 %v7544
        %v7892 = vunpack.c.h.b16 %v7544
        %v7893 = vunpack.c.l.b16 %v7545
        %v7894 = vunpack.c.h.b16 %v7545
        %v7895 = vunpack.c.l.b16 %v7546
        %v7896 = vunpack.c.h.b16 %v7546
        %v7897 = vunpack.c.l.b16 %v7547
        %v7898 = vunpack.c.h.b16 %v7547
        %v7899 = vunpack.c.l.b16 %v7548
        %v7900 = vunpack.c.h.b16 %v7548
        %v7901 = vunpack.c.l.b16 %v7549
        %v7902 = vunpack.c.h.b16 %v7549
        %v7903 = vunpack.c.l.b16 %v7550
        %v7904 = vunpack.c.h.b16 %v7550
        %v7905 = vunpack.c.l.b16 %v7551
        %v7906 = vunpack.c.h.b16 %v7551
        %v7907 = vunpack.c.l.b16 %v7552
        %v7908 = vunpack.c.h.b16 %v7552
        %v7909 = vunpack.c.l.b16 %v7553
        %v7910 = vunpack.c.h.b16 %v7553
        %v7911 = vunpack.c.l.b16 %v7554
        %v7912 = vunpack.c.h.b16 %v7554
        %v7913 = vunpack.c.l.b16 %v7555
        %v7914 = vunpack.c.h.b16 %v7555
        %v7915 = vunpack.c.l.b16 %v7556
        %v7916 = vunpack.c.h.b16 %v7556
        %v7917 = vunpack.c.l.b16 %v7557
        %v7918 = vunpack.c.h.b16 %v7557
        %v7919 = vunpack.c.l.b16 %v7558
        %v7920 = vunpack.c.h.b16 %v7558
        %v7921 = vunpack.c.l.b16 %v7559
        %v7922 = vunpack.c.h.b16 %v7559
        %v7923 = vunpack.c.l.b16 %v7560
        %v7924 = vunpack.c.h.b16 %v7560
        %v7925 = vunpack.c.l.b16 %v7561
        %v7926 = vunpack.c.h.b16 %v7561
        %v7927 = vunpack.c.l.b16 %v7562
        %v7928 = vunpack.c.h.b16 %v7562
        %v7929 = vunpack.c.l.b16 %v7563
        %v7930 = vunpack.c.h.b16 %v7563
        %v7931 = vunpack.c.l.b16 %v7564
        %v7932 = vunpack.c.h.b16 %v7564
        %v7933 = vunpack.c.l.b16 %v7565
        %v7934 = vunpack.c.h.b16 %v7565
        %v7935 = vunpack.c.l.b16 %v7566
        %v7936 = vunpack.c.h.b16 %v7566
        %v7937 = vunpack.c.l.b16 %v7567
        %v7938 = vunpack.c.h.b16 %v7567
        %v7939 = vunpack.c.l.b16 %v7568
        %v7940 = vunpack.c.h.b16 %v7568
        %v7941 = vunpack.c.l.b16 %v7569
        %v7942 = vunpack.c.h.b16 %v7569
        %v7943 = vunpack.c.l.b16 %v7570
        %v7944 = vunpack.c.h.b16 %v7570
        %v7945 = vunpack.c.l.b16 %v7571
        %v7946 = vunpack.c.h.b16 %v7571
        %v7947 = vunpack.c.l.b16 %v7572
        %v7948 = vunpack.c.h.b16 %v7572
        %v7949 = vunpack.c.l.b16 %v7573
        %v7950 = vunpack.c.h.b16 %v7573
        %v7951 = vunpack.c.l.b16 %v7574
        %v7952 = vunpack.c.h.b16 %v7574
        %v7953 = vunpack.c.l.b16 %v7575
        %v7954 = vunpack.c.h.b16 %v7575
        %v7955 = vunpack.c.l.b16 %v7576
        %v7956 = vunpack.c.h.b16 %v7576
        %v7957 = vunpack.c.l.b16 %v7577
        %v7958 = vunpack.c.h.b16 %v7577
        %v7959 = vunpack.c.l.b16 %v7578
        %v7960 = vunpack.c.h.b16 %v7578
        %v7961 = vunpack.c.l.b16 %v7579
        %v7962 = vunpack.c.h.b16 %v7579
        %v7963 = vunpack.c.l.b16 %v7580
        %v7964 = vunpack.c.h.b16 %v7580
        %v7965 = vunpack.c.l.b16 %v7581
        %v7966 = vunpack.c.h.b16 %v7581
        %v7967 = vunpack.c.l.b16 %v7582
        %v7968 = vunpack.c.h.b16 %v7582
        %v7969 = vunpack.c.l.b16 %v7583
        %v7970 = vunpack.c.h.b16 %v7583
        %v7971 = vunpack.c.l.b16 %v7584
        %v7972 = vunpack.c.h.b16 %v7584
        %v7973 = vunpack.c.l.b16 %v7585
        %v7974 = vunpack.c.h.b16 %v7585
        %v7975 = vunpack.c.l.b16 %v7586
        %v7976 = vunpack.c.h.b16 %v7586
        %v7977 = vunpack.c.l.b16 %v7587
        %v7978 = vunpack.c.h.b16 %v7587
        %v7979 = vunpack.c.l.b16 %v7588
        %v7980 = vunpack.c.h.b16 %v7588
        %v7981 = vunpack.c.l.b16 %v7589
        %v7982 = vunpack.c.h.b16 %v7589
        %v7983 = vunpack.c.l.b16 %v7590
        %v7984 = vunpack.c.h.b16 %v7590
        %v7985 = vunpack.c.l.b16 %v7591
        %v7986 = vunpack.c.h.b16 %v7591
        %v7987 = vunpack.c.l.b16 %v7592
        %v7988 = vunpack.c.h.b16 %v7592
        %v7989 = vunpack.c.l.b16 %v7593
        %v7990 = vunpack.c.h.b16 %v7593
        %v7991 = vunpack.c.l.b16 %v7594
        %v7992 = vunpack.c.h.b16 %v7594
        %v7993 = vunpack.c.l.b16 %v7595
        %v7994 = vunpack.c.h.b16 %v7595
        %v7995 = vunpack.c.l.b16 %v7596
        %v7996 = vunpack.c.h.b16 %v7596
        %v7997 = vunpack.c.l.b16 %v7597
        %v7998 = vunpack.c.h.b16 %v7597
        %v7999 = vunpack.c.l.b16 %v7598
        %v8000 = vunpack.c.h.b16 %v7598
        %v8001 = vunpack.c.l.b16 %v7599
        %v8002 = vunpack.c.h.b16 %v7599
        %v8003 = vunpack.c.l.b16 %v7600
        %v8004 = vunpack.c.h.b16 %v7600
        %v8005 = vunpack.c.l.b16 %v7601
        %v8006 = vunpack.c.h.b16 %v7601
        %v8007 = vunpack.c.l.b16 %v7602
        %v8008 = vunpack.c.h.b16 %v7602
        %v8009 = vunpack.c.l.b16 %v7603
        %v8010 = vunpack.c.h.b16 %v7603
        %v8011 = vunpack.c.l.b16 %v7604
        %v8012 = vunpack.c.h.b16 %v7604
        %v8013 = vunpack.c.l.b16 %v7605
        %v8014 = vunpack.c.h.b16 %v7605
        %v8015 = vunpack.c.l.b16 %v7606
        %v8016 = vunpack.c.h.b16 %v7606
        %v8017 = vunpack.c.l.b16 %v7607
        %v8018 = vunpack.c.h.b16 %v7607
        %v8019 = vunpack.c.l.b16 %v7608
        %v8020 = vunpack.c.h.b16 %v7608
        %v8021 = vunpack.c.l.b16 %v7609
        %v8022 = vunpack.c.h.b16 %v7609
        %v8023 = vunpack.c.l.b16 %v7610
        %v8024 = vunpack.c.h.b16 %v7610
        %v8025 = vunpack.c.l.b16 %v7611
        %v8026 = vunpack.c.h.b16 %v7611
        %v8027 = vunpack.c.l.b16 %v7612
        %v8028 = vunpack.c.h.b16 %v7612
        %v8029 = vunpack.c.l.b16 %v7613
        %v8030 = vunpack.c.h.b16 %v7613
        %v8031 = vunpack.c.l.b16 %v7614
        %v8032 = vunpack.c.h.b16 %v7614
        %v8033 = vunpack.c.l.b16 %v7615
        %v8034 = vunpack.c.h.b16 %v7615
        %v8035 = vunpack.c.l.b16 %v7616
        %v8036 = vunpack.c.h.b16 %v7616
        %v8037 = vunpack.c.l.b16 %v7617
        %v8038 = vunpack.c.h.b16 %v7617
        %v8039 = vunpack.c.l.b16 %v7618
        %v8040 = vunpack.c.h.b16 %v7618
        %v8041 = vunpack.c.l.b16 %v7619
        %v8042 = vunpack.c.h.b16 %v7619
        %v8043 = vunpack.c.l.b16 %v7620
        %v8044 = vunpack.c.h.b16 %v7620
        %v8045 = vunpack.c.l.b16 %v7621
        %v8046 = vunpack.c.h.b16 %v7621
        %v8047 = vunpack.c.l.b16 %v7622
        %v8048 = vunpack.c.h.b16 %v7622
        %v8049 = vunpack.c.l.b16 %v7623
        %v8050 = vunpack.c.h.b16 %v7623
        %v8051 = vunpack.c.l.b16 %v7624
        %v8052 = vunpack.c.h.b16 %v7624
        %v8053 = vunpack.c.l.b16 %v7625
        %v8054 = vunpack.c.h.b16 %v7625
        %v8055 = vunpack.c.l.b16 %v7626
        %v8056 = vunpack.c.h.b16 %v7626
        %v8057 = vunpack.c.l.b16 %v7627
        %v8058 = vunpack.c.h.b16 %v7627
        %v8059 = vunpack.c.l.b16 %v7628
        %v8060 = vunpack.c.h.b16 %v7628
        %v8061 = vunpack.c.l.b16 %v7629
        %v8062 = vunpack.c.h.b16 %v7629
        %v8063 = vunpack.c.l.b16 %v7630
        %v8064 = vunpack.c.h.b16 %v7630
        %v8065 = vunpack.c.l.b16 %v7631
        %v8066 = vunpack.c.h.b16 %v7631
        %v8067 = vunpack.c.l.b16 %v7632
        %v8068 = vunpack.c.h.b16 %v7632
        %v8069 = vunpack.c.l.b16 %v7633
        %v8070 = vunpack.c.h.b16 %v7633
        %v8071 = vunpack.c.l.b16 %v7634
        %v8072 = vunpack.c.h.b16 %v7634
        %v8073 = vunpack.c.l.b16 %v7635
        %v8074 = vunpack.c.h.b16 %v7635
        %v8075 = vunpack.c.l.b16 %v7636
        %v8076 = vunpack.c.h.b16 %v7636
        %v8077 = vunpack.c.l.b16 %v7637
        %v8078 = vunpack.c.h.b16 %v7637
        %v8079 = vunpack.c.l.b16 %v7638
        %v8080 = vunpack.c.h.b16 %v7638
        %v8081 = vunpack.c.l.b16 %v7639
        %v8082 = vunpack.c.h.b16 %v7639
        %v8083 = vunpack.c.l.b16 %v7640
        %v8084 = vunpack.c.h.b16 %v7640
        %v8085 = vunpack.c.l.b16 %v7641
        %v8086 = vunpack.c.h.b16 %v7641
        %v8087 = vunpack.c.l.b16 %v7642
        %v8088 = vunpack.c.h.b16 %v7642
        %v8089 = vunpack.c.l.b16 %v7643
        %v8090 = vunpack.c.h.b16 %v7643
        %v8091 = vunpack.c.l.b16 %v7644
        %v8092 = vunpack.c.h.b16 %v7644
        %v8093 = vunpack.c.l.b16 %v7645
        %v8094 = vunpack.c.h.b16 %v7645
        %v8095 = vunpack.c.l.b16 %v7646
        %v8096 = vunpack.c.h.b16 %v7646
        %v8097 = vunpack.c.l.b16 %v7647
        %v8098 = vunpack.c.h.b16 %v7647
        %v8099 = vunpack.c.l.b16 %v7648
        %v8100 = vunpack.c.h.b16 %v7648
        %v8101 = vunpack.c.l.b16 %v7649
        %v8102 = vunpack.c.h.b16 %v7649
        %v8103 = vunpack.c.l.b16 %v7650
        %v8104 = vunpack.c.h.b16 %v7650
        %v8105 = vunpack.c.l.b16 %v7651
        %v8106 = vunpack.c.h.b16 %v7651
        %v8107 = vunpack.c.l.b16 %v7652
        %v8108 = vunpack.c.h.b16 %v7652
        %v8109 = vpack.c.b16 %v7885, %v7853
        %v8110 = vpack.c.b16 %v7886, %v7854
        %v8111 = vpack.c.b16 %v7887, %v7855
        %v8112 = vpack.c.b16 %v7888, %v7856
        %v8113 = vpack.c.b16 %v7889, %v7857
        %v8114 = vpack.c.b16 %v7890, %v7858
        %v8115 = vpack.c.b16 %v7891, %v7859
        %v8116 = vpack.c.b16 %v7892, %v7860
        %v8117 = vpack.c.b16 %v7893, %v7861
        %v8118 = vpack.c.b16 %v7894, %v7862
        %v8119 = vpack.c.b16 %v7895, %v7863
        %v8120 = vpack.c.b16 %v7896, %v7864
        %v8121 = vpack.c.b16 %v7897, %v7865
        %v8122 = vpack.c.b16 %v7898, %v7866
        %v8123 = vpack.c.b16 %v7899, %v7867
        %v8124 = vpack.c.b16 %v7900, %v7868
        %v8125 = vpack.c.b16 %v7901, %v7869
        %v8126 = vpack.c.b16 %v7902, %v7870
        %v8127 = vpack.c.b16 %v7903, %v7871
        %v8128 = vpack.c.b16 %v7904, %v7872
        %v8129 = vpack.c.b16 %v7905, %v7873
        %v8130 = vpack.c.b16 %v7906, %v7874
        %v8131 = vpack.c.b16 %v7907, %v7875
        %v8132 = vpack.c.b16 %v7908, %v7876
        %v8133 = vpack.c.b16 %v7909, %v7877
        %v8134 = vpack.c.b16 %v7910, %v7878
        %v8135 = vpack.c.b16 %v7911, %v7879
        %v8136 = vpack.c.b16 %v7912, %v7880
        %v8137 = vpack.c.b16 %v7913, %v7881
        %v8138 = vpack.c.b16 %v7914, %v7882
        %v8139 = vpack.c.b16 %v7915, %v7883
        %v8140 = vpack.c.b16 %v7916, %v7884
        %v8141 = vpack.c.b16 %v7949, %v7917
        %v8142 = vpack.c.b16 %v7950, %v7918
        %v8143 = vpack.c.b16 %v7951, %v7919
        %v8144 = vpack.c.b16 %v7952, %v7920
        %v8145 = vpack.c.b16 %v7953, %v7921
        %v8146 = vpack.c.b16 %v7954, %v7922
        %v8147 = vpack.c.b16 %v7955, %v7923
        %v8148 = vpack.c.b16 %v7956, %v7924
        %v8149 = vpack.c.b16 %v7957, %v7925
        %v8150 = vpack.c.b16 %v7958, %v7926
        %v8151 = vpack.c.b16 %v7959, %v7927
        %v8152 = vpack.c.b16 %v7960, %v7928
        %v8153 = vpack.c.b16 %v7961, %v7929
        %v8154 = vpack.c.b16 %v7962, %v7930
        %v8155 = vpack.c.b16 %v7963, %v7931
        %v8156 = vpack.c.b16 %v7964, %v7932
        %v8157 = vpack.c.b16 %v7965, %v7933
        %v8158 = vpack.c.b16 %v7966, %v7934
        %v8159 = vpack.c.b16 %v7967, %v7935
        %v8160 = vpack.c.b16 %v7968, %v7936
        %v8161 = vpack.c.b16 %v7969, %v7937
        %v8162 = vpack.c.b16 %v7970, %v7938
        %v8163 = vpack.c.b16 %v7971, %v7939
        %v8164 = vpack.c.b16 %v7972, %v7940
        %v8165 = vpack.c.b16 %v7973, %v7941
        %v8166 = vpack.c.b16 %v7974, %v7942
        %v8167 = vpack.c.b16 %v7975, %v7943
        %v8168 = vpack.c.b16 %v7976, %v7944
        %v8169 = vpack.c.b16 %v7977, %v7945
        %v8170 = vpack.c.b16 %v7978, %v7946
        %v8171 = vpack.c.b16 %v7979, %v7947
        %v8172 = vpack.c.b16 %v7980, %v7948
        %v8173 = vpack.c.b16 %v8013, %v7981
        %v8174 = vpack.c.b16 %v8014, %v7982
        %v8175 = vpack.c.b16 %v8015, %v7983
        %v8176 = vpack.c.b16 %v8016, %v7984
        %v8177 = vpack.c.b16 %v8017, %v7985
        %v8178 = vpack.c.b16 %v8018, %v7986
        %v8179 = vpack.c.b16 %v8019, %v7987
        %v8180 = vpack.c.b16 %v8020, %v7988
        %v8181 = vpack.c.b16 %v8021, %v7989
        %v8182 = vpack.c.b16 %v8022, %v7990
        %v8183 = vpack.c.b16 %v8023, %v7991
        %v8184 = vpack.c.b16 %v8024, %v7992
        %v8185 = vpack.c.b16 %v8025, %v7993
        %v8186 = vpack.c.b16 %v8026, %v7994
        %v8187 = vpack.c.b16 %v8027, %v7995
        %v8188 = vpack.c.b16 %v8028, %v7996
        %v8189 = vpack.c.b16 %v8029, %v7997
        %v8190 = vpack.c.b16 %v8030, %v7998
        %v8191 = vpack.c.b16 %v8031, %v7999
        %v8192 = vpack.c.b16 %v8032, %v8000
        %v8193 = vpack.c.b16 %v8033, %v8001
        %v8194 = vpack.c.b16 %v8034, %v8002
        %v8195 = vpack.c.b16 %v8035, %v8003
        %v8196 = vpack.c.b16 %v8036, %v8004
        %v8197 = vpack.c.b16 %v8037, %v8005
        %v8198 = vpack.c.b16 %v8038, %v8006
        %v8199 = vpack.c.b16 %v8039, %v8007
        %v8200 = vpack.c.b16 %v8040, %v8008
        %v8201 = vpack.c.b16 %v8041, %v8009
        %v8202 = vpack.c.b16 %v8042, %v8010
        %v8203 = vpack.c.b16 %v8043, %v8011
        %v8204 = vpack.c.b16 %v8044, %v8012
        %v8205 = vpack.c.b16 %v8077, %v8045
        %v8206 = vpack.c.b16 %v8078, %v8046
        %v8207 = vpack.c.b16 %v8079, %v8047
        %v8208 = vpack.c.b16 %v8080, %v8048
        %v8209 = vpack.c.b16 %v8081, %v8049
        %v8210 = vpack.c.b16 %v8082, %v8050
        %v8211 = vpack.c.b16 %v8083, %v8051
        %v8212 = vpack.c.b16 %v8084, %v8052
        %v8213 = vpack.c.b16 %v8085, %v8053
        %v8214 = vpack.c.b16 %v8086, %v8054
        %v8215 = vpack.c.b16 %v8087, %v8055
        %v8216 = vpack.c.b16 %v8088, %v8056
        %v8217 = vpack.c.b16 %v8089, %v8057
        %v8218 = vpack.c.b16 %v8090, %v8058
        %v8219 = vpack.c.b16 %v8091, %v8059
        %v8220 = vpack.c.b16 %v8092, %v8060
        %v8221 = vpack.c.b16 %v8093, %v8061
        %v8222 = vpack.c.b16 %v8094, %v8062
        %v8223 = vpack.c.b16 %v8095, %v8063
        %v8224 = vpack.c.b16 %v8096, %v8064
        %v8225 = vpack.c.b16 %v8097, %v8065
        %v8226 = vpack.c.b16 %v8098, %v8066
        %v8227 = vpack.c.b16 %v8099, %v8067
        %v8228 = vpack.c.b16 %v8100, %v8068
        %v8229 = vpack.c.b16 %v8101, %v8069
        %v8230 = vpack.c.b16 %v8102, %v8070
        %v8231 = vpack.c.b16 %v8103, %v8071
        %v8232 = vpack.c.b16 %v8104, %v8072
        %v8233 = vpack.c.b16 %v8105, %v8073
        %v8234 = vpack.c.b16 %v8106, %v8074
        %v8235 = vpack.c.b16 %v8107, %v8075
        %v8236 = vpack.c.b16 %v8108, %v8076
        %8365 = vmatpush.bf16.msra.mxu0 0
        %8366 = vmatpush.bf16.msra.mxu0 0
        %8367 = vmatpush.bf16.msra.mxu0 0
        %8368 = vmatpush.bf16.msra.mxu0 0
        %8369 = vmatpush.bf16.msra.mxu0 %v8205
        %8370 = vmatpush.bf16.msra.mxu0 %v8173
        %8371 = vmatpush.bf16.msra.mxu0 %v8141
        %8372 = vmatpush.bf16.msra.mxu0 %v8109
        %8373 = vmatmul.bf16.gmra.mxu0 %v4499
        %v8374 = vpop.f32.mrf.mxu0
        %v8375 = vadd.f32 %v7661, %v8374
        %v8376 = vpop.f32.mrf.mxu0
        %8377 = vdwg.mxu0
        %8378 = vmatpush.bf16.msra.mxu0 0
        %8379 = vmatpush.bf16.msra.mxu0 0
        %8380 = vmatpush.bf16.msra.mxu0 0
        %8381 = vmatpush.bf16.msra.mxu0 0
        %8382 = vmatpush.bf16.msra.mxu0 %v8206
        %8383 = vmatpush.bf16.msra.mxu0 %v8174
        %8384 = vmatpush.bf16.msra.mxu0 %v8142
        %8385 = vmatpush.bf16.msra.mxu0 %v8110
        %8386 = vmatmul.bf16.gmra.mxu0 %v4499
        %v8387 = vpop.f32.mrf.mxu0
        %v8388 = vadd.f32 %v7662, %v8387
        %v8389 = vpop.f32.mrf.mxu0
        %8390 = vdwg.mxu0
        %8391 = vmatpush.bf16.msra.mxu0 0
        %8392 = vmatpush.bf16.msra.mxu0 0
        %8393 = vmatpush.bf16.msra.mxu0 0
        %8394 = vmatpush.bf16.msra.mxu0 0
        %8395 = vmatpush.bf16.msra.mxu0 %v8207
        %8396 = vmatpush.bf16.msra.mxu0 %v8175
        %8397 = vmatpush.bf16.msra.mxu0 %v8143
        %8398 = vmatpush.bf16.msra.mxu0 %v8111
        %8399 = vmatmul.bf16.gmra.mxu0 %v4499
        %v8400 = vpop.f32.mrf.mxu0
        %v8401 = vadd.f32 %v7663, %v8400
        %v8402 = vpop.f32.mrf.mxu0
        %8403 = vdwg.mxu0
        %8404 = vmatpush.bf16.msra.mxu0 0
        %8405 = vmatpush.bf16.msra.mxu0 0
        %8406 = vmatpush.bf16.msra.mxu0 0
        %8407 = vmatpush.bf16.msra.mxu0 0
        %8408 = vmatpush.bf16.msra.mxu0 %v8208
        %8409 = vmatpush.bf16.msra.mxu0 %v8176
        %8410 = vmatpush.bf16.msra.mxu0 %v8144
        %8411 = vmatpush.bf16.msra.mxu0 %v8112
        %8412 = vmatmul.bf16.gmra.mxu0 %v4499
        %v8413 = vpop.f32.mrf.mxu0
        %v8414 = vadd.f32 %v7664, %v8413
        %v8415 = vpop.f32.mrf.mxu0
        %8416 = vdwg.mxu0
        %8417 = vmatpush.bf16.msra.mxu0 0
        %8418 = vmatpush.bf16.msra.mxu0 0
        %8419 = vmatpush.bf16.msra.mxu0 0
        %8420 = vmatpush.bf16.msra.mxu0 0
        %8421 = vmatpush.bf16.msra.mxu0 %v8209
        %8422 = vmatpush.bf16.msra.mxu0 %v8177
        %8423 = vmatpush.bf16.msra.mxu0 %v8145
        %8424 = vmatpush.bf16.msra.mxu0 %v8113
        %8425 = vmatmul.bf16.gmra.mxu0 %v4499
        %v8426 = vpop.f32.mrf.mxu0
        %v8427 = vadd.f32 %v7665, %v8426
        %v8428 = vpop.f32.mrf.mxu0
        %8429 = vdwg.mxu0
        %8430 = vmatpush.bf16.msra.mxu0 0
        %8431 = vmatpush.bf16.msra.mxu0 0
        %8432 = vmatpush.bf16.msra.mxu0 0
        %8433 = vmatpush.bf16.msra.mxu0 0
        %8434 = vmatpush.bf16.msra.mxu0 %v8210
        %8435 = vmatpush.bf16.msra.mxu0 %v8178
        %8436 = vmatpush.bf16.msra.mxu0 %v8146
        %8437 = vmatpush.bf16.msra.mxu0 %v8114
        %8438 = vmatmul.bf16.gmra.mxu0 %v4499
        %v8439 = vpop.f32.mrf.mxu0
        %v8440 = vadd.f32 %v7666, %v8439
        %v8441 = vpop.f32.mrf.mxu0
        %8442 = vdwg.mxu0
        %8443 = vmatpush.bf16.msra.mxu0 0
        %8444 = vmatpush.bf16.msra.mxu0 0
        %8445 = vmatpush.bf16.msra.mxu0 0
        %8446 = vmatpush.bf16.msra.mxu0 0
        %8447 = vmatpush.bf16.msra.mxu0 %v8211
        %8448 = vmatpush.bf16.msra.mxu0 %v8179
        %8449 = vmatpush.bf16.msra.mxu0 %v8147
        %8450 = vmatpush.bf16.msra.mxu0 %v8115
        %8451 = vmatmul.bf16.gmra.mxu0 %v4499
        %v8452 = vpop.f32.mrf.mxu0
        %v8453 = vadd.f32 %v7667, %v8452
        %v8454 = vpop.f32.mrf.mxu0
        %8455 = vdwg.mxu0
        %8456 = vmatpush.bf16.msra.mxu0 0
        %8457 = vmatpush.bf16.msra.mxu0 0
        %8458 = vmatpush.bf16.msra.mxu0 0
        %8459 = vmatpush.bf16.msra.mxu0 0
        %8460 = vmatpush.bf16.msra.mxu0 %v8212
        %8461 = vmatpush.bf16.msra.mxu0 %v8180
        %8462 = vmatpush.bf16.msra.mxu0 %v8148
        %8463 = vmatpush.bf16.msra.mxu0 %v8116
        %8464 = vmatmul.bf16.gmra.mxu0 %v4499
        %v8465 = vpop.f32.mrf.mxu0
        %v8466 = vadd.f32 %v7668, %v8465
        %v8467 = vpop.f32.mrf.mxu0
        %8468 = vdwg.mxu0
        %8469 = vmatpush.bf16.msra.mxu0 0
        %8470 = vmatpush.bf16.msra.mxu0 0
        %8471 = vmatpush.bf16.msra.mxu0 0
        %8472 = vmatpush.bf16.msra.mxu0 0
        %8473 = vmatpush.bf16.msra.mxu0 %v8213
        %8474 = vmatpush.bf16.msra.mxu0 %v8181
        %8475 = vmatpush.bf16.msra.mxu0 %v8149
        %8476 = vmatpush.bf16.msra.mxu0 %v8117
        %8477 = vmatmul.bf16.gmra.mxu0 %v4499
        %v8478 = vpop.f32.mrf.mxu0
        %v8479 = vadd.f32 %v7669, %v8478
        %v8480 = vpop.f32.mrf.mxu0
        %8481 = vdwg.mxu0
        %8482 = vmatpush.bf16.msra.mxu0 0
        %8483 = vmatpush.bf16.msra.mxu0 0
        %8484 = vmatpush.bf16.msra.mxu0 0
        %8485 = vmatpush.bf16.msra.mxu0 0
        %8486 = vmatpush.bf16.msra.mxu0 %v8214
        %8487 = vmatpush.bf16.msra.mxu0 %v8182
        %8488 = vmatpush.bf16.msra.mxu0 %v8150
        %8489 = vmatpush.bf16.msra.mxu0 %v8118
        %8490 = vmatmul.bf16.gmra.mxu0 %v4499
        %v8491 = vpop.f32.mrf.mxu0
        %v8492 = vadd.f32 %v7670, %v8491
        %v8493 = vpop.f32.mrf.mxu0
        %8494 = vdwg.mxu0
        %8495 = vmatpush.bf16.msra.mxu0 0
        %8496 = vmatpush.bf16.msra.mxu0 0
        %8497 = vmatpush.bf16.msra.mxu0 0
        %8498 = vmatpush.bf16.msra.mxu0 0
        %8499 = vmatpush.bf16.msra.mxu0 %v8215
        %8500 = vmatpush.bf16.msra.mxu0 %v8183
        %8501 = vmatpush.bf16.msra.mxu0 %v8151
        %8502 = vmatpush.bf16.msra.mxu0 %v8119
        %8503 = vmatmul.bf16.gmra.mxu0 %v4499
        %v8504 = vpop.f32.mrf.mxu0
        %v8505 = vadd.f32 %v7671, %v8504
        %v8506 = vpop.f32.mrf.mxu0
        %8507 = vdwg.mxu0
        %8508 = vmatpush.bf16.msra.mxu0 0
        %8509 = vmatpush.bf16.msra.mxu0 0
        %8510 = vmatpush.bf16.msra.mxu0 0
        %8511 = vmatpush.bf16.msra.mxu0 0
        %8512 = vmatpush.bf16.msra.mxu0 %v8216
        %8513 = vmatpush.bf16.msra.mxu0 %v8184
        %8514 = vmatpush.bf16.msra.mxu0 %v8152
        %8515 = vmatpush.bf16.msra.mxu0 %v8120
        %8516 = vmatmul.bf16.gmra.mxu0 %v4499
        %v8517 = vpop.f32.mrf.mxu0
        %v8518 = vadd.f32 %v7672, %v8517
        %v8519 = vpop.f32.mrf.mxu0
        %8520 = vdwg.mxu0
        %8521 = vmatpush.bf16.msra.mxu0 0
        %8522 = vmatpush.bf16.msra.mxu0 0
        %8523 = vmatpush.bf16.msra.mxu0 0
        %8524 = vmatpush.bf16.msra.mxu0 0
        %8525 = vmatpush.bf16.msra.mxu0 %v8217
        %8526 = vmatpush.bf16.msra.mxu0 %v8185
        %8527 = vmatpush.bf16.msra.mxu0 %v8153
        %8528 = vmatpush.bf16.msra.mxu0 %v8121
        %8529 = vmatmul.bf16.gmra.mxu0 %v4499
        %v8530 = vpop.f32.mrf.mxu0
        %v8531 = vadd.f32 %v7673, %v8530
        %v8532 = vpop.f32.mrf.mxu0
        %8533 = vdwg.mxu0
        %8534 = vmatpush.bf16.msra.mxu0 0
        %8535 = vmatpush.bf16.msra.mxu0 0
        %8536 = vmatpush.bf16.msra.mxu0 0
        %8537 = vmatpush.bf16.msra.mxu0 0
        %8538 = vmatpush.bf16.msra.mxu0 %v8218
        %8539 = vmatpush.bf16.msra.mxu0 %v8186
        %8540 = vmatpush.bf16.msra.mxu0 %v8154
        %8541 = vmatpush.bf16.msra.mxu0 %v8122
        %8542 = vmatmul.bf16.gmra.mxu0 %v4499
        %v8543 = vpop.f32.mrf.mxu0
        %v8544 = vadd.f32 %v7674, %v8543
        %v8545 = vpop.f32.mrf.mxu0
        %8546 = vdwg.mxu0
        %8547 = vmatpush.bf16.msra.mxu0 0
        %8548 = vmatpush.bf16.msra.mxu0 0
        %8549 = vmatpush.bf16.msra.mxu0 0
        %8550 = vmatpush.bf16.msra.mxu0 0
        %8551 = vmatpush.bf16.msra.mxu0 %v8219
        %8552 = vmatpush.bf16.msra.mxu0 %v8187
        %8553 = vmatpush.bf16.msra.mxu0 %v8155
        %8554 = vmatpush.bf16.msra.mxu0 %v8123
        %8555 = vmatmul.bf16.gmra.mxu0 %v4499
        %v8556 = vpop.f32.mrf.mxu0
        %v8557 = vadd.f32 %v7675, %v8556
        %v8558 = vpop.f32.mrf.mxu0
        %8559 = vdwg.mxu0
        %8560 = vmatpush.bf16.msra.mxu0 0
        %8561 = vmatpush.bf16.msra.mxu0 0
        %8562 = vmatpush.bf16.msra.mxu0 0
        %8563 = vmatpush.bf16.msra.mxu0 0
        %8564 = vmatpush.bf16.msra.mxu0 %v8220
        %8565 = vmatpush.bf16.msra.mxu0 %v8188
        %8566 = vmatpush.bf16.msra.mxu0 %v8156
        %8567 = vmatpush.bf16.msra.mxu0 %v8124
        %8568 = vmatmul.bf16.gmra.mxu0 %v4499
        %v8569 = vpop.f32.mrf.mxu0
        %v8570 = vadd.f32 %v7676, %v8569
        %v8571 = vpop.f32.mrf.mxu0
        %8572 = vdwg.mxu0
        %8573 = vmatpush.bf16.msra.mxu0 0
        %8574 = vmatpush.bf16.msra.mxu0 0
        %8575 = vmatpush.bf16.msra.mxu0 0
        %8576 = vmatpush.bf16.msra.mxu0 0
        %8577 = vmatpush.bf16.msra.mxu0 %v8221
        %8578 = vmatpush.bf16.msra.mxu0 %v8189
        %8579 = vmatpush.bf16.msra.mxu0 %v8157
        %8580 = vmatpush.bf16.msra.mxu0 %v8125
        %8581 = vmatmul.bf16.gmra.mxu0 %v4499
        %v8582 = vpop.f32.mrf.mxu0
        %v8583 = vadd.f32 %v7677, %v8582
        %v8584 = vpop.f32.mrf.mxu0
        %8585 = vdwg.mxu0
        %8586 = vmatpush.bf16.msra.mxu0 0
        %8587 = vmatpush.bf16.msra.mxu0 0
        %8588 = vmatpush.bf16.msra.mxu0 0
        %8589 = vmatpush.bf16.msra.mxu0 0
        %8590 = vmatpush.bf16.msra.mxu0 %v8222
        %8591 = vmatpush.bf16.msra.mxu0 %v8190
        %8592 = vmatpush.bf16.msra.mxu0 %v8158
        %8593 = vmatpush.bf16.msra.mxu0 %v8126
        %8594 = vmatmul.bf16.gmra.mxu0 %v4499
        %v8595 = vpop.f32.mrf.mxu0
        %v8596 = vadd.f32 %v7678, %v8595
        %v8597 = vpop.f32.mrf.mxu0
        %8598 = vdwg.mxu0
        %8599 = vmatpush.bf16.msra.mxu0 0
        %8600 = vmatpush.bf16.msra.mxu0 0
        %8601 = vmatpush.bf16.msra.mxu0 0
        %8602 = vmatpush.bf16.msra.mxu0 0
        %8603 = vmatpush.bf16.msra.mxu0 %v8223
        %8604 = vmatpush.bf16.msra.mxu0 %v8191
        %8605 = vmatpush.bf16.msra.mxu0 %v8159
        %8606 = vmatpush.bf16.msra.mxu0 %v8127
        %8607 = vmatmul.bf16.gmra.mxu0 %v4499
        %v8608 = vpop.f32.mrf.mxu0
        %v8609 = vadd.f32 %v7679, %v8608
        %v8610 = vpop.f32.mrf.mxu0
        %8611 = vdwg.mxu0
        %8612 = vmatpush.bf16.msra.mxu0 0
        %8613 = vmatpush.bf16.msra.mxu0 0
        %8614 = vmatpush.bf16.msra.mxu0 0
        %8615 = vmatpush.bf16.msra.mxu0 0
        %8616 = vmatpush.bf16.msra.mxu0 %v8224
        %8617 = vmatpush.bf16.msra.mxu0 %v8192
        %8618 = vmatpush.bf16.msra.mxu0 %v8160
        %8619 = vmatpush.bf16.msra.mxu0 %v8128
        %8620 = vmatmul.bf16.gmra.mxu0 %v4499
        %v8621 = vpop.f32.mrf.mxu0
        %v8622 = vadd.f32 %v7680, %v8621
        %v8623 = vpop.f32.mrf.mxu0
        %8624 = vdwg.mxu0
        %8625 = vmatpush.bf16.msra.mxu0 0
        %8626 = vmatpush.bf16.msra.mxu0 0
        %8627 = vmatpush.bf16.msra.mxu0 0
        %8628 = vmatpush.bf16.msra.mxu0 0
        %8629 = vmatpush.bf16.msra.mxu0 %v8225
        %8630 = vmatpush.bf16.msra.mxu0 %v8193
        %8631 = vmatpush.bf16.msra.mxu0 %v8161
        %8632 = vmatpush.bf16.msra.mxu0 %v8129
        %8633 = vmatmul.bf16.gmra.mxu0 %v4499
        %v8634 = vpop.f32.mrf.mxu0
        %v8635 = vadd.f32 %v7681, %v8634
        %v8636 = vpop.f32.mrf.mxu0
        %8637 = vdwg.mxu0
        %8638 = vmatpush.bf16.msra.mxu0 0
        %8639 = vmatpush.bf16.msra.mxu0 0
        %8640 = vmatpush.bf16.msra.mxu0 0
        %8641 = vmatpush.bf16.msra.mxu0 0
        %8642 = vmatpush.bf16.msra.mxu0 %v8226
        %8643 = vmatpush.bf16.msra.mxu0 %v8194
        %8644 = vmatpush.bf16.msra.mxu0 %v8162
        %8645 = vmatpush.bf16.msra.mxu0 %v8130
        %8646 = vmatmul.bf16.gmra.mxu0 %v4499
        %v8647 = vpop.f32.mrf.mxu0
        %v8648 = vadd.f32 %v7682, %v8647
        %v8649 = vpop.f32.mrf.mxu0
        %8650 = vdwg.mxu0
        %8651 = vmatpush.bf16.msra.mxu0 0
        %8652 = vmatpush.bf16.msra.mxu0 0
        %8653 = vmatpush.bf16.msra.mxu0 0
        %8654 = vmatpush.bf16.msra.mxu0 0
        %8655 = vmatpush.bf16.msra.mxu0 %v8227
        %8656 = vmatpush.bf16.msra.mxu0 %v8195
        %8657 = vmatpush.bf16.msra.mxu0 %v8163
        %8658 = vmatpush.bf16.msra.mxu0 %v8131
        %8659 = vmatmul.bf16.gmra.mxu0 %v4499
        %v8660 = vpop.f32.mrf.mxu0
        %v8661 = vadd.f32 %v7683, %v8660
        %v8662 = vpop.f32.mrf.mxu0
        %8663 = vdwg.mxu0
        %8664 = vmatpush.bf16.msra.mxu0 0
        %8665 = vmatpush.bf16.msra.mxu0 0
        %8666 = vmatpush.bf16.msra.mxu0 0
        %8667 = vmatpush.bf16.msra.mxu0 0
        %8668 = vmatpush.bf16.msra.mxu0 %v8228
        %8669 = vmatpush.bf16.msra.mxu0 %v8196
        %8670 = vmatpush.bf16.msra.mxu0 %v8164
        %8671 = vmatpush.bf16.msra.mxu0 %v8132
        %8672 = vmatmul.bf16.gmra.mxu0 %v4499
        %v8673 = vpop.f32.mrf.mxu0
        %v8674 = vadd.f32 %v7684, %v8673
        %v8675 = vpop.f32.mrf.mxu0
        %8676 = vdwg.mxu0
        %8677 = vmatpush.bf16.msra.mxu0 0
        %8678 = vmatpush.bf16.msra.mxu0 0
        %8679 = vmatpush.bf16.msra.mxu0 0
        %8680 = vmatpush.bf16.msra.mxu0 0
        %8681 = vmatpush.bf16.msra.mxu0 %v8229
        %8682 = vmatpush.bf16.msra.mxu0 %v8197
        %8683 = vmatpush.bf16.msra.mxu0 %v8165
        %8684 = vmatpush.bf16.msra.mxu0 %v8133
        %8685 = vmatmul.bf16.gmra.mxu0 %v4499
        %v8686 = vpop.f32.mrf.mxu0
        %v8687 = vadd.f32 %v7685, %v8686
        %v8688 = vpop.f32.mrf.mxu0
        %8689 = vdwg.mxu0
        %8690 = vmatpush.bf16.msra.mxu0 0
        %8691 = vmatpush.bf16.msra.mxu0 0
        %8692 = vmatpush.bf16.msra.mxu0 0
        %8693 = vmatpush.bf16.msra.mxu0 0
        %8694 = vmatpush.bf16.msra.mxu0 %v8230
        %8695 = vmatpush.bf16.msra.mxu0 %v8198
        %8696 = vmatpush.bf16.msra.mxu0 %v8166
        %8697 = vmatpush.bf16.msra.mxu0 %v8134
        %8698 = vmatmul.bf16.gmra.mxu0 %v4499
        %v8699 = vpop.f32.mrf.mxu0
        %v8700 = vadd.f32 %v7686, %v8699
        %v8701 = vpop.f32.mrf.mxu0
        %8702 = vdwg.mxu0
        %8703 = vmatpush.bf16.msra.mxu0 0
        %8704 = vmatpush.bf16.msra.mxu0 0
        %8705 = vmatpush.bf16.msra.mxu0 0
        %8706 = vmatpush.bf16.msra.mxu0 0
        %8707 = vmatpush.bf16.msra.mxu0 %v8231
        %8708 = vmatpush.bf16.msra.mxu0 %v8199
        %8709 = vmatpush.bf16.msra.mxu0 %v8167
        %8710 = vmatpush.bf16.msra.mxu0 %v8135
        %8711 = vmatmul.bf16.gmra.mxu0 %v4499
        %v8712 = vpop.f32.mrf.mxu0
        %v8713 = vadd.f32 %v7687, %v8712
        %v8714 = vpop.f32.mrf.mxu0
        %8715 = vdwg.mxu0
        %8716 = vmatpush.bf16.msra.mxu0 0
        %8717 = vmatpush.bf16.msra.mxu0 0
        %8718 = vmatpush.bf16.msra.mxu0 0
        %8719 = vmatpush.bf16.msra.mxu0 0
        %8720 = vmatpush.bf16.msra.mxu0 %v8232
        %8721 = vmatpush.bf16.msra.mxu0 %v8200
        %8722 = vmatpush.bf16.msra.mxu0 %v8168
        %8723 = vmatpush.bf16.msra.mxu0 %v8136
        %8724 = vmatmul.bf16.gmra.mxu0 %v4499
        %v8725 = vpop.f32.mrf.mxu0
        %v8726 = vadd.f32 %v7688, %v8725
        %v8727 = vpop.f32.mrf.mxu0
        %8728 = vdwg.mxu0
        %8729 = vmatpush.bf16.msra.mxu0 0
        %8730 = vmatpush.bf16.msra.mxu0 0
        %8731 = vmatpush.bf16.msra.mxu0 0
        %8732 = vmatpush.bf16.msra.mxu0 0
        %8733 = vmatpush.bf16.msra.mxu0 %v8233
        %8734 = vmatpush.bf16.msra.mxu0 %v8201
        %8735 = vmatpush.bf16.msra.mxu0 %v8169
        %8736 = vmatpush.bf16.msra.mxu0 %v8137
        %8737 = vmatmul.bf16.gmra.mxu0 %v4499
        %v8738 = vpop.f32.mrf.mxu0
        %v8739 = vadd.f32 %v7689, %v8738
        %v8740 = vpop.f32.mrf.mxu0
        %8741 = vdwg.mxu0
        %8742 = vmatpush.bf16.msra.mxu0 0
        %8743 = vmatpush.bf16.msra.mxu0 0
        %8744 = vmatpush.bf16.msra.mxu0 0
        %8745 = vmatpush.bf16.msra.mxu0 0
        %8746 = vmatpush.bf16.msra.mxu0 %v8234
        %8747 = vmatpush.bf16.msra.mxu0 %v8202
        %8748 = vmatpush.bf16.msra.mxu0 %v8170
        %8749 = vmatpush.bf16.msra.mxu0 %v8138
        %8750 = vmatmul.bf16.gmra.mxu0 %v4499
        %v8751 = vpop.f32.mrf.mxu0
        %v8752 = vadd.f32 %v7690, %v8751
        %v8753 = vpop.f32.mrf.mxu0
        %8754 = vdwg.mxu0
        %8755 = vmatpush.bf16.msra.mxu0 0
        %8756 = vmatpush.bf16.msra.mxu0 0
        %8757 = vmatpush.bf16.msra.mxu0 0
        %8758 = vmatpush.bf16.msra.mxu0 0
        %8759 = vmatpush.bf16.msra.mxu0 %v8235
        %8760 = vmatpush.bf16.msra.mxu0 %v8203
        %8761 = vmatpush.bf16.msra.mxu0 %v8171
        %8762 = vmatpush.bf16.msra.mxu0 %v8139
        %8763 = vmatmul.bf16.gmra.mxu0 %v4499
        %v8764 = vpop.f32.mrf.mxu0
        %v8765 = vadd.f32 %v7691, %v8764
        %v8766 = vpop.f32.mrf.mxu0
        %8767 = vdwg.mxu0
        %8768 = vmatpush.bf16.msra.mxu0 0
        %8769 = vmatpush.bf16.msra.mxu0 0
        %8770 = vmatpush.bf16.msra.mxu0 0
        %8771 = vmatpush.bf16.msra.mxu0 0
        %8772 = vmatpush.bf16.msra.mxu0 %v8236
        %8773 = vmatpush.bf16.msra.mxu0 %v8204
        %8774 = vmatpush.bf16.msra.mxu0 %v8172
        %8775 = vmatpush.bf16.msra.mxu0 %v8140
        %8776 = vmatmul.bf16.gmra.mxu0 %v4499
        %v8777 = vpop.f32.mrf.mxu0
        %v8778 = vadd.f32 %v7692, %v8777
        %v8779 = vpop.f32.mrf.mxu0
        %8780 = vdwg.mxu0
        %8781 = vst [vmem:[%s768 + $0x300] sm:$0xff] %v8375
        %8782 = vst [vmem:[%s768 + $0x308] sm:$0xff] %v8388
        %8783 = vst [vmem:[%s768 + $0x310] sm:$0xff] %v8401
        %8784 = vst [vmem:[%s768 + $0x318] sm:$0xff] %v8414
        %8785 = vst [vmem:[%s768 + $0x320] sm:$0xff] %v8427
        %8786 = vst [vmem:[%s768 + $0x328] sm:$0xff] %v8440
        %8787 = vst [vmem:[%s768 + $0x330] sm:$0xff] %v8453
        %8788 = vst [vmem:[%s768 + $0x338] sm:$0xff] %v8466
        %8789 = vst [vmem:[%s768 + $0x340] sm:$0xff] %v8479
        %8790 = vst [vmem:[%s768 + $0x348] sm:$0xff] %v8492
        %8791 = vst [vmem:[%s768 + $0x350] sm:$0xff] %v8505
        %8792 = vst [vmem:[%s768 + $0x358] sm:$0xff] %v8518
        %8793 = vst [vmem:[%s768 + $0x360] sm:$0xff] %v8531
        %8794 = vst [vmem:[%s768 + $0x368] sm:$0xff] %v8544
        %8795 = vst [vmem:[%s768 + $0x370] sm:$0xff] %v8557
        %8796 = vst [vmem:[%s768 + $0x378] sm:$0xff] %v8570
        %8797 = vst [vmem:[%s768 + $0x380] sm:$0xff] %v8583
        %8798 = vst [vmem:[%s768 + $0x388] sm:$0xff] %v8596
        %8799 = vst [vmem:[%s768 + $0x390] sm:$0xff] %v8609
        %8800 = vst [vmem:[%s768 + $0x398] sm:$0xff] %v8622
        %8801 = vst [vmem:[%s768 + $0x3a0] sm:$0xff] %v8635
        %8802 = vst [vmem:[%s768 + $0x3a8] sm:$0xff] %v8648
        %8803 = vst [vmem:[%s768 + $0x3b0] sm:$0xff] %v8661
        %8804 = vst [vmem:[%s768 + $0x3b8] sm:$0xff] %v8674
        %8805 = vst [vmem:[%s768 + $0x3c0] sm:$0xff] %v8687
        %8806 = vst [vmem:[%s768 + $0x3c8] sm:$0xff] %v8700
        %8807 = vst [vmem:[%s768 + $0x3d0] sm:$0xff] %v8713
        %8808 = vst [vmem:[%s768 + $0x3d8] sm:$0xff] %v8726
        %8809 = vst [vmem:[%s768 + $0x3e0] sm:$0xff] %v8739
        %8810 = vst [vmem:[%s768 + $0x3e8] sm:$0xff] %v8752
        %8811 = vst [vmem:[%s768 + $0x3f0] sm:$0xff] %v8765
        %8812 = vst [vmem:[%s768 + $0x3f8] sm:$0xff] %v8778
        %s8813 = sand.u32 %s582, 1
        %s8814 = scalar_lea.sflag [#allocation3], %s8813
        %s8815 = sand.u32 %s582, 1
        %s8816 = smul.addr %s8815, 1024
        %s8817 = scalar_lea.vmem [#allocation2], %s8816
        // Predicated region
        $region121: #{seq2seq_forward.1} parent=119 // pred_check
          %p8818 = pneg %p592
        $region122: #{seq2seq_forward.1} parent=119 // pred_check_branch
          %8820 = sbr.rel (%p8818) target = $region124
        $region123: #{seq2seq_forward.1} parent=119 // pred_region
          %8822 = vsyncadd %s8814, 0
          %s8823 = smul.addr %s39, 128
          %s8824 = smul.addr %s8823, 8
          %s8825 = scalar_lea.hbm %s25, %s8824
          %s8827 = sshll.u32 %s8817, 4
          %s8828 = int_to_ptr.vmem [resolvable:$true] %s8827
          %s8829 = sshll.u32 %s8825, 4
          %s8830 = int_to_ptr.hbm [resolvable:$true] %s8829
          %8832 = dma.vmem_to_hbm [thread:$0]  %s8828, 16384, %s8830, %s8814
        $region124: #{seq2seq_forward.1} parent=119 // pred_fallthru
          _
      $region120: #{seq2seq_forward.1} parent=5 // pred_fallthru
        _
      %p8833 = scmp.le.s32.totalorder 2, %s34
      // Predicated region
      $region125: #{seq2seq_forward.1} parent=5 // pred_check
        %p8834 = pneg %p8833
      $region126: #{seq2seq_forward.1} parent=5 // pred_check_branch
        %8836 = sbr.rel (%p8834) target = $region128
      $region127: #{seq2seq_forward.1} parent=5 // pred_region
        %s8837 = ssub.s32 %s34, 2
        // Predicated region
        $region129: #{seq2seq_forward.1} parent=127 // pred_check
          %p8838 = pneg %p598
        $region130: #{seq2seq_forward.1} parent=127 // pred_check_branch
          %8840 = sbr.rel (%p8838) target = $region132
        $region131: #{seq2seq_forward.1} parent=127 // pred_region
          %s8841 = sand.u32 %s583, 1
          %s8842 = scalar_lea.sflag [#allocation3], %s8841
          %s8843 = sand.u32 %s583, 1
          %s8844 = smul.addr %s8843, 1024
          %s8845 = scalar_lea.vmem [#allocation2], %s8844
          %8847 = dma.done %s8842, 16384
        $region132: #{seq2seq_forward.1} parent=127 // pred_fallthru
          _
      $region128: #{seq2seq_forward.1} parent=5 // pred_fallthru
        _
    $region6: #{seq2seq_forward.1} parent=1 // loop_footer
      %s38 = sadd.s32 1, %s34
    $region7: #{seq2seq_forward.1} parent=1 // loop_footer_branch
      %33 = sbr.rel target = $region3
    $region8: #{seq2seq_forward.1} parent=1 // loop_exit
      _
    %8848 = vsyncpa [#allocation3], 1
    %s8849 = scalar_lea.sflag [#allocation3], 1
    %8850 = vsyncpa %s8849, 1

</llo_original>
